<compile_context>
chip_gen: v7x
topology: tpu7x:2x2x1
jax: 0.10.0
libtpu: 0.0.40
codegen_flags: <defaults>
</compile_context>

<pallas_src>
import jax
import jax.numpy as jnp
from jax.experimental import pallas as pl
from jax.experimental.pallas import tpu as pltpu

EPS = 1e-5
LANE = 128


def _round_up(n, m=LANE):
    return ((n + m - 1) // m) * m


def _bn_relu(acc, g, be):
    """Training-mode BatchNorm folded to per-channel scale/shift, then ReLU.

    Single pass over the (M, C) f32 accumulator: sum and sum-of-squares together,
    var = E[x^2] - mean^2 (clamped at 0 against cancellation).  rsqrt -> EUP slot.
    """
    inv_m = 1.0 / acc.shape[0]
    s = jnp.sum(acc, axis=0, keepdims=True)
    sq = jnp.sum(acc * acc, axis=0, keepdims=True)
    mean = s * inv_m
    var = jnp.maximum(sq * inv_m - mean * mean, 0.0)
    scale = g * jax.lax.rsqrt(var + EPS)
    shift = be - mean * scale
    return jnp.maximum(acc * scale + shift, 0.0)


def _make_kernel(N, H, W):
    Hp, Wp = H + 2, W + 2
    M = N * H * W

    def kernel(p1_ref, w1_ref, g1_ref, be1_ref, w2_ref, g2_ref, be2_ref,
               o_ref, h1_ref):
        Cpo = o_ref.shape[-1]          # lane-dense conv output channels
        cdt = h1_ref.dtype             # MXU operand dtype (bf16 on the perf path)

        # ---- conv1: one dense-K MXU matmul (im2col pre-built in wrapper) ----
        acc1 = jnp.dot(p1_ref[...], w1_ref[...],
                       preferred_element_type=jnp.float32)          # (M, Cpo) f32
        y1 = _bn_relu(acc1, g1_ref[...], be1_ref[...])

        # ---- stage conv1 output with a 1-px halo; zero only the halo strips ----
        h1_ref[:, 0:1, :, :] = jnp.zeros((N, 1, Wp, Cpo), cdt)
        h1_ref[:, H + 1:H + 2, :, :] = jnp.zeros((N, 1, Wp, Cpo), cdt)
        h1_ref[:, :, 0:1, :] = jnp.zeros((N, Hp, 1, Cpo), cdt)
        h1_ref[:, :, W + 1:W + 2, :] = jnp.zeros((N, Hp, 1, Cpo), cdt)
        h1_ref[:, 1:H + 1, 1:W + 1, :] = y1.reshape(N, H, W, Cpo).astype(cdt)

        # ---- conv2: 9 accumulated tap matmuls straight from h1 (no p2 scratch) ----
        acc2 = jnp.zeros((M, Cpo), jnp.float32)
        for dy in range(3):
            for dx in range(3):
                k = dy * 3 + dx
                tap = h1_ref[:, dy:dy + H, dx:dx + W, :].reshape(M, Cpo)
                acc2 = acc2 + jnp.dot(tap, w2_ref[k],
                                      preferred_element_type=jnp.float32)

        o_ref[...] = _bn_relu(acc2, g2_ref[...], be2_ref[...])

    return kernel


def double_conv(x_nchw, params, *, mxu_dtype=jnp.bfloat16):
    # b1 / b2 intentionally dropped: conv bias immediately followed by BatchNorm
    # cancels exactly under the mean subtraction (valid ONLY because BN follows).
    w1, _b1, g1, be1, w2, _b2, g2, be2 = params
    N, Cin, H, W = x_nchw.shape
    Cout = w1.shape[-1]
    M = N * H * W
    K1 = _round_up(9 * Cin)     # dense tap*Cin contraction (36 -> 128 lanes)
    Cpo = _round_up(Cout)       # lane-dense conv outputs

    # ---- conv1 im2col in the wrapper (XLA): only useful K lanes cross HBM ----
    x = jnp.transpose(x_nchw, (0, 2, 3, 1)).astype(jnp.float32)
    xp = jnp.pad(x, ((0, 0), (1, 1), (1, 1), (0, 0)))
    taps = [xp[:, dy:dy + H, dx:dx + W, :] for dy in range(3) for dx in range(3)]
    patches = jnp.concatenate(taps, axis=-1).reshape(M, 9 * Cin)
    patches = jnp.pad(patches, ((0, 0), (0, K1 - 9 * Cin))).astype(mxu_dtype)

    # Dense-K conv1 weight: row (dy*3+dx)*Cin + cin matches the patch packing.
    w1m = jnp.zeros((K1, Cpo), jnp.float32)
    w1m = w1m.at[:9 * Cin, :Cout].set(w1.reshape(9 * Cin, Cout).astype(jnp.float32))
    w1m = w1m.astype(mxu_dtype)

    # Per-tap conv2 weights (9, Cpo, Cpo); padded rows/cols are zero so padded
    # h1 lanes can never leak into real output channels.
    w2m = jnp.zeros((9, Cpo, Cpo), jnp.float32)
    w2m = w2m.at[:, :Cout, :Cout].set(w2.reshape(9, Cout, Cout).astype(jnp.float32))
    w2m = w2m.astype(mxu_dtype)

    # INVARIANT: zero gamma/beta padding keeps padded lanes at exactly 0.
    def pad_vec(v):
        return jnp.pad(v.astype(jnp.float32), (0, Cpo - Cout)).reshape(1, Cpo)

    def full(shape):
        return pl.BlockSpec(shape, lambda i, _n=len(shape): (0,) * _n)

    # VMEM budget (bf16 path), including the 2x double-buffer multiplier on the
    # grid=(1,) specs: 2*(patches 128K + w1m 32K + w2m 288K + 4 vecs + out 256K)
    # ~ 1.4 MiB, plus h1 scratch 162 KiB and transient tap/acc temps < 2 MiB.
    out2d = pl.pallas_call(
        _make_kernel(N, H, W),
        out_shape=jax.ShapeDtypeStruct((M, Cpo), jnp.float32),
        grid=(1,),
        in_specs=[full(patches.shape), full(w1m.shape),
                  full((1, Cpo)), full((1, Cpo)),
                  full(w2m.shape), full((1, Cpo)), full((1, Cpo))],
        out_specs=full((M, Cpo)),
        scratch_shapes=[pltpu.VMEM((N, H + 2, W + 2, Cpo), mxu_dtype)],
        compiler_params=pltpu.CompilerParams(
            dimension_semantics=("arbitrary",),   # TODO(synk): "parallel" M axis once tiled
            vmem_limit_bytes=32 * 1024 * 1024),
    )(patches, w1m, pad_vec(g1), pad_vec(be1), w2m, pad_vec(g2), pad_vec(be2))

    out = out2d[:, :Cout].reshape(N, H, W, Cout)      # drop lane padding
    return jnp.transpose(out, (0, 3, 1, 2))           # NHWC -> NCHW


def ref_double_conv(x_nchw, params):
    """Pure-JAX f32 reference mirroring the PyTorch module (training-mode BN)."""
    w1, b1, g1, be1, w2, b2, g2, be2 = params

    def conv(x, w, b):
        y = jax.lax.conv_general_dilated(
            x, w, window_strides=(1, 1), padding=((1, 1), (1, 1)),
            dimension_numbers=('NCHW', 'HWIO', 'NCHW'))
        return y + b[None, :, None, None]

    def bn_relu(x, g, be):
        m = jnp.mean(x, axis=(0, 2, 3), keepdims=True)
        v = jnp.mean((x - m) ** 2, axis=(0, 2, 3), keepdims=True)
        y = (x - m) * jax.lax.rsqrt(v + EPS)
        y = y * g[None, :, None, None] + be[None, :, None, None]
        return jnp.maximum(y, 0.0)

    h = bn_relu(conv(x_nchw, w1, b1), g1, be1)
    return bn_relu(conv(h, w2, b2), g2, be2)


if __name__ == "__main__":
    N, Cin, Cout, H, W = 2, 4, 8, 16, 16
    key = jax.random.PRNGKey(0)
    ks = jax.random.split(key, 9)

    x = jax.random.normal(ks[0], (N, Cin, H, W), jnp.float32)
    w1 = jax.random.normal(ks[1], (3, 3, Cin, Cout), jnp.float32) * 0.1
    b1 = jax.random.normal(ks[2], (Cout,), jnp.float32) * 0.1
    g1 = 1.0 + 0.1 * jax.random.normal(ks[3], (Cout,), jnp.float32)
    be1 = 0.1 * jax.random.normal(ks[4], (Cout,), jnp.float32)
    w2 = jax.random.normal(ks[5], (3, 3, Cout, Cout), jnp.float32) * 0.1
    b2 = jax.random.normal(ks[6], (Cout,), jnp.float32) * 0.1
    g2 = 1.0 + 0.1 * jax.random.normal(ks[7], (Cout,), jnp.float32)
    be2 = 0.1 * jax.random.normal(ks[8], (Cout,), jnp.float32)
    params = (w1, b1, g1, be1, w2, b2, g2, be2)

    ref = jax.block_until_ready(ref_double_conv(x, params))

    # Exactness check: f32 MXU operands must match the f32 reference tightly.
    out_f32 = jax.block_until_ready(double_conv(x, params, mxu_dtype=jnp.float32))
    assert out_f32.shape == (N, Cout, H, W), out_f32.shape
    assert jnp.allclose(out_f32, ref, rtol=1e-3, atol=1e-3), \
        float(jnp.max(jnp.abs(out_f32 - ref)))

    # Perf path (v6e/v7x): bf16 MXU operands, f32 accumulation & BN statistics.
    out_bf16 = jax.block_until_ready(double_conv(x, params, mxu_dtype=jnp.bfloat16))
    assert out_bf16.shape == (N, Cout, H, W), out_bf16.shape
    assert jnp.allclose(out_bf16, ref, rtol=5e-2, atol=5e-2), \
        float(jnp.max(jnp.abs(out_bf16 - ref)))

    print("KERNEL_OK")
</pallas_src>

<mosaic_0001>
module attributes {stable_mosaic.version = 11 : i64} {
  func.func @kernel(%arg0: i32, %arg1: memref<512x128xf32, #tpu.memory_space<vmem>>, %arg2: memref<128x128xf32, #tpu.memory_space<vmem>>, %arg3: memref<1x128xf32, #tpu.memory_space<vmem>>, %arg4: memref<1x128xf32, #tpu.memory_space<vmem>>, %arg5: memref<9x128x128xf32, #tpu.memory_space<vmem>>, %arg6: memref<1x128xf32, #tpu.memory_space<vmem>>, %arg7: memref<1x128xf32, #tpu.memory_space<vmem>>, %arg8: memref<512x128xf32, #tpu.memory_space<vmem>>, %arg9: memref<2x18x18x128xf32, #tpu.memory_space<vmem>>) attributes {dimension_semantics = [#tpu.dimension_semantics<arbitrary>], iteration_bounds = array<i64: 1>, scalar_prefetch = 0 : i64, scratch_operands = 1 : i64, tpu.core_type = #tpu.core_type<tc>, window_params = [{pipeline_mode = #tpu.pipeline_mode<synchronous>, transform_indices = @transform_0, window_bounds = array<i64: 512, 128>}, {pipeline_mode = #tpu.pipeline_mode<synchronous>, transform_indices = @transform_1, window_bounds = array<i64: 128, 128>}, {pipeline_mode = #tpu.pipeline_mode<synchronous>, transform_indices = @transform_2, window_bounds = array<i64: 1, 128>}, {pipeline_mode = #tpu.pipeline_mode<synchronous>, transform_indices = @transform_3, window_bounds = array<i64: 1, 128>}, {pipeline_mode = #tpu.pipeline_mode<synchronous>, transform_indices = @transform_4, window_bounds = array<i64: 9, 128, 128>}, {pipeline_mode = #tpu.pipeline_mode<synchronous>, transform_indices = @transform_5, window_bounds = array<i64: 1, 128>}, {pipeline_mode = #tpu.pipeline_mode<synchronous>, transform_indices = @transform_6, window_bounds = array<i64: 1, 128>}, {pipeline_mode = #tpu.pipeline_mode<synchronous>, transform_indices = @transform_7, window_bounds = array<i64: 512, 128>}]} {
    %c0 = arith.constant 0 : index
    %c0_0 = arith.constant 0 : index
    %0 = vector.load %arg1[%c0, %c0_0] : memref<512x128xf32, #tpu.memory_space<vmem>>, vector<512x128xf32>
    %c0_1 = arith.constant 0 : index
    %c0_2 = arith.constant 0 : index
    %1 = vector.load %arg2[%c0_1, %c0_2] : memref<128x128xf32, #tpu.memory_space<vmem>>, vector<128x128xf32>
    %cst = arith.constant dense<0.000000e+00> : vector<512x128xf32>
    %2 = tpu.matmul %0, %1, %cst {dimension_numbers = #tpu.dot_dimension_numbers<[1], [0], [0], [1], [0, 0, 1, 1], [], []>} : vector<512x128xf32>, vector<128x128xf32>, vector<512x128xf32> -> vector<512x128xf32>
    %c0_3 = arith.constant 0 : index
    %c0_4 = arith.constant 0 : index
    %3 = vector.load %arg3[%c0_3, %c0_4] : memref<1x128xf32, #tpu.memory_space<vmem>>, vector<1x128xf32>
    %c0_5 = arith.constant 0 : index
    %c0_6 = arith.constant 0 : index
    %4 = vector.load %arg4[%c0_5, %c0_6] : memref<1x128xf32, #tpu.memory_space<vmem>>, vector<1x128xf32>
    %cst_7 = arith.constant dense<0.000000e+00> : vector<128xf32>
    %5 = vector.multi_reduction <add>, %2, %cst_7 [0] : vector<512x128xf32> to vector<128xf32>
    %6 = vector.shape_cast %5 : vector<128xf32> to vector<1x128xf32>
    %7 = arith.mulf %2, %2 : vector<512x128xf32>
    %cst_8 = arith.constant dense<0.000000e+00> : vector<128xf32>
    %8 = vector.multi_reduction <add>, %7, %cst_8 [0] : vector<512x128xf32> to vector<128xf32>
    %9 = vector.shape_cast %8 : vector<128xf32> to vector<1x128xf32>
    %cst_9 = arith.constant 0.001953125 : f32
    %10 = vector.broadcast %cst_9 : f32 to vector<1x128xf32>
    %11 = arith.mulf %6, %10 : vector<1x128xf32>
    %cst_10 = arith.constant 0.001953125 : f32
    %12 = vector.broadcast %cst_10 : f32 to vector<1x128xf32>
    %13 = arith.mulf %9, %12 : vector<1x128xf32>
    %14 = arith.mulf %11, %11 : vector<1x128xf32>
    %15 = arith.subf %13, %14 : vector<1x128xf32>
    %cst_11 = arith.constant 0.000000e+00 : f32
    %16 = vector.broadcast %cst_11 : f32 to vector<1x128xf32>
    %17 = arith.maximumf %15, %16 : vector<1x128xf32>
    %cst_12 = arith.constant 9.99999974E-6 : f32
    %18 = vector.broadcast %cst_12 : f32 to vector<1x128xf32>
    %19 = arith.addf %17, %18 : vector<1x128xf32>
    %20 = math.rsqrt %19 : vector<1x128xf32>
    %21 = arith.mulf %3, %20 : vector<1x128xf32>
    %22 = arith.mulf %11, %21 : vector<1x128xf32>
    %23 = arith.subf %4, %22 : vector<1x128xf32>
    %24 = vector.broadcast %21 : vector<1x128xf32> to vector<512x128xf32>
    %25 = arith.mulf %2, %24 : vector<512x128xf32>
    %26 = vector.broadcast %23 : vector<1x128xf32> to vector<512x128xf32>
    %27 = arith.addf %25, %26 : vector<512x128xf32>
    %cst_13 = arith.constant 0.000000e+00 : f32
    %28 = vector.broadcast %cst_13 : f32 to vector<512x128xf32>
    %29 = arith.maximumf %27, %28 : vector<512x128xf32>
    %cst_14 = arith.constant 0.000000e+00 : f32
    %30 = vector.broadcast %cst_14 : f32 to vector<2x1x18x128xf32>
    %c0_15 = arith.constant 0 : index
    %c0_16 = arith.constant 0 : index
    %c0_17 = arith.constant 0 : index
    %c0_18 = arith.constant 0 : index
    %31 = vector.load %arg9[%c0_15, %c0_16, %c0_17, %c0_18] : memref<2x18x18x128xf32, #tpu.memory_space<vmem>>, vector<2x1x18x128xf32>
    tpu.vector_store %arg9[%c0_15, %c0_16, %c0_17, %c0_18], %30 {strides = array<i32>} : memref<2x18x18x128xf32, #tpu.memory_space<vmem>>, vector<2x1x18x128xf32>,
    %cst_19 = arith.constant 0.000000e+00 : f32
    %32 = vector.broadcast %cst_19 : f32 to vector<2x1x18x128xf32>
    %c0_20 = arith.constant 0 : index
    %c17 = arith.constant 17 : index
    %c0_21 = arith.constant 0 : index
    %c0_22 = arith.constant 0 : index
    %33 = vector.load %arg9[%c0_20, %c17, %c0_21, %c0_22] : memref<2x18x18x128xf32, #tpu.memory_space<vmem>>, vector<2x1x18x128xf32>
    tpu.vector_store %arg9[%c0_20, %c17, %c0_21, %c0_22], %32 {strides = array<i32>} : memref<2x18x18x128xf32, #tpu.memory_space<vmem>>, vector<2x1x18x128xf32>,
    %cst_23 = arith.constant 0.000000e+00 : f32
    %34 = vector.broadcast %cst_23 : f32 to vector<2x18x1x128xf32>
    %c0_24 = arith.constant 0 : index
    %c0_25 = arith.constant 0 : index
    %c0_26 = arith.constant 0 : index
    %c0_27 = arith.constant 0 : index
    %35 = vector.load %arg9[%c0_24, %c0_25, %c0_26, %c0_27] : memref<2x18x18x128xf32, #tpu.memory_space<vmem>>, vector<2x18x1x128xf32>
    tpu.vector_store %arg9[%c0_24, %c0_25, %c0_26, %c0_27], %34 {strides = array<i32>} : memref<2x18x18x128xf32, #tpu.memory_space<vmem>>, vector<2x18x1x128xf32>,
    %cst_28 = arith.constant 0.000000e+00 : f32
    %36 = vector.broadcast %cst_28 : f32 to vector<2x18x1x128xf32>
    %c0_29 = arith.constant 0 : index
    %c0_30 = arith.constant 0 : index
    %c17_31 = arith.constant 17 : index
    %c0_32 = arith.constant 0 : index
    %37 = vector.load %arg9[%c0_29, %c0_30, %c17_31, %c0_32] : memref<2x18x18x128xf32, #tpu.memory_space<vmem>>, vector<2x18x1x128xf32>
    tpu.vector_store %arg9[%c0_29, %c0_30, %c17_31, %c0_32], %36 {strides = array<i32>} : memref<2x18x18x128xf32, #tpu.memory_space<vmem>>, vector<2x18x1x128xf32>,
    %38 = vector.shape_cast %29 : vector<512x128xf32> to vector<2x16x16x128xf32>
    %c0_33 = arith.constant 0 : index
    %c1 = arith.constant 1 : index
    %c1_34 = arith.constant 1 : index
    %c0_35 = arith.constant 0 : index
    %39 = vector.load %arg9[%c0_33, %c1, %c1_34, %c0_35] : memref<2x18x18x128xf32, #tpu.memory_space<vmem>>, vector<2x16x16x128xf32>
    tpu.vector_store %arg9[%c0_33, %c1, %c1_34, %c0_35], %38 {strides = array<i32>} : memref<2x18x18x128xf32, #tpu.memory_space<vmem>>, vector<2x16x16x128xf32>,
    %cst_36 = arith.constant 0.000000e+00 : f32
    %40 = vector.broadcast %cst_36 : f32 to vector<512x128xf32>
    %c0_37 = arith.constant 0 : index
    %c0_38 = arith.constant 0 : index
    %c0_39 = arith.constant 0 : index
    %c0_40 = arith.constant 0 : index
    %41 = vector.load %arg9[%c0_37, %c0_38, %c0_39, %c0_40] : memref<2x18x18x128xf32, #tpu.memory_space<vmem>>, vector<2x16x16x128xf32>
    %42 = vector.shape_cast %41 : vector<2x16x16x128xf32> to vector<512x128xf32>
    %c0_41 = arith.constant 0 : index
    %c0_42 = arith.constant 0 : index
    %c0_43 = arith.constant 0 : index
    %43 = vector.load %arg5[%c0_41, %c0_42, %c0_43] : memref<9x128x128xf32, #tpu.memory_space<vmem>>, vector<1x128x128xf32>
    %44 = vector.shape_cast %43 : vector<1x128x128xf32> to vector<128x128xf32>
    %cst_44 = arith.constant dense<0.000000e+00> : vector<512x128xf32>
    %45 = tpu.matmul %42, %44, %cst_44 {dimension_numbers = #tpu.dot_dimension_numbers<[1], [0], [0], [1], [0, 0, 1, 1], [], []>} : vector<512x128xf32>, vector<128x128xf32>, vector<512x128xf32> -> vector<512x128xf32>
    %46 = arith.addf %40, %45 : vector<512x128xf32>
    %c0_45 = arith.constant 0 : index
    %c0_46 = arith.constant 0 : index
    %c1_47 = arith.constant 1 : index
    %c0_48 = arith.constant 0 : index
    %47 = vector.load %arg9[%c0_45, %c0_46, %c1_47, %c0_48] : memref<2x18x18x128xf32, #tpu.memory_space<vmem>>, vector<2x16x16x128xf32>
    %48 = vector.shape_cast %47 : vector<2x16x16x128xf32> to vector<512x128xf32>
    %c1_49 = arith.constant 1 : index
    %c0_50 = arith.constant 0 : index
    %c0_51 = arith.constant 0 : index
    %49 = vector.load %arg5[%c1_49, %c0_50, %c0_51] : memref<9x128x128xf32, #tpu.memory_space<vmem>>, vector<1x128x128xf32>
    %50 = vector.shape_cast %49 : vector<1x128x128xf32> to vector<128x128xf32>
    %cst_52 = arith.constant dense<0.000000e+00> : vector<512x128xf32>
    %51 = tpu.matmul %48, %50, %cst_52 {dimension_numbers = #tpu.dot_dimension_numbers<[1], [0], [0], [1], [0, 0, 1, 1], [], []>} : vector<512x128xf32>, vector<128x128xf32>, vector<512x128xf32> -> vector<512x128xf32>
    %52 = arith.addf %46, %51 : vector<512x128xf32>
    %c0_53 = arith.constant 0 : index
    %c0_54 = arith.constant 0 : index
    %c2 = arith.constant 2 : index
    %c0_55 = arith.constant 0 : index
    %53 = vector.load %arg9[%c0_53, %c0_54, %c2, %c0_55] : memref<2x18x18x128xf32, #tpu.memory_space<vmem>>, vector<2x16x16x128xf32>
    %54 = vector.shape_cast %53 : vector<2x16x16x128xf32> to vector<512x128xf32>
    %c2_56 = arith.constant 2 : index
    %c0_57 = arith.constant 0 : index
    %c0_58 = arith.constant 0 : index
    %55 = vector.load %arg5[%c2_56, %c0_57, %c0_58] : memref<9x128x128xf32, #tpu.memory_space<vmem>>, vector<1x128x128xf32>
    %56 = vector.shape_cast %55 : vector<1x128x128xf32> to vector<128x128xf32>
    %cst_59 = arith.constant dense<0.000000e+00> : vector<512x128xf32>
    %57 = tpu.matmul %54, %56, %cst_59 {dimension_numbers = #tpu.dot_dimension_numbers<[1], [0], [0], [1], [0, 0, 1, 1], [], []>} : vector<512x128xf32>, vector<128x128xf32>, vector<512x128xf32> -> vector<512x128xf32>
    %58 = arith.addf %52, %57 : vector<512x128xf32>
    %c0_60 = arith.constant 0 : index
    %c1_61 = arith.constant 1 : index
    %c0_62 = arith.constant 0 : index
    %c0_63 = arith.constant 0 : index
    %59 = vector.load %arg9[%c0_60, %c1_61, %c0_62, %c0_63] : memref<2x18x18x128xf32, #tpu.memory_space<vmem>>, vector<2x16x16x128xf32>
    %60 = vector.shape_cast %59 : vector<2x16x16x128xf32> to vector<512x128xf32>
    %c3 = arith.constant 3 : index
    %c0_64 = arith.constant 0 : index
    %c0_65 = arith.constant 0 : index
    %61 = vector.load %arg5[%c3, %c0_64, %c0_65] : memref<9x128x128xf32, #tpu.memory_space<vmem>>, vector<1x128x128xf32>
    %62 = vector.shape_cast %61 : vector<1x128x128xf32> to vector<128x128xf32>
    %cst_66 = arith.constant dense<0.000000e+00> : vector<512x128xf32>
    %63 = tpu.matmul %60, %62, %cst_66 {dimension_numbers = #tpu.dot_dimension_numbers<[1], [0], [0], [1], [0, 0, 1, 1], [], []>} : vector<512x128xf32>, vector<128x128xf32>, vector<512x128xf32> -> vector<512x128xf32>
    %64 = arith.addf %58, %63 : vector<512x128xf32>
    %c0_67 = arith.constant 0 : index
    %c1_68 = arith.constant 1 : index
    %c1_69 = arith.constant 1 : index
    %c0_70 = arith.constant 0 : index
    %65 = vector.load %arg9[%c0_67, %c1_68, %c1_69, %c0_70] : memref<2x18x18x128xf32, #tpu.memory_space<vmem>>, vector<2x16x16x128xf32>
    %66 = vector.shape_cast %65 : vector<2x16x16x128xf32> to vector<512x128xf32>
    %c4 = arith.constant 4 : index
    %c0_71 = arith.constant 0 : index
    %c0_72 = arith.constant 0 : index
    %67 = vector.load %arg5[%c4, %c0_71, %c0_72] : memref<9x128x128xf32, #tpu.memory_space<vmem>>, vector<1x128x128xf32>
    %68 = vector.shape_cast %67 : vector<1x128x128xf32> to vector<128x128xf32>
    %cst_73 = arith.constant dense<0.000000e+00> : vector<512x128xf32>
    %69 = tpu.matmul %66, %68, %cst_73 {dimension_numbers = #tpu.dot_dimension_numbers<[1], [0], [0], [1], [0, 0, 1, 1], [], []>} : vector<512x128xf32>, vector<128x128xf32>, vector<512x128xf32> -> vector<512x128xf32>
    %70 = arith.addf %64, %69 : vector<512x128xf32>
    %c0_74 = arith.constant 0 : index
    %c1_75 = arith.constant 1 : index
    %c2_76 = arith.constant 2 : index
    %c0_77 = arith.constant 0 : index
    %71 = vector.load %arg9[%c0_74, %c1_75, %c2_76, %c0_77] : memref<2x18x18x128xf32, #tpu.memory_space<vmem>>, vector<2x16x16x128xf32>
    %72 = vector.shape_cast %71 : vector<2x16x16x128xf32> to vector<512x128xf32>
    %c5 = arith.constant 5 : index
    %c0_78 = arith.constant 0 : index
    %c0_79 = arith.constant 0 : index
    %73 = vector.load %arg5[%c5, %c0_78, %c0_79] : memref<9x128x128xf32, #tpu.memory_space<vmem>>, vector<1x128x128xf32>
    %74 = vector.shape_cast %73 : vector<1x128x128xf32> to vector<128x128xf32>
    %cst_80 = arith.constant dense<0.000000e+00> : vector<512x128xf32>
    %75 = tpu.matmul %72, %74, %cst_80 {dimension_numbers = #tpu.dot_dimension_numbers<[1], [0], [0], [1], [0, 0, 1, 1], [], []>} : vector<512x128xf32>, vector<128x128xf32>, vector<512x128xf32> -> vector<512x128xf32>
    %76 = arith.addf %70, %75 : vector<512x128xf32>
    %c0_81 = arith.constant 0 : index
    %c2_82 = arith.constant 2 : index
    %c0_83 = arith.constant 0 : index
    %c0_84 = arith.constant 0 : index
    %77 = vector.load %arg9[%c0_81, %c2_82, %c0_83, %c0_84] : memref<2x18x18x128xf32, #tpu.memory_space<vmem>>, vector<2x16x16x128xf32>
    %78 = vector.shape_cast %77 : vector<2x16x16x128xf32> to vector<512x128xf32>
    %c6 = arith.constant 6 : index
    %c0_85 = arith.constant 0 : index
    %c0_86 = arith.constant 0 : index
    %79 = vector.load %arg5[%c6, %c0_85, %c0_86] : memref<9x128x128xf32, #tpu.memory_space<vmem>>, vector<1x128x128xf32>
    %80 = vector.shape_cast %79 : vector<1x128x128xf32> to vector<128x128xf32>
    %cst_87 = arith.constant dense<0.000000e+00> : vector<512x128xf32>
    %81 = tpu.matmul %78, %80, %cst_87 {dimension_numbers = #tpu.dot_dimension_numbers<[1], [0], [0], [1], [0, 0, 1, 1], [], []>} : vector<512x128xf32>, vector<128x128xf32>, vector<512x128xf32> -> vector<512x128xf32>
    %82 = arith.addf %76, %81 : vector<512x128xf32>
    %c0_88 = arith.constant 0 : index
    %c2_89 = arith.constant 2 : index
    %c1_90 = arith.constant 1 : index
    %c0_91 = arith.constant 0 : index
    %83 = vector.load %arg9[%c0_88, %c2_89, %c1_90, %c0_91] : memref<2x18x18x128xf32, #tpu.memory_space<vmem>>, vector<2x16x16x128xf32>
    %84 = vector.shape_cast %83 : vector<2x16x16x128xf32> to vector<512x128xf32>
    %c7 = arith.constant 7 : index
    %c0_92 = arith.constant 0 : index
    %c0_93 = arith.constant 0 : index
    %85 = vector.load %arg5[%c7, %c0_92, %c0_93] : memref<9x128x128xf32, #tpu.memory_space<vmem>>, vector<1x128x128xf32>
    %86 = vector.shape_cast %85 : vector<1x128x128xf32> to vector<128x128xf32>
    %cst_94 = arith.constant dense<0.000000e+00> : vector<512x128xf32>
    %87 = tpu.matmul %84, %86, %cst_94 {dimension_numbers = #tpu.dot_dimension_numbers<[1], [0], [0], [1], [0, 0, 1, 1], [], []>} : vector<512x128xf32>, vector<128x128xf32>, vector<512x128xf32> -> vector<512x128xf32>
    %88 = arith.addf %82, %87 : vector<512x128xf32>
    %c0_95 = arith.constant 0 : index
    %c2_96 = arith.constant 2 : index
    %c2_97 = arith.constant 2 : index
    %c0_98 = arith.constant 0 : index
    %89 = vector.load %arg9[%c0_95, %c2_96, %c2_97, %c0_98] : memref<2x18x18x128xf32, #tpu.memory_space<vmem>>, vector<2x16x16x128xf32>
    %90 = vector.shape_cast %89 : vector<2x16x16x128xf32> to vector<512x128xf32>
    %c8 = arith.constant 8 : index
    %c0_99 = arith.constant 0 : index
    %c0_100 = arith.constant 0 : index
    %91 = vector.load %arg5[%c8, %c0_99, %c0_100] : memref<9x128x128xf32, #tpu.memory_space<vmem>>, vector<1x128x128xf32>
    %92 = vector.shape_cast %91 : vector<1x128x128xf32> to vector<128x128xf32>
    %cst_101 = arith.constant dense<0.000000e+00> : vector<512x128xf32>
    %93 = tpu.matmul %90, %92, %cst_101 {dimension_numbers = #tpu.dot_dimension_numbers<[1], [0], [0], [1], [0, 0, 1, 1], [], []>} : vector<512x128xf32>, vector<128x128xf32>, vector<512x128xf32> -> vector<512x128xf32>
    %94 = arith.addf %88, %93 : vector<512x128xf32>
    %c0_102 = arith.constant 0 : index
    %c0_103 = arith.constant 0 : index
    %95 = vector.load %arg6[%c0_102, %c0_103] : memref<1x128xf32, #tpu.memory_space<vmem>>, vector<1x128xf32>
    %c0_104 = arith.constant 0 : index
    %c0_105 = arith.constant 0 : index
    %96 = vector.load %arg7[%c0_104, %c0_105] : memref<1x128xf32, #tpu.memory_space<vmem>>, vector<1x128xf32>
    %cst_106 = arith.constant dense<0.000000e+00> : vector<128xf32>
    %97 = vector.multi_reduction <add>, %94, %cst_106 [0] : vector<512x128xf32> to vector<128xf32>
    %98 = vector.shape_cast %97 : vector<128xf32> to vector<1x128xf32>
    %99 = arith.mulf %94, %94 : vector<512x128xf32>
    %cst_107 = arith.constant dense<0.000000e+00> : vector<128xf32>
    %100 = vector.multi_reduction <add>, %99, %cst_107 [0] : vector<512x128xf32> to vector<128xf32>
    %101 = vector.shape_cast %100 : vector<128xf32> to vector<1x128xf32>
    %cst_108 = arith.constant 0.001953125 : f32
    %102 = vector.broadcast %cst_108 : f32 to vector<1x128xf32>
    %103 = arith.mulf %98, %102 : vector<1x128xf32>
    %cst_109 = arith.constant 0.001953125 : f32
    %104 = vector.broadcast %cst_109 : f32 to vector<1x128xf32>
    %105 = arith.mulf %101, %104 : vector<1x128xf32>
    %106 = arith.mulf %103, %103 : vector<1x128xf32>
    %107 = arith.subf %105, %106 : vector<1x128xf32>
    %cst_110 = arith.constant 0.000000e+00 : f32
    %108 = vector.broadcast %cst_110 : f32 to vector<1x128xf32>
    %109 = arith.maximumf %107, %108 : vector<1x128xf32>
    %cst_111 = arith.constant 9.99999974E-6 : f32
    %110 = vector.broadcast %cst_111 : f32 to vector<1x128xf32>
    %111 = arith.addf %109, %110 : vector<1x128xf32>
    %112 = math.rsqrt %111 : vector<1x128xf32>
    %113 = arith.mulf %95, %112 : vector<1x128xf32>
    %114 = arith.mulf %103, %113 : vector<1x128xf32>
    %115 = arith.subf %96, %114 : vector<1x128xf32>
    %116 = vector.broadcast %113 : vector<1x128xf32> to vector<512x128xf32>
    %117 = arith.mulf %94, %116 : vector<512x128xf32>
    %118 = vector.broadcast %115 : vector<1x128xf32> to vector<512x128xf32>
    %119 = arith.addf %117, %118 : vector<512x128xf32>
    %cst_112 = arith.constant 0.000000e+00 : f32
    %120 = vector.broadcast %cst_112 : f32 to vector<512x128xf32>
    %121 = arith.maximumf %119, %120 : vector<512x128xf32>
    %c0_113 = arith.constant 0 : index
    %c0_114 = arith.constant 0 : index
    %122 = vector.load %arg8[%c0_113, %c0_114] : memref<512x128xf32, #tpu.memory_space<vmem>>, vector<512x128xf32>
    tpu.vector_store %arg8[%c0_113, %c0_114], %121 {strides = array<i32>} : memref<512x128xf32, #tpu.memory_space<vmem>>, vector<512x128xf32>,
    return
  }
  func.func @transform_0(%arg0: i32) -> (i32, i32) {
    %c0_i32 = arith.constant 0 : i32
    %c0_i32_0 = arith.constant 0 : i32
    %c0_i32_1 = arith.constant 0 : i32
    return %c0_i32, %c0_i32_0 : i32, i32
  }
  func.func @transform_1(%arg0: i32) -> (i32, i32) {
    %c0_i32 = arith.constant 0 : i32
    %c0_i32_0 = arith.constant 0 : i32
    %c0_i32_1 = arith.constant 0 : i32
    return %c0_i32, %c0_i32_0 : i32, i32
  }
  func.func @transform_2(%arg0: i32) -> (i32, i32) {
    %c0_i32 = arith.constant 0 : i32
    %c0_i32_0 = arith.constant 0 : i32
    %c0_i32_1 = arith.constant 0 : i32
    return %c0_i32, %c0_i32_0 : i32, i32
  }
  func.func @transform_3(%arg0: i32) -> (i32, i32) {
    %c0_i32 = arith.constant 0 : i32
    %c0_i32_0 = arith.constant 0 : i32
    %c0_i32_1 = arith.constant 0 : i32
    return %c0_i32, %c0_i32_0 : i32, i32
  }
  func.func @transform_4(%arg0: i32) -> (i32, i32, i32) {
    %c0_i32 = arith.constant 0 : i32
    %c0_i32_0 = arith.constant 0 : i32
    %c0_i32_1 = arith.constant 0 : i32
    %c0_i32_2 = arith.constant 0 : i32
    return %c0_i32, %c0_i32_0, %c0_i32_1 : i32, i32, i32
  }
  func.func @transform_5(%arg0: i32) -> (i32, i32) {
    %c0_i32 = arith.constant 0 : i32
    %c0_i32_0 = arith.constant 0 : i32
    %c0_i32_1 = arith.constant 0 : i32
    return %c0_i32, %c0_i32_0 : i32, i32
  }
  func.func @transform_6(%arg0: i32) -> (i32, i32) {
    %c0_i32 = arith.constant 0 : i32
    %c0_i32_0 = arith.constant 0 : i32
    %c0_i32_1 = arith.constant 0 : i32
    return %c0_i32, %c0_i32_0 : i32, i32
  }
  func.func @transform_7(%arg0: i32) -> (i32, i32) {
    %c0_i32 = arith.constant 0 : i32
    %c0_i32_0 = arith.constant 0 : i32
    %c0_i32_1 = arith.constant 0 : i32
    return %c0_i32, %c0_i32_0 : i32, i32
  }
}

</mosaic_0001>

<llo_original>
// kernel: tpu_custom_call.1
$region0: #{tpu_custom_call.1}
  #allocation0 [shape = 'u32[]', space=smem, size = 0x4, offset = 0x4, fixed_abs, tag = 'smem constant byte address 0x4 - core index']
  #allocation1 [shape = 'u32[144,128]{1,0:T(1,128)}', space=vmem, size = 0x12000, scoped, tag = 'internal scratch']
  #allocation2 [shape = 'f32[2,18,18,128]{3,2,1,0:T(8,128)}', space=vmem, size = 0x6c000, scoped, tag = 'scratch operand']
  %s0 = inlined_call_operand.hbm [shape: f32[512,128], index: 0, kind: input, shape index: {}]
  %s1 = inlined_call_operand.hbm [shape: f32[128,128], index: 1, kind: input, shape index: {}]
  %s2 = inlined_call_operand.vmem [shape: f32[1,128], index: 2, kind: input, shape index: {}]
  %s3 = inlined_call_operand.vmem [shape: f32[1,128], index: 3, kind: input, shape index: {}]
  %s4 = inlined_call_operand.hbm [shape: f32[9,128,128], index: 4, kind: input, shape index: {}]
  %s5 = inlined_call_operand.vmem [shape: f32[1,128], index: 5, kind: input, shape index: {}]
  %s6 = inlined_call_operand.vmem [shape: f32[1,128], index: 6, kind: input, shape index: {}]
  %s7 = inlined_call_operand.hbm [shape: f32[512,128], index: 7, kind: output, shape index: {}]
  %s8 = sld [smem:[#allocation0]]
  $region50: #{tpu_custom_call.1} parent=0
    _
  %s10 = ssub.s32 1, %s8
  %s11 = scalar_select 0, %s10, %s8
  $region1: #{tpu_custom_call.1} parent=0
    #allocation3 [shape = 'u8[262144]{0}', space=vmem, size = 0x40000, scoped, tag = 'input window, operand 0, single buffered']
    #allocation4 [shape = 's32[1]{0}', space=sflag, size = 0x4, scoped, tag = 'scoped memory for tpu_custom_call.1']
    #allocation5 [shape = 's32[1]{0}', space=sflag, size = 0x4, scoped, tag = 'scoped memory for tpu_custom_call.1']
    #allocation6 [shape = 'u8[65536]{0}', space=vmem, size = 0x10000, scoped, tag = 'input window, operand 1, single buffered']
    #allocation7 [shape = 's32[1]{0}', space=sflag, size = 0x4, scoped, tag = 'scoped memory for tpu_custom_call.1']
    #allocation8 [shape = 'u8[589824]{0}', space=vmem, size = 0x90000, scoped, tag = 'input window, operand 4, single buffered']
    #allocation9 [shape = 'u8[262144]{0}', space=vmem, size = 0x40000, scoped, tag = 'output window, operand 0, single buffered']
    %12 = vsyncpa [#allocation4], 0
    %13 = vsyncpa [#allocation7], 0
    %14 = vsyncpa [#allocation5], 0
    // Predicated region
    $region2: #{tpu_custom_call.1} parent=1 // pred_check
      _
    $region3: #{tpu_custom_call.1} parent=1 // pred_check_branch
      %16 = sbr.rel (0) target = $region5
    $region4: #{tpu_custom_call.1} parent=1 // pred_region
      %s18 = ssub.s32 8192, 8192
      %19 = vsyncadd [#allocation4], %s18
      %s20 = sshll.u32 [#allocation3], 4
      %s21 = int_to_ptr.vmem [resolvable:$true] %s20
      %26 = dma.hbm_to_vmem [thread:$0]  %s0, 8192, %s21, [#allocation4], 128, 128, 8
    $region5: #{tpu_custom_call.1} parent=1 // pred_fallthru
      _
    // Predicated region
    $region6: #{tpu_custom_call.1} parent=1 // pred_check
      _
    $region7: #{tpu_custom_call.1} parent=1 // pred_check_branch
      %28 = sbr.rel (0) target = $region9
    $region8: #{tpu_custom_call.1} parent=1 // pred_region
      %s30 = ssub.s32 2048, 2048
      %31 = vsyncadd [#allocation7], %s30
      %s32 = sshll.u32 [#allocation6], 4
      %s33 = int_to_ptr.vmem [resolvable:$true] %s32
      %38 = dma.hbm_to_vmem [thread:$0]  %s1, 2048, %s33, [#allocation7], 128, 128, 8
    $region9: #{tpu_custom_call.1} parent=1 // pred_fallthru
      _
    // Predicated region
    $region10: #{tpu_custom_call.1} parent=1 // pred_check
      _
    $region11: #{tpu_custom_call.1} parent=1 // pred_check_branch
      %40 = sbr.rel (0) target = $region13
    $region12: #{tpu_custom_call.1} parent=1 // pred_region
      _
    $region13: #{tpu_custom_call.1} parent=1 // pred_fallthru
      _
    // Predicated region
    $region14: #{tpu_custom_call.1} parent=1 // pred_check
      _
    $region15: #{tpu_custom_call.1} parent=1 // pred_check_branch
      %42 = sbr.rel (0) target = $region17
    $region16: #{tpu_custom_call.1} parent=1 // pred_region
      _
    $region17: #{tpu_custom_call.1} parent=1 // pred_fallthru
      _
    // Predicated region
    $region18: #{tpu_custom_call.1} parent=1 // pred_check
      _
    $region19: #{tpu_custom_call.1} parent=1 // pred_check_branch
      %44 = sbr.rel (0) target = $region21
    $region20: #{tpu_custom_call.1} parent=1 // pred_region
      %s46 = ssub.s32 18432, 18432
      %47 = vsyncadd [#allocation7], %s46
      %s48 = sshll.u32 [#allocation8], 4
      %s49 = int_to_ptr.vmem [resolvable:$true] %s48
      %54 = dma.hbm_to_vmem [thread:$0]  %s4, 18432, %s49, [#allocation7], 128, 128, 8
    $region21: #{tpu_custom_call.1} parent=1 // pred_fallthru
      _
    // Predicated region
    $region22: #{tpu_custom_call.1} parent=1 // pred_check
      _
    $region23: #{tpu_custom_call.1} parent=1 // pred_check_branch
      %56 = sbr.rel (0) target = $region25
    $region24: #{tpu_custom_call.1} parent=1 // pred_region
      _
    $region25: #{tpu_custom_call.1} parent=1 // pred_fallthru
      _
    // Predicated region
    $region26: #{tpu_custom_call.1} parent=1 // pred_check
      _
    $region27: #{tpu_custom_call.1} parent=1 // pred_check_branch
      %58 = sbr.rel (0) target = $region29
    $region28: #{tpu_custom_call.1} parent=1 // pred_region
      _
    $region29: #{tpu_custom_call.1} parent=1 // pred_fallthru
      _
    // Predicated region
    $region30: #{tpu_custom_call.1} parent=1 // pred_check
      _
    $region31: #{tpu_custom_call.1} parent=1 // pred_check_branch
      %60 = sbr.rel (0) target = $region33
    $region32: #{tpu_custom_call.1} parent=1 // pred_region
      %61 = dma.done [#allocation4], 8192
    $region33: #{tpu_custom_call.1} parent=1 // pred_fallthru
      _
    // Predicated region
    $region34: #{tpu_custom_call.1} parent=1 // pred_check
      _
    $region35: #{tpu_custom_call.1} parent=1 // pred_check_branch
      %63 = sbr.rel (0) target = $region37
    $region36: #{tpu_custom_call.1} parent=1 // pred_region
      %64 = dma.done [#allocation7], 2048
    $region37: #{tpu_custom_call.1} parent=1 // pred_fallthru
      _
    // Predicated region
    $region38: #{tpu_custom_call.1} parent=1 // pred_check
      _
    $region39: #{tpu_custom_call.1} parent=1 // pred_check_branch
      %66 = sbr.rel (0) target = $region41
    $region40: #{tpu_custom_call.1} parent=1 // pred_region
      %67 = dma.done [#allocation7], 18432
    $region41: #{tpu_custom_call.1} parent=1 // pred_fallthru
      _
    %v68 = vld [vmem:[#allocation3] sm:$0xff]
    %v69 = vld [vmem:[#allocation3 + $0x8] sm:$0xff]
    %v70 = vld [vmem:[#allocation3 + $0x10] sm:$0xff]
    %v71 = vld [vmem:[#allocation3 + $0x18] sm:$0xff]
    %v72 = vld [vmem:[#allocation3 + $0x20] sm:$0xff]
    %v73 = vld [vmem:[#allocation3 + $0x28] sm:$0xff]
    %v74 = vld [vmem:[#allocation3 + $0x30] sm:$0xff]
    %v75 = vld [vmem:[#allocation3 + $0x38] sm:$0xff]
    %v76 = vld [vmem:[#allocation3 + $0x40] sm:$0xff]
    %v77 = vld [vmem:[#allocation3 + $0x48] sm:$0xff]
    %v78 = vld [vmem:[#allocation3 + $0x50] sm:$0xff]
    %v79 = vld [vmem:[#allocation3 + $0x58] sm:$0xff]
    %v80 = vld [vmem:[#allocation3 + $0x60] sm:$0xff]
    %v81 = vld [vmem:[#allocation3 + $0x68] sm:$0xff]
    %v82 = vld [vmem:[#allocation3 + $0x70] sm:$0xff]
    %v83 = vld [vmem:[#allocation3 + $0x78] sm:$0xff]
    %v84 = vld [vmem:[#allocation3 + $0x80] sm:$0xff]
    %v85 = vld [vmem:[#allocation3 + $0x88] sm:$0xff]
    %v86 = vld [vmem:[#allocation3 + $0x90] sm:$0xff]
    %v87 = vld [vmem:[#allocation3 + $0x98] sm:$0xff]
    %v88 = vld [vmem:[#allocation3 + $0xa0] sm:$0xff]
    %v89 = vld [vmem:[#allocation3 + $0xa8] sm:$0xff]
    %v90 = vld [vmem:[#allocation3 + $0xb0] sm:$0xff]
    %v91 = vld [vmem:[#allocation3 + $0xb8] sm:$0xff]
    %v92 = vld [vmem:[#allocation3 + $0xc0] sm:$0xff]
    %v93 = vld [vmem:[#allocation3 + $0xc8] sm:$0xff]
    %v94 = vld [vmem:[#allocation3 + $0xd0] sm:$0xff]
    %v95 = vld [vmem:[#allocation3 + $0xd8] sm:$0xff]
    %v96 = vld [vmem:[#allocation3 + $0xe0] sm:$0xff]
    %v97 = vld [vmem:[#allocation3 + $0xe8] sm:$0xff]
    %v98 = vld [vmem:[#allocation3 + $0xf0] sm:$0xff]
    %v99 = vld [vmem:[#allocation3 + $0xf8] sm:$0xff]
    %v100 = vld [vmem:[#allocation3 + $0x100] sm:$0xff]
    %v101 = vld [vmem:[#allocation3 + $0x108] sm:$0xff]
    %v102 = vld [vmem:[#allocation3 + $0x110] sm:$0xff]
    %v103 = vld [vmem:[#allocation3 + $0x118] sm:$0xff]
    %v104 = vld [vmem:[#allocation3 + $0x120] sm:$0xff]
    %v105 = vld [vmem:[#allocation3 + $0x128] sm:$0xff]
    %v106 = vld [vmem:[#allocation3 + $0x130] sm:$0xff]
    %v107 = vld [vmem:[#allocation3 + $0x138] sm:$0xff]
    %v108 = vld [vmem:[#allocation3 + $0x140] sm:$0xff]
    %v109 = vld [vmem:[#allocation3 + $0x148] sm:$0xff]
    %v110 = vld [vmem:[#allocation3 + $0x150] sm:$0xff]
    %v111 = vld [vmem:[#allocation3 + $0x158] sm:$0xff]
    %v112 = vld [vmem:[#allocation3 + $0x160] sm:$0xff]
    %v113 = vld [vmem:[#allocation3 + $0x168] sm:$0xff]
    %v114 = vld [vmem:[#allocation3 + $0x170] sm:$0xff]
    %v115 = vld [vmem:[#allocation3 + $0x178] sm:$0xff]
    %v116 = vld [vmem:[#allocation3 + $0x180] sm:$0xff]
    %v117 = vld [vmem:[#allocation3 + $0x188] sm:$0xff]
    %v118 = vld [vmem:[#allocation3 + $0x190] sm:$0xff]
    %v119 = vld [vmem:[#allocation3 + $0x198] sm:$0xff]
    %v120 = vld [vmem:[#allocation3 + $0x1a0] sm:$0xff]
    %v121 = vld [vmem:[#allocation3 + $0x1a8] sm:$0xff]
    %v122 = vld [vmem:[#allocation3 + $0x1b0] sm:$0xff]
    %v123 = vld [vmem:[#allocation3 + $0x1b8] sm:$0xff]
    %v124 = vld [vmem:[#allocation3 + $0x1c0] sm:$0xff]
    %v125 = vld [vmem:[#allocation3 + $0x1c8] sm:$0xff]
    %v126 = vld [vmem:[#allocation3 + $0x1d0] sm:$0xff]
    %v127 = vld [vmem:[#allocation3 + $0x1d8] sm:$0xff]
    %v128 = vld [vmem:[#allocation3 + $0x1e0] sm:$0xff]
    %v129 = vld [vmem:[#allocation3 + $0x1e8] sm:$0xff]
    %v130 = vld [vmem:[#allocation3 + $0x1f0] sm:$0xff]
    %v131 = vld [vmem:[#allocation3 + $0x1f8] sm:$0xff]
    %v132 = vld [vmem:[#allocation6] sm:$0xff]
    %v133 = vld [vmem:[#allocation6 + $0x8] sm:$0xff]
    %v134 = vld [vmem:[#allocation6 + $0x10] sm:$0xff]
    %v135 = vld [vmem:[#allocation6 + $0x18] sm:$0xff]
    %v136 = vld [vmem:[#allocation6 + $0x20] sm:$0xff]
    %v137 = vld [vmem:[#allocation6 + $0x28] sm:$0xff]
    %v138 = vld [vmem:[#allocation6 + $0x30] sm:$0xff]
    %v139 = vld [vmem:[#allocation6 + $0x38] sm:$0xff]
    %v140 = vld [vmem:[#allocation6 + $0x40] sm:$0xff]
    %v141 = vld [vmem:[#allocation6 + $0x48] sm:$0xff]
    %v142 = vld [vmem:[#allocation6 + $0x50] sm:$0xff]
    %v143 = vld [vmem:[#allocation6 + $0x58] sm:$0xff]
    %v144 = vld [vmem:[#allocation6 + $0x60] sm:$0xff]
    %v145 = vld [vmem:[#allocation6 + $0x68] sm:$0xff]
    %v146 = vld [vmem:[#allocation6 + $0x70] sm:$0xff]
    %v147 = vld [vmem:[#allocation6 + $0x78] sm:$0xff]
    %148 = vmatprep.subr.mxu0 0.0
    %149 = vmatpush1.msra.mxu0 %v132
    %150 = vmatprep.subr.mxu0 0.0
    %151 = vmatpush1.msra.mxu0 %v133
    %152 = vmatprep.subr.mxu0 0.0
    %153 = vmatpush1.msra.mxu0 %v134
    %154 = vmatprep.subr.mxu0 0.0
    %155 = vmatpush1.msra.mxu0 %v135
    %156 = vmatprep.subr.mxu0 0.0
    %157 = vmatpush1.msra.mxu0 %v136
    %158 = vmatprep.subr.mxu0 0.0
    %159 = vmatpush1.msra.mxu0 %v137
    %160 = vmatprep.subr.mxu0 0.0
    %161 = vmatpush1.msra.mxu0 %v138
    %162 = vmatprep.subr.mxu0 0.0
    %163 = vmatpush1.msra.mxu0 %v139
    %164 = vmatprep.subr.mxu0 0.0
    %165 = vmatpush1.msra.mxu0 %v140
    %166 = vmatprep.subr.mxu0 0.0
    %167 = vmatpush1.msra.mxu0 %v141
    %168 = vmatprep.subr.mxu0 0.0
    %169 = vmatpush1.msra.mxu0 %v142
    %170 = vmatprep.subr.mxu0 0.0
    %171 = vmatpush1.msra.mxu0 %v143
    %172 = vmatprep.subr.mxu0 0.0
    %173 = vmatpush1.msra.mxu0 %v144
    %174 = vmatprep.subr.mxu0 0.0
    %175 = vmatpush1.msra.mxu0 %v145
    %176 = vmatprep.subr.mxu0 0.0
    %177 = vmatpush1.msra.mxu0 %v146
    %178 = vmatprep.subr.mxu0 0.0
    %179 = vmatpush1.msra.mxu0 %v147
    %180 = vmatprep.subr.mxu0 0.0
    %181 = vmatpush1.msra.mxu0 0.0
    %182 = vmatprep.subr.mxu0 0.0
    %183 = vmatpush1.msra.mxu0 0.0
    %184 = vmatprep.subr.mxu0 0.0
    %185 = vmatpush1.msra.mxu0 0.0
    %186 = vmatprep.subr.mxu0 0.0
    %187 = vmatpush1.msra.mxu0 0.0
    %188 = vmatprep.subr.mxu0 0.0
    %189 = vmatpush1.msra.mxu0 0.0
    %190 = vmatprep.subr.mxu0 0.0
    %191 = vmatpush1.msra.mxu0 0.0
    %192 = vmatprep.subr.mxu0 0.0
    %193 = vmatpush1.msra.mxu0 0.0
    %194 = vmatprep.subr.mxu0 0.0
    %195 = vmatpush1.msra.mxu0 0.0
    %196 = vmatprep.subr.mxu0 0.0
    %197 = vmatpush1.msra.mxu0 0.0
    %198 = vmatprep.subr.mxu0 0.0
    %199 = vmatpush1.msra.mxu0 0.0
    %200 = vmatprep.subr.mxu0 0.0
    %201 = vmatpush1.msra.mxu0 0.0
    %202 = vmatprep.subr.mxu0 0.0
    %203 = vmatpush1.msra.mxu0 0.0
    %204 = vmatprep.subr.mxu0 0.0
    %205 = vmatpush1.msra.mxu0 0.0
    %206 = vmatprep.subr.mxu0 0.0
    %207 = vmatpush1.msra.mxu0 0.0
    %208 = vmatprep.subr.mxu0 0.0
    %209 = vmatpush1.msra.mxu0 0.0
    %210 = vmatprep.subr.mxu0 0.0
    %211 = vmatpush1.msra.mxu0 0.0
    %212 = vmatprep.mubr.f32.mxu0 0.0
    %213 = vmatmul.mubr.f32.gmra.mrb[0].mxu0 %v68
    %v214 = vpop.f32.mrb[0].mxu0
    %v215 = vadd.f32 0.0, %v214
    %v216 = vpop.f32.mrb[0].mxu0
    %217 = vmatprep.mubr.f32.mxu0 0.0
    %218 = vmatmul.mubr.f32.gmra.mrb[0].mxu0 %v69
    %v219 = vpop.f32.mrb[0].mxu0
    %v220 = vadd.f32 0.0, %v219
    %v221 = vpop.f32.mrb[0].mxu0
    %222 = vmatprep.mubr.f32.mxu0 0.0
    %223 = vmatmul.mubr.f32.gmra.mrb[0].mxu0 %v70
    %v224 = vpop.f32.mrb[0].mxu0
    %v225 = vadd.f32 0.0, %v224
    %v226 = vpop.f32.mrb[0].mxu0
    %227 = vmatprep.mubr.f32.mxu0 0.0
    %228 = vmatmul.mubr.f32.gmra.mrb[0].mxu0 %v71
    %v229 = vpop.f32.mrb[0].mxu0
    %v230 = vadd.f32 0.0, %v229
    %v231 = vpop.f32.mrb[0].mxu0
    %232 = vmatprep.mubr.f32.mxu0 0.0
    %233 = vmatmul.mubr.f32.gmra.mrb[0].mxu0 %v72
    %v234 = vpop.f32.mrb[0].mxu0
    %v235 = vadd.f32 0.0, %v234
    %v236 = vpop.f32.mrb[0].mxu0
    %237 = vmatprep.mubr.f32.mxu0 0.0
    %238 = vmatmul.mubr.f32.gmra.mrb[0].mxu0 %v73
    %v239 = vpop.f32.mrb[0].mxu0
    %v240 = vadd.f32 0.0, %v239
    %v241 = vpop.f32.mrb[0].mxu0
    %242 = vmatprep.mubr.f32.mxu0 0.0
    %243 = vmatmul.mubr.f32.gmra.mrb[0].mxu0 %v74
    %v244 = vpop.f32.mrb[0].mxu0
    %v245 = vadd.f32 0.0, %v244
    %v246 = vpop.f32.mrb[0].mxu0
    %247 = vmatprep.mubr.f32.mxu0 0.0
    %248 = vmatmul.mubr.f32.gmra.mrb[0].mxu0 %v75
    %v249 = vpop.f32.mrb[0].mxu0
    %v250 = vadd.f32 0.0, %v249
    %v251 = vpop.f32.mrb[0].mxu0
    %252 = vmatprep.mubr.f32.mxu0 0.0
    %253 = vmatmul.mubr.f32.gmra.mrb[0].mxu0 %v76
    %v254 = vpop.f32.mrb[0].mxu0
    %v255 = vadd.f32 0.0, %v254
    %v256 = vpop.f32.mrb[0].mxu0
    %257 = vmatprep.mubr.f32.mxu0 0.0
    %258 = vmatmul.mubr.f32.gmra.mrb[0].mxu0 %v77
    %v259 = vpop.f32.mrb[0].mxu0
    %v260 = vadd.f32 0.0, %v259
    %v261 = vpop.f32.mrb[0].mxu0
    %262 = vmatprep.mubr.f32.mxu0 0.0
    %263 = vmatmul.mubr.f32.gmra.mrb[0].mxu0 %v78
    %v264 = vpop.f32.mrb[0].mxu0
    %v265 = vadd.f32 0.0, %v264
    %v266 = vpop.f32.mrb[0].mxu0
    %267 = vmatprep.mubr.f32.mxu0 0.0
    %268 = vmatmul.mubr.f32.gmra.mrb[0].mxu0 %v79
    %v269 = vpop.f32.mrb[0].mxu0
    %v270 = vadd.f32 0.0, %v269
    %v271 = vpop.f32.mrb[0].mxu0
    %272 = vmatprep.mubr.f32.mxu0 0.0
    %273 = vmatmul.mubr.f32.gmra.mrb[0].mxu0 %v80
    %v274 = vpop.f32.mrb[0].mxu0
    %v275 = vadd.f32 0.0, %v274
    %v276 = vpop.f32.mrb[0].mxu0
    %277 = vmatprep.mubr.f32.mxu0 0.0
    %278 = vmatmul.mubr.f32.gmra.mrb[0].mxu0 %v81
    %v279 = vpop.f32.mrb[0].mxu0
    %v280 = vadd.f32 0.0, %v279
    %v281 = vpop.f32.mrb[0].mxu0
    %282 = vmatprep.mubr.f32.mxu0 0.0
    %283 = vmatmul.mubr.f32.gmra.mrb[0].mxu0 %v82
    %v284 = vpop.f32.mrb[0].mxu0
    %v285 = vadd.f32 0.0, %v284
    %v286 = vpop.f32.mrb[0].mxu0
    %287 = vmatprep.mubr.f32.mxu0 0.0
    %288 = vmatmul.mubr.f32.gmra.mrb[0].mxu0 %v83
    %v289 = vpop.f32.mrb[0].mxu0
    %v290 = vadd.f32 0.0, %v289
    %v291 = vpop.f32.mrb[0].mxu0
    %292 = vmatprep.mubr.f32.mxu0 0.0
    %293 = vmatmul.mubr.f32.gmra.mrb[0].mxu0 %v84
    %v294 = vpop.f32.mrb[0].mxu0
    %v295 = vadd.f32 0.0, %v294
    %v296 = vpop.f32.mrb[0].mxu0
    %297 = vmatprep.mubr.f32.mxu0 0.0
    %298 = vmatmul.mubr.f32.gmra.mrb[0].mxu0 %v85
    %v299 = vpop.f32.mrb[0].mxu0
    %v300 = vadd.f32 0.0, %v299
    %v301 = vpop.f32.mrb[0].mxu0
    %302 = vmatprep.mubr.f32.mxu0 0.0
    %303 = vmatmul.mubr.f32.gmra.mrb[0].mxu0 %v86
    %v304 = vpop.f32.mrb[0].mxu0
    %v305 = vadd.f32 0.0, %v304
    %v306 = vpop.f32.mrb[0].mxu0
    %307 = vmatprep.mubr.f32.mxu0 0.0
    %308 = vmatmul.mubr.f32.gmra.mrb[0].mxu0 %v87
    %v309 = vpop.f32.mrb[0].mxu0
    %v310 = vadd.f32 0.0, %v309
    %v311 = vpop.f32.mrb[0].mxu0
    %312 = vmatprep.mubr.f32.mxu0 0.0
    %313 = vmatmul.mubr.f32.gmra.mrb[0].mxu0 %v88
    %v314 = vpop.f32.mrb[0].mxu0
    %v315 = vadd.f32 0.0, %v314
    %v316 = vpop.f32.mrb[0].mxu0
    %317 = vmatprep.mubr.f32.mxu0 0.0
    %318 = vmatmul.mubr.f32.gmra.mrb[0].mxu0 %v89
    %v319 = vpop.f32.mrb[0].mxu0
    %v320 = vadd.f32 0.0, %v319
    %v321 = vpop.f32.mrb[0].mxu0
    %322 = vmatprep.mubr.f32.mxu0 0.0
    %323 = vmatmul.mubr.f32.gmra.mrb[0].mxu0 %v90
    %v324 = vpop.f32.mrb[0].mxu0
    %v325 = vadd.f32 0.0, %v324
    %v326 = vpop.f32.mrb[0].mxu0
    %327 = vmatprep.mubr.f32.mxu0 0.0
    %328 = vmatmul.mubr.f32.gmra.mrb[0].mxu0 %v91
    %v329 = vpop.f32.mrb[0].mxu0
    %v330 = vadd.f32 0.0, %v329
    %v331 = vpop.f32.mrb[0].mxu0
    %332 = vmatprep.mubr.f32.mxu0 0.0
    %333 = vmatmul.mubr.f32.gmra.mrb[0].mxu0 %v92
    %v334 = vpop.f32.mrb[0].mxu0
    %v335 = vadd.f32 0.0, %v334
    %v336 = vpop.f32.mrb[0].mxu0
    %337 = vmatprep.mubr.f32.mxu0 0.0
    %338 = vmatmul.mubr.f32.gmra.mrb[0].mxu0 %v93
    %v339 = vpop.f32.mrb[0].mxu0
    %v340 = vadd.f32 0.0, %v339
    %v341 = vpop.f32.mrb[0].mxu0
    %342 = vmatprep.mubr.f32.mxu0 0.0
    %343 = vmatmul.mubr.f32.gmra.mrb[0].mxu0 %v94
    %v344 = vpop.f32.mrb[0].mxu0
    %v345 = vadd.f32 0.0, %v344
    %v346 = vpop.f32.mrb[0].mxu0
    %347 = vmatprep.mubr.f32.mxu0 0.0
    %348 = vmatmul.mubr.f32.gmra.mrb[0].mxu0 %v95
    %v349 = vpop.f32.mrb[0].mxu0
    %v350 = vadd.f32 0.0, %v349
    %v351 = vpop.f32.mrb[0].mxu0
    %352 = vmatprep.mubr.f32.mxu0 0.0
    %353 = vmatmul.mubr.f32.gmra.mrb[0].mxu0 %v96
    %v354 = vpop.f32.mrb[0].mxu0
    %v355 = vadd.f32 0.0, %v354
    %v356 = vpop.f32.mrb[0].mxu0
    %357 = vmatprep.mubr.f32.mxu0 0.0
    %358 = vmatmul.mubr.f32.gmra.mrb[0].mxu0 %v97
    %v359 = vpop.f32.mrb[0].mxu0
    %v360 = vadd.f32 0.0, %v359
    %v361 = vpop.f32.mrb[0].mxu0
    %362 = vmatprep.mubr.f32.mxu0 0.0
    %363 = vmatmul.mubr.f32.gmra.mrb[0].mxu0 %v98
    %v364 = vpop.f32.mrb[0].mxu0
    %v365 = vadd.f32 0.0, %v364
    %v366 = vpop.f32.mrb[0].mxu0
    %367 = vmatprep.mubr.f32.mxu0 0.0
    %368 = vmatmul.mubr.f32.gmra.mrb[0].mxu0 %v99
    %v369 = vpop.f32.mrb[0].mxu0
    %v370 = vadd.f32 0.0, %v369
    %v371 = vpop.f32.mrb[0].mxu0
    %372 = vmatprep.mubr.f32.mxu0 0.0
    %373 = vmatmul.mubr.f32.gmra.mrb[0].mxu0 %v100
    %v374 = vpop.f32.mrb[0].mxu0
    %v375 = vadd.f32 0.0, %v374
    %v376 = vpop.f32.mrb[0].mxu0
    %377 = vmatprep.mubr.f32.mxu0 0.0
    %378 = vmatmul.mubr.f32.gmra.mrb[0].mxu0 %v101
    %v379 = vpop.f32.mrb[0].mxu0
    %v380 = vadd.f32 0.0, %v379
    %v381 = vpop.f32.mrb[0].mxu0
    %382 = vmatprep.mubr.f32.mxu0 0.0
    %383 = vmatmul.mubr.f32.gmra.mrb[0].mxu0 %v102
    %v384 = vpop.f32.mrb[0].mxu0
    %v385 = vadd.f32 0.0, %v384
    %v386 = vpop.f32.mrb[0].mxu0
    %387 = vmatprep.mubr.f32.mxu0 0.0
    %388 = vmatmul.mubr.f32.gmra.mrb[0].mxu0 %v103
    %v389 = vpop.f32.mrb[0].mxu0
    %v390 = vadd.f32 0.0, %v389
    %v391 = vpop.f32.mrb[0].mxu0
    %392 = vmatprep.mubr.f32.mxu0 0.0
    %393 = vmatmul.mubr.f32.gmra.mrb[0].mxu0 %v104
    %v394 = vpop.f32.mrb[0].mxu0
    %v395 = vadd.f32 0.0, %v394
    %v396 = vpop.f32.mrb[0].mxu0
    %397 = vmatprep.mubr.f32.mxu0 0.0
    %398 = vmatmul.mubr.f32.gmra.mrb[0].mxu0 %v105
    %v399 = vpop.f32.mrb[0].mxu0
    %v400 = vadd.f32 0.0, %v399
    %v401 = vpop.f32.mrb[0].mxu0
    %402 = vmatprep.mubr.f32.mxu0 0.0
    %403 = vmatmul.mubr.f32.gmra.mrb[0].mxu0 %v106
    %v404 = vpop.f32.mrb[0].mxu0
    %v405 = vadd.f32 0.0, %v404
    %v406 = vpop.f32.mrb[0].mxu0
    %407 = vmatprep.mubr.f32.mxu0 0.0
    %408 = vmatmul.mubr.f32.gmra.mrb[0].mxu0 %v107
    %v409 = vpop.f32.mrb[0].mxu0
    %v410 = vadd.f32 0.0, %v409
    %v411 = vpop.f32.mrb[0].mxu0
    %412 = vmatprep.mubr.f32.mxu0 0.0
    %413 = vmatmul.mubr.f32.gmra.mrb[0].mxu0 %v108
    %v414 = vpop.f32.mrb[0].mxu0
    %v415 = vadd.f32 0.0, %v414
    %v416 = vpop.f32.mrb[0].mxu0
    %417 = vmatprep.mubr.f32.mxu0 0.0
    %418 = vmatmul.mubr.f32.gmra.mrb[0].mxu0 %v109
    %v419 = vpop.f32.mrb[0].mxu0
    %v420 = vadd.f32 0.0, %v419
    %v421 = vpop.f32.mrb[0].mxu0
    %422 = vmatprep.mubr.f32.mxu0 0.0
    %423 = vmatmul.mubr.f32.gmra.mrb[0].mxu0 %v110
    %v424 = vpop.f32.mrb[0].mxu0
    %v425 = vadd.f32 0.0, %v424
    %v426 = vpop.f32.mrb[0].mxu0
    %427 = vmatprep.mubr.f32.mxu0 0.0
    %428 = vmatmul.mubr.f32.gmra.mrb[0].mxu0 %v111
    %v429 = vpop.f32.mrb[0].mxu0
    %v430 = vadd.f32 0.0, %v429
    %v431 = vpop.f32.mrb[0].mxu0
    %432 = vmatprep.mubr.f32.mxu0 0.0
    %433 = vmatmul.mubr.f32.gmra.mrb[0].mxu0 %v112
    %v434 = vpop.f32.mrb[0].mxu0
    %v435 = vadd.f32 0.0, %v434
    %v436 = vpop.f32.mrb[0].mxu0
    %437 = vmatprep.mubr.f32.mxu0 0.0
    %438 = vmatmul.mubr.f32.gmra.mrb[0].mxu0 %v113
    %v439 = vpop.f32.mrb[0].mxu0
    %v440 = vadd.f32 0.0, %v439
    %v441 = vpop.f32.mrb[0].mxu0
    %442 = vmatprep.mubr.f32.mxu0 0.0
    %443 = vmatmul.mubr.f32.gmra.mrb[0].mxu0 %v114
    %v444 = vpop.f32.mrb[0].mxu0
    %v445 = vadd.f32 0.0, %v444
    %v446 = vpop.f32.mrb[0].mxu0
    %447 = vmatprep.mubr.f32.mxu0 0.0
    %448 = vmatmul.mubr.f32.gmra.mrb[0].mxu0 %v115
    %v449 = vpop.f32.mrb[0].mxu0
    %v450 = vadd.f32 0.0, %v449
    %v451 = vpop.f32.mrb[0].mxu0
    %452 = vmatprep.mubr.f32.mxu0 0.0
    %453 = vmatmul.mubr.f32.gmra.mrb[0].mxu0 %v116
    %v454 = vpop.f32.mrb[0].mxu0
    %v455 = vadd.f32 0.0, %v454
    %v456 = vpop.f32.mrb[0].mxu0
    %457 = vmatprep.mubr.f32.mxu0 0.0
    %458 = vmatmul.mubr.f32.gmra.mrb[0].mxu0 %v117
    %v459 = vpop.f32.mrb[0].mxu0
    %v460 = vadd.f32 0.0, %v459
    %v461 = vpop.f32.mrb[0].mxu0
    %462 = vmatprep.mubr.f32.mxu0 0.0
    %463 = vmatmul.mubr.f32.gmra.mrb[0].mxu0 %v118
    %v464 = vpop.f32.mrb[0].mxu0
    %v465 = vadd.f32 0.0, %v464
    %v466 = vpop.f32.mrb[0].mxu0
    %467 = vmatprep.mubr.f32.mxu0 0.0
    %468 = vmatmul.mubr.f32.gmra.mrb[0].mxu0 %v119
    %v469 = vpop.f32.mrb[0].mxu0
    %v470 = vadd.f32 0.0, %v469
    %v471 = vpop.f32.mrb[0].mxu0
    %472 = vmatprep.mubr.f32.mxu0 0.0
    %473 = vmatmul.mubr.f32.gmra.mrb[0].mxu0 %v120
    %v474 = vpop.f32.mrb[0].mxu0
    %v475 = vadd.f32 0.0, %v474
    %v476 = vpop.f32.mrb[0].mxu0
    %477 = vmatprep.mubr.f32.mxu0 0.0
    %478 = vmatmul.mubr.f32.gmra.mrb[0].mxu0 %v121
    %v479 = vpop.f32.mrb[0].mxu0
    %v480 = vadd.f32 0.0, %v479
    %v481 = vpop.f32.mrb[0].mxu0
    %482 = vmatprep.mubr.f32.mxu0 0.0
    %483 = vmatmul.mubr.f32.gmra.mrb[0].mxu0 %v122
    %v484 = vpop.f32.mrb[0].mxu0
    %v485 = vadd.f32 0.0, %v484
    %v486 = vpop.f32.mrb[0].mxu0
    %487 = vmatprep.mubr.f32.mxu0 0.0
    %488 = vmatmul.mubr.f32.gmra.mrb[0].mxu0 %v123
    %v489 = vpop.f32.mrb[0].mxu0
    %v490 = vadd.f32 0.0, %v489
    %v491 = vpop.f32.mrb[0].mxu0
    %492 = vmatprep.mubr.f32.mxu0 0.0
    %493 = vmatmul.mubr.f32.gmra.mrb[0].mxu0 %v124
    %v494 = vpop.f32.mrb[0].mxu0
    %v495 = vadd.f32 0.0, %v494
    %v496 = vpop.f32.mrb[0].mxu0
    %497 = vmatprep.mubr.f32.mxu0 0.0
    %498 = vmatmul.mubr.f32.gmra.mrb[0].mxu0 %v125
    %v499 = vpop.f32.mrb[0].mxu0
    %v500 = vadd.f32 0.0, %v499
    %v501 = vpop.f32.mrb[0].mxu0
    %502 = vmatprep.mubr.f32.mxu0 0.0
    %503 = vmatmul.mubr.f32.gmra.mrb[0].mxu0 %v126
    %v504 = vpop.f32.mrb[0].mxu0
    %v505 = vadd.f32 0.0, %v504
    %v506 = vpop.f32.mrb[0].mxu0
    %507 = vmatprep.mubr.f32.mxu0 0.0
    %508 = vmatmul.mubr.f32.gmra.mrb[0].mxu0 %v127
    %v509 = vpop.f32.mrb[0].mxu0
    %v510 = vadd.f32 0.0, %v509
    %v511 = vpop.f32.mrb[0].mxu0
    %512 = vmatprep.mubr.f32.mxu0 0.0
    %513 = vmatmul.mubr.f32.gmra.mrb[0].mxu0 %v128
    %v514 = vpop.f32.mrb[0].mxu0
    %v515 = vadd.f32 0.0, %v514
    %v516 = vpop.f32.mrb[0].mxu0
    %517 = vmatprep.mubr.f32.mxu0 0.0
    %518 = vmatmul.mubr.f32.gmra.mrb[0].mxu0 %v129
    %v519 = vpop.f32.mrb[0].mxu0
    %v520 = vadd.f32 0.0, %v519
    %v521 = vpop.f32.mrb[0].mxu0
    %522 = vmatprep.mubr.f32.mxu0 0.0
    %523 = vmatmul.mubr.f32.gmra.mrb[0].mxu0 %v130
    %v524 = vpop.f32.mrb[0].mxu0
    %v525 = vadd.f32 0.0, %v524
    %v526 = vpop.f32.mrb[0].mxu0
    %527 = vmatprep.mubr.f32.mxu0 0.0
    %528 = vmatmul.mubr.f32.gmra.mrb[0].mxu0 %v131
    %v529 = vpop.f32.mrb[0].mxu0
    %v530 = vadd.f32 0.0, %v529
    %v531 = vpop.f32.mrb[0].mxu0
    %532 = vdwg.mxu0
    %v533 = vld [vmem:[%s2] sm:$0x1]
    %v534 = vld [vmem:[%s3] sm:$0x1]
    %v535 = vadd.f32 %v215, %v220
    %v536 = vadd.f32 %v535, %v225
    %v537 = vadd.f32 %v536, %v230
    %v538 = vadd.f32 %v537, %v235
    %v539 = vadd.f32 %v538, %v240
    %v540 = vadd.f32 %v539, %v245
    %v541 = vadd.f32 %v540, %v250
    %v542 = vadd.f32 %v541, %v255
    %v543 = vadd.f32 %v542, %v260
    %v544 = vadd.f32 %v543, %v265
    %v545 = vadd.f32 %v544, %v270
    %v546 = vadd.f32 %v545, %v275
    %v547 = vadd.f32 %v546, %v280
    %v548 = vadd.f32 %v547, %v285
    %v549 = vadd.f32 %v548, %v290
    %v550 = vadd.f32 %v549, %v295
    %v551 = vadd.f32 %v550, %v300
    %v552 = vadd.f32 %v551, %v305
    %v553 = vadd.f32 %v552, %v310
    %v554 = vadd.f32 %v553, %v315
    %v555 = vadd.f32 %v554, %v320
    %v556 = vadd.f32 %v555, %v325
    %v557 = vadd.f32 %v556, %v330
    %v558 = vadd.f32 %v557, %v335
    %v559 = vadd.f32 %v558, %v340
    %v560 = vadd.f32 %v559, %v345
    %v561 = vadd.f32 %v560, %v350
    %v562 = vadd.f32 %v561, %v355
    %v563 = vadd.f32 %v562, %v360
    %v564 = vadd.f32 %v563, %v365
    %v565 = vadd.f32 %v564, %v370
    %v566 = vadd.f32 %v565, %v375
    %v567 = vadd.f32 %v566, %v380
    %v568 = vadd.f32 %v567, %v385
    %v569 = vadd.f32 %v568, %v390
    %v570 = vadd.f32 %v569, %v395
    %v571 = vadd.f32 %v570, %v400
    %v572 = vadd.f32 %v571, %v405
    %v573 = vadd.f32 %v572, %v410
    %v574 = vadd.f32 %v573, %v415
    %v575 = vadd.f32 %v574, %v420
    %v576 = vadd.f32 %v575, %v425
    %v577 = vadd.f32 %v576, %v430
    %v578 = vadd.f32 %v577, %v435
    %v579 = vadd.f32 %v578, %v440
    %v580 = vadd.f32 %v579, %v445
    %v581 = vadd.f32 %v580, %v450
    %v582 = vadd.f32 %v581, %v455
    %v583 = vadd.f32 %v582, %v460
    %v584 = vadd.f32 %v583, %v465
    %v585 = vadd.f32 %v584, %v470
    %v586 = vadd.f32 %v585, %v475
    %v587 = vadd.f32 %v586, %v480
    %v588 = vadd.f32 %v587, %v485
    %v589 = vadd.f32 %v588, %v490
    %v590 = vadd.f32 %v589, %v495
    %v591 = vadd.f32 %v590, %v500
    %v592 = vadd.f32 %v591, %v505
    %v593 = vadd.f32 %v592, %v510
    %v594 = vadd.f32 %v593, %v515
    %v595 = vadd.f32 %v594, %v520
    %v596 = vadd.f32 %v595, %v525
    %v597 = vadd.f32 %v596, %v530
    %v598 = vrot.slane %v597, 4
    %v599 = vadd.f32 %v597, %v598
    %v600 = vrot.slane %v599, 2
    %v601 = vadd.f32 %v599, %v600
    %v602 = vrot.slane %v601, 1
    %v603 = vadd.f32 %v601, %v602
    %v604 = vmul.f32 %v215, %v215
    %v605 = vmul.f32 %v220, %v220
    %v606 = vmul.f32 %v225, %v225
    %v607 = vmul.f32 %v230, %v230
    %v608 = vmul.f32 %v235, %v235
    %v609 = vmul.f32 %v240, %v240
    %v610 = vmul.f32 %v245, %v245
    %v611 = vmul.f32 %v250, %v250
    %v612 = vmul.f32 %v255, %v255
    %v613 = vmul.f32 %v260, %v260
    %v614 = vmul.f32 %v265, %v265
    %v615 = vmul.f32 %v270, %v270
    %v616 = vmul.f32 %v275, %v275
    %v617 = vmul.f32 %v280, %v280
    %v618 = vmul.f32 %v285, %v285
    %v619 = vmul.f32 %v290, %v290
    %v620 = vmul.f32 %v295, %v295
    %v621 = vmul.f32 %v300, %v300
    %v622 = vmul.f32 %v305, %v305
    %v623 = vmul.f32 %v310, %v310
    %v624 = vmul.f32 %v315, %v315
    %v625 = vmul.f32 %v320, %v320
    %v626 = vmul.f32 %v325, %v325
    %v627 = vmul.f32 %v330, %v330
    %v628 = vmul.f32 %v335, %v335
    %v629 = vmul.f32 %v340, %v340
    %v630 = vmul.f32 %v345, %v345
    %v631 = vmul.f32 %v350, %v350
    %v632 = vmul.f32 %v355, %v355
    %v633 = vmul.f32 %v360, %v360
    %v634 = vmul.f32 %v365, %v365
    %v635 = vmul.f32 %v370, %v370
    %v636 = vmul.f32 %v375, %v375
    %v637 = vmul.f32 %v380, %v380
    %v638 = vmul.f32 %v385, %v385
    %v639 = vmul.f32 %v390, %v390
    %v640 = vmul.f32 %v395, %v395
    %v641 = vmul.f32 %v400, %v400
    %v642 = vmul.f32 %v405, %v405
    %v643 = vmul.f32 %v410, %v410
    %v644 = vmul.f32 %v415, %v415
    %v645 = vmul.f32 %v420, %v420
    %v646 = vmul.f32 %v425, %v425
    %v647 = vmul.f32 %v430, %v430
    %v648 = vmul.f32 %v435, %v435
    %v649 = vmul.f32 %v440, %v440
    %v650 = vmul.f32 %v445, %v445
    %v651 = vmul.f32 %v450, %v450
    %v652 = vmul.f32 %v455, %v455
    %v653 = vmul.f32 %v460, %v460
    %v654 = vmul.f32 %v465, %v465
    %v655 = vmul.f32 %v470, %v470
    %v656 = vmul.f32 %v475, %v475
    %v657 = vmul.f32 %v480, %v480
    %v658 = vmul.f32 %v485, %v485
    %v659 = vmul.f32 %v490, %v490
    %v660 = vmul.f32 %v495, %v495
    %v661 = vmul.f32 %v500, %v500
    %v662 = vmul.f32 %v505, %v505
    %v663 = vmul.f32 %v510, %v510
    %v664 = vmul.f32 %v515, %v515
    %v665 = vmul.f32 %v520, %v520
    %v666 = vmul.f32 %v525, %v525
    %v667 = vmul.f32 %v530, %v530
    %v668 = vadd.f32 %v604, %v605
    %v669 = vadd.f32 %v668, %v606
    %v670 = vadd.f32 %v669, %v607
    %v671 = vadd.f32 %v670, %v608
    %v672 = vadd.f32 %v671, %v609
    %v673 = vadd.f32 %v672, %v610
    %v674 = vadd.f32 %v673, %v611
    %v675 = vadd.f32 %v674, %v612
    %v676 = vadd.f32 %v675, %v613
    %v677 = vadd.f32 %v676, %v614
    %v678 = vadd.f32 %v677, %v615
    %v679 = vadd.f32 %v678, %v616
    %v680 = vadd.f32 %v679, %v617
    %v681 = vadd.f32 %v680, %v618
    %v682 = vadd.f32 %v681, %v619
    %v683 = vadd.f32 %v682, %v620
    %v684 = vadd.f32 %v683, %v621
    %v685 = vadd.f32 %v684, %v622
    %v686 = vadd.f32 %v685, %v623
    %v687 = vadd.f32 %v686, %v624
    %v688 = vadd.f32 %v687, %v625
    %v689 = vadd.f32 %v688, %v626
    %v690 = vadd.f32 %v689, %v627
    %v691 = vadd.f32 %v690, %v628
    %v692 = vadd.f32 %v691, %v629
    %v693 = vadd.f32 %v692, %v630
    %v694 = vadd.f32 %v693, %v631
    %v695 = vadd.f32 %v694, %v632
    %v696 = vadd.f32 %v695, %v633
    %v697 = vadd.f32 %v696, %v634
    %v698 = vadd.f32 %v697, %v635
    %v699 = vadd.f32 %v698, %v636
    %v700 = vadd.f32 %v699, %v637
    %v701 = vadd.f32 %v700, %v638
    %v702 = vadd.f32 %v701, %v639
    %v703 = vadd.f32 %v702, %v640
    %v704 = vadd.f32 %v703, %v641
    %v705 = vadd.f32 %v704, %v642
    %v706 = vadd.f32 %v705, %v643
    %v707 = vadd.f32 %v706, %v644
    %v708 = vadd.f32 %v707, %v645
    %v709 = vadd.f32 %v708, %v646
    %v710 = vadd.f32 %v709, %v647
    %v711 = vadd.f32 %v710, %v648
    %v712 = vadd.f32 %v711, %v649
    %v713 = vadd.f32 %v712, %v650
    %v714 = vadd.f32 %v713, %v651
    %v715 = vadd.f32 %v714, %v652
    %v716 = vadd.f32 %v715, %v653
    %v717 = vadd.f32 %v716, %v654
    %v718 = vadd.f32 %v717, %v655
    %v719 = vadd.f32 %v718, %v656
    %v720 = vadd.f32 %v719, %v657
    %v721 = vadd.f32 %v720, %v658
    %v722 = vadd.f32 %v721, %v659
    %v723 = vadd.f32 %v722, %v660
    %v724 = vadd.f32 %v723, %v661
    %v725 = vadd.f32 %v724, %v662
    %v726 = vadd.f32 %v725, %v663
    %v727 = vadd.f32 %v726, %v664
    %v728 = vadd.f32 %v727, %v665
    %v729 = vadd.f32 %v728, %v666
    %v730 = vadd.f32 %v729, %v667
    %v731 = vrot.slane %v730, 4
    %v732 = vadd.f32 %v730, %v731
    %v733 = vrot.slane %v732, 2
    %v734 = vadd.f32 %v732, %v733
    %v735 = vrot.slane %v734, 1
    %v736 = vadd.f32 %v734, %v735
    %v737 = vmul.f32 %v603, 0.001953125
    %v738 = vmul.f32 %v736, 0.001953125
    %v739 = vmul.f32 %v737, %v737
    %v740 = vsub.f32 %v738, %v739
    %v741 = vmax.f32 %v740, 0.0
    %v742 = vadd.f32 %v741, 1e-05
    %v743 = vrsqrt.pop %v742
    %v744 = vmul.f32 %v533, %v743
    %v745 = vmul.f32 %v737, %v744
    %v746 = vsub.f32 %v534, %v745
    %v748 = vlaneseq
    %v749 = vshrl.u32 %v748, 7
    %v750 = vsub.s32 0, %v749
    %v751 = vrot.slane %v744, %v750
    %v753 = vmul.f32 %v215, %v751
    %v754 = vmul.f32 %v220, %v751
    %v755 = vmul.f32 %v225, %v751
    %v756 = vmul.f32 %v230, %v751
    %v757 = vmul.f32 %v235, %v751
    %v758 = vmul.f32 %v240, %v751
    %v759 = vmul.f32 %v245, %v751
    %v760 = vmul.f32 %v250, %v751
    %v761 = vmul.f32 %v255, %v751
    %v762 = vmul.f32 %v260, %v751
    %v763 = vmul.f32 %v265, %v751
    %v764 = vmul.f32 %v270, %v751
    %v765 = vmul.f32 %v275, %v751
    %v766 = vmul.f32 %v280, %v751
    %v767 = vmul.f32 %v285, %v751
    %v768 = vmul.f32 %v290, %v751
    %v769 = vmul.f32 %v295, %v751
    %v770 = vmul.f32 %v300, %v751
    %v771 = vmul.f32 %v305, %v751
    %v772 = vmul.f32 %v310, %v751
    %v773 = vmul.f32 %v315, %v751
    %v774 = vmul.f32 %v320, %v751
    %v775 = vmul.f32 %v325, %v751
    %v776 = vmul.f32 %v330, %v751
    %v777 = vmul.f32 %v335, %v751
    %v778 = vmul.f32 %v340, %v751
    %v779 = vmul.f32 %v345, %v751
    %v780 = vmul.f32 %v350, %v751
    %v781 = vmul.f32 %v355, %v751
    %v782 = vmul.f32 %v360, %v751
    %v783 = vmul.f32 %v365, %v751
    %v784 = vmul.f32 %v370, %v751
    %v785 = vmul.f32 %v375, %v751
    %v786 = vmul.f32 %v380, %v751
    %v787 = vmul.f32 %v385, %v751
    %v788 = vmul.f32 %v390, %v751
    %v789 = vmul.f32 %v395, %v751
    %v790 = vmul.f32 %v400, %v751
    %v791 = vmul.f32 %v405, %v751
    %v792 = vmul.f32 %v410, %v751
    %v793 = vmul.f32 %v415, %v751
    %v794 = vmul.f32 %v420, %v751
    %v795 = vmul.f32 %v425, %v751
    %v796 = vmul.f32 %v430, %v751
    %v797 = vmul.f32 %v435, %v751
    %v798 = vmul.f32 %v440, %v751
    %v799 = vmul.f32 %v445, %v751
    %v800 = vmul.f32 %v450, %v751
    %v801 = vmul.f32 %v455, %v751
    %v802 = vmul.f32 %v460, %v751
    %v803 = vmul.f32 %v465, %v751
    %v804 = vmul.f32 %v470, %v751
    %v805 = vmul.f32 %v475, %v751
    %v806 = vmul.f32 %v480, %v751
    %v807 = vmul.f32 %v485, %v751
    %v808 = vmul.f32 %v490, %v751
    %v809 = vmul.f32 %v495, %v751
    %v810 = vmul.f32 %v500, %v751
    %v811 = vmul.f32 %v505, %v751
    %v812 = vmul.f32 %v510, %v751
    %v813 = vmul.f32 %v515, %v751
    %v814 = vmul.f32 %v520, %v751
    %v815 = vmul.f32 %v525, %v751
    %v816 = vmul.f32 %v530, %v751
    %v818 = vlaneseq
    %v819 = vshrl.u32 %v818, 7
    %v820 = vsub.s32 0, %v819
    %v821 = vrot.slane %v746, %v820
    %v823 = vadd.f32 %v753, %v821
    %v824 = vadd.f32 %v754, %v821
    %v825 = vadd.f32 %v755, %v821
    %v826 = vadd.f32 %v756, %v821
    %v827 = vadd.f32 %v757, %v821
    %v828 = vadd.f32 %v758, %v821
    %v829 = vadd.f32 %v759, %v821
    %v830 = vadd.f32 %v760, %v821
    %v831 = vadd.f32 %v761, %v821
    %v832 = vadd.f32 %v762, %v821
    %v833 = vadd.f32 %v763, %v821
    %v834 = vadd.f32 %v764, %v821
    %v835 = vadd.f32 %v765, %v821
    %v836 = vadd.f32 %v766, %v821
    %v837 = vadd.f32 %v767, %v821
    %v838 = vadd.f32 %v768, %v821
    %v839 = vadd.f32 %v769, %v821
    %v840 = vadd.f32 %v770, %v821
    %v841 = vadd.f32 %v771, %v821
    %v842 = vadd.f32 %v772, %v821
    %v843 = vadd.f32 %v773, %v821
    %v844 = vadd.f32 %v774, %v821
    %v845 = vadd.f32 %v775, %v821
    %v846 = vadd.f32 %v776, %v821
    %v847 = vadd.f32 %v777, %v821
    %v848 = vadd.f32 %v778, %v821
    %v849 = vadd.f32 %v779, %v821
    %v850 = vadd.f32 %v780, %v821
    %v851 = vadd.f32 %v781, %v821
    %v852 = vadd.f32 %v782, %v821
    %v853 = vadd.f32 %v783, %v821
    %v854 = vadd.f32 %v784, %v821
    %v855 = vadd.f32 %v785, %v821
    %v856 = vadd.f32 %v786, %v821
    %v857 = vadd.f32 %v787, %v821
    %v858 = vadd.f32 %v788, %v821
    %v859 = vadd.f32 %v789, %v821
    %v860 = vadd.f32 %v790, %v821
    %v861 = vadd.f32 %v791, %v821
    %v862 = vadd.f32 %v792, %v821
    %v863 = vadd.f32 %v793, %v821
    %v864 = vadd.f32 %v794, %v821
    %v865 = vadd.f32 %v795, %v821
    %v866 = vadd.f32 %v796, %v821
    %v867 = vadd.f32 %v797, %v821
    %v868 = vadd.f32 %v798, %v821
    %v869 = vadd.f32 %v799, %v821
    %v870 = vadd.f32 %v800, %v821
    %v871 = vadd.f32 %v801, %v821
    %v872 = vadd.f32 %v802, %v821
    %v873 = vadd.f32 %v803, %v821
    %v874 = vadd.f32 %v804, %v821
    %v875 = vadd.f32 %v805, %v821
    %v876 = vadd.f32 %v806, %v821
    %v877 = vadd.f32 %v807, %v821
    %v878 = vadd.f32 %v808, %v821
    %v879 = vadd.f32 %v809, %v821
    %v880 = vadd.f32 %v810, %v821
    %v881 = vadd.f32 %v811, %v821
    %v882 = vadd.f32 %v812, %v821
    %v883 = vadd.f32 %v813, %v821
    %v884 = vadd.f32 %v814, %v821
    %v885 = vadd.f32 %v815, %v821
    %v886 = vadd.f32 %v816, %v821
    %v887 = vmax.f32 %v823, 0.0
    %v888 = vmax.f32 %v824, 0.0
    %v889 = vmax.f32 %v825, 0.0
    %v890 = vmax.f32 %v826, 0.0
    %v891 = vmax.f32 %v827, 0.0
    %v892 = vmax.f32 %v828, 0.0
    %v893 = vmax.f32 %v829, 0.0
    %v894 = vmax.f32 %v830, 0.0
    %v895 = vmax.f32 %v831, 0.0
    %v896 = vmax.f32 %v832, 0.0
    %v897 = vmax.f32 %v833, 0.0
    %v898 = vmax.f32 %v834, 0.0
    %v899 = vmax.f32 %v835, 0.0
    %v900 = vmax.f32 %v836, 0.0
    %v901 = vmax.f32 %v837, 0.0
    %v902 = vmax.f32 %v838, 0.0
    %v903 = vmax.f32 %v839, 0.0
    %v904 = vmax.f32 %v840, 0.0
    %v905 = vmax.f32 %v841, 0.0
    %v906 = vmax.f32 %v842, 0.0
    %v907 = vmax.f32 %v843, 0.0
    %v908 = vmax.f32 %v844, 0.0
    %v909 = vmax.f32 %v845, 0.0
    %v910 = vmax.f32 %v846, 0.0
    %v911 = vmax.f32 %v847, 0.0
    %v912 = vmax.f32 %v848, 0.0
    %v913 = vmax.f32 %v849, 0.0
    %v914 = vmax.f32 %v850, 0.0
    %v915 = vmax.f32 %v851, 0.0
    %v916 = vmax.f32 %v852, 0.0
    %v917 = vmax.f32 %v853, 0.0
    %v918 = vmax.f32 %v854, 0.0
    %v919 = vmax.f32 %v855, 0.0
    %v920 = vmax.f32 %v856, 0.0
    %v921 = vmax.f32 %v857, 0.0
    %v922 = vmax.f32 %v858, 0.0
    %v923 = vmax.f32 %v859, 0.0
    %v924 = vmax.f32 %v860, 0.0
    %v925 = vmax.f32 %v861, 0.0
    %v926 = vmax.f32 %v862, 0.0
    %v927 = vmax.f32 %v863, 0.0
    %v928 = vmax.f32 %v864, 0.0
    %v929 = vmax.f32 %v865, 0.0
    %v930 = vmax.f32 %v866, 0.0
    %v931 = vmax.f32 %v867, 0.0
    %v932 = vmax.f32 %v868, 0.0
    %v933 = vmax.f32 %v869, 0.0
    %v934 = vmax.f32 %v870, 0.0
    %v935 = vmax.f32 %v871, 0.0
    %v936 = vmax.f32 %v872, 0.0
    %v937 = vmax.f32 %v873, 0.0
    %v938 = vmax.f32 %v874, 0.0
    %v939 = vmax.f32 %v875, 0.0
    %v940 = vmax.f32 %v876, 0.0
    %v941 = vmax.f32 %v877, 0.0
    %v942 = vmax.f32 %v878, 0.0
    %v943 = vmax.f32 %v879, 0.0
    %v944 = vmax.f32 %v880, 0.0
    %v945 = vmax.f32 %v881, 0.0
    %v946 = vmax.f32 %v882, 0.0
    %v947 = vmax.f32 %v883, 0.0
    %v948 = vmax.f32 %v884, 0.0
    %v949 = vmax.f32 %v885, 0.0
    %v950 = vmax.f32 %v886, 0.0
    %951 = vst [vmem:[#allocation2] sm:$0xff] 0.0
    %952 = vst [vmem:[#allocation2 + $0x8] sm:$0xff] 0.0
    %953 = vst [vmem:[#allocation2 + $0x10] sm:$0x3] 0.0
    %954 = vst [vmem:[#allocation2 + $0x1b0] sm:$0xff] 0.0
    %955 = vst [vmem:[#allocation2 + $0x1b8] sm:$0xff] 0.0
    %956 = vst [vmem:[#allocation2 + $0x1c0] sm:$0x3] 0.0
    %s957 = scalar_lea.vmem [#allocation2], 408
    %958 = vst [vmem:[%s957] sm:$0xff] 0.0
    %959 = vst [vmem:[%s957 + $0x8] sm:$0xff] 0.0
    %960 = vst [vmem:[%s957 + $0x10] sm:$0x3] 0.0
    %961 = vst [vmem:[%s957 + $0x1b0] sm:$0xff] 0.0
    %962 = vst [vmem:[%s957 + $0x1b8] sm:$0xff] 0.0
    %963 = vst [vmem:[%s957 + $0x1c0] sm:$0x3] 0.0
    %964 = vst [vmem:[#allocation2] sm:$0x1] 0.0
    %965 = vst [vmem:[#allocation2 + $0x18] sm:$0x1] 0.0
    %966 = vst [vmem:[#allocation2 + $0x30] sm:$0x1] 0.0
    %967 = vst [vmem:[#allocation2 + $0x48] sm:$0x1] 0.0
    %968 = vst [vmem:[#allocation2 + $0x60] sm:$0x1] 0.0
    %969 = vst [vmem:[#allocation2 + $0x78] sm:$0x1] 0.0
    %970 = vst [vmem:[#allocation2 + $0x90] sm:$0x1] 0.0
    %971 = vst [vmem:[#allocation2 + $0xa8] sm:$0x1] 0.0
    %972 = vst [vmem:[#allocation2 + $0xc0] sm:$0x1] 0.0
    %973 = vst [vmem:[#allocation2 + $0xd8] sm:$0x1] 0.0
    %974 = vst [vmem:[#allocation2 + $0xf0] sm:$0x1] 0.0
    %975 = vst [vmem:[#allocation2 + $0x108] sm:$0x1] 0.0
    %976 = vst [vmem:[#allocation2 + $0x120] sm:$0x1] 0.0
    %977 = vst [vmem:[#allocation2 + $0x138] sm:$0x1] 0.0
    %978 = vst [vmem:[#allocation2 + $0x150] sm:$0x1] 0.0
    %979 = vst [vmem:[#allocation2 + $0x168] sm:$0x1] 0.0
    %980 = vst [vmem:[#allocation2 + $0x180] sm:$0x1] 0.0
    %981 = vst [vmem:[#allocation2 + $0x198] sm:$0x1] 0.0
    %982 = vst [vmem:[#allocation2 + $0x1b0] sm:$0x1] 0.0
    %983 = vst [vmem:[#allocation2 + $0x1c8] sm:$0x1] 0.0
    %984 = vst [vmem:[#allocation2 + $0x1e0] sm:$0x1] 0.0
    %985 = vst [vmem:[#allocation2 + $0x1f8] sm:$0x1] 0.0
    %986 = vst [vmem:[#allocation2 + $0x210] sm:$0x1] 0.0
    %987 = vst [vmem:[#allocation2 + $0x228] sm:$0x1] 0.0
    %988 = vst [vmem:[#allocation2 + $0x240] sm:$0x1] 0.0
    %989 = vst [vmem:[#allocation2 + $0x258] sm:$0x1] 0.0
    %990 = vst [vmem:[#allocation2 + $0x270] sm:$0x1] 0.0
    %991 = vst [vmem:[#allocation2 + $0x288] sm:$0x1] 0.0
    %992 = vst [vmem:[#allocation2 + $0x2a0] sm:$0x1] 0.0
    %993 = vst [vmem:[#allocation2 + $0x2b8] sm:$0x1] 0.0
    %994 = vst [vmem:[#allocation2 + $0x2d0] sm:$0x1] 0.0
    %995 = vst [vmem:[#allocation2 + $0x2e8] sm:$0x1] 0.0
    %996 = vst [vmem:[#allocation2 + $0x300] sm:$0x1] 0.0
    %997 = vst [vmem:[#allocation2 + $0x318] sm:$0x1] 0.0
    %998 = vst [vmem:[#allocation2 + $0x330] sm:$0x1] 0.0
    %999 = vst [vmem:[#allocation2 + $0x348] sm:$0x1] 0.0
    %1000 = vst [vmem:[#allocation2 + $0x11] sm:$0x1] 0.0
    %1001 = vst [vmem:[#allocation2 + $0x29] sm:$0x1] 0.0
    %1002 = vst [vmem:[#allocation2 + $0x41] sm:$0x1] 0.0
    %1003 = vst [vmem:[#allocation2 + $0x59] sm:$0x1] 0.0
    %1004 = vst [vmem:[#allocation2 + $0x71] sm:$0x1] 0.0
    %1005 = vst [vmem:[#allocation2 + $0x89] sm:$0x1] 0.0
    %1006 = vst [vmem:[#allocation2 + $0xa1] sm:$0x1] 0.0
    %1007 = vst [vmem:[#allocation2 + $0xb9] sm:$0x1] 0.0
    %1008 = vst [vmem:[#allocation2 + $0xd1] sm:$0x1] 0.0
    %1009 = vst [vmem:[#allocation2 + $0xe9] sm:$0x1] 0.0
    %1010 = vst [vmem:[#allocation2 + $0x101] sm:$0x1] 0.0
    %1011 = vst [vmem:[#allocation2 + $0x119] sm:$0x1] 0.0
    %1012 = vst [vmem:[#allocation2 + $0x131] sm:$0x1] 0.0
    %1013 = vst [vmem:[#allocation2 + $0x149] sm:$0x1] 0.0
    %1014 = vst [vmem:[#allocation2 + $0x161] sm:$0x1] 0.0
    %1015 = vst [vmem:[#allocation2 + $0x179] sm:$0x1] 0.0
    %1016 = vst [vmem:[#allocation2 + $0x191] sm:$0x1] 0.0
    %1017 = vst [vmem:[#allocation2 + $0x1a9] sm:$0x1] 0.0
    %1018 = vst [vmem:[#allocation2 + $0x1c1] sm:$0x1] 0.0
    %1019 = vst [vmem:[#allocation2 + $0x1d9] sm:$0x1] 0.0
    %1020 = vst [vmem:[#allocation2 + $0x1f1] sm:$0x1] 0.0
    %1021 = vst [vmem:[#allocation2 + $0x209] sm:$0x1] 0.0
    %1022 = vst [vmem:[#allocation2 + $0x221] sm:$0x1] 0.0
    %1023 = vst [vmem:[#allocation2 + $0x239] sm:$0x1] 0.0
    %1024 = vst [vmem:[#allocation2 + $0x251] sm:$0x1] 0.0
    %1025 = vst [vmem:[#allocation2 + $0x269] sm:$0x1] 0.0
    %1026 = vst [vmem:[#allocation2 + $0x281] sm:$0x1] 0.0
    %1027 = vst [vmem:[#allocation2 + $0x299] sm:$0x1] 0.0
    %1028 = vst [vmem:[#allocation2 + $0x2b1] sm:$0x1] 0.0
    %1029 = vst [vmem:[#allocation2 + $0x2c9] sm:$0x1] 0.0
    %1030 = vst [vmem:[#allocation2 + $0x2e1] sm:$0x1] 0.0
    %1031 = vst [vmem:[#allocation2 + $0x2f9] sm:$0x1] 0.0
    %1032 = vst [vmem:[#allocation2 + $0x311] sm:$0x1] 0.0
    %1033 = vst [vmem:[#allocation2 + $0x329] sm:$0x1] 0.0
    %1034 = vst [vmem:[#allocation2 + $0x341] sm:$0x1] 0.0
    %1035 = vst [vmem:[#allocation2 + $0x359] sm:$0x1] 0.0
    %s1036 = scalar_lea.vmem [#allocation2], 24
    %1037 = vst [vmem:[%s1036 + $0x1] sm:$0xff] %v887
    %1038 = vst [vmem:[%s1036 + $0x9] sm:$0xff] %v888
    %1039 = vst [vmem:[%s1036 + $0x19] sm:$0xff] %v889
    %1040 = vst [vmem:[%s1036 + $0x21] sm:$0xff] %v890
    %1041 = vst [vmem:[%s1036 + $0x31] sm:$0xff] %v891
    %1042 = vst [vmem:[%s1036 + $0x39] sm:$0xff] %v892
    %1043 = vst [vmem:[%s1036 + $0x49] sm:$0xff] %v893
    %1044 = vst [vmem:[%s1036 + $0x51] sm:$0xff] %v894
    %1045 = vst [vmem:[%s1036 + $0x61] sm:$0xff] %v895
    %1046 = vst [vmem:[%s1036 + $0x69] sm:$0xff] %v896
    %1047 = vst [vmem:[%s1036 + $0x79] sm:$0xff] %v897
    %1048 = vst [vmem:[%s1036 + $0x81] sm:$0xff] %v898
    %1049 = vst [vmem:[%s1036 + $0x91] sm:$0xff] %v899
    %1050 = vst [vmem:[%s1036 + $0x99] sm:$0xff] %v900
    %1051 = vst [vmem:[%s1036 + $0xa9] sm:$0xff] %v901
    %1052 = vst [vmem:[%s1036 + $0xb1] sm:$0xff] %v902
    %1053 = vst [vmem:[%s1036 + $0xc1] sm:$0xff] %v903
    %1054 = vst [vmem:[%s1036 + $0xc9] sm:$0xff] %v904
    %1055 = vst [vmem:[%s1036 + $0xd9] sm:$0xff] %v905
    %1056 = vst [vmem:[%s1036 + $0xe1] sm:$0xff] %v906
    %1057 = vst [vmem:[%s1036 + $0xf1] sm:$0xff] %v907
    %1058 = vst [vmem:[%s1036 + $0xf9] sm:$0xff] %v908
    %1059 = vst [vmem:[%s1036 + $0x109] sm:$0xff] %v909
    %1060 = vst [vmem:[%s1036 + $0x111] sm:$0xff] %v910
    %1061 = vst [vmem:[%s1036 + $0x121] sm:$0xff] %v911
    %1062 = vst [vmem:[%s1036 + $0x129] sm:$0xff] %v912
    %1063 = vst [vmem:[%s1036 + $0x139] sm:$0xff] %v913
    %1064 = vst [vmem:[%s1036 + $0x141] sm:$0xff] %v914
    %1065 = vst [vmem:[%s1036 + $0x151] sm:$0xff] %v915
    %1066 = vst [vmem:[%s1036 + $0x159] sm:$0xff] %v916
    %1067 = vst [vmem:[%s1036 + $0x169] sm:$0xff] %v917
    %1068 = vst [vmem:[%s1036 + $0x171] sm:$0xff] %v918
    %1069 = vst [vmem:[%s1036 + $0x1b1] sm:$0xff] %v919
    %1070 = vst [vmem:[%s1036 + $0x1b9] sm:$0xff] %v920
    %1071 = vst [vmem:[%s1036 + $0x1c9] sm:$0xff] %v921
    %1072 = vst [vmem:[%s1036 + $0x1d1] sm:$0xff] %v922
    %1073 = vst [vmem:[%s1036 + $0x1e1] sm:$0xff] %v923
    %1074 = vst [vmem:[%s1036 + $0x1e9] sm:$0xff] %v924
    %1075 = vst [vmem:[%s1036 + $0x1f9] sm:$0xff] %v925
    %1076 = vst [vmem:[%s1036 + $0x201] sm:$0xff] %v926
    %1077 = vst [vmem:[%s1036 + $0x211] sm:$0xff] %v927
    %1078 = vst [vmem:[%s1036 + $0x219] sm:$0xff] %v928
    %1079 = vst [vmem:[%s1036 + $0x229] sm:$0xff] %v929
    %1080 = vst [vmem:[%s1036 + $0x231] sm:$0xff] %v930
    %1081 = vst [vmem:[%s1036 + $0x241] sm:$0xff] %v931
    %1082 = vst [vmem:[%s1036 + $0x249] sm:$0xff] %v932
    %1083 = vst [vmem:[%s1036 + $0x259] sm:$0xff] %v933
    %1084 = vst [vmem:[%s1036 + $0x261] sm:$0xff] %v934
    %1085 = vst [vmem:[%s1036 + $0x271] sm:$0xff] %v935
    %1086 = vst [vmem:[%s1036 + $0x279] sm:$0xff] %v936
    %1087 = vst [vmem:[%s1036 + $0x289] sm:$0xff] %v937
    %1088 = vst [vmem:[%s1036 + $0x291] sm:$0xff] %v938
    %1089 = vst [vmem:[%s1036 + $0x2a1] sm:$0xff] %v939
    %1090 = vst [vmem:[%s1036 + $0x2a9] sm:$0xff] %v940
    %1091 = vst [vmem:[%s1036 + $0x2b9] sm:$0xff] %v941
    %1092 = vst [vmem:[%s1036 + $0x2c1] sm:$0xff] %v942
    %1093 = vst [vmem:[%s1036 + $0x2d1] sm:$0xff] %v943
    %1094 = vst [vmem:[%s1036 + $0x2d9] sm:$0xff] %v944
    %1095 = vst [vmem:[%s1036 + $0x2e9] sm:$0xff] %v945
    %1096 = vst [vmem:[%s1036 + $0x2f1] sm:$0xff] %v946
    %1097 = vst [vmem:[%s1036 + $0x301] sm:$0xff] %v947
    %1098 = vst [vmem:[%s1036 + $0x309] sm:$0xff] %v948
    %1099 = vst [vmem:[%s1036 + $0x319] sm:$0xff] %v949
    %1100 = vst [vmem:[%s1036 + $0x321] sm:$0xff] %v950
    %v1101 = vld [vmem:[#allocation2] sm:$0xff]
    %v1102 = vld [vmem:[#allocation2 + $0x8] sm:$0xff]
    %v1103 = vld [vmem:[#allocation2 + $0x18] sm:$0xff]
    %v1104 = vld [vmem:[#allocation2 + $0x20] sm:$0xff]
    %v1105 = vld [vmem:[#allocation2 + $0x30] sm:$0xff]
    %v1106 = vld [vmem:[#allocation2 + $0x38] sm:$0xff]
    %v1107 = vld [vmem:[#allocation2 + $0x48] sm:$0xff]
    %v1108 = vld [vmem:[#allocation2 + $0x50] sm:$0xff]
    %v1109 = vld [vmem:[#allocation2 + $0x60] sm:$0xff]
    %v1110 = vld [vmem:[#allocation2 + $0x68] sm:$0xff]
    %v1111 = vld [vmem:[#allocation2 + $0x78] sm:$0xff]
    %v1112 = vld [vmem:[#allocation2 + $0x80] sm:$0xff]
    %v1113 = vld [vmem:[#allocation2 + $0x90] sm:$0xff]
    %v1114 = vld [vmem:[#allocation2 + $0x98] sm:$0xff]
    %v1115 = vld [vmem:[#allocation2 + $0xa8] sm:$0xff]
    %v1116 = vld [vmem:[#allocation2 + $0xb0] sm:$0xff]
    %v1117 = vld [vmem:[#allocation2 + $0xc0] sm:$0xff]
    %v1118 = vld [vmem:[#allocation2 + $0xc8] sm:$0xff]
    %v1119 = vld [vmem:[#allocation2 + $0xd8] sm:$0xff]
    %v1120 = vld [vmem:[#allocation2 + $0xe0] sm:$0xff]
    %v1121 = vld [vmem:[#allocation2 + $0xf0] sm:$0xff]
    %v1122 = vld [vmem:[#allocation2 + $0xf8] sm:$0xff]
    %v1123 = vld [vmem:[#allocation2 + $0x108] sm:$0xff]
    %v1124 = vld [vmem:[#allocation2 + $0x110] sm:$0xff]
    %v1125 = vld [vmem:[#allocation2 + $0x120] sm:$0xff]
    %v1126 = vld [vmem:[#allocation2 + $0x128] sm:$0xff]
    %v1127 = vld [vmem:[#allocation2 + $0x138] sm:$0xff]
    %v1128 = vld [vmem:[#allocation2 + $0x140] sm:$0xff]
    %v1129 = vld [vmem:[#allocation2 + $0x150] sm:$0xff]
    %v1130 = vld [vmem:[#allocation2 + $0x158] sm:$0xff]
    %v1131 = vld [vmem:[#allocation2 + $0x168] sm:$0xff]
    %v1132 = vld [vmem:[#allocation2 + $0x170] sm:$0xff]
    %v1133 = vld [vmem:[#allocation2 + $0x1b0] sm:$0xff]
    %v1134 = vld [vmem:[#allocation2 + $0x1b8] sm:$0xff]
    %v1135 = vld [vmem:[#allocation2 + $0x1c8] sm:$0xff]
    %v1136 = vld [vmem:[#allocation2 + $0x1d0] sm:$0xff]
    %v1137 = vld [vmem:[#allocation2 + $0x1e0] sm:$0xff]
    %v1138 = vld [vmem:[#allocation2 + $0x1e8] sm:$0xff]
    %v1139 = vld [vmem:[#allocation2 + $0x1f8] sm:$0xff]
    %v1140 = vld [vmem:[#allocation2 + $0x200] sm:$0xff]
    %v1141 = vld [vmem:[#allocation2 + $0x210] sm:$0xff]
    %v1142 = vld [vmem:[#allocation2 + $0x218] sm:$0xff]
    %v1143 = vld [vmem:[#allocation2 + $0x228] sm:$0xff]
    %v1144 = vld [vmem:[#allocation2 + $0x230] sm:$0xff]
    %v1145 = vld [vmem:[#allocation2 + $0x240] sm:$0xff]
    %v1146 = vld [vmem:[#allocation2 + $0x248] sm:$0xff]
    %v1147 = vld [vmem:[#allocation2 + $0x258] sm:$0xff]
    %v1148 = vld [vmem:[#allocation2 + $0x260] sm:$0xff]
    %v1149 = vld [vmem:[#allocation2 + $0x270] sm:$0xff]
    %v1150 = vld [vmem:[#allocation2 + $0x278] sm:$0xff]
    %v1151 = vld [vmem:[#allocation2 + $0x288] sm:$0xff]
    %v1152 = vld [vmem:[#allocation2 + $0x290] sm:$0xff]
    %v1153 = vld [vmem:[#allocation2 + $0x2a0] sm:$0xff]
    %v1154 = vld [vmem:[#allocation2 + $0x2a8] sm:$0xff]
    %v1155 = vld [vmem:[#allocation2 + $0x2b8] sm:$0xff]
    %v1156 = vld [vmem:[#allocation2 + $0x2c0] sm:$0xff]
    %v1157 = vld [vmem:[#allocation2 + $0x2d0] sm:$0xff]
    %v1158 = vld [vmem:[#allocation2 + $0x2d8] sm:$0xff]
    %v1159 = vld [vmem:[#allocation2 + $0x2e8] sm:$0xff]
    %v1160 = vld [vmem:[#allocation2 + $0x2f0] sm:$0xff]
    %v1161 = vld [vmem:[#allocation2 + $0x300] sm:$0xff]
    %v1162 = vld [vmem:[#allocation2 + $0x308] sm:$0xff]
    %v1163 = vld [vmem:[#allocation2 + $0x318] sm:$0xff]
    %v1164 = vld [vmem:[#allocation2 + $0x320] sm:$0xff]
    %v1165 = vld [vmem:[#allocation8] sm:$0xff]
    %v1166 = vld [vmem:[#allocation8 + $0x8] sm:$0xff]
    %v1167 = vld [vmem:[#allocation8 + $0x10] sm:$0xff]
    %v1168 = vld [vmem:[#allocation8 + $0x18] sm:$0xff]
    %v1169 = vld [vmem:[#allocation8 + $0x20] sm:$0xff]
    %v1170 = vld [vmem:[#allocation8 + $0x28] sm:$0xff]
    %v1171 = vld [vmem:[#allocation8 + $0x30] sm:$0xff]
    %v1172 = vld [vmem:[#allocation8 + $0x38] sm:$0xff]
    %v1173 = vld [vmem:[#allocation8 + $0x40] sm:$0xff]
    %v1174 = vld [vmem:[#allocation8 + $0x48] sm:$0xff]
    %v1175 = vld [vmem:[#allocation8 + $0x50] sm:$0xff]
    %v1176 = vld [vmem:[#allocation8 + $0x58] sm:$0xff]
    %v1177 = vld [vmem:[#allocation8 + $0x60] sm:$0xff]
    %v1178 = vld [vmem:[#allocation8 + $0x68] sm:$0xff]
    %v1179 = vld [vmem:[#allocation8 + $0x70] sm:$0xff]
    %v1180 = vld [vmem:[#allocation8 + $0x78] sm:$0xff]
    %v1181 = vld [vmem:[#allocation2 + $0x1] sm:$0xff]
    %v1182 = vld [vmem:[#allocation2 + $0x9] sm:$0xff]
    %v1183 = vld [vmem:[#allocation2 + $0x19] sm:$0xff]
    %v1184 = vld [vmem:[#allocation2 + $0x21] sm:$0xff]
    %v1185 = vld [vmem:[#allocation2 + $0x31] sm:$0xff]
    %v1186 = vld [vmem:[#allocation2 + $0x39] sm:$0xff]
    %v1187 = vld [vmem:[#allocation2 + $0x49] sm:$0xff]
    %v1188 = vld [vmem:[#allocation2 + $0x51] sm:$0xff]
    %v1189 = vld [vmem:[#allocation2 + $0x61] sm:$0xff]
    %v1190 = vld [vmem:[#allocation2 + $0x69] sm:$0xff]
    %v1191 = vld [vmem:[#allocation2 + $0x79] sm:$0xff]
    %v1192 = vld [vmem:[#allocation2 + $0x81] sm:$0xff]
    %v1193 = vld [vmem:[#allocation2 + $0x91] sm:$0xff]
    %v1194 = vld [vmem:[#allocation2 + $0x99] sm:$0xff]
    %v1195 = vld [vmem:[#allocation2 + $0xa9] sm:$0xff]
    %v1196 = vld [vmem:[#allocation2 + $0xb1] sm:$0xff]
    %v1197 = vld [vmem:[#allocation2 + $0xc1] sm:$0xff]
    %v1198 = vld [vmem:[#allocation2 + $0xc9] sm:$0xff]
    %v1199 = vld [vmem:[#allocation2 + $0xd9] sm:$0xff]
    %v1200 = vld [vmem:[#allocation2 + $0xe1] sm:$0xff]
    %v1201 = vld [vmem:[#allocation2 + $0xf1] sm:$0xff]
    %v1202 = vld [vmem:[#allocation2 + $0xf9] sm:$0xff]
    %v1203 = vld [vmem:[#allocation2 + $0x109] sm:$0xff]
    %v1204 = vld [vmem:[#allocation2 + $0x111] sm:$0xff]
    %v1205 = vld [vmem:[#allocation2 + $0x121] sm:$0xff]
    %v1206 = vld [vmem:[#allocation2 + $0x129] sm:$0xff]
    %v1207 = vld [vmem:[#allocation2 + $0x139] sm:$0xff]
    %v1208 = vld [vmem:[#allocation2 + $0x141] sm:$0xff]
    %v1209 = vld [vmem:[#allocation2 + $0x151] sm:$0xff]
    %v1210 = vld [vmem:[#allocation2 + $0x159] sm:$0xff]
    %v1211 = vld [vmem:[#allocation2 + $0x169] sm:$0xff]
    %v1212 = vld [vmem:[#allocation2 + $0x171] sm:$0xff]
    %v1213 = vld [vmem:[#allocation2 + $0x1b1] sm:$0xff]
    %v1214 = vld [vmem:[#allocation2 + $0x1b9] sm:$0xff]
    %v1215 = vld [vmem:[#allocation2 + $0x1c9] sm:$0xff]
    %v1216 = vld [vmem:[#allocation2 + $0x1d1] sm:$0xff]
    %v1217 = vld [vmem:[#allocation2 + $0x1e1] sm:$0xff]
    %v1218 = vld [vmem:[#allocation2 + $0x1e9] sm:$0xff]
    %v1219 = vld [vmem:[#allocation2 + $0x1f9] sm:$0xff]
    %v1220 = vld [vmem:[#allocation2 + $0x201] sm:$0xff]
    %v1221 = vld [vmem:[#allocation2 + $0x211] sm:$0xff]
    %v1222 = vld [vmem:[#allocation2 + $0x219] sm:$0xff]
    %v1223 = vld [vmem:[#allocation2 + $0x229] sm:$0xff]
    %v1224 = vld [vmem:[#allocation2 + $0x231] sm:$0xff]
    %v1225 = vld [vmem:[#allocation2 + $0x241] sm:$0xff]
    %v1226 = vld [vmem:[#allocation2 + $0x249] sm:$0xff]
    %v1227 = vld [vmem:[#allocation2 + $0x259] sm:$0xff]
    %v1228 = vld [vmem:[#allocation2 + $0x261] sm:$0xff]
    %v1229 = vld [vmem:[#allocation2 + $0x271] sm:$0xff]
    %v1230 = vld [vmem:[#allocation2 + $0x279] sm:$0xff]
    %v1231 = vld [vmem:[#allocation2 + $0x289] sm:$0xff]
    %v1232 = vld [vmem:[#allocation2 + $0x291] sm:$0xff]
    %v1233 = vld [vmem:[#allocation2 + $0x2a1] sm:$0xff]
    %v1234 = vld [vmem:[#allocation2 + $0x2a9] sm:$0xff]
    %v1235 = vld [vmem:[#allocation2 + $0x2b9] sm:$0xff]
    %v1236 = vld [vmem:[#allocation2 + $0x2c1] sm:$0xff]
    %v1237 = vld [vmem:[#allocation2 + $0x2d1] sm:$0xff]
    %v1238 = vld [vmem:[#allocation2 + $0x2d9] sm:$0xff]
    %v1239 = vld [vmem:[#allocation2 + $0x2e9] sm:$0xff]
    %v1240 = vld [vmem:[#allocation2 + $0x2f1] sm:$0xff]
    %v1241 = vld [vmem:[#allocation2 + $0x301] sm:$0xff]
    %v1242 = vld [vmem:[#allocation2 + $0x309] sm:$0xff]
    %v1243 = vld [vmem:[#allocation2 + $0x319] sm:$0xff]
    %v1244 = vld [vmem:[#allocation2 + $0x321] sm:$0xff]
    %s1245 = scalar_lea.vmem [#allocation8], 128
    %v1246 = vld [vmem:[%s1245] sm:$0xff]
    %v1247 = vld [vmem:[%s1245 + $0x8] sm:$0xff]
    %v1248 = vld [vmem:[%s1245 + $0x10] sm:$0xff]
    %v1249 = vld [vmem:[%s1245 + $0x18] sm:$0xff]
    %v1250 = vld [vmem:[%s1245 + $0x20] sm:$0xff]
    %v1251 = vld [vmem:[%s1245 + $0x28] sm:$0xff]
    %v1252 = vld [vmem:[%s1245 + $0x30] sm:$0xff]
    %v1253 = vld [vmem:[%s1245 + $0x38] sm:$0xff]
    %v1254 = vld [vmem:[%s1245 + $0x40] sm:$0xff]
    %v1255 = vld [vmem:[%s1245 + $0x48] sm:$0xff]
    %v1256 = vld [vmem:[%s1245 + $0x50] sm:$0xff]
    %v1257 = vld [vmem:[%s1245 + $0x58] sm:$0xff]
    %v1258 = vld [vmem:[%s1245 + $0x60] sm:$0xff]
    %v1259 = vld [vmem:[%s1245 + $0x68] sm:$0xff]
    %v1260 = vld [vmem:[%s1245 + $0x70] sm:$0xff]
    %v1261 = vld [vmem:[%s1245 + $0x78] sm:$0xff]
    %1262 = vmatprep.subr.mxu0 0.0
    %1263 = vmatpush1.msra.mxu0 %v1246
    %1264 = vmatprep.subr.mxu0 0.0
    %1265 = vmatpush1.msra.mxu0 %v1247
    %1266 = vmatprep.subr.mxu0 0.0
    %1267 = vmatpush1.msra.mxu0 %v1248
    %1268 = vmatprep.subr.mxu0 0.0
    %1269 = vmatpush1.msra.mxu0 %v1249
    %1270 = vmatprep.subr.mxu0 0.0
    %1271 = vmatpush1.msra.mxu0 %v1250
    %1272 = vmatprep.subr.mxu0 0.0
    %1273 = vmatpush1.msra.mxu0 %v1251
    %1274 = vmatprep.subr.mxu0 0.0
    %1275 = vmatpush1.msra.mxu0 %v1252
    %1276 = vmatprep.subr.mxu0 0.0
    %1277 = vmatpush1.msra.mxu0 %v1253
    %1278 = vmatprep.subr.mxu0 0.0
    %1279 = vmatpush1.msra.mxu0 %v1254
    %1280 = vmatprep.subr.mxu0 0.0
    %1281 = vmatpush1.msra.mxu0 %v1255
    %1282 = vmatprep.subr.mxu0 0.0
    %1283 = vmatpush1.msra.mxu0 %v1256
    %1284 = vmatprep.subr.mxu0 0.0
    %1285 = vmatpush1.msra.mxu0 %v1257
    %1286 = vmatprep.subr.mxu0 0.0
    %1287 = vmatpush1.msra.mxu0 %v1258
    %1288 = vmatprep.subr.mxu0 0.0
    %1289 = vmatpush1.msra.mxu0 %v1259
    %1290 = vmatprep.subr.mxu0 0.0
    %1291 = vmatpush1.msra.mxu0 %v1260
    %1292 = vmatprep.subr.mxu0 0.0
    %1293 = vmatpush1.msra.mxu0 %v1261
    %1294 = vmatprep.subr.mxu0 0.0
    %1295 = vmatpush1.msra.mxu0 0.0
    %1296 = vmatprep.subr.mxu0 0.0
    %1297 = vmatpush1.msra.mxu0 0.0
    %1298 = vmatprep.subr.mxu0 0.0
    %1299 = vmatpush1.msra.mxu0 0.0
    %1300 = vmatprep.subr.mxu0 0.0
    %1301 = vmatpush1.msra.mxu0 0.0
    %1302 = vmatprep.subr.mxu0 0.0
    %1303 = vmatpush1.msra.mxu0 0.0
    %1304 = vmatprep.subr.mxu0 0.0
    %1305 = vmatpush1.msra.mxu0 0.0
    %1306 = vmatprep.subr.mxu0 0.0
    %1307 = vmatpush1.msra.mxu0 0.0
    %1308 = vmatprep.subr.mxu0 0.0
    %1309 = vmatpush1.msra.mxu0 0.0
    %1310 = vmatprep.subr.mxu0 0.0
    %1311 = vmatpush1.msra.mxu0 0.0
    %1312 = vmatprep.subr.mxu0 0.0
    %1313 = vmatpush1.msra.mxu0 0.0
    %1314 = vmatprep.subr.mxu0 0.0
    %1315 = vmatpush1.msra.mxu0 0.0
    %1316 = vmatprep.subr.mxu0 0.0
    %1317 = vmatpush1.msra.mxu0 0.0
    %1318 = vmatprep.subr.mxu0 0.0
    %1319 = vmatpush1.msra.mxu0 0.0
    %1320 = vmatprep.subr.mxu0 0.0
    %1321 = vmatpush1.msra.mxu0 0.0
    %1322 = vmatprep.subr.mxu0 0.0
    %1323 = vmatpush1.msra.mxu0 0.0
    %1324 = vmatprep.subr.mxu0 0.0
    %1325 = vmatpush1.msra.mxu0 0.0
    %1326 = vmatprep.mubr.f32.mxu0 0.0
    %1327 = vmatmul.mubr.f32.gmra.mrb[0].mxu0 %v1181
    %v1328 = vpop.f32.mrb[0].mxu0
    %v1329 = vadd.f32 0.0, %v1328
    %v1330 = vpop.f32.mrb[0].mxu0
    %1331 = vmatprep.mubr.f32.mxu0 0.0
    %1332 = vmatmul.mubr.f32.gmra.mrb[0].mxu0 %v1182
    %v1333 = vpop.f32.mrb[0].mxu0
    %v1334 = vadd.f32 0.0, %v1333
    %v1335 = vpop.f32.mrb[0].mxu0
    %1336 = vmatprep.mubr.f32.mxu0 0.0
    %1337 = vmatmul.mubr.f32.gmra.mrb[0].mxu0 %v1183
    %v1338 = vpop.f32.mrb[0].mxu0
    %v1339 = vadd.f32 0.0, %v1338
    %v1340 = vpop.f32.mrb[0].mxu0
    %1341 = vmatprep.mubr.f32.mxu0 0.0
    %1342 = vmatmul.mubr.f32.gmra.mrb[0].mxu0 %v1184
    %v1343 = vpop.f32.mrb[0].mxu0
    %v1344 = vadd.f32 0.0, %v1343
    %v1345 = vpop.f32.mrb[0].mxu0
    %1346 = vmatprep.mubr.f32.mxu0 0.0
    %1347 = vmatmul.mubr.f32.gmra.mrb[0].mxu0 %v1185
    %v1348 = vpop.f32.mrb[0].mxu0
    %v1349 = vadd.f32 0.0, %v1348
    %v1350 = vpop.f32.mrb[0].mxu0
    %1351 = vmatprep.mubr.f32.mxu0 0.0
    %1352 = vmatmul.mubr.f32.gmra.mrb[0].mxu0 %v1186
    %v1353 = vpop.f32.mrb[0].mxu0
    %v1354 = vadd.f32 0.0, %v1353
    %v1355 = vpop.f32.mrb[0].mxu0
    %1356 = vmatprep.mubr.f32.mxu0 0.0
    %1357 = vmatmul.mubr.f32.gmra.mrb[0].mxu0 %v1187
    %v1358 = vpop.f32.mrb[0].mxu0
    %v1359 = vadd.f32 0.0, %v1358
    %v1360 = vpop.f32.mrb[0].mxu0
    %1361 = vmatprep.mubr.f32.mxu0 0.0
    %1362 = vmatmul.mubr.f32.gmra.mrb[0].mxu0 %v1188
    %v1363 = vpop.f32.mrb[0].mxu0
    %v1364 = vadd.f32 0.0, %v1363
    %v1365 = vpop.f32.mrb[0].mxu0
    %1366 = vmatprep.mubr.f32.mxu0 0.0
    %1367 = vmatmul.mubr.f32.gmra.mrb[0].mxu0 %v1189
    %v1368 = vpop.f32.mrb[0].mxu0
    %v1369 = vadd.f32 0.0, %v1368
    %v1370 = vpop.f32.mrb[0].mxu0
    %1371 = vmatprep.mubr.f32.mxu0 0.0
    %1372 = vmatmul.mubr.f32.gmra.mrb[0].mxu0 %v1190
    %v1373 = vpop.f32.mrb[0].mxu0
    %v1374 = vadd.f32 0.0, %v1373
    %v1375 = vpop.f32.mrb[0].mxu0
    %1376 = vmatprep.mubr.f32.mxu0 0.0
    %1377 = vmatmul.mubr.f32.gmra.mrb[0].mxu0 %v1191
    %v1378 = vpop.f32.mrb[0].mxu0
    %v1379 = vadd.f32 0.0, %v1378
    %v1380 = vpop.f32.mrb[0].mxu0
    %1381 = vmatprep.mubr.f32.mxu0 0.0
    %1382 = vmatmul.mubr.f32.gmra.mrb[0].mxu0 %v1192
    %v1383 = vpop.f32.mrb[0].mxu0
    %v1384 = vadd.f32 0.0, %v1383
    %v1385 = vpop.f32.mrb[0].mxu0
    %1386 = vmatprep.mubr.f32.mxu0 0.0
    %1387 = vmatmul.mubr.f32.gmra.mrb[0].mxu0 %v1193
    %v1388 = vpop.f32.mrb[0].mxu0
    %v1389 = vadd.f32 0.0, %v1388
    %v1390 = vpop.f32.mrb[0].mxu0
    %1391 = vmatprep.mubr.f32.mxu0 0.0
    %1392 = vmatmul.mubr.f32.gmra.mrb[0].mxu0 %v1194
    %v1393 = vpop.f32.mrb[0].mxu0
    %v1394 = vadd.f32 0.0, %v1393
    %v1395 = vpop.f32.mrb[0].mxu0
    %1396 = vmatprep.mubr.f32.mxu0 0.0
    %1397 = vmatmul.mubr.f32.gmra.mrb[0].mxu0 %v1195
    %v1398 = vpop.f32.mrb[0].mxu0
    %v1399 = vadd.f32 0.0, %v1398
    %v1400 = vpop.f32.mrb[0].mxu0
    %1401 = vmatprep.mubr.f32.mxu0 0.0
    %1402 = vmatmul.mubr.f32.gmra.mrb[0].mxu0 %v1196
    %v1403 = vpop.f32.mrb[0].mxu0
    %v1404 = vadd.f32 0.0, %v1403
    %v1405 = vpop.f32.mrb[0].mxu0
    %1406 = vmatprep.mubr.f32.mxu0 0.0
    %1407 = vmatmul.mubr.f32.gmra.mrb[0].mxu0 %v1197
    %v1408 = vpop.f32.mrb[0].mxu0
    %v1409 = vadd.f32 0.0, %v1408
    %v1410 = vpop.f32.mrb[0].mxu0
    %1411 = vmatprep.mubr.f32.mxu0 0.0
    %1412 = vmatmul.mubr.f32.gmra.mrb[0].mxu0 %v1198
    %v1413 = vpop.f32.mrb[0].mxu0
    %v1414 = vadd.f32 0.0, %v1413
    %v1415 = vpop.f32.mrb[0].mxu0
    %1416 = vmatprep.mubr.f32.mxu0 0.0
    %1417 = vmatmul.mubr.f32.gmra.mrb[0].mxu0 %v1199
    %v1418 = vpop.f32.mrb[0].mxu0
    %v1419 = vadd.f32 0.0, %v1418
    %v1420 = vpop.f32.mrb[0].mxu0
    %1421 = vmatprep.mubr.f32.mxu0 0.0
    %1422 = vmatmul.mubr.f32.gmra.mrb[0].mxu0 %v1200
    %v1423 = vpop.f32.mrb[0].mxu0
    %v1424 = vadd.f32 0.0, %v1423
    %v1425 = vpop.f32.mrb[0].mxu0
    %1426 = vmatprep.mubr.f32.mxu0 0.0
    %1427 = vmatmul.mubr.f32.gmra.mrb[0].mxu0 %v1201
    %v1428 = vpop.f32.mrb[0].mxu0
    %v1429 = vadd.f32 0.0, %v1428
    %v1430 = vpop.f32.mrb[0].mxu0
    %1431 = vmatprep.mubr.f32.mxu0 0.0
    %1432 = vmatmul.mubr.f32.gmra.mrb[0].mxu0 %v1202
    %v1433 = vpop.f32.mrb[0].mxu0
    %v1434 = vadd.f32 0.0, %v1433
    %v1435 = vpop.f32.mrb[0].mxu0
    %1436 = vmatprep.mubr.f32.mxu0 0.0
    %1437 = vmatmul.mubr.f32.gmra.mrb[0].mxu0 %v1203
    %v1438 = vpop.f32.mrb[0].mxu0
    %v1439 = vadd.f32 0.0, %v1438
    %v1440 = vpop.f32.mrb[0].mxu0
    %1441 = vmatprep.mubr.f32.mxu0 0.0
    %1442 = vmatmul.mubr.f32.gmra.mrb[0].mxu0 %v1204
    %v1443 = vpop.f32.mrb[0].mxu0
    %v1444 = vadd.f32 0.0, %v1443
    %v1445 = vpop.f32.mrb[0].mxu0
    %1446 = vmatprep.mubr.f32.mxu0 0.0
    %1447 = vmatmul.mubr.f32.gmra.mrb[0].mxu0 %v1205
    %v1448 = vpop.f32.mrb[0].mxu0
    %v1449 = vadd.f32 0.0, %v1448
    %v1450 = vpop.f32.mrb[0].mxu0
    %1451 = vmatprep.mubr.f32.mxu0 0.0
    %1452 = vmatmul.mubr.f32.gmra.mrb[0].mxu0 %v1206
    %v1453 = vpop.f32.mrb[0].mxu0
    %v1454 = vadd.f32 0.0, %v1453
    %v1455 = vpop.f32.mrb[0].mxu0
    %1456 = vmatprep.mubr.f32.mxu0 0.0
    %1457 = vmatmul.mubr.f32.gmra.mrb[0].mxu0 %v1207
    %v1458 = vpop.f32.mrb[0].mxu0
    %v1459 = vadd.f32 0.0, %v1458
    %v1460 = vpop.f32.mrb[0].mxu0
    %1461 = vmatprep.mubr.f32.mxu0 0.0
    %1462 = vmatmul.mubr.f32.gmra.mrb[0].mxu0 %v1208
    %v1463 = vpop.f32.mrb[0].mxu0
    %v1464 = vadd.f32 0.0, %v1463
    %v1465 = vpop.f32.mrb[0].mxu0
    %1466 = vmatprep.mubr.f32.mxu0 0.0
    %1467 = vmatmul.mubr.f32.gmra.mrb[0].mxu0 %v1209
    %v1468 = vpop.f32.mrb[0].mxu0
    %v1469 = vadd.f32 0.0, %v1468
    %v1470 = vpop.f32.mrb[0].mxu0
    %1471 = vmatprep.mubr.f32.mxu0 0.0
    %1472 = vmatmul.mubr.f32.gmra.mrb[0].mxu0 %v1210
    %v1473 = vpop.f32.mrb[0].mxu0
    %v1474 = vadd.f32 0.0, %v1473
    %v1475 = vpop.f32.mrb[0].mxu0
    %1476 = vmatprep.mubr.f32.mxu0 0.0
    %1477 = vmatmul.mubr.f32.gmra.mrb[0].mxu0 %v1211
    %v1478 = vpop.f32.mrb[0].mxu0
    %v1479 = vadd.f32 0.0, %v1478
    %v1480 = vpop.f32.mrb[0].mxu0
    %1481 = vmatprep.mubr.f32.mxu0 0.0
    %1482 = vmatmul.mubr.f32.gmra.mrb[0].mxu0 %v1212
    %v1483 = vpop.f32.mrb[0].mxu0
    %v1484 = vadd.f32 0.0, %v1483
    %v1485 = vpop.f32.mrb[0].mxu0
    %1486 = vmatprep.mubr.f32.mxu0 0.0
    %1487 = vmatmul.mubr.f32.gmra.mrb[0].mxu0 %v1213
    %v1488 = vpop.f32.mrb[0].mxu0
    %v1489 = vadd.f32 0.0, %v1488
    %v1490 = vpop.f32.mrb[0].mxu0
    %1491 = vmatprep.mubr.f32.mxu0 0.0
    %1492 = vmatmul.mubr.f32.gmra.mrb[0].mxu0 %v1214
    %v1493 = vpop.f32.mrb[0].mxu0
    %v1494 = vadd.f32 0.0, %v1493
    %v1495 = vpop.f32.mrb[0].mxu0
    %1496 = vmatprep.mubr.f32.mxu0 0.0
    %1497 = vmatmul.mubr.f32.gmra.mrb[0].mxu0 %v1215
    %v1498 = vpop.f32.mrb[0].mxu0
    %v1499 = vadd.f32 0.0, %v1498
    %v1500 = vpop.f32.mrb[0].mxu0
    %1501 = vmatprep.mubr.f32.mxu0 0.0
    %1502 = vmatmul.mubr.f32.gmra.mrb[0].mxu0 %v1216
    %v1503 = vpop.f32.mrb[0].mxu0
    %v1504 = vadd.f32 0.0, %v1503
    %v1505 = vpop.f32.mrb[0].mxu0
    %1506 = vmatprep.mubr.f32.mxu0 0.0
    %1507 = vmatmul.mubr.f32.gmra.mrb[0].mxu0 %v1217
    %v1508 = vpop.f32.mrb[0].mxu0
    %v1509 = vadd.f32 0.0, %v1508
    %v1510 = vpop.f32.mrb[0].mxu0
    %1511 = vmatprep.mubr.f32.mxu0 0.0
    %1512 = vmatmul.mubr.f32.gmra.mrb[0].mxu0 %v1218
    %v1513 = vpop.f32.mrb[0].mxu0
    %v1514 = vadd.f32 0.0, %v1513
    %v1515 = vpop.f32.mrb[0].mxu0
    %1516 = vmatprep.mubr.f32.mxu0 0.0
    %1517 = vmatmul.mubr.f32.gmra.mrb[0].mxu0 %v1219
    %v1518 = vpop.f32.mrb[0].mxu0
    %v1519 = vadd.f32 0.0, %v1518
    %v1520 = vpop.f32.mrb[0].mxu0
    %1521 = vmatprep.mubr.f32.mxu0 0.0
    %1522 = vmatmul.mubr.f32.gmra.mrb[0].mxu0 %v1220
    %v1523 = vpop.f32.mrb[0].mxu0
    %v1524 = vadd.f32 0.0, %v1523
    %v1525 = vpop.f32.mrb[0].mxu0
    %1526 = vmatprep.mubr.f32.mxu0 0.0
    %1527 = vmatmul.mubr.f32.gmra.mrb[0].mxu0 %v1221
    %v1528 = vpop.f32.mrb[0].mxu0
    %v1529 = vadd.f32 0.0, %v1528
    %v1530 = vpop.f32.mrb[0].mxu0
    %1531 = vmatprep.mubr.f32.mxu0 0.0
    %1532 = vmatmul.mubr.f32.gmra.mrb[0].mxu0 %v1222
    %v1533 = vpop.f32.mrb[0].mxu0
    %v1534 = vadd.f32 0.0, %v1533
    %v1535 = vpop.f32.mrb[0].mxu0
    %1536 = vmatprep.mubr.f32.mxu0 0.0
    %1537 = vmatmul.mubr.f32.gmra.mrb[0].mxu0 %v1223
    %v1538 = vpop.f32.mrb[0].mxu0
    %v1539 = vadd.f32 0.0, %v1538
    %v1540 = vpop.f32.mrb[0].mxu0
    %1541 = vmatprep.mubr.f32.mxu0 0.0
    %1542 = vmatmul.mubr.f32.gmra.mrb[0].mxu0 %v1224
    %v1543 = vpop.f32.mrb[0].mxu0
    %v1544 = vadd.f32 0.0, %v1543
    %v1545 = vpop.f32.mrb[0].mxu0
    %1546 = vmatprep.mubr.f32.mxu0 0.0
    %1547 = vmatmul.mubr.f32.gmra.mrb[0].mxu0 %v1225
    %v1548 = vpop.f32.mrb[0].mxu0
    %v1549 = vadd.f32 0.0, %v1548
    %v1550 = vpop.f32.mrb[0].mxu0
    %1551 = vmatprep.mubr.f32.mxu0 0.0
    %1552 = vmatmul.mubr.f32.gmra.mrb[0].mxu0 %v1226
    %v1553 = vpop.f32.mrb[0].mxu0
    %v1554 = vadd.f32 0.0, %v1553
    %v1555 = vpop.f32.mrb[0].mxu0
    %1556 = vmatprep.mubr.f32.mxu0 0.0
    %1557 = vmatmul.mubr.f32.gmra.mrb[0].mxu0 %v1227
    %v1558 = vpop.f32.mrb[0].mxu0
    %v1559 = vadd.f32 0.0, %v1558
    %v1560 = vpop.f32.mrb[0].mxu0
    %1561 = vmatprep.mubr.f32.mxu0 0.0
    %1562 = vmatmul.mubr.f32.gmra.mrb[0].mxu0 %v1228
    %v1563 = vpop.f32.mrb[0].mxu0
    %v1564 = vadd.f32 0.0, %v1563
    %v1565 = vpop.f32.mrb[0].mxu0
    %1566 = vmatprep.mubr.f32.mxu0 0.0
    %1567 = vmatmul.mubr.f32.gmra.mrb[0].mxu0 %v1229
    %v1568 = vpop.f32.mrb[0].mxu0
    %v1569 = vadd.f32 0.0, %v1568
    %v1570 = vpop.f32.mrb[0].mxu0
    %1571 = vmatprep.mubr.f32.mxu0 0.0
    %1572 = vmatmul.mubr.f32.gmra.mrb[0].mxu0 %v1230
    %v1573 = vpop.f32.mrb[0].mxu0
    %v1574 = vadd.f32 0.0, %v1573
    %v1575 = vpop.f32.mrb[0].mxu0
    %1576 = vmatprep.mubr.f32.mxu0 0.0
    %1577 = vmatmul.mubr.f32.gmra.mrb[0].mxu0 %v1231
    %v1578 = vpop.f32.mrb[0].mxu0
    %v1579 = vadd.f32 0.0, %v1578
    %v1580 = vpop.f32.mrb[0].mxu0
    %1581 = vmatprep.mubr.f32.mxu0 0.0
    %1582 = vmatmul.mubr.f32.gmra.mrb[0].mxu0 %v1232
    %v1583 = vpop.f32.mrb[0].mxu0
    %v1584 = vadd.f32 0.0, %v1583
    %v1585 = vpop.f32.mrb[0].mxu0
    %1586 = vmatprep.mubr.f32.mxu0 0.0
    %1587 = vmatmul.mubr.f32.gmra.mrb[0].mxu0 %v1233
    %v1588 = vpop.f32.mrb[0].mxu0
    %v1589 = vadd.f32 0.0, %v1588
    %v1590 = vpop.f32.mrb[0].mxu0
    %1591 = vmatprep.mubr.f32.mxu0 0.0
    %1592 = vmatmul.mubr.f32.gmra.mrb[0].mxu0 %v1234
    %v1593 = vpop.f32.mrb[0].mxu0
    %v1594 = vadd.f32 0.0, %v1593
    %v1595 = vpop.f32.mrb[0].mxu0
    %1596 = vmatprep.mubr.f32.mxu0 0.0
    %1597 = vmatmul.mubr.f32.gmra.mrb[0].mxu0 %v1235
    %v1598 = vpop.f32.mrb[0].mxu0
    %v1599 = vadd.f32 0.0, %v1598
    %v1600 = vpop.f32.mrb[0].mxu0
    %1601 = vmatprep.mubr.f32.mxu0 0.0
    %1602 = vmatmul.mubr.f32.gmra.mrb[0].mxu0 %v1236
    %v1603 = vpop.f32.mrb[0].mxu0
    %v1604 = vadd.f32 0.0, %v1603
    %v1605 = vpop.f32.mrb[0].mxu0
    %1606 = vmatprep.mubr.f32.mxu0 0.0
    %1607 = vmatmul.mubr.f32.gmra.mrb[0].mxu0 %v1237
    %v1608 = vpop.f32.mrb[0].mxu0
    %v1609 = vadd.f32 0.0, %v1608
    %v1610 = vpop.f32.mrb[0].mxu0
    %1611 = vmatprep.mubr.f32.mxu0 0.0
    %1612 = vmatmul.mubr.f32.gmra.mrb[0].mxu0 %v1238
    %v1613 = vpop.f32.mrb[0].mxu0
    %v1614 = vadd.f32 0.0, %v1613
    %v1615 = vpop.f32.mrb[0].mxu0
    %1616 = vmatprep.mubr.f32.mxu0 0.0
    %1617 = vmatmul.mubr.f32.gmra.mrb[0].mxu0 %v1239
    %v1618 = vpop.f32.mrb[0].mxu0
    %v1619 = vadd.f32 0.0, %v1618
    %v1620 = vpop.f32.mrb[0].mxu0
    %1621 = vmatprep.mubr.f32.mxu0 0.0
    %1622 = vmatmul.mubr.f32.gmra.mrb[0].mxu0 %v1240
    %v1623 = vpop.f32.mrb[0].mxu0
    %v1624 = vadd.f32 0.0, %v1623
    %v1625 = vpop.f32.mrb[0].mxu0
    %1626 = vmatprep.mubr.f32.mxu0 0.0
    %1627 = vmatmul.mubr.f32.gmra.mrb[0].mxu0 %v1241
    %v1628 = vpop.f32.mrb[0].mxu0
    %v1629 = vadd.f32 0.0, %v1628
    %v1630 = vpop.f32.mrb[0].mxu0
    %1631 = vmatprep.mubr.f32.mxu0 0.0
    %1632 = vmatmul.mubr.f32.gmra.mrb[0].mxu0 %v1242
    %v1633 = vpop.f32.mrb[0].mxu0
    %v1634 = vadd.f32 0.0, %v1633
    %v1635 = vpop.f32.mrb[0].mxu0
    %1636 = vmatprep.mubr.f32.mxu0 0.0
    %1637 = vmatmul.mubr.f32.gmra.mrb[0].mxu0 %v1243
    %v1638 = vpop.f32.mrb[0].mxu0
    %v1639 = vadd.f32 0.0, %v1638
    %v1640 = vpop.f32.mrb[0].mxu0
    %1641 = vmatprep.mubr.f32.mxu0 0.0
    %1642 = vmatmul.mubr.f32.gmra.mrb[0].mxu0 %v1244
    %v1643 = vpop.f32.mrb[0].mxu0
    %v1644 = vadd.f32 0.0, %v1643
    %v1645 = vpop.f32.mrb[0].mxu0
    %1646 = vdwg.mxu0
    %1647 = vmatprep.subr.mxu0 0.0
    %1648 = vmatpush1.msra.mxu0 %v1165
    %1649 = vmatprep.subr.mxu0 0.0
    %1650 = vmatpush1.msra.mxu0 %v1166
    %1651 = vmatprep.subr.mxu0 0.0
    %1652 = vmatpush1.msra.mxu0 %v1167
    %1653 = vmatprep.subr.mxu0 0.0
    %1654 = vmatpush1.msra.mxu0 %v1168
    %1655 = vmatprep.subr.mxu0 0.0
    %1656 = vmatpush1.msra.mxu0 %v1169
    %1657 = vmatprep.subr.mxu0 0.0
    %1658 = vmatpush1.msra.mxu0 %v1170
    %1659 = vmatprep.subr.mxu0 0.0
    %1660 = vmatpush1.msra.mxu0 %v1171
    %1661 = vmatprep.subr.mxu0 0.0
    %1662 = vmatpush1.msra.mxu0 %v1172
    %1663 = vmatprep.subr.mxu0 0.0
    %1664 = vmatpush1.msra.mxu0 %v1173
    %1665 = vmatprep.subr.mxu0 0.0
    %1666 = vmatpush1.msra.mxu0 %v1174
    %1667 = vmatprep.subr.mxu0 0.0
    %1668 = vmatpush1.msra.mxu0 %v1175
    %1669 = vmatprep.subr.mxu0 0.0
    %1670 = vmatpush1.msra.mxu0 %v1176
    %1671 = vmatprep.subr.mxu0 0.0
    %1672 = vmatpush1.msra.mxu0 %v1177
    %1673 = vmatprep.subr.mxu0 0.0
    %1674 = vmatpush1.msra.mxu0 %v1178
    %1675 = vmatprep.subr.mxu0 0.0
    %1676 = vmatpush1.msra.mxu0 %v1179
    %1677 = vmatprep.subr.mxu0 0.0
    %1678 = vmatpush1.msra.mxu0 %v1180
    %1679 = vmatprep.subr.mxu0 0.0
    %1680 = vmatpush1.msra.mxu0 0.0
    %1681 = vmatprep.subr.mxu0 0.0
    %1682 = vmatpush1.msra.mxu0 0.0
    %1683 = vmatprep.subr.mxu0 0.0
    %1684 = vmatpush1.msra.mxu0 0.0
    %1685 = vmatprep.subr.mxu0 0.0
    %1686 = vmatpush1.msra.mxu0 0.0
    %1687 = vmatprep.subr.mxu0 0.0
    %1688 = vmatpush1.msra.mxu0 0.0
    %1689 = vmatprep.subr.mxu0 0.0
    %1690 = vmatpush1.msra.mxu0 0.0
    %1691 = vmatprep.subr.mxu0 0.0
    %1692 = vmatpush1.msra.mxu0 0.0
    %1693 = vmatprep.subr.mxu0 0.0
    %1694 = vmatpush1.msra.mxu0 0.0
    %1695 = vmatprep.subr.mxu0 0.0
    %1696 = vmatpush1.msra.mxu0 0.0
    %1697 = vmatprep.subr.mxu0 0.0
    %1698 = vmatpush1.msra.mxu0 0.0
    %1699 = vmatprep.subr.mxu0 0.0
    %1700 = vmatpush1.msra.mxu0 0.0
    %1701 = vmatprep.subr.mxu0 0.0
    %1702 = vmatpush1.msra.mxu0 0.0
    %1703 = vmatprep.subr.mxu0 0.0
    %1704 = vmatpush1.msra.mxu0 0.0
    %1705 = vmatprep.subr.mxu0 0.0
    %1706 = vmatpush1.msra.mxu0 0.0
    %1707 = vmatprep.subr.mxu0 0.0
    %1708 = vmatpush1.msra.mxu0 0.0
    %1709 = vmatprep.subr.mxu0 0.0
    %1710 = vmatpush1.msra.mxu0 0.0
    %1711 = vmatprep.mubr.f32.mxu0 0.0
    %1712 = vmatmul.mubr.f32.gmra.mrb[0].mxu0 %v1101
    %v1713 = vpop.f32.mrb[0].mxu0
    %v1714 = vadd.f32 %v1329, %v1713
    %v1715 = vpop.f32.mrb[0].mxu0
    %1716 = vmatprep.mubr.f32.mxu0 0.0
    %1717 = vmatmul.mubr.f32.gmra.mrb[0].mxu0 %v1102
    %v1718 = vpop.f32.mrb[0].mxu0
    %v1719 = vadd.f32 %v1334, %v1718
    %v1720 = vpop.f32.mrb[0].mxu0
    %1721 = vmatprep.mubr.f32.mxu0 0.0
    %1722 = vmatmul.mubr.f32.gmra.mrb[0].mxu0 %v1103
    %v1723 = vpop.f32.mrb[0].mxu0
    %v1724 = vadd.f32 %v1339, %v1723
    %v1725 = vpop.f32.mrb[0].mxu0
    %1726 = vmatprep.mubr.f32.mxu0 0.0
    %1727 = vmatmul.mubr.f32.gmra.mrb[0].mxu0 %v1104
    %v1728 = vpop.f32.mrb[0].mxu0
    %v1729 = vadd.f32 %v1344, %v1728
    %v1730 = vpop.f32.mrb[0].mxu0
    %1731 = vmatprep.mubr.f32.mxu0 0.0
    %1732 = vmatmul.mubr.f32.gmra.mrb[0].mxu0 %v1105
    %v1733 = vpop.f32.mrb[0].mxu0
    %v1734 = vadd.f32 %v1349, %v1733
    %v1735 = vpop.f32.mrb[0].mxu0
    %1736 = vmatprep.mubr.f32.mxu0 0.0
    %1737 = vmatmul.mubr.f32.gmra.mrb[0].mxu0 %v1106
    %v1738 = vpop.f32.mrb[0].mxu0
    %v1739 = vadd.f32 %v1354, %v1738
    %v1740 = vpop.f32.mrb[0].mxu0
    %1741 = vmatprep.mubr.f32.mxu0 0.0
    %1742 = vmatmul.mubr.f32.gmra.mrb[0].mxu0 %v1107
    %v1743 = vpop.f32.mrb[0].mxu0
    %v1744 = vadd.f32 %v1359, %v1743
    %v1745 = vpop.f32.mrb[0].mxu0
    %1746 = vmatprep.mubr.f32.mxu0 0.0
    %1747 = vmatmul.mubr.f32.gmra.mrb[0].mxu0 %v1108
    %v1748 = vpop.f32.mrb[0].mxu0
    %v1749 = vadd.f32 %v1364, %v1748
    %v1750 = vpop.f32.mrb[0].mxu0
    %1751 = vmatprep.mubr.f32.mxu0 0.0
    %1752 = vmatmul.mubr.f32.gmra.mrb[0].mxu0 %v1109
    %v1753 = vpop.f32.mrb[0].mxu0
    %v1754 = vadd.f32 %v1369, %v1753
    %v1755 = vpop.f32.mrb[0].mxu0
    %1756 = vmatprep.mubr.f32.mxu0 0.0
    %1757 = vmatmul.mubr.f32.gmra.mrb[0].mxu0 %v1110
    %v1758 = vpop.f32.mrb[0].mxu0
    %v1759 = vadd.f32 %v1374, %v1758
    %v1760 = vpop.f32.mrb[0].mxu0
    %1761 = vmatprep.mubr.f32.mxu0 0.0
    %1762 = vmatmul.mubr.f32.gmra.mrb[0].mxu0 %v1111
    %v1763 = vpop.f32.mrb[0].mxu0
    %v1764 = vadd.f32 %v1379, %v1763
    %v1765 = vpop.f32.mrb[0].mxu0
    %1766 = vmatprep.mubr.f32.mxu0 0.0
    %1767 = vmatmul.mubr.f32.gmra.mrb[0].mxu0 %v1112
    %v1768 = vpop.f32.mrb[0].mxu0
    %v1769 = vadd.f32 %v1384, %v1768
    %v1770 = vpop.f32.mrb[0].mxu0
    %1771 = vmatprep.mubr.f32.mxu0 0.0
    %1772 = vmatmul.mubr.f32.gmra.mrb[0].mxu0 %v1113
    %v1773 = vpop.f32.mrb[0].mxu0
    %v1774 = vadd.f32 %v1389, %v1773
    %v1775 = vpop.f32.mrb[0].mxu0
    %1776 = vmatprep.mubr.f32.mxu0 0.0
    %1777 = vmatmul.mubr.f32.gmra.mrb[0].mxu0 %v1114
    %v1778 = vpop.f32.mrb[0].mxu0
    %v1779 = vadd.f32 %v1394, %v1778
    %v1780 = vpop.f32.mrb[0].mxu0
    %1781 = vmatprep.mubr.f32.mxu0 0.0
    %1782 = vmatmul.mubr.f32.gmra.mrb[0].mxu0 %v1115
    %v1783 = vpop.f32.mrb[0].mxu0
    %v1784 = vadd.f32 %v1399, %v1783
    %v1785 = vpop.f32.mrb[0].mxu0
    %1786 = vmatprep.mubr.f32.mxu0 0.0
    %1787 = vmatmul.mubr.f32.gmra.mrb[0].mxu0 %v1116
    %v1788 = vpop.f32.mrb[0].mxu0
    %v1789 = vadd.f32 %v1404, %v1788
    %v1790 = vpop.f32.mrb[0].mxu0
    %1791 = vmatprep.mubr.f32.mxu0 0.0
    %1792 = vmatmul.mubr.f32.gmra.mrb[0].mxu0 %v1117
    %v1793 = vpop.f32.mrb[0].mxu0
    %v1794 = vadd.f32 %v1409, %v1793
    %v1795 = vpop.f32.mrb[0].mxu0
    %1796 = vmatprep.mubr.f32.mxu0 0.0
    %1797 = vmatmul.mubr.f32.gmra.mrb[0].mxu0 %v1118
    %v1798 = vpop.f32.mrb[0].mxu0
    %v1799 = vadd.f32 %v1414, %v1798
    %v1800 = vpop.f32.mrb[0].mxu0
    %1801 = vmatprep.mubr.f32.mxu0 0.0
    %1802 = vmatmul.mubr.f32.gmra.mrb[0].mxu0 %v1119
    %v1803 = vpop.f32.mrb[0].mxu0
    %v1804 = vadd.f32 %v1419, %v1803
    %v1805 = vpop.f32.mrb[0].mxu0
    %1806 = vmatprep.mubr.f32.mxu0 0.0
    %1807 = vmatmul.mubr.f32.gmra.mrb[0].mxu0 %v1120
    %v1808 = vpop.f32.mrb[0].mxu0
    %v1809 = vadd.f32 %v1424, %v1808
    %v1810 = vpop.f32.mrb[0].mxu0
    %1811 = vmatprep.mubr.f32.mxu0 0.0
    %1812 = vmatmul.mubr.f32.gmra.mrb[0].mxu0 %v1121
    %v1813 = vpop.f32.mrb[0].mxu0
    %v1814 = vadd.f32 %v1429, %v1813
    %v1815 = vpop.f32.mrb[0].mxu0
    %1816 = vmatprep.mubr.f32.mxu0 0.0
    %1817 = vmatmul.mubr.f32.gmra.mrb[0].mxu0 %v1122
    %v1818 = vpop.f32.mrb[0].mxu0
    %v1819 = vadd.f32 %v1434, %v1818
    %v1820 = vpop.f32.mrb[0].mxu0
    %1821 = vmatprep.mubr.f32.mxu0 0.0
    %1822 = vmatmul.mubr.f32.gmra.mrb[0].mxu0 %v1123
    %v1823 = vpop.f32.mrb[0].mxu0
    %v1824 = vadd.f32 %v1439, %v1823
    %v1825 = vpop.f32.mrb[0].mxu0
    %1826 = vmatprep.mubr.f32.mxu0 0.0
    %1827 = vmatmul.mubr.f32.gmra.mrb[0].mxu0 %v1124
    %v1828 = vpop.f32.mrb[0].mxu0
    %v1829 = vadd.f32 %v1444, %v1828
    %v1830 = vpop.f32.mrb[0].mxu0
    %1831 = vmatprep.mubr.f32.mxu0 0.0
    %1832 = vmatmul.mubr.f32.gmra.mrb[0].mxu0 %v1125
    %v1833 = vpop.f32.mrb[0].mxu0
    %v1834 = vadd.f32 %v1449, %v1833
    %v1835 = vpop.f32.mrb[0].mxu0
    %1836 = vmatprep.mubr.f32.mxu0 0.0
    %1837 = vmatmul.mubr.f32.gmra.mrb[0].mxu0 %v1126
    %v1838 = vpop.f32.mrb[0].mxu0
    %v1839 = vadd.f32 %v1454, %v1838
    %v1840 = vpop.f32.mrb[0].mxu0
    %1841 = vmatprep.mubr.f32.mxu0 0.0
    %1842 = vmatmul.mubr.f32.gmra.mrb[0].mxu0 %v1127
    %v1843 = vpop.f32.mrb[0].mxu0
    %v1844 = vadd.f32 %v1459, %v1843
    %v1845 = vpop.f32.mrb[0].mxu0
    %1846 = vmatprep.mubr.f32.mxu0 0.0
    %1847 = vmatmul.mubr.f32.gmra.mrb[0].mxu0 %v1128
    %v1848 = vpop.f32.mrb[0].mxu0
    %v1849 = vadd.f32 %v1464, %v1848
    %v1850 = vpop.f32.mrb[0].mxu0
    %1851 = vmatprep.mubr.f32.mxu0 0.0
    %1852 = vmatmul.mubr.f32.gmra.mrb[0].mxu0 %v1129
    %v1853 = vpop.f32.mrb[0].mxu0
    %v1854 = vadd.f32 %v1469, %v1853
    %v1855 = vpop.f32.mrb[0].mxu0
    %1856 = vmatprep.mubr.f32.mxu0 0.0
    %1857 = vmatmul.mubr.f32.gmra.mrb[0].mxu0 %v1130
    %v1858 = vpop.f32.mrb[0].mxu0
    %v1859 = vadd.f32 %v1474, %v1858
    %v1860 = vpop.f32.mrb[0].mxu0
    %1861 = vmatprep.mubr.f32.mxu0 0.0
    %1862 = vmatmul.mubr.f32.gmra.mrb[0].mxu0 %v1131
    %v1863 = vpop.f32.mrb[0].mxu0
    %v1864 = vadd.f32 %v1479, %v1863
    %v1865 = vpop.f32.mrb[0].mxu0
    %1866 = vmatprep.mubr.f32.mxu0 0.0
    %1867 = vmatmul.mubr.f32.gmra.mrb[0].mxu0 %v1132
    %v1868 = vpop.f32.mrb[0].mxu0
    %v1869 = vadd.f32 %v1484, %v1868
    %v1870 = vpop.f32.mrb[0].mxu0
    %1871 = vmatprep.mubr.f32.mxu0 0.0
    %1872 = vmatmul.mubr.f32.gmra.mrb[0].mxu0 %v1133
    %v1873 = vpop.f32.mrb[0].mxu0
    %v1874 = vadd.f32 %v1489, %v1873
    %v1875 = vpop.f32.mrb[0].mxu0
    %1876 = vmatprep.mubr.f32.mxu0 0.0
    %1877 = vmatmul.mubr.f32.gmra.mrb[0].mxu0 %v1134
    %v1878 = vpop.f32.mrb[0].mxu0
    %v1879 = vadd.f32 %v1494, %v1878
    %v1880 = vpop.f32.mrb[0].mxu0
    %1881 = vmatprep.mubr.f32.mxu0 0.0
    %1882 = vmatmul.mubr.f32.gmra.mrb[0].mxu0 %v1135
    %v1883 = vpop.f32.mrb[0].mxu0
    %v1884 = vadd.f32 %v1499, %v1883
    %v1885 = vpop.f32.mrb[0].mxu0
    %1886 = vmatprep.mubr.f32.mxu0 0.0
    %1887 = vmatmul.mubr.f32.gmra.mrb[0].mxu0 %v1136
    %v1888 = vpop.f32.mrb[0].mxu0
    %v1889 = vadd.f32 %v1504, %v1888
    %v1890 = vpop.f32.mrb[0].mxu0
    %1891 = vmatprep.mubr.f32.mxu0 0.0
    %1892 = vmatmul.mubr.f32.gmra.mrb[0].mxu0 %v1137
    %v1893 = vpop.f32.mrb[0].mxu0
    %v1894 = vadd.f32 %v1509, %v1893
    %v1895 = vpop.f32.mrb[0].mxu0
    %1896 = vmatprep.mubr.f32.mxu0 0.0
    %1897 = vmatmul.mubr.f32.gmra.mrb[0].mxu0 %v1138
    %v1898 = vpop.f32.mrb[0].mxu0
    %v1899 = vadd.f32 %v1514, %v1898
    %v1900 = vpop.f32.mrb[0].mxu0
    %1901 = vmatprep.mubr.f32.mxu0 0.0
    %1902 = vmatmul.mubr.f32.gmra.mrb[0].mxu0 %v1139
    %v1903 = vpop.f32.mrb[0].mxu0
    %v1904 = vadd.f32 %v1519, %v1903
    %v1905 = vpop.f32.mrb[0].mxu0
    %1906 = vmatprep.mubr.f32.mxu0 0.0
    %1907 = vmatmul.mubr.f32.gmra.mrb[0].mxu0 %v1140
    %v1908 = vpop.f32.mrb[0].mxu0
    %v1909 = vadd.f32 %v1524, %v1908
    %v1910 = vpop.f32.mrb[0].mxu0
    %1911 = vmatprep.mubr.f32.mxu0 0.0
    %1912 = vmatmul.mubr.f32.gmra.mrb[0].mxu0 %v1141
    %v1913 = vpop.f32.mrb[0].mxu0
    %v1914 = vadd.f32 %v1529, %v1913
    %v1915 = vpop.f32.mrb[0].mxu0
    %1916 = vmatprep.mubr.f32.mxu0 0.0
    %1917 = vmatmul.mubr.f32.gmra.mrb[0].mxu0 %v1142
    %v1918 = vpop.f32.mrb[0].mxu0
    %v1919 = vadd.f32 %v1534, %v1918
    %v1920 = vpop.f32.mrb[0].mxu0
    %1921 = vmatprep.mubr.f32.mxu0 0.0
    %1922 = vmatmul.mubr.f32.gmra.mrb[0].mxu0 %v1143
    %v1923 = vpop.f32.mrb[0].mxu0
    %v1924 = vadd.f32 %v1539, %v1923
    %v1925 = vpop.f32.mrb[0].mxu0
    %1926 = vmatprep.mubr.f32.mxu0 0.0
    %1927 = vmatmul.mubr.f32.gmra.mrb[0].mxu0 %v1144
    %v1928 = vpop.f32.mrb[0].mxu0
    %v1929 = vadd.f32 %v1544, %v1928
    %v1930 = vpop.f32.mrb[0].mxu0
    %1931 = vmatprep.mubr.f32.mxu0 0.0
    %1932 = vmatmul.mubr.f32.gmra.mrb[0].mxu0 %v1145
    %v1933 = vpop.f32.mrb[0].mxu0
    %v1934 = vadd.f32 %v1549, %v1933
    %v1935 = vpop.f32.mrb[0].mxu0
    %1936 = vmatprep.mubr.f32.mxu0 0.0
    %1937 = vmatmul.mubr.f32.gmra.mrb[0].mxu0 %v1146
    %v1938 = vpop.f32.mrb[0].mxu0
    %v1939 = vadd.f32 %v1554, %v1938
    %v1940 = vpop.f32.mrb[0].mxu0
    %1941 = vmatprep.mubr.f32.mxu0 0.0
    %1942 = vmatmul.mubr.f32.gmra.mrb[0].mxu0 %v1147
    %v1943 = vpop.f32.mrb[0].mxu0
    %v1944 = vadd.f32 %v1559, %v1943
    %v1945 = vpop.f32.mrb[0].mxu0
    %1946 = vmatprep.mubr.f32.mxu0 0.0
    %1947 = vmatmul.mubr.f32.gmra.mrb[0].mxu0 %v1148
    %v1948 = vpop.f32.mrb[0].mxu0
    %v1949 = vadd.f32 %v1564, %v1948
    %v1950 = vpop.f32.mrb[0].mxu0
    %1951 = vmatprep.mubr.f32.mxu0 0.0
    %1952 = vmatmul.mubr.f32.gmra.mrb[0].mxu0 %v1149
    %v1953 = vpop.f32.mrb[0].mxu0
    %v1954 = vadd.f32 %v1569, %v1953
    %v1955 = vpop.f32.mrb[0].mxu0
    %1956 = vmatprep.mubr.f32.mxu0 0.0
    %1957 = vmatmul.mubr.f32.gmra.mrb[0].mxu0 %v1150
    %v1958 = vpop.f32.mrb[0].mxu0
    %v1959 = vadd.f32 %v1574, %v1958
    %v1960 = vpop.f32.mrb[0].mxu0
    %1961 = vmatprep.mubr.f32.mxu0 0.0
    %1962 = vmatmul.mubr.f32.gmra.mrb[0].mxu0 %v1151
    %v1963 = vpop.f32.mrb[0].mxu0
    %v1964 = vadd.f32 %v1579, %v1963
    %v1965 = vpop.f32.mrb[0].mxu0
    %1966 = vmatprep.mubr.f32.mxu0 0.0
    %1967 = vmatmul.mubr.f32.gmra.mrb[0].mxu0 %v1152
    %v1968 = vpop.f32.mrb[0].mxu0
    %v1969 = vadd.f32 %v1584, %v1968
    %v1970 = vpop.f32.mrb[0].mxu0
    %1971 = vmatprep.mubr.f32.mxu0 0.0
    %1972 = vmatmul.mubr.f32.gmra.mrb[0].mxu0 %v1153
    %v1973 = vpop.f32.mrb[0].mxu0
    %v1974 = vadd.f32 %v1589, %v1973
    %v1975 = vpop.f32.mrb[0].mxu0
    %1976 = vmatprep.mubr.f32.mxu0 0.0
    %1977 = vmatmul.mubr.f32.gmra.mrb[0].mxu0 %v1154
    %v1978 = vpop.f32.mrb[0].mxu0
    %v1979 = vadd.f32 %v1594, %v1978
    %v1980 = vpop.f32.mrb[0].mxu0
    %1981 = vmatprep.mubr.f32.mxu0 0.0
    %1982 = vmatmul.mubr.f32.gmra.mrb[0].mxu0 %v1155
    %v1983 = vpop.f32.mrb[0].mxu0
    %v1984 = vadd.f32 %v1599, %v1983
    %v1985 = vpop.f32.mrb[0].mxu0
    %1986 = vmatprep.mubr.f32.mxu0 0.0
    %1987 = vmatmul.mubr.f32.gmra.mrb[0].mxu0 %v1156
    %v1988 = vpop.f32.mrb[0].mxu0
    %v1989 = vadd.f32 %v1604, %v1988
    %v1990 = vpop.f32.mrb[0].mxu0
    %1991 = vmatprep.mubr.f32.mxu0 0.0
    %1992 = vmatmul.mubr.f32.gmra.mrb[0].mxu0 %v1157
    %v1993 = vpop.f32.mrb[0].mxu0
    %v1994 = vadd.f32 %v1609, %v1993
    %v1995 = vpop.f32.mrb[0].mxu0
    %1996 = vmatprep.mubr.f32.mxu0 0.0
    %1997 = vmatmul.mubr.f32.gmra.mrb[0].mxu0 %v1158
    %v1998 = vpop.f32.mrb[0].mxu0
    %v1999 = vadd.f32 %v1614, %v1998
    %v2000 = vpop.f32.mrb[0].mxu0
    %2001 = vmatprep.mubr.f32.mxu0 0.0
    %2002 = vmatmul.mubr.f32.gmra.mrb[0].mxu0 %v1159
    %v2003 = vpop.f32.mrb[0].mxu0
    %v2004 = vadd.f32 %v1619, %v2003
    %v2005 = vpop.f32.mrb[0].mxu0
    %2006 = vmatprep.mubr.f32.mxu0 0.0
    %2007 = vmatmul.mubr.f32.gmra.mrb[0].mxu0 %v1160
    %v2008 = vpop.f32.mrb[0].mxu0
    %v2009 = vadd.f32 %v1624, %v2008
    %v2010 = vpop.f32.mrb[0].mxu0
    %2011 = vmatprep.mubr.f32.mxu0 0.0
    %2012 = vmatmul.mubr.f32.gmra.mrb[0].mxu0 %v1161
    %v2013 = vpop.f32.mrb[0].mxu0
    %v2014 = vadd.f32 %v1629, %v2013
    %v2015 = vpop.f32.mrb[0].mxu0
    %2016 = vmatprep.mubr.f32.mxu0 0.0
    %2017 = vmatmul.mubr.f32.gmra.mrb[0].mxu0 %v1162
    %v2018 = vpop.f32.mrb[0].mxu0
    %v2019 = vadd.f32 %v1634, %v2018
    %v2020 = vpop.f32.mrb[0].mxu0
    %2021 = vmatprep.mubr.f32.mxu0 0.0
    %2022 = vmatmul.mubr.f32.gmra.mrb[0].mxu0 %v1163
    %v2023 = vpop.f32.mrb[0].mxu0
    %v2024 = vadd.f32 %v1639, %v2023
    %v2025 = vpop.f32.mrb[0].mxu0
    %2026 = vmatprep.mubr.f32.mxu0 0.0
    %2027 = vmatmul.mubr.f32.gmra.mrb[0].mxu0 %v1164
    %v2028 = vpop.f32.mrb[0].mxu0
    %v2029 = vadd.f32 %v1644, %v2028
    %v2030 = vpop.f32.mrb[0].mxu0
    %2031 = vdwg.mxu0
    %v2032 = vld [vmem:[#allocation2 + $0x2] sm:$0xff]
    %v2033 = vld [vmem:[#allocation2 + $0xa] sm:$0xff]
    %v2034 = vld [vmem:[#allocation2 + $0x1a] sm:$0xff]
    %v2035 = vld [vmem:[#allocation2 + $0x22] sm:$0xff]
    %v2036 = vld [vmem:[#allocation2 + $0x32] sm:$0xff]
    %v2037 = vld [vmem:[#allocation2 + $0x3a] sm:$0xff]
    %v2038 = vld [vmem:[#allocation2 + $0x4a] sm:$0xff]
    %v2039 = vld [vmem:[#allocation2 + $0x52] sm:$0xff]
    %v2040 = vld [vmem:[#allocation2 + $0x62] sm:$0xff]
    %v2041 = vld [vmem:[#allocation2 + $0x6a] sm:$0xff]
    %v2042 = vld [vmem:[#allocation2 + $0x7a] sm:$0xff]
    %v2043 = vld [vmem:[#allocation2 + $0x82] sm:$0xff]
    %v2044 = vld [vmem:[#allocation2 + $0x92] sm:$0xff]
    %v2045 = vld [vmem:[#allocation2 + $0x9a] sm:$0xff]
    %v2046 = vld [vmem:[#allocation2 + $0xaa] sm:$0xff]
    %v2047 = vld [vmem:[#allocation2 + $0xb2] sm:$0xff]
    %v2048 = vld [vmem:[#allocation2 + $0xc2] sm:$0xff]
    %v2049 = vld [vmem:[#allocation2 + $0xca] sm:$0xff]
    %v2050 = vld [vmem:[#allocation2 + $0xda] sm:$0xff]
    %v2051 = vld [vmem:[#allocation2 + $0xe2] sm:$0xff]
    %v2052 = vld [vmem:[#allocation2 + $0xf2] sm:$0xff]
    %v2053 = vld [vmem:[#allocation2 + $0xfa] sm:$0xff]
    %v2054 = vld [vmem:[#allocation2 + $0x10a] sm:$0xff]
    %v2055 = vld [vmem:[#allocation2 + $0x112] sm:$0xff]
    %v2056 = vld [vmem:[#allocation2 + $0x122] sm:$0xff]
    %v2057 = vld [vmem:[#allocation2 + $0x12a] sm:$0xff]
    %v2058 = vld [vmem:[#allocation2 + $0x13a] sm:$0xff]
    %v2059 = vld [vmem:[#allocation2 + $0x142] sm:$0xff]
    %v2060 = vld [vmem:[#allocation2 + $0x152] sm:$0xff]
    %v2061 = vld [vmem:[#allocation2 + $0x15a] sm:$0xff]
    %v2062 = vld [vmem:[#allocation2 + $0x16a] sm:$0xff]
    %v2063 = vld [vmem:[#allocation2 + $0x172] sm:$0xff]
    %v2064 = vld [vmem:[#allocation2 + $0x1b2] sm:$0xff]
    %v2065 = vld [vmem:[#allocation2 + $0x1ba] sm:$0xff]
    %v2066 = vld [vmem:[#allocation2 + $0x1ca] sm:$0xff]
    %v2067 = vld [vmem:[#allocation2 + $0x1d2] sm:$0xff]
    %v2068 = vld [vmem:[#allocation2 + $0x1e2] sm:$0xff]
    %v2069 = vld [vmem:[#allocation2 + $0x1ea] sm:$0xff]
    %v2070 = vld [vmem:[#allocation2 + $0x1fa] sm:$0xff]
    %v2071 = vld [vmem:[#allocation2 + $0x202] sm:$0xff]
    %v2072 = vld [vmem:[#allocation2 + $0x212] sm:$0xff]
    %v2073 = vld [vmem:[#allocation2 + $0x21a] sm:$0xff]
    %v2074 = vld [vmem:[#allocation2 + $0x22a] sm:$0xff]
    %v2075 = vld [vmem:[#allocation2 + $0x232] sm:$0xff]
    %v2076 = vld [vmem:[#allocation2 + $0x242] sm:$0xff]
    %v2077 = vld [vmem:[#allocation2 + $0x24a] sm:$0xff]
    %v2078 = vld [vmem:[#allocation2 + $0x25a] sm:$0xff]
    %v2079 = vld [vmem:[#allocation2 + $0x262] sm:$0xff]
    %v2080 = vld [vmem:[#allocation2 + $0x272] sm:$0xff]
    %v2081 = vld [vmem:[#allocation2 + $0x27a] sm:$0xff]
    %v2082 = vld [vmem:[#allocation2 + $0x28a] sm:$0xff]
    %v2083 = vld [vmem:[#allocation2 + $0x292] sm:$0xff]
    %v2084 = vld [vmem:[#allocation2 + $0x2a2] sm:$0xff]
    %v2085 = vld [vmem:[#allocation2 + $0x2aa] sm:$0xff]
    %v2086 = vld [vmem:[#allocation2 + $0x2ba] sm:$0xff]
    %v2087 = vld [vmem:[#allocation2 + $0x2c2] sm:$0xff]
    %v2088 = vld [vmem:[#allocation2 + $0x2d2] sm:$0xff]
    %v2089 = vld [vmem:[#allocation2 + $0x2da] sm:$0xff]
    %v2090 = vld [vmem:[#allocation2 + $0x2ea] sm:$0xff]
    %v2091 = vld [vmem:[#allocation2 + $0x2f2] sm:$0xff]
    %v2092 = vld [vmem:[#allocation2 + $0x302] sm:$0xff]
    %v2093 = vld [vmem:[#allocation2 + $0x30a] sm:$0xff]
    %v2094 = vld [vmem:[#allocation2 + $0x31a] sm:$0xff]
    %v2095 = vld [vmem:[#allocation2 + $0x322] sm:$0xff]
    %s2096 = scalar_lea.vmem [#allocation8], 256
    %v2097 = vld [vmem:[%s2096] sm:$0xff]
    %v2098 = vld [vmem:[%s2096 + $0x8] sm:$0xff]
    %v2099 = vld [vmem:[%s2096 + $0x10] sm:$0xff]
    %v2100 = vld [vmem:[%s2096 + $0x18] sm:$0xff]
    %v2101 = vld [vmem:[%s2096 + $0x20] sm:$0xff]
    %v2102 = vld [vmem:[%s2096 + $0x28] sm:$0xff]
    %v2103 = vld [vmem:[%s2096 + $0x30] sm:$0xff]
    %v2104 = vld [vmem:[%s2096 + $0x38] sm:$0xff]
    %v2105 = vld [vmem:[%s2096 + $0x40] sm:$0xff]
    %v2106 = vld [vmem:[%s2096 + $0x48] sm:$0xff]
    %v2107 = vld [vmem:[%s2096 + $0x50] sm:$0xff]
    %v2108 = vld [vmem:[%s2096 + $0x58] sm:$0xff]
    %v2109 = vld [vmem:[%s2096 + $0x60] sm:$0xff]
    %v2110 = vld [vmem:[%s2096 + $0x68] sm:$0xff]
    %v2111 = vld [vmem:[%s2096 + $0x70] sm:$0xff]
    %v2112 = vld [vmem:[%s2096 + $0x78] sm:$0xff]
    %2113 = vmatprep.subr.mxu0 0.0
    %2114 = vmatpush1.msra.mxu0 %v2097
    %2115 = vmatprep.subr.mxu0 0.0
    %2116 = vmatpush1.msra.mxu0 %v2098
    %2117 = vmatprep.subr.mxu0 0.0
    %2118 = vmatpush1.msra.mxu0 %v2099
    %2119 = vmatprep.subr.mxu0 0.0
    %2120 = vmatpush1.msra.mxu0 %v2100
    %2121 = vmatprep.subr.mxu0 0.0
    %2122 = vmatpush1.msra.mxu0 %v2101
    %2123 = vmatprep.subr.mxu0 0.0
    %2124 = vmatpush1.msra.mxu0 %v2102
    %2125 = vmatprep.subr.mxu0 0.0
    %2126 = vmatpush1.msra.mxu0 %v2103
    %2127 = vmatprep.subr.mxu0 0.0
    %2128 = vmatpush1.msra.mxu0 %v2104
    %2129 = vmatprep.subr.mxu0 0.0
    %2130 = vmatpush1.msra.mxu0 %v2105
    %2131 = vmatprep.subr.mxu0 0.0
    %2132 = vmatpush1.msra.mxu0 %v2106
    %2133 = vmatprep.subr.mxu0 0.0
    %2134 = vmatpush1.msra.mxu0 %v2107
    %2135 = vmatprep.subr.mxu0 0.0
    %2136 = vmatpush1.msra.mxu0 %v2108
    %2137 = vmatprep.subr.mxu0 0.0
    %2138 = vmatpush1.msra.mxu0 %v2109
    %2139 = vmatprep.subr.mxu0 0.0
    %2140 = vmatpush1.msra.mxu0 %v2110
    %2141 = vmatprep.subr.mxu0 0.0
    %2142 = vmatpush1.msra.mxu0 %v2111
    %2143 = vmatprep.subr.mxu0 0.0
    %2144 = vmatpush1.msra.mxu0 %v2112
    %2145 = vmatprep.subr.mxu0 0.0
    %2146 = vmatpush1.msra.mxu0 0.0
    %2147 = vmatprep.subr.mxu0 0.0
    %2148 = vmatpush1.msra.mxu0 0.0
    %2149 = vmatprep.subr.mxu0 0.0
    %2150 = vmatpush1.msra.mxu0 0.0
    %2151 = vmatprep.subr.mxu0 0.0
    %2152 = vmatpush1.msra.mxu0 0.0
    %2153 = vmatprep.subr.mxu0 0.0
    %2154 = vmatpush1.msra.mxu0 0.0
    %2155 = vmatprep.subr.mxu0 0.0
    %2156 = vmatpush1.msra.mxu0 0.0
    %2157 = vmatprep.subr.mxu0 0.0
    %2158 = vmatpush1.msra.mxu0 0.0
    %2159 = vmatprep.subr.mxu0 0.0
    %2160 = vmatpush1.msra.mxu0 0.0
    %2161 = vmatprep.subr.mxu0 0.0
    %2162 = vmatpush1.msra.mxu0 0.0
    %2163 = vmatprep.subr.mxu0 0.0
    %2164 = vmatpush1.msra.mxu0 0.0
    %2165 = vmatprep.subr.mxu0 0.0
    %2166 = vmatpush1.msra.mxu0 0.0
    %2167 = vmatprep.subr.mxu0 0.0
    %2168 = vmatpush1.msra.mxu0 0.0
    %2169 = vmatprep.subr.mxu0 0.0
    %2170 = vmatpush1.msra.mxu0 0.0
    %2171 = vmatprep.subr.mxu0 0.0
    %2172 = vmatpush1.msra.mxu0 0.0
    %2173 = vmatprep.subr.mxu0 0.0
    %2174 = vmatpush1.msra.mxu0 0.0
    %2175 = vmatprep.subr.mxu0 0.0
    %2176 = vmatpush1.msra.mxu0 0.0
    %2177 = vmatprep.mubr.f32.mxu0 0.0
    %2178 = vmatmul.mubr.f32.gmra.mrb[0].mxu0 %v2032
    %v2179 = vpop.f32.mrb[0].mxu0
    %v2180 = vadd.f32 0.0, %v2179
    %v2181 = vpop.f32.mrb[0].mxu0
    %2182 = vmatprep.mubr.f32.mxu0 0.0
    %2183 = vmatmul.mubr.f32.gmra.mrb[0].mxu0 %v2033
    %v2184 = vpop.f32.mrb[0].mxu0
    %v2185 = vadd.f32 0.0, %v2184
    %v2186 = vpop.f32.mrb[0].mxu0
    %2187 = vmatprep.mubr.f32.mxu0 0.0
    %2188 = vmatmul.mubr.f32.gmra.mrb[0].mxu0 %v2034
    %v2189 = vpop.f32.mrb[0].mxu0
    %v2190 = vadd.f32 0.0, %v2189
    %v2191 = vpop.f32.mrb[0].mxu0
    %2192 = vmatprep.mubr.f32.mxu0 0.0
    %2193 = vmatmul.mubr.f32.gmra.mrb[0].mxu0 %v2035
    %v2194 = vpop.f32.mrb[0].mxu0
    %v2195 = vadd.f32 0.0, %v2194
    %v2196 = vpop.f32.mrb[0].mxu0
    %2197 = vmatprep.mubr.f32.mxu0 0.0
    %2198 = vmatmul.mubr.f32.gmra.mrb[0].mxu0 %v2036
    %v2199 = vpop.f32.mrb[0].mxu0
    %v2200 = vadd.f32 0.0, %v2199
    %v2201 = vpop.f32.mrb[0].mxu0
    %2202 = vmatprep.mubr.f32.mxu0 0.0
    %2203 = vmatmul.mubr.f32.gmra.mrb[0].mxu0 %v2037
    %v2204 = vpop.f32.mrb[0].mxu0
    %v2205 = vadd.f32 0.0, %v2204
    %v2206 = vpop.f32.mrb[0].mxu0
    %2207 = vmatprep.mubr.f32.mxu0 0.0
    %2208 = vmatmul.mubr.f32.gmra.mrb[0].mxu0 %v2038
    %v2209 = vpop.f32.mrb[0].mxu0
    %v2210 = vadd.f32 0.0, %v2209
    %v2211 = vpop.f32.mrb[0].mxu0
    %2212 = vmatprep.mubr.f32.mxu0 0.0
    %2213 = vmatmul.mubr.f32.gmra.mrb[0].mxu0 %v2039
    %v2214 = vpop.f32.mrb[0].mxu0
    %v2215 = vadd.f32 0.0, %v2214
    %v2216 = vpop.f32.mrb[0].mxu0
    %2217 = vmatprep.mubr.f32.mxu0 0.0
    %2218 = vmatmul.mubr.f32.gmra.mrb[0].mxu0 %v2040
    %v2219 = vpop.f32.mrb[0].mxu0
    %v2220 = vadd.f32 0.0, %v2219
    %v2221 = vpop.f32.mrb[0].mxu0
    %2222 = vmatprep.mubr.f32.mxu0 0.0
    %2223 = vmatmul.mubr.f32.gmra.mrb[0].mxu0 %v2041
    %v2224 = vpop.f32.mrb[0].mxu0
    %v2225 = vadd.f32 0.0, %v2224
    %v2226 = vpop.f32.mrb[0].mxu0
    %2227 = vmatprep.mubr.f32.mxu0 0.0
    %2228 = vmatmul.mubr.f32.gmra.mrb[0].mxu0 %v2042
    %v2229 = vpop.f32.mrb[0].mxu0
    %v2230 = vadd.f32 0.0, %v2229
    %v2231 = vpop.f32.mrb[0].mxu0
    %2232 = vmatprep.mubr.f32.mxu0 0.0
    %2233 = vmatmul.mubr.f32.gmra.mrb[0].mxu0 %v2043
    %v2234 = vpop.f32.mrb[0].mxu0
    %v2235 = vadd.f32 0.0, %v2234
    %v2236 = vpop.f32.mrb[0].mxu0
    %2237 = vmatprep.mubr.f32.mxu0 0.0
    %2238 = vmatmul.mubr.f32.gmra.mrb[0].mxu0 %v2044
    %v2239 = vpop.f32.mrb[0].mxu0
    %v2240 = vadd.f32 0.0, %v2239
    %v2241 = vpop.f32.mrb[0].mxu0
    %2242 = vmatprep.mubr.f32.mxu0 0.0
    %2243 = vmatmul.mubr.f32.gmra.mrb[0].mxu0 %v2045
    %v2244 = vpop.f32.mrb[0].mxu0
    %v2245 = vadd.f32 0.0, %v2244
    %v2246 = vpop.f32.mrb[0].mxu0
    %2247 = vmatprep.mubr.f32.mxu0 0.0
    %2248 = vmatmul.mubr.f32.gmra.mrb[0].mxu0 %v2046
    %v2249 = vpop.f32.mrb[0].mxu0
    %v2250 = vadd.f32 0.0, %v2249
    %v2251 = vpop.f32.mrb[0].mxu0
    %2252 = vmatprep.mubr.f32.mxu0 0.0
    %2253 = vmatmul.mubr.f32.gmra.mrb[0].mxu0 %v2047
    %v2254 = vpop.f32.mrb[0].mxu0
    %v2255 = vadd.f32 0.0, %v2254
    %v2256 = vpop.f32.mrb[0].mxu0
    %2257 = vmatprep.mubr.f32.mxu0 0.0
    %2258 = vmatmul.mubr.f32.gmra.mrb[0].mxu0 %v2048
    %v2259 = vpop.f32.mrb[0].mxu0
    %v2260 = vadd.f32 0.0, %v2259
    %v2261 = vpop.f32.mrb[0].mxu0
    %2262 = vmatprep.mubr.f32.mxu0 0.0
    %2263 = vmatmul.mubr.f32.gmra.mrb[0].mxu0 %v2049
    %v2264 = vpop.f32.mrb[0].mxu0
    %v2265 = vadd.f32 0.0, %v2264
    %v2266 = vpop.f32.mrb[0].mxu0
    %2267 = vmatprep.mubr.f32.mxu0 0.0
    %2268 = vmatmul.mubr.f32.gmra.mrb[0].mxu0 %v2050
    %v2269 = vpop.f32.mrb[0].mxu0
    %v2270 = vadd.f32 0.0, %v2269
    %v2271 = vpop.f32.mrb[0].mxu0
    %2272 = vmatprep.mubr.f32.mxu0 0.0
    %2273 = vmatmul.mubr.f32.gmra.mrb[0].mxu0 %v2051
    %v2274 = vpop.f32.mrb[0].mxu0
    %v2275 = vadd.f32 0.0, %v2274
    %v2276 = vpop.f32.mrb[0].mxu0
    %2277 = vmatprep.mubr.f32.mxu0 0.0
    %2278 = vmatmul.mubr.f32.gmra.mrb[0].mxu0 %v2052
    %v2279 = vpop.f32.mrb[0].mxu0
    %v2280 = vadd.f32 0.0, %v2279
    %v2281 = vpop.f32.mrb[0].mxu0
    %2282 = vmatprep.mubr.f32.mxu0 0.0
    %2283 = vmatmul.mubr.f32.gmra.mrb[0].mxu0 %v2053
    %v2284 = vpop.f32.mrb[0].mxu0
    %v2285 = vadd.f32 0.0, %v2284
    %v2286 = vpop.f32.mrb[0].mxu0
    %2287 = vmatprep.mubr.f32.mxu0 0.0
    %2288 = vmatmul.mubr.f32.gmra.mrb[0].mxu0 %v2054
    %v2289 = vpop.f32.mrb[0].mxu0
    %v2290 = vadd.f32 0.0, %v2289
    %v2291 = vpop.f32.mrb[0].mxu0
    %2292 = vmatprep.mubr.f32.mxu0 0.0
    %2293 = vmatmul.mubr.f32.gmra.mrb[0].mxu0 %v2055
    %v2294 = vpop.f32.mrb[0].mxu0
    %v2295 = vadd.f32 0.0, %v2294
    %v2296 = vpop.f32.mrb[0].mxu0
    %2297 = vmatprep.mubr.f32.mxu0 0.0
    %2298 = vmatmul.mubr.f32.gmra.mrb[0].mxu0 %v2056
    %v2299 = vpop.f32.mrb[0].mxu0
    %v2300 = vadd.f32 0.0, %v2299
    %v2301 = vpop.f32.mrb[0].mxu0
    %2302 = vmatprep.mubr.f32.mxu0 0.0
    %2303 = vmatmul.mubr.f32.gmra.mrb[0].mxu0 %v2057
    %v2304 = vpop.f32.mrb[0].mxu0
    %v2305 = vadd.f32 0.0, %v2304
    %v2306 = vpop.f32.mrb[0].mxu0
    %2307 = vmatprep.mubr.f32.mxu0 0.0
    %2308 = vmatmul.mubr.f32.gmra.mrb[0].mxu0 %v2058
    %v2309 = vpop.f32.mrb[0].mxu0
    %v2310 = vadd.f32 0.0, %v2309
    %v2311 = vpop.f32.mrb[0].mxu0
    %2312 = vmatprep.mubr.f32.mxu0 0.0
    %2313 = vmatmul.mubr.f32.gmra.mrb[0].mxu0 %v2059
    %v2314 = vpop.f32.mrb[0].mxu0
    %v2315 = vadd.f32 0.0, %v2314
    %v2316 = vpop.f32.mrb[0].mxu0
    %2317 = vmatprep.mubr.f32.mxu0 0.0
    %2318 = vmatmul.mubr.f32.gmra.mrb[0].mxu0 %v2060
    %v2319 = vpop.f32.mrb[0].mxu0
    %v2320 = vadd.f32 0.0, %v2319
    %v2321 = vpop.f32.mrb[0].mxu0
    %2322 = vmatprep.mubr.f32.mxu0 0.0
    %2323 = vmatmul.mubr.f32.gmra.mrb[0].mxu0 %v2061
    %v2324 = vpop.f32.mrb[0].mxu0
    %v2325 = vadd.f32 0.0, %v2324
    %v2326 = vpop.f32.mrb[0].mxu0
    %2327 = vmatprep.mubr.f32.mxu0 0.0
    %2328 = vmatmul.mubr.f32.gmra.mrb[0].mxu0 %v2062
    %v2329 = vpop.f32.mrb[0].mxu0
    %v2330 = vadd.f32 0.0, %v2329
    %v2331 = vpop.f32.mrb[0].mxu0
    %2332 = vmatprep.mubr.f32.mxu0 0.0
    %2333 = vmatmul.mubr.f32.gmra.mrb[0].mxu0 %v2063
    %v2334 = vpop.f32.mrb[0].mxu0
    %v2335 = vadd.f32 0.0, %v2334
    %v2336 = vpop.f32.mrb[0].mxu0
    %2337 = vmatprep.mubr.f32.mxu0 0.0
    %2338 = vmatmul.mubr.f32.gmra.mrb[0].mxu0 %v2064
    %v2339 = vpop.f32.mrb[0].mxu0
    %v2340 = vadd.f32 0.0, %v2339
    %v2341 = vpop.f32.mrb[0].mxu0
    %2342 = vmatprep.mubr.f32.mxu0 0.0
    %2343 = vmatmul.mubr.f32.gmra.mrb[0].mxu0 %v2065
    %v2344 = vpop.f32.mrb[0].mxu0
    %v2345 = vadd.f32 0.0, %v2344
    %v2346 = vpop.f32.mrb[0].mxu0
    %2347 = vmatprep.mubr.f32.mxu0 0.0
    %2348 = vmatmul.mubr.f32.gmra.mrb[0].mxu0 %v2066
    %v2349 = vpop.f32.mrb[0].mxu0
    %v2350 = vadd.f32 0.0, %v2349
    %v2351 = vpop.f32.mrb[0].mxu0
    %2352 = vmatprep.mubr.f32.mxu0 0.0
    %2353 = vmatmul.mubr.f32.gmra.mrb[0].mxu0 %v2067
    %v2354 = vpop.f32.mrb[0].mxu0
    %v2355 = vadd.f32 0.0, %v2354
    %v2356 = vpop.f32.mrb[0].mxu0
    %2357 = vmatprep.mubr.f32.mxu0 0.0
    %2358 = vmatmul.mubr.f32.gmra.mrb[0].mxu0 %v2068
    %v2359 = vpop.f32.mrb[0].mxu0
    %v2360 = vadd.f32 0.0, %v2359
    %v2361 = vpop.f32.mrb[0].mxu0
    %2362 = vmatprep.mubr.f32.mxu0 0.0
    %2363 = vmatmul.mubr.f32.gmra.mrb[0].mxu0 %v2069
    %v2364 = vpop.f32.mrb[0].mxu0
    %v2365 = vadd.f32 0.0, %v2364
    %v2366 = vpop.f32.mrb[0].mxu0
    %2367 = vmatprep.mubr.f32.mxu0 0.0
    %2368 = vmatmul.mubr.f32.gmra.mrb[0].mxu0 %v2070
    %v2369 = vpop.f32.mrb[0].mxu0
    %v2370 = vadd.f32 0.0, %v2369
    %v2371 = vpop.f32.mrb[0].mxu0
    %2372 = vmatprep.mubr.f32.mxu0 0.0
    %2373 = vmatmul.mubr.f32.gmra.mrb[0].mxu0 %v2071
    %v2374 = vpop.f32.mrb[0].mxu0
    %v2375 = vadd.f32 0.0, %v2374
    %v2376 = vpop.f32.mrb[0].mxu0
    %2377 = vmatprep.mubr.f32.mxu0 0.0
    %2378 = vmatmul.mubr.f32.gmra.mrb[0].mxu0 %v2072
    %v2379 = vpop.f32.mrb[0].mxu0
    %v2380 = vadd.f32 0.0, %v2379
    %v2381 = vpop.f32.mrb[0].mxu0
    %2382 = vmatprep.mubr.f32.mxu0 0.0
    %2383 = vmatmul.mubr.f32.gmra.mrb[0].mxu0 %v2073
    %v2384 = vpop.f32.mrb[0].mxu0
    %v2385 = vadd.f32 0.0, %v2384
    %v2386 = vpop.f32.mrb[0].mxu0
    %2387 = vmatprep.mubr.f32.mxu0 0.0
    %2388 = vmatmul.mubr.f32.gmra.mrb[0].mxu0 %v2074
    %v2389 = vpop.f32.mrb[0].mxu0
    %v2390 = vadd.f32 0.0, %v2389
    %v2391 = vpop.f32.mrb[0].mxu0
    %2392 = vmatprep.mubr.f32.mxu0 0.0
    %2393 = vmatmul.mubr.f32.gmra.mrb[0].mxu0 %v2075
    %v2394 = vpop.f32.mrb[0].mxu0
    %v2395 = vadd.f32 0.0, %v2394
    %v2396 = vpop.f32.mrb[0].mxu0
    %2397 = vmatprep.mubr.f32.mxu0 0.0
    %2398 = vmatmul.mubr.f32.gmra.mrb[0].mxu0 %v2076
    %v2399 = vpop.f32.mrb[0].mxu0
    %v2400 = vadd.f32 0.0, %v2399
    %v2401 = vpop.f32.mrb[0].mxu0
    %2402 = vmatprep.mubr.f32.mxu0 0.0
    %2403 = vmatmul.mubr.f32.gmra.mrb[0].mxu0 %v2077
    %v2404 = vpop.f32.mrb[0].mxu0
    %v2405 = vadd.f32 0.0, %v2404
    %v2406 = vpop.f32.mrb[0].mxu0
    %2407 = vmatprep.mubr.f32.mxu0 0.0
    %2408 = vmatmul.mubr.f32.gmra.mrb[0].mxu0 %v2078
    %v2409 = vpop.f32.mrb[0].mxu0
    %v2410 = vadd.f32 0.0, %v2409
    %v2411 = vpop.f32.mrb[0].mxu0
    %2412 = vmatprep.mubr.f32.mxu0 0.0
    %2413 = vmatmul.mubr.f32.gmra.mrb[0].mxu0 %v2079
    %v2414 = vpop.f32.mrb[0].mxu0
    %v2415 = vadd.f32 0.0, %v2414
    %v2416 = vpop.f32.mrb[0].mxu0
    %2417 = vmatprep.mubr.f32.mxu0 0.0
    %2418 = vmatmul.mubr.f32.gmra.mrb[0].mxu0 %v2080
    %v2419 = vpop.f32.mrb[0].mxu0
    %v2420 = vadd.f32 0.0, %v2419
    %v2421 = vpop.f32.mrb[0].mxu0
    %2422 = vmatprep.mubr.f32.mxu0 0.0
    %2423 = vmatmul.mubr.f32.gmra.mrb[0].mxu0 %v2081
    %v2424 = vpop.f32.mrb[0].mxu0
    %v2425 = vadd.f32 0.0, %v2424
    %v2426 = vpop.f32.mrb[0].mxu0
    %2427 = vmatprep.mubr.f32.mxu0 0.0
    %2428 = vmatmul.mubr.f32.gmra.mrb[0].mxu0 %v2082
    %v2429 = vpop.f32.mrb[0].mxu0
    %v2430 = vadd.f32 0.0, %v2429
    %v2431 = vpop.f32.mrb[0].mxu0
    %2432 = vmatprep.mubr.f32.mxu0 0.0
    %2433 = vmatmul.mubr.f32.gmra.mrb[0].mxu0 %v2083
    %v2434 = vpop.f32.mrb[0].mxu0
    %v2435 = vadd.f32 0.0, %v2434
    %v2436 = vpop.f32.mrb[0].mxu0
    %2437 = vmatprep.mubr.f32.mxu0 0.0
    %2438 = vmatmul.mubr.f32.gmra.mrb[0].mxu0 %v2084
    %v2439 = vpop.f32.mrb[0].mxu0
    %v2440 = vadd.f32 0.0, %v2439
    %v2441 = vpop.f32.mrb[0].mxu0
    %2442 = vmatprep.mubr.f32.mxu0 0.0
    %2443 = vmatmul.mubr.f32.gmra.mrb[0].mxu0 %v2085
    %v2444 = vpop.f32.mrb[0].mxu0
    %v2445 = vadd.f32 0.0, %v2444
    %v2446 = vpop.f32.mrb[0].mxu0
    %2447 = vmatprep.mubr.f32.mxu0 0.0
    %2448 = vmatmul.mubr.f32.gmra.mrb[0].mxu0 %v2086
    %v2449 = vpop.f32.mrb[0].mxu0
    %v2450 = vadd.f32 0.0, %v2449
    %v2451 = vpop.f32.mrb[0].mxu0
    %2452 = vmatprep.mubr.f32.mxu0 0.0
    %2453 = vmatmul.mubr.f32.gmra.mrb[0].mxu0 %v2087
    %v2454 = vpop.f32.mrb[0].mxu0
    %v2455 = vadd.f32 0.0, %v2454
    %v2456 = vpop.f32.mrb[0].mxu0
    %2457 = vmatprep.mubr.f32.mxu0 0.0
    %2458 = vmatmul.mubr.f32.gmra.mrb[0].mxu0 %v2088
    %v2459 = vpop.f32.mrb[0].mxu0
    %v2460 = vadd.f32 0.0, %v2459
    %v2461 = vpop.f32.mrb[0].mxu0
    %2462 = vmatprep.mubr.f32.mxu0 0.0
    %2463 = vmatmul.mubr.f32.gmra.mrb[0].mxu0 %v2089
    %v2464 = vpop.f32.mrb[0].mxu0
    %v2465 = vadd.f32 0.0, %v2464
    %v2466 = vpop.f32.mrb[0].mxu0
    %2467 = vmatprep.mubr.f32.mxu0 0.0
    %2468 = vmatmul.mubr.f32.gmra.mrb[0].mxu0 %v2090
    %v2469 = vpop.f32.mrb[0].mxu0
    %v2470 = vadd.f32 0.0, %v2469
    %v2471 = vpop.f32.mrb[0].mxu0
    %2472 = vmatprep.mubr.f32.mxu0 0.0
    %2473 = vmatmul.mubr.f32.gmra.mrb[0].mxu0 %v2091
    %v2474 = vpop.f32.mrb[0].mxu0
    %v2475 = vadd.f32 0.0, %v2474
    %v2476 = vpop.f32.mrb[0].mxu0
    %2477 = vmatprep.mubr.f32.mxu0 0.0
    %2478 = vmatmul.mubr.f32.gmra.mrb[0].mxu0 %v2092
    %v2479 = vpop.f32.mrb[0].mxu0
    %v2480 = vadd.f32 0.0, %v2479
    %v2481 = vpop.f32.mrb[0].mxu0
    %2482 = vmatprep.mubr.f32.mxu0 0.0
    %2483 = vmatmul.mubr.f32.gmra.mrb[0].mxu0 %v2093
    %v2484 = vpop.f32.mrb[0].mxu0
    %v2485 = vadd.f32 0.0, %v2484
    %v2486 = vpop.f32.mrb[0].mxu0
    %2487 = vmatprep.mubr.f32.mxu0 0.0
    %2488 = vmatmul.mubr.f32.gmra.mrb[0].mxu0 %v2094
    %v2489 = vpop.f32.mrb[0].mxu0
    %v2490 = vadd.f32 0.0, %v2489
    %v2491 = vpop.f32.mrb[0].mxu0
    %2492 = vmatprep.mubr.f32.mxu0 0.0
    %2493 = vmatmul.mubr.f32.gmra.mrb[0].mxu0 %v2095
    %v2494 = vpop.f32.mrb[0].mxu0
    %v2495 = vadd.f32 0.0, %v2494
    %v2496 = vpop.f32.mrb[0].mxu0
    %2497 = vdwg.mxu0
    %v2498 = vadd.f32 %v1714, %v2180
    %v2499 = vadd.f32 %v1719, %v2185
    %v2500 = vadd.f32 %v1724, %v2190
    %v2501 = vadd.f32 %v1729, %v2195
    %v2502 = vadd.f32 %v1734, %v2200
    %v2503 = vadd.f32 %v1739, %v2205
    %v2504 = vadd.f32 %v1744, %v2210
    %v2505 = vadd.f32 %v1749, %v2215
    %v2506 = vadd.f32 %v1754, %v2220
    %v2507 = vadd.f32 %v1759, %v2225
    %v2508 = vadd.f32 %v1764, %v2230
    %v2509 = vadd.f32 %v1769, %v2235
    %v2510 = vadd.f32 %v1774, %v2240
    %v2511 = vadd.f32 %v1779, %v2245
    %v2512 = vadd.f32 %v1784, %v2250
    %v2513 = vadd.f32 %v1789, %v2255
    %v2514 = vadd.f32 %v1794, %v2260
    %v2515 = vadd.f32 %v1799, %v2265
    %v2516 = vadd.f32 %v1804, %v2270
    %v2517 = vadd.f32 %v1809, %v2275
    %v2518 = vadd.f32 %v1814, %v2280
    %v2519 = vadd.f32 %v1819, %v2285
    %v2520 = vadd.f32 %v1824, %v2290
    %v2521 = vadd.f32 %v1829, %v2295
    %v2522 = vadd.f32 %v1834, %v2300
    %v2523 = vadd.f32 %v1839, %v2305
    %v2524 = vadd.f32 %v1844, %v2310
    %v2525 = vadd.f32 %v1849, %v2315
    %v2526 = vadd.f32 %v1854, %v2320
    %v2527 = vadd.f32 %v1859, %v2325
    %v2528 = vadd.f32 %v1864, %v2330
    %v2529 = vadd.f32 %v1869, %v2335
    %v2530 = vadd.f32 %v1874, %v2340
    %v2531 = vadd.f32 %v1879, %v2345
    %v2532 = vadd.f32 %v1884, %v2350
    %v2533 = vadd.f32 %v1889, %v2355
    %v2534 = vadd.f32 %v1894, %v2360
    %v2535 = vadd.f32 %v1899, %v2365
    %v2536 = vadd.f32 %v1904, %v2370
    %v2537 = vadd.f32 %v1909, %v2375
    %v2538 = vadd.f32 %v1914, %v2380
    %v2539 = vadd.f32 %v1919, %v2385
    %v2540 = vadd.f32 %v1924, %v2390
    %v2541 = vadd.f32 %v1929, %v2395
    %v2542 = vadd.f32 %v1934, %v2400
    %v2543 = vadd.f32 %v1939, %v2405
    %v2544 = vadd.f32 %v1944, %v2410
    %v2545 = vadd.f32 %v1949, %v2415
    %v2546 = vadd.f32 %v1954, %v2420
    %v2547 = vadd.f32 %v1959, %v2425
    %v2548 = vadd.f32 %v1964, %v2430
    %v2549 = vadd.f32 %v1969, %v2435
    %v2550 = vadd.f32 %v1974, %v2440
    %v2551 = vadd.f32 %v1979, %v2445
    %v2552 = vadd.f32 %v1984, %v2450
    %v2553 = vadd.f32 %v1989, %v2455
    %v2554 = vadd.f32 %v1994, %v2460
    %v2555 = vadd.f32 %v1999, %v2465
    %v2556 = vadd.f32 %v2004, %v2470
    %v2557 = vadd.f32 %v2009, %v2475
    %v2558 = vadd.f32 %v2014, %v2480
    %v2559 = vadd.f32 %v2019, %v2485
    %v2560 = vadd.f32 %v2024, %v2490
    %v2561 = vadd.f32 %v2029, %v2495
    %v2562 = vld [vmem:[%s1036] sm:$0xff]
    %v2563 = vld [vmem:[%s1036 + $0x8] sm:$0xff]
    %v2564 = vld [vmem:[%s1036 + $0x18] sm:$0xff]
    %v2565 = vld [vmem:[%s1036 + $0x20] sm:$0xff]
    %v2566 = vld [vmem:[%s1036 + $0x30] sm:$0xff]
    %v2567 = vld [vmem:[%s1036 + $0x38] sm:$0xff]
    %v2568 = vld [vmem:[%s1036 + $0x48] sm:$0xff]
    %v2569 = vld [vmem:[%s1036 + $0x50] sm:$0xff]
    %v2570 = vld [vmem:[%s1036 + $0x60] sm:$0xff]
    %v2571 = vld [vmem:[%s1036 + $0x68] sm:$0xff]
    %v2572 = vld [vmem:[%s1036 + $0x78] sm:$0xff]
    %v2573 = vld [vmem:[%s1036 + $0x80] sm:$0xff]
    %v2574 = vld [vmem:[%s1036 + $0x90] sm:$0xff]
    %v2575 = vld [vmem:[%s1036 + $0x98] sm:$0xff]
    %v2576 = vld [vmem:[%s1036 + $0xa8] sm:$0xff]
    %v2577 = vld [vmem:[%s1036 + $0xb0] sm:$0xff]
    %v2578 = vld [vmem:[%s1036 + $0xc0] sm:$0xff]
    %v2579 = vld [vmem:[%s1036 + $0xc8] sm:$0xff]
    %v2580 = vld [vmem:[%s1036 + $0xd8] sm:$0xff]
    %v2581 = vld [vmem:[%s1036 + $0xe0] sm:$0xff]
    %v2582 = vld [vmem:[%s1036 + $0xf0] sm:$0xff]
    %v2583 = vld [vmem:[%s1036 + $0xf8] sm:$0xff]
    %v2584 = vld [vmem:[%s1036 + $0x108] sm:$0xff]
    %v2585 = vld [vmem:[%s1036 + $0x110] sm:$0xff]
    %v2586 = vld [vmem:[%s1036 + $0x120] sm:$0xff]
    %v2587 = vld [vmem:[%s1036 + $0x128] sm:$0xff]
    %v2588 = vld [vmem:[%s1036 + $0x138] sm:$0xff]
    %v2589 = vld [vmem:[%s1036 + $0x140] sm:$0xff]
    %v2590 = vld [vmem:[%s1036 + $0x150] sm:$0xff]
    %v2591 = vld [vmem:[%s1036 + $0x158] sm:$0xff]
    %v2592 = vld [vmem:[%s1036 + $0x168] sm:$0xff]
    %v2593 = vld [vmem:[%s1036 + $0x170] sm:$0xff]
    %v2594 = vld [vmem:[%s1036 + $0x1b0] sm:$0xff]
    %v2595 = vld [vmem:[%s1036 + $0x1b8] sm:$0xff]
    %v2596 = vld [vmem:[%s1036 + $0x1c8] sm:$0xff]
    %v2597 = vld [vmem:[%s1036 + $0x1d0] sm:$0xff]
    %v2598 = vld [vmem:[%s1036 + $0x1e0] sm:$0xff]
    %v2599 = vld [vmem:[%s1036 + $0x1e8] sm:$0xff]
    %v2600 = vld [vmem:[%s1036 + $0x1f8] sm:$0xff]
    %v2601 = vld [vmem:[%s1036 + $0x200] sm:$0xff]
    %v2602 = vld [vmem:[%s1036 + $0x210] sm:$0xff]
    %v2603 = vld [vmem:[%s1036 + $0x218] sm:$0xff]
    %v2604 = vld [vmem:[%s1036 + $0x228] sm:$0xff]
    %v2605 = vld [vmem:[%s1036 + $0x230] sm:$0xff]
    %v2606 = vld [vmem:[%s1036 + $0x240] sm:$0xff]
    %v2607 = vld [vmem:[%s1036 + $0x248] sm:$0xff]
    %v2608 = vld [vmem:[%s1036 + $0x258] sm:$0xff]
    %v2609 = vld [vmem:[%s1036 + $0x260] sm:$0xff]
    %v2610 = vld [vmem:[%s1036 + $0x270] sm:$0xff]
    %v2611 = vld [vmem:[%s1036 + $0x278] sm:$0xff]
    %v2612 = vld [vmem:[%s1036 + $0x288] sm:$0xff]
    %v2613 = vld [vmem:[%s1036 + $0x290] sm:$0xff]
    %v2614 = vld [vmem:[%s1036 + $0x2a0] sm:$0xff]
    %v2615 = vld [vmem:[%s1036 + $0x2a8] sm:$0xff]
    %v2616 = vld [vmem:[%s1036 + $0x2b8] sm:$0xff]
    %v2617 = vld [vmem:[%s1036 + $0x2c0] sm:$0xff]
    %v2618 = vld [vmem:[%s1036 + $0x2d0] sm:$0xff]
    %v2619 = vld [vmem:[%s1036 + $0x2d8] sm:$0xff]
    %v2620 = vld [vmem:[%s1036 + $0x2e8] sm:$0xff]
    %v2621 = vld [vmem:[%s1036 + $0x2f0] sm:$0xff]
    %v2622 = vld [vmem:[%s1036 + $0x300] sm:$0xff]
    %v2623 = vld [vmem:[%s1036 + $0x308] sm:$0xff]
    %v2624 = vld [vmem:[%s1036 + $0x318] sm:$0xff]
    %v2625 = vld [vmem:[%s1036 + $0x320] sm:$0xff]
    %s2626 = scalar_lea.vmem [#allocation8], 384
    %v2627 = vld [vmem:[%s2626] sm:$0xff]
    %v2628 = vld [vmem:[%s2626 + $0x8] sm:$0xff]
    %v2629 = vld [vmem:[%s2626 + $0x10] sm:$0xff]
    %v2630 = vld [vmem:[%s2626 + $0x18] sm:$0xff]
    %v2631 = vld [vmem:[%s2626 + $0x20] sm:$0xff]
    %v2632 = vld [vmem:[%s2626 + $0x28] sm:$0xff]
    %v2633 = vld [vmem:[%s2626 + $0x30] sm:$0xff]
    %v2634 = vld [vmem:[%s2626 + $0x38] sm:$0xff]
    %v2635 = vld [vmem:[%s2626 + $0x40] sm:$0xff]
    %v2636 = vld [vmem:[%s2626 + $0x48] sm:$0xff]
    %v2637 = vld [vmem:[%s2626 + $0x50] sm:$0xff]
    %v2638 = vld [vmem:[%s2626 + $0x58] sm:$0xff]
    %v2639 = vld [vmem:[%s2626 + $0x60] sm:$0xff]
    %v2640 = vld [vmem:[%s2626 + $0x68] sm:$0xff]
    %v2641 = vld [vmem:[%s2626 + $0x70] sm:$0xff]
    %v2642 = vld [vmem:[%s2626 + $0x78] sm:$0xff]
    %2643 = vmatprep.subr.mxu0 0.0
    %2644 = vmatpush1.msra.mxu0 %v2627
    %2645 = vmatprep.subr.mxu0 0.0
    %2646 = vmatpush1.msra.mxu0 %v2628
    %2647 = vmatprep.subr.mxu0 0.0
    %2648 = vmatpush1.msra.mxu0 %v2629
    %2649 = vmatprep.subr.mxu0 0.0
    %2650 = vmatpush1.msra.mxu0 %v2630
    %2651 = vmatprep.subr.mxu0 0.0
    %2652 = vmatpush1.msra.mxu0 %v2631
    %2653 = vmatprep.subr.mxu0 0.0
    %2654 = vmatpush1.msra.mxu0 %v2632
    %2655 = vmatprep.subr.mxu0 0.0
    %2656 = vmatpush1.msra.mxu0 %v2633
    %2657 = vmatprep.subr.mxu0 0.0
    %2658 = vmatpush1.msra.mxu0 %v2634
    %2659 = vmatprep.subr.mxu0 0.0
    %2660 = vmatpush1.msra.mxu0 %v2635
    %2661 = vmatprep.subr.mxu0 0.0
    %2662 = vmatpush1.msra.mxu0 %v2636
    %2663 = vmatprep.subr.mxu0 0.0
    %2664 = vmatpush1.msra.mxu0 %v2637
    %2665 = vmatprep.subr.mxu0 0.0
    %2666 = vmatpush1.msra.mxu0 %v2638
    %2667 = vmatprep.subr.mxu0 0.0
    %2668 = vmatpush1.msra.mxu0 %v2639
    %2669 = vmatprep.subr.mxu0 0.0
    %2670 = vmatpush1.msra.mxu0 %v2640
    %2671 = vmatprep.subr.mxu0 0.0
    %2672 = vmatpush1.msra.mxu0 %v2641
    %2673 = vmatprep.subr.mxu0 0.0
    %2674 = vmatpush1.msra.mxu0 %v2642
    %2675 = vmatprep.subr.mxu0 0.0
    %2676 = vmatpush1.msra.mxu0 0.0
    %2677 = vmatprep.subr.mxu0 0.0
    %2678 = vmatpush1.msra.mxu0 0.0
    %2679 = vmatprep.subr.mxu0 0.0
    %2680 = vmatpush1.msra.mxu0 0.0
    %2681 = vmatprep.subr.mxu0 0.0
    %2682 = vmatpush1.msra.mxu0 0.0
    %2683 = vmatprep.subr.mxu0 0.0
    %2684 = vmatpush1.msra.mxu0 0.0
    %2685 = vmatprep.subr.mxu0 0.0
    %2686 = vmatpush1.msra.mxu0 0.0
    %2687 = vmatprep.subr.mxu0 0.0
    %2688 = vmatpush1.msra.mxu0 0.0
    %2689 = vmatprep.subr.mxu0 0.0
    %2690 = vmatpush1.msra.mxu0 0.0
    %2691 = vmatprep.subr.mxu0 0.0
    %2692 = vmatpush1.msra.mxu0 0.0
    %2693 = vmatprep.subr.mxu0 0.0
    %2694 = vmatpush1.msra.mxu0 0.0
    %2695 = vmatprep.subr.mxu0 0.0
    %2696 = vmatpush1.msra.mxu0 0.0
    %2697 = vmatprep.subr.mxu0 0.0
    %2698 = vmatpush1.msra.mxu0 0.0
    %2699 = vmatprep.subr.mxu0 0.0
    %2700 = vmatpush1.msra.mxu0 0.0
    %2701 = vmatprep.subr.mxu0 0.0
    %2702 = vmatpush1.msra.mxu0 0.0
    %2703 = vmatprep.subr.mxu0 0.0
    %2704 = vmatpush1.msra.mxu0 0.0
    %2705 = vmatprep.subr.mxu0 0.0
    %2706 = vmatpush1.msra.mxu0 0.0
    %2707 = vmatprep.mubr.f32.mxu0 0.0
    %2708 = vmatmul.mubr.f32.gmra.mrb[0].mxu0 %v2562
    %v2709 = vpop.f32.mrb[0].mxu0
    %v2710 = vadd.f32 0.0, %v2709
    %v2711 = vpop.f32.mrb[0].mxu0
    %2712 = vmatprep.mubr.f32.mxu0 0.0
    %2713 = vmatmul.mubr.f32.gmra.mrb[0].mxu0 %v2563
    %v2714 = vpop.f32.mrb[0].mxu0
    %v2715 = vadd.f32 0.0, %v2714
    %v2716 = vpop.f32.mrb[0].mxu0
    %2717 = vmatprep.mubr.f32.mxu0 0.0
    %2718 = vmatmul.mubr.f32.gmra.mrb[0].mxu0 %v2564
    %v2719 = vpop.f32.mrb[0].mxu0
    %v2720 = vadd.f32 0.0, %v2719
    %v2721 = vpop.f32.mrb[0].mxu0
    %2722 = vmatprep.mubr.f32.mxu0 0.0
    %2723 = vmatmul.mubr.f32.gmra.mrb[0].mxu0 %v2565
    %v2724 = vpop.f32.mrb[0].mxu0
    %v2725 = vadd.f32 0.0, %v2724
    %v2726 = vpop.f32.mrb[0].mxu0
    %2727 = vmatprep.mubr.f32.mxu0 0.0
    %2728 = vmatmul.mubr.f32.gmra.mrb[0].mxu0 %v2566
    %v2729 = vpop.f32.mrb[0].mxu0
    %v2730 = vadd.f32 0.0, %v2729
    %v2731 = vpop.f32.mrb[0].mxu0
    %2732 = vmatprep.mubr.f32.mxu0 0.0
    %2733 = vmatmul.mubr.f32.gmra.mrb[0].mxu0 %v2567
    %v2734 = vpop.f32.mrb[0].mxu0
    %v2735 = vadd.f32 0.0, %v2734
    %v2736 = vpop.f32.mrb[0].mxu0
    %2737 = vmatprep.mubr.f32.mxu0 0.0
    %2738 = vmatmul.mubr.f32.gmra.mrb[0].mxu0 %v2568
    %v2739 = vpop.f32.mrb[0].mxu0
    %v2740 = vadd.f32 0.0, %v2739
    %v2741 = vpop.f32.mrb[0].mxu0
    %2742 = vmatprep.mubr.f32.mxu0 0.0
    %2743 = vmatmul.mubr.f32.gmra.mrb[0].mxu0 %v2569
    %v2744 = vpop.f32.mrb[0].mxu0
    %v2745 = vadd.f32 0.0, %v2744
    %v2746 = vpop.f32.mrb[0].mxu0
    %2747 = vmatprep.mubr.f32.mxu0 0.0
    %2748 = vmatmul.mubr.f32.gmra.mrb[0].mxu0 %v2570
    %v2749 = vpop.f32.mrb[0].mxu0
    %v2750 = vadd.f32 0.0, %v2749
    %v2751 = vpop.f32.mrb[0].mxu0
    %2752 = vmatprep.mubr.f32.mxu0 0.0
    %2753 = vmatmul.mubr.f32.gmra.mrb[0].mxu0 %v2571
    %v2754 = vpop.f32.mrb[0].mxu0
    %v2755 = vadd.f32 0.0, %v2754
    %v2756 = vpop.f32.mrb[0].mxu0
    %2757 = vmatprep.mubr.f32.mxu0 0.0
    %2758 = vmatmul.mubr.f32.gmra.mrb[0].mxu0 %v2572
    %v2759 = vpop.f32.mrb[0].mxu0
    %v2760 = vadd.f32 0.0, %v2759
    %v2761 = vpop.f32.mrb[0].mxu0
    %2762 = vmatprep.mubr.f32.mxu0 0.0
    %2763 = vmatmul.mubr.f32.gmra.mrb[0].mxu0 %v2573
    %v2764 = vpop.f32.mrb[0].mxu0
    %v2765 = vadd.f32 0.0, %v2764
    %v2766 = vpop.f32.mrb[0].mxu0
    %2767 = vmatprep.mubr.f32.mxu0 0.0
    %2768 = vmatmul.mubr.f32.gmra.mrb[0].mxu0 %v2574
    %v2769 = vpop.f32.mrb[0].mxu0
    %v2770 = vadd.f32 0.0, %v2769
    %v2771 = vpop.f32.mrb[0].mxu0
    %2772 = vmatprep.mubr.f32.mxu0 0.0
    %2773 = vmatmul.mubr.f32.gmra.mrb[0].mxu0 %v2575
    %v2774 = vpop.f32.mrb[0].mxu0
    %v2775 = vadd.f32 0.0, %v2774
    %v2776 = vpop.f32.mrb[0].mxu0
    %2777 = vmatprep.mubr.f32.mxu0 0.0
    %2778 = vmatmul.mubr.f32.gmra.mrb[0].mxu0 %v2576
    %v2779 = vpop.f32.mrb[0].mxu0
    %v2780 = vadd.f32 0.0, %v2779
    %v2781 = vpop.f32.mrb[0].mxu0
    %2782 = vmatprep.mubr.f32.mxu0 0.0
    %2783 = vmatmul.mubr.f32.gmra.mrb[0].mxu0 %v2577
    %v2784 = vpop.f32.mrb[0].mxu0
    %v2785 = vadd.f32 0.0, %v2784
    %v2786 = vpop.f32.mrb[0].mxu0
    %2787 = vmatprep.mubr.f32.mxu0 0.0
    %2788 = vmatmul.mubr.f32.gmra.mrb[0].mxu0 %v2578
    %v2789 = vpop.f32.mrb[0].mxu0
    %v2790 = vadd.f32 0.0, %v2789
    %v2791 = vpop.f32.mrb[0].mxu0
    %2792 = vmatprep.mubr.f32.mxu0 0.0
    %2793 = vmatmul.mubr.f32.gmra.mrb[0].mxu0 %v2579
    %v2794 = vpop.f32.mrb[0].mxu0
    %v2795 = vadd.f32 0.0, %v2794
    %v2796 = vpop.f32.mrb[0].mxu0
    %2797 = vmatprep.mubr.f32.mxu0 0.0
    %2798 = vmatmul.mubr.f32.gmra.mrb[0].mxu0 %v2580
    %v2799 = vpop.f32.mrb[0].mxu0
    %v2800 = vadd.f32 0.0, %v2799
    %v2801 = vpop.f32.mrb[0].mxu0
    %2802 = vmatprep.mubr.f32.mxu0 0.0
    %2803 = vmatmul.mubr.f32.gmra.mrb[0].mxu0 %v2581
    %v2804 = vpop.f32.mrb[0].mxu0
    %v2805 = vadd.f32 0.0, %v2804
    %v2806 = vpop.f32.mrb[0].mxu0
    %2807 = vmatprep.mubr.f32.mxu0 0.0
    %2808 = vmatmul.mubr.f32.gmra.mrb[0].mxu0 %v2582
    %v2809 = vpop.f32.mrb[0].mxu0
    %v2810 = vadd.f32 0.0, %v2809
    %v2811 = vpop.f32.mrb[0].mxu0
    %2812 = vmatprep.mubr.f32.mxu0 0.0
    %2813 = vmatmul.mubr.f32.gmra.mrb[0].mxu0 %v2583
    %v2814 = vpop.f32.mrb[0].mxu0
    %v2815 = vadd.f32 0.0, %v2814
    %v2816 = vpop.f32.mrb[0].mxu0
    %2817 = vmatprep.mubr.f32.mxu0 0.0
    %2818 = vmatmul.mubr.f32.gmra.mrb[0].mxu0 %v2584
    %v2819 = vpop.f32.mrb[0].mxu0
    %v2820 = vadd.f32 0.0, %v2819
    %v2821 = vpop.f32.mrb[0].mxu0
    %2822 = vmatprep.mubr.f32.mxu0 0.0
    %2823 = vmatmul.mubr.f32.gmra.mrb[0].mxu0 %v2585
    %v2824 = vpop.f32.mrb[0].mxu0
    %v2825 = vadd.f32 0.0, %v2824
    %v2826 = vpop.f32.mrb[0].mxu0
    %2827 = vmatprep.mubr.f32.mxu0 0.0
    %2828 = vmatmul.mubr.f32.gmra.mrb[0].mxu0 %v2586
    %v2829 = vpop.f32.mrb[0].mxu0
    %v2830 = vadd.f32 0.0, %v2829
    %v2831 = vpop.f32.mrb[0].mxu0
    %2832 = vmatprep.mubr.f32.mxu0 0.0
    %2833 = vmatmul.mubr.f32.gmra.mrb[0].mxu0 %v2587
    %v2834 = vpop.f32.mrb[0].mxu0
    %v2835 = vadd.f32 0.0, %v2834
    %v2836 = vpop.f32.mrb[0].mxu0
    %2837 = vmatprep.mubr.f32.mxu0 0.0
    %2838 = vmatmul.mubr.f32.gmra.mrb[0].mxu0 %v2588
    %v2839 = vpop.f32.mrb[0].mxu0
    %v2840 = vadd.f32 0.0, %v2839
    %v2841 = vpop.f32.mrb[0].mxu0
    %2842 = vmatprep.mubr.f32.mxu0 0.0
    %2843 = vmatmul.mubr.f32.gmra.mrb[0].mxu0 %v2589
    %v2844 = vpop.f32.mrb[0].mxu0
    %v2845 = vadd.f32 0.0, %v2844
    %v2846 = vpop.f32.mrb[0].mxu0
    %2847 = vmatprep.mubr.f32.mxu0 0.0
    %2848 = vmatmul.mubr.f32.gmra.mrb[0].mxu0 %v2590
    %v2849 = vpop.f32.mrb[0].mxu0
    %v2850 = vadd.f32 0.0, %v2849
    %v2851 = vpop.f32.mrb[0].mxu0
    %2852 = vmatprep.mubr.f32.mxu0 0.0
    %2853 = vmatmul.mubr.f32.gmra.mrb[0].mxu0 %v2591
    %v2854 = vpop.f32.mrb[0].mxu0
    %v2855 = vadd.f32 0.0, %v2854
    %v2856 = vpop.f32.mrb[0].mxu0
    %2857 = vmatprep.mubr.f32.mxu0 0.0
    %2858 = vmatmul.mubr.f32.gmra.mrb[0].mxu0 %v2592
    %v2859 = vpop.f32.mrb[0].mxu0
    %v2860 = vadd.f32 0.0, %v2859
    %v2861 = vpop.f32.mrb[0].mxu0
    %2862 = vmatprep.mubr.f32.mxu0 0.0
    %2863 = vmatmul.mubr.f32.gmra.mrb[0].mxu0 %v2593
    %v2864 = vpop.f32.mrb[0].mxu0
    %v2865 = vadd.f32 0.0, %v2864
    %v2866 = vpop.f32.mrb[0].mxu0
    %2867 = vmatprep.mubr.f32.mxu0 0.0
    %2868 = vmatmul.mubr.f32.gmra.mrb[0].mxu0 %v2594
    %v2869 = vpop.f32.mrb[0].mxu0
    %v2870 = vadd.f32 0.0, %v2869
    %v2871 = vpop.f32.mrb[0].mxu0
    %2872 = vmatprep.mubr.f32.mxu0 0.0
    %2873 = vmatmul.mubr.f32.gmra.mrb[0].mxu0 %v2595
    %v2874 = vpop.f32.mrb[0].mxu0
    %v2875 = vadd.f32 0.0, %v2874
    %v2876 = vpop.f32.mrb[0].mxu0
    %2877 = vmatprep.mubr.f32.mxu0 0.0
    %2878 = vmatmul.mubr.f32.gmra.mrb[0].mxu0 %v2596
    %v2879 = vpop.f32.mrb[0].mxu0
    %v2880 = vadd.f32 0.0, %v2879
    %v2881 = vpop.f32.mrb[0].mxu0
    %2882 = vmatprep.mubr.f32.mxu0 0.0
    %2883 = vmatmul.mubr.f32.gmra.mrb[0].mxu0 %v2597
    %v2884 = vpop.f32.mrb[0].mxu0
    %v2885 = vadd.f32 0.0, %v2884
    %v2886 = vpop.f32.mrb[0].mxu0
    %2887 = vmatprep.mubr.f32.mxu0 0.0
    %2888 = vmatmul.mubr.f32.gmra.mrb[0].mxu0 %v2598
    %v2889 = vpop.f32.mrb[0].mxu0
    %v2890 = vadd.f32 0.0, %v2889
    %v2891 = vpop.f32.mrb[0].mxu0
    %2892 = vmatprep.mubr.f32.mxu0 0.0
    %2893 = vmatmul.mubr.f32.gmra.mrb[0].mxu0 %v2599
    %v2894 = vpop.f32.mrb[0].mxu0
    %v2895 = vadd.f32 0.0, %v2894
    %v2896 = vpop.f32.mrb[0].mxu0
    %2897 = vmatprep.mubr.f32.mxu0 0.0
    %2898 = vmatmul.mubr.f32.gmra.mrb[0].mxu0 %v2600
    %v2899 = vpop.f32.mrb[0].mxu0
    %v2900 = vadd.f32 0.0, %v2899
    %v2901 = vpop.f32.mrb[0].mxu0
    %2902 = vmatprep.mubr.f32.mxu0 0.0
    %2903 = vmatmul.mubr.f32.gmra.mrb[0].mxu0 %v2601
    %v2904 = vpop.f32.mrb[0].mxu0
    %v2905 = vadd.f32 0.0, %v2904
    %v2906 = vpop.f32.mrb[0].mxu0
    %2907 = vmatprep.mubr.f32.mxu0 0.0
    %2908 = vmatmul.mubr.f32.gmra.mrb[0].mxu0 %v2602
    %v2909 = vpop.f32.mrb[0].mxu0
    %v2910 = vadd.f32 0.0, %v2909
    %v2911 = vpop.f32.mrb[0].mxu0
    %2912 = vmatprep.mubr.f32.mxu0 0.0
    %2913 = vmatmul.mubr.f32.gmra.mrb[0].mxu0 %v2603
    %v2914 = vpop.f32.mrb[0].mxu0
    %v2915 = vadd.f32 0.0, %v2914
    %v2916 = vpop.f32.mrb[0].mxu0
    %2917 = vmatprep.mubr.f32.mxu0 0.0
    %2918 = vmatmul.mubr.f32.gmra.mrb[0].mxu0 %v2604
    %v2919 = vpop.f32.mrb[0].mxu0
    %v2920 = vadd.f32 0.0, %v2919
    %v2921 = vpop.f32.mrb[0].mxu0
    %2922 = vmatprep.mubr.f32.mxu0 0.0
    %2923 = vmatmul.mubr.f32.gmra.mrb[0].mxu0 %v2605
    %v2924 = vpop.f32.mrb[0].mxu0
    %v2925 = vadd.f32 0.0, %v2924
    %v2926 = vpop.f32.mrb[0].mxu0
    %2927 = vmatprep.mubr.f32.mxu0 0.0
    %2928 = vmatmul.mubr.f32.gmra.mrb[0].mxu0 %v2606
    %v2929 = vpop.f32.mrb[0].mxu0
    %v2930 = vadd.f32 0.0, %v2929
    %v2931 = vpop.f32.mrb[0].mxu0
    %2932 = vmatprep.mubr.f32.mxu0 0.0
    %2933 = vmatmul.mubr.f32.gmra.mrb[0].mxu0 %v2607
    %v2934 = vpop.f32.mrb[0].mxu0
    %v2935 = vadd.f32 0.0, %v2934
    %v2936 = vpop.f32.mrb[0].mxu0
    %2937 = vmatprep.mubr.f32.mxu0 0.0
    %2938 = vmatmul.mubr.f32.gmra.mrb[0].mxu0 %v2608
    %v2939 = vpop.f32.mrb[0].mxu0
    %v2940 = vadd.f32 0.0, %v2939
    %v2941 = vpop.f32.mrb[0].mxu0
    %2942 = vmatprep.mubr.f32.mxu0 0.0
    %2943 = vmatmul.mubr.f32.gmra.mrb[0].mxu0 %v2609
    %v2944 = vpop.f32.mrb[0].mxu0
    %v2945 = vadd.f32 0.0, %v2944
    %v2946 = vpop.f32.mrb[0].mxu0
    %2947 = vmatprep.mubr.f32.mxu0 0.0
    %2948 = vmatmul.mubr.f32.gmra.mrb[0].mxu0 %v2610
    %v2949 = vpop.f32.mrb[0].mxu0
    %v2950 = vadd.f32 0.0, %v2949
    %v2951 = vpop.f32.mrb[0].mxu0
    %2952 = vmatprep.mubr.f32.mxu0 0.0
    %2953 = vmatmul.mubr.f32.gmra.mrb[0].mxu0 %v2611
    %v2954 = vpop.f32.mrb[0].mxu0
    %v2955 = vadd.f32 0.0, %v2954
    %v2956 = vpop.f32.mrb[0].mxu0
    %2957 = vmatprep.mubr.f32.mxu0 0.0
    %2958 = vmatmul.mubr.f32.gmra.mrb[0].mxu0 %v2612
    %v2959 = vpop.f32.mrb[0].mxu0
    %v2960 = vadd.f32 0.0, %v2959
    %v2961 = vpop.f32.mrb[0].mxu0
    %2962 = vmatprep.mubr.f32.mxu0 0.0
    %2963 = vmatmul.mubr.f32.gmra.mrb[0].mxu0 %v2613
    %v2964 = vpop.f32.mrb[0].mxu0
    %v2965 = vadd.f32 0.0, %v2964
    %v2966 = vpop.f32.mrb[0].mxu0
    %2967 = vmatprep.mubr.f32.mxu0 0.0
    %2968 = vmatmul.mubr.f32.gmra.mrb[0].mxu0 %v2614
    %v2969 = vpop.f32.mrb[0].mxu0
    %v2970 = vadd.f32 0.0, %v2969
    %v2971 = vpop.f32.mrb[0].mxu0
    %2972 = vmatprep.mubr.f32.mxu0 0.0
    %2973 = vmatmul.mubr.f32.gmra.mrb[0].mxu0 %v2615
    %v2974 = vpop.f32.mrb[0].mxu0
    %v2975 = vadd.f32 0.0, %v2974
    %v2976 = vpop.f32.mrb[0].mxu0
    %2977 = vmatprep.mubr.f32.mxu0 0.0
    %2978 = vmatmul.mubr.f32.gmra.mrb[0].mxu0 %v2616
    %v2979 = vpop.f32.mrb[0].mxu0
    %v2980 = vadd.f32 0.0, %v2979
    %v2981 = vpop.f32.mrb[0].mxu0
    %2982 = vmatprep.mubr.f32.mxu0 0.0
    %2983 = vmatmul.mubr.f32.gmra.mrb[0].mxu0 %v2617
    %v2984 = vpop.f32.mrb[0].mxu0
    %v2985 = vadd.f32 0.0, %v2984
    %v2986 = vpop.f32.mrb[0].mxu0
    %2987 = vmatprep.mubr.f32.mxu0 0.0
    %2988 = vmatmul.mubr.f32.gmra.mrb[0].mxu0 %v2618
    %v2989 = vpop.f32.mrb[0].mxu0
    %v2990 = vadd.f32 0.0, %v2989
    %v2991 = vpop.f32.mrb[0].mxu0
    %2992 = vmatprep.mubr.f32.mxu0 0.0
    %2993 = vmatmul.mubr.f32.gmra.mrb[0].mxu0 %v2619
    %v2994 = vpop.f32.mrb[0].mxu0
    %v2995 = vadd.f32 0.0, %v2994
    %v2996 = vpop.f32.mrb[0].mxu0
    %2997 = vmatprep.mubr.f32.mxu0 0.0
    %2998 = vmatmul.mubr.f32.gmra.mrb[0].mxu0 %v2620
    %v2999 = vpop.f32.mrb[0].mxu0
    %v3000 = vadd.f32 0.0, %v2999
    %v3001 = vpop.f32.mrb[0].mxu0
    %3002 = vmatprep.mubr.f32.mxu0 0.0
    %3003 = vmatmul.mubr.f32.gmra.mrb[0].mxu0 %v2621
    %v3004 = vpop.f32.mrb[0].mxu0
    %v3005 = vadd.f32 0.0, %v3004
    %v3006 = vpop.f32.mrb[0].mxu0
    %3007 = vmatprep.mubr.f32.mxu0 0.0
    %3008 = vmatmul.mubr.f32.gmra.mrb[0].mxu0 %v2622
    %v3009 = vpop.f32.mrb[0].mxu0
    %v3010 = vadd.f32 0.0, %v3009
    %v3011 = vpop.f32.mrb[0].mxu0
    %3012 = vmatprep.mubr.f32.mxu0 0.0
    %3013 = vmatmul.mubr.f32.gmra.mrb[0].mxu0 %v2623
    %v3014 = vpop.f32.mrb[0].mxu0
    %v3015 = vadd.f32 0.0, %v3014
    %v3016 = vpop.f32.mrb[0].mxu0
    %3017 = vmatprep.mubr.f32.mxu0 0.0
    %3018 = vmatmul.mubr.f32.gmra.mrb[0].mxu0 %v2624
    %v3019 = vpop.f32.mrb[0].mxu0
    %v3020 = vadd.f32 0.0, %v3019
    %v3021 = vpop.f32.mrb[0].mxu0
    %3022 = vmatprep.mubr.f32.mxu0 0.0
    %3023 = vmatmul.mubr.f32.gmra.mrb[0].mxu0 %v2625
    %v3024 = vpop.f32.mrb[0].mxu0
    %v3025 = vadd.f32 0.0, %v3024
    %v3026 = vpop.f32.mrb[0].mxu0
    %3027 = vdwg.mxu0
    %v3028 = vadd.f32 %v2498, %v2710
    %v3029 = vadd.f32 %v2499, %v2715
    %v3030 = vadd.f32 %v2500, %v2720
    %v3031 = vadd.f32 %v2501, %v2725
    %v3032 = vadd.f32 %v2502, %v2730
    %v3033 = vadd.f32 %v2503, %v2735
    %v3034 = vadd.f32 %v2504, %v2740
    %v3035 = vadd.f32 %v2505, %v2745
    %v3036 = vadd.f32 %v2506, %v2750
    %v3037 = vadd.f32 %v2507, %v2755
    %v3038 = vadd.f32 %v2508, %v2760
    %v3039 = vadd.f32 %v2509, %v2765
    %v3040 = vadd.f32 %v2510, %v2770
    %v3041 = vadd.f32 %v2511, %v2775
    %v3042 = vadd.f32 %v2512, %v2780
    %v3043 = vadd.f32 %v2513, %v2785
    %v3044 = vadd.f32 %v2514, %v2790
    %v3045 = vadd.f32 %v2515, %v2795
    %v3046 = vadd.f32 %v2516, %v2800
    %v3047 = vadd.f32 %v2517, %v2805
    %v3048 = vadd.f32 %v2518, %v2810
    %v3049 = vadd.f32 %v2519, %v2815
    %v3050 = vadd.f32 %v2520, %v2820
    %v3051 = vadd.f32 %v2521, %v2825
    %v3052 = vadd.f32 %v2522, %v2830
    %v3053 = vadd.f32 %v2523, %v2835
    %v3054 = vadd.f32 %v2524, %v2840
    %v3055 = vadd.f32 %v2525, %v2845
    %v3056 = vadd.f32 %v2526, %v2850
    %v3057 = vadd.f32 %v2527, %v2855
    %v3058 = vadd.f32 %v2528, %v2860
    %v3059 = vadd.f32 %v2529, %v2865
    %v3060 = vadd.f32 %v2530, %v2870
    %v3061 = vadd.f32 %v2531, %v2875
    %v3062 = vadd.f32 %v2532, %v2880
    %v3063 = vadd.f32 %v2533, %v2885
    %v3064 = vadd.f32 %v2534, %v2890
    %v3065 = vadd.f32 %v2535, %v2895
    %v3066 = vadd.f32 %v2536, %v2900
    %v3067 = vadd.f32 %v2537, %v2905
    %v3068 = vadd.f32 %v2538, %v2910
    %v3069 = vadd.f32 %v2539, %v2915
    %v3070 = vadd.f32 %v2540, %v2920
    %v3071 = vadd.f32 %v2541, %v2925
    %v3072 = vadd.f32 %v2542, %v2930
    %v3073 = vadd.f32 %v2543, %v2935
    %v3074 = vadd.f32 %v2544, %v2940
    %v3075 = vadd.f32 %v2545, %v2945
    %v3076 = vadd.f32 %v2546, %v2950
    %v3077 = vadd.f32 %v2547, %v2955
    %v3078 = vadd.f32 %v2548, %v2960
    %v3079 = vadd.f32 %v2549, %v2965
    %v3080 = vadd.f32 %v2550, %v2970
    %v3081 = vadd.f32 %v2551, %v2975
    %v3082 = vadd.f32 %v2552, %v2980
    %v3083 = vadd.f32 %v2553, %v2985
    %v3084 = vadd.f32 %v2554, %v2990
    %v3085 = vadd.f32 %v2555, %v2995
    %v3086 = vadd.f32 %v2556, %v3000
    %v3087 = vadd.f32 %v2557, %v3005
    %v3088 = vadd.f32 %v2558, %v3010
    %v3089 = vadd.f32 %v2559, %v3015
    %v3090 = vadd.f32 %v2560, %v3020
    %v3091 = vadd.f32 %v2561, %v3025
    %v3092 = vld [vmem:[%s1036 + $0x1] sm:$0xff]
    %v3093 = vld [vmem:[%s1036 + $0x9] sm:$0xff]
    %v3094 = vld [vmem:[%s1036 + $0x19] sm:$0xff]
    %v3095 = vld [vmem:[%s1036 + $0x21] sm:$0xff]
    %v3096 = vld [vmem:[%s1036 + $0x31] sm:$0xff]
    %v3097 = vld [vmem:[%s1036 + $0x39] sm:$0xff]
    %v3098 = vld [vmem:[%s1036 + $0x49] sm:$0xff]
    %v3099 = vld [vmem:[%s1036 + $0x51] sm:$0xff]
    %v3100 = vld [vmem:[%s1036 + $0x61] sm:$0xff]
    %v3101 = vld [vmem:[%s1036 + $0x69] sm:$0xff]
    %v3102 = vld [vmem:[%s1036 + $0x79] sm:$0xff]
    %v3103 = vld [vmem:[%s1036 + $0x81] sm:$0xff]
    %v3104 = vld [vmem:[%s1036 + $0x91] sm:$0xff]
    %v3105 = vld [vmem:[%s1036 + $0x99] sm:$0xff]
    %v3106 = vld [vmem:[%s1036 + $0xa9] sm:$0xff]
    %v3107 = vld [vmem:[%s1036 + $0xb1] sm:$0xff]
    %v3108 = vld [vmem:[%s1036 + $0xc1] sm:$0xff]
    %v3109 = vld [vmem:[%s1036 + $0xc9] sm:$0xff]
    %v3110 = vld [vmem:[%s1036 + $0xd9] sm:$0xff]
    %v3111 = vld [vmem:[%s1036 + $0xe1] sm:$0xff]
    %v3112 = vld [vmem:[%s1036 + $0xf1] sm:$0xff]
    %v3113 = vld [vmem:[%s1036 + $0xf9] sm:$0xff]
    %v3114 = vld [vmem:[%s1036 + $0x109] sm:$0xff]
    %v3115 = vld [vmem:[%s1036 + $0x111] sm:$0xff]
    %v3116 = vld [vmem:[%s1036 + $0x121] sm:$0xff]
    %v3117 = vld [vmem:[%s1036 + $0x129] sm:$0xff]
    %v3118 = vld [vmem:[%s1036 + $0x139] sm:$0xff]
    %v3119 = vld [vmem:[%s1036 + $0x141] sm:$0xff]
    %v3120 = vld [vmem:[%s1036 + $0x151] sm:$0xff]
    %v3121 = vld [vmem:[%s1036 + $0x159] sm:$0xff]
    %v3122 = vld [vmem:[%s1036 + $0x169] sm:$0xff]
    %v3123 = vld [vmem:[%s1036 + $0x171] sm:$0xff]
    %v3124 = vld [vmem:[%s1036 + $0x1b1] sm:$0xff]
    %v3125 = vld [vmem:[%s1036 + $0x1b9] sm:$0xff]
    %v3126 = vld [vmem:[%s1036 + $0x1c9] sm:$0xff]
    %v3127 = vld [vmem:[%s1036 + $0x1d1] sm:$0xff]
    %v3128 = vld [vmem:[%s1036 + $0x1e1] sm:$0xff]
    %v3129 = vld [vmem:[%s1036 + $0x1e9] sm:$0xff]
    %v3130 = vld [vmem:[%s1036 + $0x1f9] sm:$0xff]
    %v3131 = vld [vmem:[%s1036 + $0x201] sm:$0xff]
    %v3132 = vld [vmem:[%s1036 + $0x211] sm:$0xff]
    %v3133 = vld [vmem:[%s1036 + $0x219] sm:$0xff]
    %v3134 = vld [vmem:[%s1036 + $0x229] sm:$0xff]
    %v3135 = vld [vmem:[%s1036 + $0x231] sm:$0xff]
    %v3136 = vld [vmem:[%s1036 + $0x241] sm:$0xff]
    %v3137 = vld [vmem:[%s1036 + $0x249] sm:$0xff]
    %v3138 = vld [vmem:[%s1036 + $0x259] sm:$0xff]
    %v3139 = vld [vmem:[%s1036 + $0x261] sm:$0xff]
    %v3140 = vld [vmem:[%s1036 + $0x271] sm:$0xff]
    %v3141 = vld [vmem:[%s1036 + $0x279] sm:$0xff]
    %v3142 = vld [vmem:[%s1036 + $0x289] sm:$0xff]
    %v3143 = vld [vmem:[%s1036 + $0x291] sm:$0xff]
    %v3144 = vld [vmem:[%s1036 + $0x2a1] sm:$0xff]
    %v3145 = vld [vmem:[%s1036 + $0x2a9] sm:$0xff]
    %v3146 = vld [vmem:[%s1036 + $0x2b9] sm:$0xff]
    %v3147 = vld [vmem:[%s1036 + $0x2c1] sm:$0xff]
    %v3148 = vld [vmem:[%s1036 + $0x2d1] sm:$0xff]
    %v3149 = vld [vmem:[%s1036 + $0x2d9] sm:$0xff]
    %v3150 = vld [vmem:[%s1036 + $0x2e9] sm:$0xff]
    %v3151 = vld [vmem:[%s1036 + $0x2f1] sm:$0xff]
    %v3152 = vld [vmem:[%s1036 + $0x301] sm:$0xff]
    %v3153 = vld [vmem:[%s1036 + $0x309] sm:$0xff]
    %v3154 = vld [vmem:[%s1036 + $0x319] sm:$0xff]
    %v3155 = vld [vmem:[%s1036 + $0x321] sm:$0xff]
    %s3156 = scalar_lea.vmem [#allocation8], 512
    %v3157 = vld [vmem:[%s3156] sm:$0xff]
    %v3158 = vld [vmem:[%s3156 + $0x8] sm:$0xff]
    %v3159 = vld [vmem:[%s3156 + $0x10] sm:$0xff]
    %v3160 = vld [vmem:[%s3156 + $0x18] sm:$0xff]
    %v3161 = vld [vmem:[%s3156 + $0x20] sm:$0xff]
    %v3162 = vld [vmem:[%s3156 + $0x28] sm:$0xff]
    %v3163 = vld [vmem:[%s3156 + $0x30] sm:$0xff]
    %v3164 = vld [vmem:[%s3156 + $0x38] sm:$0xff]
    %v3165 = vld [vmem:[%s3156 + $0x40] sm:$0xff]
    %v3166 = vld [vmem:[%s3156 + $0x48] sm:$0xff]
    %v3167 = vld [vmem:[%s3156 + $0x50] sm:$0xff]
    %v3168 = vld [vmem:[%s3156 + $0x58] sm:$0xff]
    %v3169 = vld [vmem:[%s3156 + $0x60] sm:$0xff]
    %v3170 = vld [vmem:[%s3156 + $0x68] sm:$0xff]
    %v3171 = vld [vmem:[%s3156 + $0x70] sm:$0xff]
    %v3172 = vld [vmem:[%s3156 + $0x78] sm:$0xff]
    %3173 = vmatprep.subr.mxu0 0.0
    %3174 = vmatpush1.msra.mxu0 %v3157
    %3175 = vmatprep.subr.mxu0 0.0
    %3176 = vmatpush1.msra.mxu0 %v3158
    %3177 = vmatprep.subr.mxu0 0.0
    %3178 = vmatpush1.msra.mxu0 %v3159
    %3179 = vmatprep.subr.mxu0 0.0
    %3180 = vmatpush1.msra.mxu0 %v3160
    %3181 = vmatprep.subr.mxu0 0.0
    %3182 = vmatpush1.msra.mxu0 %v3161
    %3183 = vmatprep.subr.mxu0 0.0
    %3184 = vmatpush1.msra.mxu0 %v3162
    %3185 = vmatprep.subr.mxu0 0.0
    %3186 = vmatpush1.msra.mxu0 %v3163
    %3187 = vmatprep.subr.mxu0 0.0
    %3188 = vmatpush1.msra.mxu0 %v3164
    %3189 = vmatprep.subr.mxu0 0.0
    %3190 = vmatpush1.msra.mxu0 %v3165
    %3191 = vmatprep.subr.mxu0 0.0
    %3192 = vmatpush1.msra.mxu0 %v3166
    %3193 = vmatprep.subr.mxu0 0.0
    %3194 = vmatpush1.msra.mxu0 %v3167
    %3195 = vmatprep.subr.mxu0 0.0
    %3196 = vmatpush1.msra.mxu0 %v3168
    %3197 = vmatprep.subr.mxu0 0.0
    %3198 = vmatpush1.msra.mxu0 %v3169
    %3199 = vmatprep.subr.mxu0 0.0
    %3200 = vmatpush1.msra.mxu0 %v3170
    %3201 = vmatprep.subr.mxu0 0.0
    %3202 = vmatpush1.msra.mxu0 %v3171
    %3203 = vmatprep.subr.mxu0 0.0
    %3204 = vmatpush1.msra.mxu0 %v3172
    %3205 = vmatprep.subr.mxu0 0.0
    %3206 = vmatpush1.msra.mxu0 0.0
    %3207 = vmatprep.subr.mxu0 0.0
    %3208 = vmatpush1.msra.mxu0 0.0
    %3209 = vmatprep.subr.mxu0 0.0
    %3210 = vmatpush1.msra.mxu0 0.0
    %3211 = vmatprep.subr.mxu0 0.0
    %3212 = vmatpush1.msra.mxu0 0.0
    %3213 = vmatprep.subr.mxu0 0.0
    %3214 = vmatpush1.msra.mxu0 0.0
    %3215 = vmatprep.subr.mxu0 0.0
    %3216 = vmatpush1.msra.mxu0 0.0
    %3217 = vmatprep.subr.mxu0 0.0
    %3218 = vmatpush1.msra.mxu0 0.0
    %3219 = vmatprep.subr.mxu0 0.0
    %3220 = vmatpush1.msra.mxu0 0.0
    %3221 = vmatprep.subr.mxu0 0.0
    %3222 = vmatpush1.msra.mxu0 0.0
    %3223 = vmatprep.subr.mxu0 0.0
    %3224 = vmatpush1.msra.mxu0 0.0
    %3225 = vmatprep.subr.mxu0 0.0
    %3226 = vmatpush1.msra.mxu0 0.0
    %3227 = vmatprep.subr.mxu0 0.0
    %3228 = vmatpush1.msra.mxu0 0.0
    %3229 = vmatprep.subr.mxu0 0.0
    %3230 = vmatpush1.msra.mxu0 0.0
    %3231 = vmatprep.subr.mxu0 0.0
    %3232 = vmatpush1.msra.mxu0 0.0
    %3233 = vmatprep.subr.mxu0 0.0
    %3234 = vmatpush1.msra.mxu0 0.0
    %3235 = vmatprep.subr.mxu0 0.0
    %3236 = vmatpush1.msra.mxu0 0.0
    %3237 = vmatprep.mubr.f32.mxu0 0.0
    %3238 = vmatmul.mubr.f32.gmra.mrb[0].mxu0 %v3092
    %v3239 = vpop.f32.mrb[0].mxu0
    %v3240 = vadd.f32 0.0, %v3239
    %v3241 = vpop.f32.mrb[0].mxu0
    %3242 = vmatprep.mubr.f32.mxu0 0.0
    %3243 = vmatmul.mubr.f32.gmra.mrb[0].mxu0 %v3093
    %v3244 = vpop.f32.mrb[0].mxu0
    %v3245 = vadd.f32 0.0, %v3244
    %v3246 = vpop.f32.mrb[0].mxu0
    %3247 = vmatprep.mubr.f32.mxu0 0.0
    %3248 = vmatmul.mubr.f32.gmra.mrb[0].mxu0 %v3094
    %v3249 = vpop.f32.mrb[0].mxu0
    %v3250 = vadd.f32 0.0, %v3249
    %v3251 = vpop.f32.mrb[0].mxu0
    %3252 = vmatprep.mubr.f32.mxu0 0.0
    %3253 = vmatmul.mubr.f32.gmra.mrb[0].mxu0 %v3095
    %v3254 = vpop.f32.mrb[0].mxu0
    %v3255 = vadd.f32 0.0, %v3254
    %v3256 = vpop.f32.mrb[0].mxu0
    %3257 = vmatprep.mubr.f32.mxu0 0.0
    %3258 = vmatmul.mubr.f32.gmra.mrb[0].mxu0 %v3096
    %v3259 = vpop.f32.mrb[0].mxu0
    %v3260 = vadd.f32 0.0, %v3259
    %v3261 = vpop.f32.mrb[0].mxu0
    %3262 = vmatprep.mubr.f32.mxu0 0.0
    %3263 = vmatmul.mubr.f32.gmra.mrb[0].mxu0 %v3097
    %v3264 = vpop.f32.mrb[0].mxu0
    %v3265 = vadd.f32 0.0, %v3264
    %v3266 = vpop.f32.mrb[0].mxu0
    %3267 = vmatprep.mubr.f32.mxu0 0.0
    %3268 = vmatmul.mubr.f32.gmra.mrb[0].mxu0 %v3098
    %v3269 = vpop.f32.mrb[0].mxu0
    %v3270 = vadd.f32 0.0, %v3269
    %v3271 = vpop.f32.mrb[0].mxu0
    %3272 = vmatprep.mubr.f32.mxu0 0.0
    %3273 = vmatmul.mubr.f32.gmra.mrb[0].mxu0 %v3099
    %v3274 = vpop.f32.mrb[0].mxu0
    %v3275 = vadd.f32 0.0, %v3274
    %v3276 = vpop.f32.mrb[0].mxu0
    %3277 = vmatprep.mubr.f32.mxu0 0.0
    %3278 = vmatmul.mubr.f32.gmra.mrb[0].mxu0 %v3100
    %v3279 = vpop.f32.mrb[0].mxu0
    %v3280 = vadd.f32 0.0, %v3279
    %v3281 = vpop.f32.mrb[0].mxu0
    %3282 = vmatprep.mubr.f32.mxu0 0.0
    %3283 = vmatmul.mubr.f32.gmra.mrb[0].mxu0 %v3101
    %v3284 = vpop.f32.mrb[0].mxu0
    %v3285 = vadd.f32 0.0, %v3284
    %v3286 = vpop.f32.mrb[0].mxu0
    %3287 = vmatprep.mubr.f32.mxu0 0.0
    %3288 = vmatmul.mubr.f32.gmra.mrb[0].mxu0 %v3102
    %v3289 = vpop.f32.mrb[0].mxu0
    %v3290 = vadd.f32 0.0, %v3289
    %v3291 = vpop.f32.mrb[0].mxu0
    %3292 = vmatprep.mubr.f32.mxu0 0.0
    %3293 = vmatmul.mubr.f32.gmra.mrb[0].mxu0 %v3103
    %v3294 = vpop.f32.mrb[0].mxu0
    %v3295 = vadd.f32 0.0, %v3294
    %v3296 = vpop.f32.mrb[0].mxu0
    %3297 = vmatprep.mubr.f32.mxu0 0.0
    %3298 = vmatmul.mubr.f32.gmra.mrb[0].mxu0 %v3104
    %v3299 = vpop.f32.mrb[0].mxu0
    %v3300 = vadd.f32 0.0, %v3299
    %v3301 = vpop.f32.mrb[0].mxu0
    %3302 = vmatprep.mubr.f32.mxu0 0.0
    %3303 = vmatmul.mubr.f32.gmra.mrb[0].mxu0 %v3105
    %v3304 = vpop.f32.mrb[0].mxu0
    %v3305 = vadd.f32 0.0, %v3304
    %v3306 = vpop.f32.mrb[0].mxu0
    %3307 = vmatprep.mubr.f32.mxu0 0.0
    %3308 = vmatmul.mubr.f32.gmra.mrb[0].mxu0 %v3106
    %v3309 = vpop.f32.mrb[0].mxu0
    %v3310 = vadd.f32 0.0, %v3309
    %v3311 = vpop.f32.mrb[0].mxu0
    %3312 = vmatprep.mubr.f32.mxu0 0.0
    %3313 = vmatmul.mubr.f32.gmra.mrb[0].mxu0 %v3107
    %v3314 = vpop.f32.mrb[0].mxu0
    %v3315 = vadd.f32 0.0, %v3314
    %v3316 = vpop.f32.mrb[0].mxu0
    %3317 = vmatprep.mubr.f32.mxu0 0.0
    %3318 = vmatmul.mubr.f32.gmra.mrb[0].mxu0 %v3108
    %v3319 = vpop.f32.mrb[0].mxu0
    %v3320 = vadd.f32 0.0, %v3319
    %v3321 = vpop.f32.mrb[0].mxu0
    %3322 = vmatprep.mubr.f32.mxu0 0.0
    %3323 = vmatmul.mubr.f32.gmra.mrb[0].mxu0 %v3109
    %v3324 = vpop.f32.mrb[0].mxu0
    %v3325 = vadd.f32 0.0, %v3324
    %v3326 = vpop.f32.mrb[0].mxu0
    %3327 = vmatprep.mubr.f32.mxu0 0.0
    %3328 = vmatmul.mubr.f32.gmra.mrb[0].mxu0 %v3110
    %v3329 = vpop.f32.mrb[0].mxu0
    %v3330 = vadd.f32 0.0, %v3329
    %v3331 = vpop.f32.mrb[0].mxu0
    %3332 = vmatprep.mubr.f32.mxu0 0.0
    %3333 = vmatmul.mubr.f32.gmra.mrb[0].mxu0 %v3111
    %v3334 = vpop.f32.mrb[0].mxu0
    %v3335 = vadd.f32 0.0, %v3334
    %v3336 = vpop.f32.mrb[0].mxu0
    %3337 = vmatprep.mubr.f32.mxu0 0.0
    %3338 = vmatmul.mubr.f32.gmra.mrb[0].mxu0 %v3112
    %v3339 = vpop.f32.mrb[0].mxu0
    %v3340 = vadd.f32 0.0, %v3339
    %v3341 = vpop.f32.mrb[0].mxu0
    %3342 = vmatprep.mubr.f32.mxu0 0.0
    %3343 = vmatmul.mubr.f32.gmra.mrb[0].mxu0 %v3113
    %v3344 = vpop.f32.mrb[0].mxu0
    %v3345 = vadd.f32 0.0, %v3344
    %v3346 = vpop.f32.mrb[0].mxu0
    %3347 = vmatprep.mubr.f32.mxu0 0.0
    %3348 = vmatmul.mubr.f32.gmra.mrb[0].mxu0 %v3114
    %v3349 = vpop.f32.mrb[0].mxu0
    %v3350 = vadd.f32 0.0, %v3349
    %v3351 = vpop.f32.mrb[0].mxu0
    %3352 = vmatprep.mubr.f32.mxu0 0.0
    %3353 = vmatmul.mubr.f32.gmra.mrb[0].mxu0 %v3115
    %v3354 = vpop.f32.mrb[0].mxu0
    %v3355 = vadd.f32 0.0, %v3354
    %v3356 = vpop.f32.mrb[0].mxu0
    %3357 = vmatprep.mubr.f32.mxu0 0.0
    %3358 = vmatmul.mubr.f32.gmra.mrb[0].mxu0 %v3116
    %v3359 = vpop.f32.mrb[0].mxu0
    %v3360 = vadd.f32 0.0, %v3359
    %v3361 = vpop.f32.mrb[0].mxu0
    %3362 = vmatprep.mubr.f32.mxu0 0.0
    %3363 = vmatmul.mubr.f32.gmra.mrb[0].mxu0 %v3117
    %v3364 = vpop.f32.mrb[0].mxu0
    %v3365 = vadd.f32 0.0, %v3364
    %v3366 = vpop.f32.mrb[0].mxu0
    %3367 = vmatprep.mubr.f32.mxu0 0.0
    %3368 = vmatmul.mubr.f32.gmra.mrb[0].mxu0 %v3118
    %v3369 = vpop.f32.mrb[0].mxu0
    %v3370 = vadd.f32 0.0, %v3369
    %v3371 = vpop.f32.mrb[0].mxu0
    %3372 = vmatprep.mubr.f32.mxu0 0.0
    %3373 = vmatmul.mubr.f32.gmra.mrb[0].mxu0 %v3119
    %v3374 = vpop.f32.mrb[0].mxu0
    %v3375 = vadd.f32 0.0, %v3374
    %v3376 = vpop.f32.mrb[0].mxu0
    %3377 = vmatprep.mubr.f32.mxu0 0.0
    %3378 = vmatmul.mubr.f32.gmra.mrb[0].mxu0 %v3120
    %v3379 = vpop.f32.mrb[0].mxu0
    %v3380 = vadd.f32 0.0, %v3379
    %v3381 = vpop.f32.mrb[0].mxu0
    %3382 = vmatprep.mubr.f32.mxu0 0.0
    %3383 = vmatmul.mubr.f32.gmra.mrb[0].mxu0 %v3121
    %v3384 = vpop.f32.mrb[0].mxu0
    %v3385 = vadd.f32 0.0, %v3384
    %v3386 = vpop.f32.mrb[0].mxu0
    %3387 = vmatprep.mubr.f32.mxu0 0.0
    %3388 = vmatmul.mubr.f32.gmra.mrb[0].mxu0 %v3122
    %v3389 = vpop.f32.mrb[0].mxu0
    %v3390 = vadd.f32 0.0, %v3389
    %v3391 = vpop.f32.mrb[0].mxu0
    %3392 = vmatprep.mubr.f32.mxu0 0.0
    %3393 = vmatmul.mubr.f32.gmra.mrb[0].mxu0 %v3123
    %v3394 = vpop.f32.mrb[0].mxu0
    %v3395 = vadd.f32 0.0, %v3394
    %v3396 = vpop.f32.mrb[0].mxu0
    %3397 = vmatprep.mubr.f32.mxu0 0.0
    %3398 = vmatmul.mubr.f32.gmra.mrb[0].mxu0 %v3124
    %v3399 = vpop.f32.mrb[0].mxu0
    %v3400 = vadd.f32 0.0, %v3399
    %v3401 = vpop.f32.mrb[0].mxu0
    %3402 = vmatprep.mubr.f32.mxu0 0.0
    %3403 = vmatmul.mubr.f32.gmra.mrb[0].mxu0 %v3125
    %v3404 = vpop.f32.mrb[0].mxu0
    %v3405 = vadd.f32 0.0, %v3404
    %v3406 = vpop.f32.mrb[0].mxu0
    %3407 = vmatprep.mubr.f32.mxu0 0.0
    %3408 = vmatmul.mubr.f32.gmra.mrb[0].mxu0 %v3126
    %v3409 = vpop.f32.mrb[0].mxu0
    %v3410 = vadd.f32 0.0, %v3409
    %v3411 = vpop.f32.mrb[0].mxu0
    %3412 = vmatprep.mubr.f32.mxu0 0.0
    %3413 = vmatmul.mubr.f32.gmra.mrb[0].mxu0 %v3127
    %v3414 = vpop.f32.mrb[0].mxu0
    %v3415 = vadd.f32 0.0, %v3414
    %v3416 = vpop.f32.mrb[0].mxu0
    %3417 = vmatprep.mubr.f32.mxu0 0.0
    %3418 = vmatmul.mubr.f32.gmra.mrb[0].mxu0 %v3128
    %v3419 = vpop.f32.mrb[0].mxu0
    %v3420 = vadd.f32 0.0, %v3419
    %v3421 = vpop.f32.mrb[0].mxu0
    %3422 = vmatprep.mubr.f32.mxu0 0.0
    %3423 = vmatmul.mubr.f32.gmra.mrb[0].mxu0 %v3129
    %v3424 = vpop.f32.mrb[0].mxu0
    %v3425 = vadd.f32 0.0, %v3424
    %v3426 = vpop.f32.mrb[0].mxu0
    %3427 = vmatprep.mubr.f32.mxu0 0.0
    %3428 = vmatmul.mubr.f32.gmra.mrb[0].mxu0 %v3130
    %v3429 = vpop.f32.mrb[0].mxu0
    %v3430 = vadd.f32 0.0, %v3429
    %v3431 = vpop.f32.mrb[0].mxu0
    %3432 = vmatprep.mubr.f32.mxu0 0.0
    %3433 = vmatmul.mubr.f32.gmra.mrb[0].mxu0 %v3131
    %v3434 = vpop.f32.mrb[0].mxu0
    %v3435 = vadd.f32 0.0, %v3434
    %v3436 = vpop.f32.mrb[0].mxu0
    %3437 = vmatprep.mubr.f32.mxu0 0.0
    %3438 = vmatmul.mubr.f32.gmra.mrb[0].mxu0 %v3132
    %v3439 = vpop.f32.mrb[0].mxu0
    %v3440 = vadd.f32 0.0, %v3439
    %v3441 = vpop.f32.mrb[0].mxu0
    %3442 = vmatprep.mubr.f32.mxu0 0.0
    %3443 = vmatmul.mubr.f32.gmra.mrb[0].mxu0 %v3133
    %v3444 = vpop.f32.mrb[0].mxu0
    %v3445 = vadd.f32 0.0, %v3444
    %v3446 = vpop.f32.mrb[0].mxu0
    %3447 = vmatprep.mubr.f32.mxu0 0.0
    %3448 = vmatmul.mubr.f32.gmra.mrb[0].mxu0 %v3134
    %v3449 = vpop.f32.mrb[0].mxu0
    %v3450 = vadd.f32 0.0, %v3449
    %v3451 = vpop.f32.mrb[0].mxu0
    %3452 = vmatprep.mubr.f32.mxu0 0.0
    %3453 = vmatmul.mubr.f32.gmra.mrb[0].mxu0 %v3135
    %v3454 = vpop.f32.mrb[0].mxu0
    %v3455 = vadd.f32 0.0, %v3454
    %v3456 = vpop.f32.mrb[0].mxu0
    %3457 = vmatprep.mubr.f32.mxu0 0.0
    %3458 = vmatmul.mubr.f32.gmra.mrb[0].mxu0 %v3136
    %v3459 = vpop.f32.mrb[0].mxu0
    %v3460 = vadd.f32 0.0, %v3459
    %v3461 = vpop.f32.mrb[0].mxu0
    %3462 = vmatprep.mubr.f32.mxu0 0.0
    %3463 = vmatmul.mubr.f32.gmra.mrb[0].mxu0 %v3137
    %v3464 = vpop.f32.mrb[0].mxu0
    %v3465 = vadd.f32 0.0, %v3464
    %v3466 = vpop.f32.mrb[0].mxu0
    %3467 = vmatprep.mubr.f32.mxu0 0.0
    %3468 = vmatmul.mubr.f32.gmra.mrb[0].mxu0 %v3138
    %v3469 = vpop.f32.mrb[0].mxu0
    %v3470 = vadd.f32 0.0, %v3469
    %v3471 = vpop.f32.mrb[0].mxu0
    %3472 = vmatprep.mubr.f32.mxu0 0.0
    %3473 = vmatmul.mubr.f32.gmra.mrb[0].mxu0 %v3139
    %v3474 = vpop.f32.mrb[0].mxu0
    %v3475 = vadd.f32 0.0, %v3474
    %v3476 = vpop.f32.mrb[0].mxu0
    %3477 = vmatprep.mubr.f32.mxu0 0.0
    %3478 = vmatmul.mubr.f32.gmra.mrb[0].mxu0 %v3140
    %v3479 = vpop.f32.mrb[0].mxu0
    %v3480 = vadd.f32 0.0, %v3479
    %v3481 = vpop.f32.mrb[0].mxu0
    %3482 = vmatprep.mubr.f32.mxu0 0.0
    %3483 = vmatmul.mubr.f32.gmra.mrb[0].mxu0 %v3141
    %v3484 = vpop.f32.mrb[0].mxu0
    %v3485 = vadd.f32 0.0, %v3484
    %v3486 = vpop.f32.mrb[0].mxu0
    %3487 = vmatprep.mubr.f32.mxu0 0.0
    %3488 = vmatmul.mubr.f32.gmra.mrb[0].mxu0 %v3142
    %v3489 = vpop.f32.mrb[0].mxu0
    %v3490 = vadd.f32 0.0, %v3489
    %v3491 = vpop.f32.mrb[0].mxu0
    %3492 = vmatprep.mubr.f32.mxu0 0.0
    %3493 = vmatmul.mubr.f32.gmra.mrb[0].mxu0 %v3143
    %v3494 = vpop.f32.mrb[0].mxu0
    %v3495 = vadd.f32 0.0, %v3494
    %v3496 = vpop.f32.mrb[0].mxu0
    %3497 = vmatprep.mubr.f32.mxu0 0.0
    %3498 = vmatmul.mubr.f32.gmra.mrb[0].mxu0 %v3144
    %v3499 = vpop.f32.mrb[0].mxu0
    %v3500 = vadd.f32 0.0, %v3499
    %v3501 = vpop.f32.mrb[0].mxu0
    %3502 = vmatprep.mubr.f32.mxu0 0.0
    %3503 = vmatmul.mubr.f32.gmra.mrb[0].mxu0 %v3145
    %v3504 = vpop.f32.mrb[0].mxu0
    %v3505 = vadd.f32 0.0, %v3504
    %v3506 = vpop.f32.mrb[0].mxu0
    %3507 = vmatprep.mubr.f32.mxu0 0.0
    %3508 = vmatmul.mubr.f32.gmra.mrb[0].mxu0 %v3146
    %v3509 = vpop.f32.mrb[0].mxu0
    %v3510 = vadd.f32 0.0, %v3509
    %v3511 = vpop.f32.mrb[0].mxu0
    %3512 = vmatprep.mubr.f32.mxu0 0.0
    %3513 = vmatmul.mubr.f32.gmra.mrb[0].mxu0 %v3147
    %v3514 = vpop.f32.mrb[0].mxu0
    %v3515 = vadd.f32 0.0, %v3514
    %v3516 = vpop.f32.mrb[0].mxu0
    %3517 = vmatprep.mubr.f32.mxu0 0.0
    %3518 = vmatmul.mubr.f32.gmra.mrb[0].mxu0 %v3148
    %v3519 = vpop.f32.mrb[0].mxu0
    %v3520 = vadd.f32 0.0, %v3519
    %v3521 = vpop.f32.mrb[0].mxu0
    %3522 = vmatprep.mubr.f32.mxu0 0.0
    %3523 = vmatmul.mubr.f32.gmra.mrb[0].mxu0 %v3149
    %v3524 = vpop.f32.mrb[0].mxu0
    %v3525 = vadd.f32 0.0, %v3524
    %v3526 = vpop.f32.mrb[0].mxu0
    %3527 = vmatprep.mubr.f32.mxu0 0.0
    %3528 = vmatmul.mubr.f32.gmra.mrb[0].mxu0 %v3150
    %v3529 = vpop.f32.mrb[0].mxu0
    %v3530 = vadd.f32 0.0, %v3529
    %v3531 = vpop.f32.mrb[0].mxu0
    %3532 = vmatprep.mubr.f32.mxu0 0.0
    %3533 = vmatmul.mubr.f32.gmra.mrb[0].mxu0 %v3151
    %v3534 = vpop.f32.mrb[0].mxu0
    %v3535 = vadd.f32 0.0, %v3534
    %v3536 = vpop.f32.mrb[0].mxu0
    %3537 = vmatprep.mubr.f32.mxu0 0.0
    %3538 = vmatmul.mubr.f32.gmra.mrb[0].mxu0 %v3152
    %v3539 = vpop.f32.mrb[0].mxu0
    %v3540 = vadd.f32 0.0, %v3539
    %v3541 = vpop.f32.mrb[0].mxu0
    %3542 = vmatprep.mubr.f32.mxu0 0.0
    %3543 = vmatmul.mubr.f32.gmra.mrb[0].mxu0 %v3153
    %v3544 = vpop.f32.mrb[0].mxu0
    %v3545 = vadd.f32 0.0, %v3544
    %v3546 = vpop.f32.mrb[0].mxu0
    %3547 = vmatprep.mubr.f32.mxu0 0.0
    %3548 = vmatmul.mubr.f32.gmra.mrb[0].mxu0 %v3154
    %v3549 = vpop.f32.mrb[0].mxu0
    %v3550 = vadd.f32 0.0, %v3549
    %v3551 = vpop.f32.mrb[0].mxu0
    %3552 = vmatprep.mubr.f32.mxu0 0.0
    %3553 = vmatmul.mubr.f32.gmra.mrb[0].mxu0 %v3155
    %v3554 = vpop.f32.mrb[0].mxu0
    %v3555 = vadd.f32 0.0, %v3554
    %v3556 = vpop.f32.mrb[0].mxu0
    %3557 = vdwg.mxu0
    %v3558 = vadd.f32 %v3028, %v3240
    %v3559 = vadd.f32 %v3029, %v3245
    %v3560 = vadd.f32 %v3030, %v3250
    %v3561 = vadd.f32 %v3031, %v3255
    %v3562 = vadd.f32 %v3032, %v3260
    %v3563 = vadd.f32 %v3033, %v3265
    %v3564 = vadd.f32 %v3034, %v3270
    %v3565 = vadd.f32 %v3035, %v3275
    %v3566 = vadd.f32 %v3036, %v3280
    %v3567 = vadd.f32 %v3037, %v3285
    %v3568 = vadd.f32 %v3038, %v3290
    %v3569 = vadd.f32 %v3039, %v3295
    %v3570 = vadd.f32 %v3040, %v3300
    %v3571 = vadd.f32 %v3041, %v3305
    %v3572 = vadd.f32 %v3042, %v3310
    %v3573 = vadd.f32 %v3043, %v3315
    %v3574 = vadd.f32 %v3044, %v3320
    %v3575 = vadd.f32 %v3045, %v3325
    %v3576 = vadd.f32 %v3046, %v3330
    %v3577 = vadd.f32 %v3047, %v3335
    %v3578 = vadd.f32 %v3048, %v3340
    %v3579 = vadd.f32 %v3049, %v3345
    %v3580 = vadd.f32 %v3050, %v3350
    %v3581 = vadd.f32 %v3051, %v3355
    %v3582 = vadd.f32 %v3052, %v3360
    %v3583 = vadd.f32 %v3053, %v3365
    %v3584 = vadd.f32 %v3054, %v3370
    %v3585 = vadd.f32 %v3055, %v3375
    %v3586 = vadd.f32 %v3056, %v3380
    %v3587 = vadd.f32 %v3057, %v3385
    %v3588 = vadd.f32 %v3058, %v3390
    %v3589 = vadd.f32 %v3059, %v3395
    %v3590 = vadd.f32 %v3060, %v3400
    %v3591 = vadd.f32 %v3061, %v3405
    %v3592 = vadd.f32 %v3062, %v3410
    %v3593 = vadd.f32 %v3063, %v3415
    %v3594 = vadd.f32 %v3064, %v3420
    %v3595 = vadd.f32 %v3065, %v3425
    %v3596 = vadd.f32 %v3066, %v3430
    %v3597 = vadd.f32 %v3067, %v3435
    %v3598 = vadd.f32 %v3068, %v3440
    %v3599 = vadd.f32 %v3069, %v3445
    %v3600 = vadd.f32 %v3070, %v3450
    %v3601 = vadd.f32 %v3071, %v3455
    %v3602 = vadd.f32 %v3072, %v3460
    %v3603 = vadd.f32 %v3073, %v3465
    %v3604 = vadd.f32 %v3074, %v3470
    %v3605 = vadd.f32 %v3075, %v3475
    %v3606 = vadd.f32 %v3076, %v3480
    %v3607 = vadd.f32 %v3077, %v3485
    %v3608 = vadd.f32 %v3078, %v3490
    %v3609 = vadd.f32 %v3079, %v3495
    %v3610 = vadd.f32 %v3080, %v3500
    %v3611 = vadd.f32 %v3081, %v3505
    %v3612 = vadd.f32 %v3082, %v3510
    %v3613 = vadd.f32 %v3083, %v3515
    %v3614 = vadd.f32 %v3084, %v3520
    %v3615 = vadd.f32 %v3085, %v3525
    %v3616 = vadd.f32 %v3086, %v3530
    %v3617 = vadd.f32 %v3087, %v3535
    %v3618 = vadd.f32 %v3088, %v3540
    %v3619 = vadd.f32 %v3089, %v3545
    %v3620 = vadd.f32 %v3090, %v3550
    %v3621 = vadd.f32 %v3091, %v3555
    %v3622 = vld [vmem:[%s1036 + $0x2] sm:$0xff]
    %v3623 = vld [vmem:[%s1036 + $0xa] sm:$0xff]
    %v3624 = vld [vmem:[%s1036 + $0x1a] sm:$0xff]
    %v3625 = vld [vmem:[%s1036 + $0x22] sm:$0xff]
    %v3626 = vld [vmem:[%s1036 + $0x32] sm:$0xff]
    %v3627 = vld [vmem:[%s1036 + $0x3a] sm:$0xff]
    %v3628 = vld [vmem:[%s1036 + $0x4a] sm:$0xff]
    %v3629 = vld [vmem:[%s1036 + $0x52] sm:$0xff]
    %v3630 = vld [vmem:[%s1036 + $0x62] sm:$0xff]
    %v3631 = vld [vmem:[%s1036 + $0x6a] sm:$0xff]
    %v3632 = vld [vmem:[%s1036 + $0x7a] sm:$0xff]
    %v3633 = vld [vmem:[%s1036 + $0x82] sm:$0xff]
    %v3634 = vld [vmem:[%s1036 + $0x92] sm:$0xff]
    %v3635 = vld [vmem:[%s1036 + $0x9a] sm:$0xff]
    %v3636 = vld [vmem:[%s1036 + $0xaa] sm:$0xff]
    %v3637 = vld [vmem:[%s1036 + $0xb2] sm:$0xff]
    %v3638 = vld [vmem:[%s1036 + $0xc2] sm:$0xff]
    %v3639 = vld [vmem:[%s1036 + $0xca] sm:$0xff]
    %v3640 = vld [vmem:[%s1036 + $0xda] sm:$0xff]
    %v3641 = vld [vmem:[%s1036 + $0xe2] sm:$0xff]
    %v3642 = vld [vmem:[%s1036 + $0xf2] sm:$0xff]
    %v3643 = vld [vmem:[%s1036 + $0xfa] sm:$0xff]
    %v3644 = vld [vmem:[%s1036 + $0x10a] sm:$0xff]
    %v3645 = vld [vmem:[%s1036 + $0x112] sm:$0xff]
    %v3646 = vld [vmem:[%s1036 + $0x122] sm:$0xff]
    %v3647 = vld [vmem:[%s1036 + $0x12a] sm:$0xff]
    %v3648 = vld [vmem:[%s1036 + $0x13a] sm:$0xff]
    %v3649 = vld [vmem:[%s1036 + $0x142] sm:$0xff]
    %v3650 = vld [vmem:[%s1036 + $0x152] sm:$0xff]
    %v3651 = vld [vmem:[%s1036 + $0x15a] sm:$0xff]
    %v3652 = vld [vmem:[%s1036 + $0x16a] sm:$0xff]
    %v3653 = vld [vmem:[%s1036 + $0x172] sm:$0xff]
    %v3654 = vld [vmem:[%s1036 + $0x1b2] sm:$0xff]
    %v3655 = vld [vmem:[%s1036 + $0x1ba] sm:$0xff]
    %v3656 = vld [vmem:[%s1036 + $0x1ca] sm:$0xff]
    %v3657 = vld [vmem:[%s1036 + $0x1d2] sm:$0xff]
    %v3658 = vld [vmem:[%s1036 + $0x1e2] sm:$0xff]
    %v3659 = vld [vmem:[%s1036 + $0x1ea] sm:$0xff]
    %v3660 = vld [vmem:[%s1036 + $0x1fa] sm:$0xff]
    %v3661 = vld [vmem:[%s1036 + $0x202] sm:$0xff]
    %v3662 = vld [vmem:[%s1036 + $0x212] sm:$0xff]
    %v3663 = vld [vmem:[%s1036 + $0x21a] sm:$0xff]
    %v3664 = vld [vmem:[%s1036 + $0x22a] sm:$0xff]
    %v3665 = vld [vmem:[%s1036 + $0x232] sm:$0xff]
    %v3666 = vld [vmem:[%s1036 + $0x242] sm:$0xff]
    %v3667 = vld [vmem:[%s1036 + $0x24a] sm:$0xff]
    %v3668 = vld [vmem:[%s1036 + $0x25a] sm:$0xff]
    %v3669 = vld [vmem:[%s1036 + $0x262] sm:$0xff]
    %v3670 = vld [vmem:[%s1036 + $0x272] sm:$0xff]
    %v3671 = vld [vmem:[%s1036 + $0x27a] sm:$0xff]
    %v3672 = vld [vmem:[%s1036 + $0x28a] sm:$0xff]
    %v3673 = vld [vmem:[%s1036 + $0x292] sm:$0xff]
    %v3674 = vld [vmem:[%s1036 + $0x2a2] sm:$0xff]
    %v3675 = vld [vmem:[%s1036 + $0x2aa] sm:$0xff]
    %v3676 = vld [vmem:[%s1036 + $0x2ba] sm:$0xff]
    %v3677 = vld [vmem:[%s1036 + $0x2c2] sm:$0xff]
    %v3678 = vld [vmem:[%s1036 + $0x2d2] sm:$0xff]
    %v3679 = vld [vmem:[%s1036 + $0x2da] sm:$0xff]
    %v3680 = vld [vmem:[%s1036 + $0x2ea] sm:$0xff]
    %v3681 = vld [vmem:[%s1036 + $0x2f2] sm:$0xff]
    %v3682 = vld [vmem:[%s1036 + $0x302] sm:$0xff]
    %v3683 = vld [vmem:[%s1036 + $0x30a] sm:$0xff]
    %v3684 = vld [vmem:[%s1036 + $0x31a] sm:$0xff]
    %v3685 = vld [vmem:[%s1036 + $0x322] sm:$0xff]
    %s3686 = scalar_lea.vmem [#allocation8], 640
    %v3687 = vld [vmem:[%s3686] sm:$0xff]
    %v3688 = vld [vmem:[%s3686 + $0x8] sm:$0xff]
    %v3689 = vld [vmem:[%s3686 + $0x10] sm:$0xff]
    %v3690 = vld [vmem:[%s3686 + $0x18] sm:$0xff]
    %v3691 = vld [vmem:[%s3686 + $0x20] sm:$0xff]
    %v3692 = vld [vmem:[%s3686 + $0x28] sm:$0xff]
    %v3693 = vld [vmem:[%s3686 + $0x30] sm:$0xff]
    %v3694 = vld [vmem:[%s3686 + $0x38] sm:$0xff]
    %v3695 = vld [vmem:[%s3686 + $0x40] sm:$0xff]
    %v3696 = vld [vmem:[%s3686 + $0x48] sm:$0xff]
    %v3697 = vld [vmem:[%s3686 + $0x50] sm:$0xff]
    %v3698 = vld [vmem:[%s3686 + $0x58] sm:$0xff]
    %v3699 = vld [vmem:[%s3686 + $0x60] sm:$0xff]
    %v3700 = vld [vmem:[%s3686 + $0x68] sm:$0xff]
    %v3701 = vld [vmem:[%s3686 + $0x70] sm:$0xff]
    %v3702 = vld [vmem:[%s3686 + $0x78] sm:$0xff]
    %3703 = vmatprep.subr.mxu0 0.0
    %3704 = vmatpush1.msra.mxu0 %v3687
    %3705 = vmatprep.subr.mxu0 0.0
    %3706 = vmatpush1.msra.mxu0 %v3688
    %3707 = vmatprep.subr.mxu0 0.0
    %3708 = vmatpush1.msra.mxu0 %v3689
    %3709 = vmatprep.subr.mxu0 0.0
    %3710 = vmatpush1.msra.mxu0 %v3690
    %3711 = vmatprep.subr.mxu0 0.0
    %3712 = vmatpush1.msra.mxu0 %v3691
    %3713 = vmatprep.subr.mxu0 0.0
    %3714 = vmatpush1.msra.mxu0 %v3692
    %3715 = vmatprep.subr.mxu0 0.0
    %3716 = vmatpush1.msra.mxu0 %v3693
    %3717 = vmatprep.subr.mxu0 0.0
    %3718 = vmatpush1.msra.mxu0 %v3694
    %3719 = vmatprep.subr.mxu0 0.0
    %3720 = vmatpush1.msra.mxu0 %v3695
    %3721 = vmatprep.subr.mxu0 0.0
    %3722 = vmatpush1.msra.mxu0 %v3696
    %3723 = vmatprep.subr.mxu0 0.0
    %3724 = vmatpush1.msra.mxu0 %v3697
    %3725 = vmatprep.subr.mxu0 0.0
    %3726 = vmatpush1.msra.mxu0 %v3698
    %3727 = vmatprep.subr.mxu0 0.0
    %3728 = vmatpush1.msra.mxu0 %v3699
    %3729 = vmatprep.subr.mxu0 0.0
    %3730 = vmatpush1.msra.mxu0 %v3700
    %3731 = vmatprep.subr.mxu0 0.0
    %3732 = vmatpush1.msra.mxu0 %v3701
    %3733 = vmatprep.subr.mxu0 0.0
    %3734 = vmatpush1.msra.mxu0 %v3702
    %3735 = vmatprep.subr.mxu0 0.0
    %3736 = vmatpush1.msra.mxu0 0.0
    %3737 = vmatprep.subr.mxu0 0.0
    %3738 = vmatpush1.msra.mxu0 0.0
    %3739 = vmatprep.subr.mxu0 0.0
    %3740 = vmatpush1.msra.mxu0 0.0
    %3741 = vmatprep.subr.mxu0 0.0
    %3742 = vmatpush1.msra.mxu0 0.0
    %3743 = vmatprep.subr.mxu0 0.0
    %3744 = vmatpush1.msra.mxu0 0.0
    %3745 = vmatprep.subr.mxu0 0.0
    %3746 = vmatpush1.msra.mxu0 0.0
    %3747 = vmatprep.subr.mxu0 0.0
    %3748 = vmatpush1.msra.mxu0 0.0
    %3749 = vmatprep.subr.mxu0 0.0
    %3750 = vmatpush1.msra.mxu0 0.0
    %3751 = vmatprep.subr.mxu0 0.0
    %3752 = vmatpush1.msra.mxu0 0.0
    %3753 = vmatprep.subr.mxu0 0.0
    %3754 = vmatpush1.msra.mxu0 0.0
    %3755 = vmatprep.subr.mxu0 0.0
    %3756 = vmatpush1.msra.mxu0 0.0
    %3757 = vmatprep.subr.mxu0 0.0
    %3758 = vmatpush1.msra.mxu0 0.0
    %3759 = vmatprep.subr.mxu0 0.0
    %3760 = vmatpush1.msra.mxu0 0.0
    %3761 = vmatprep.subr.mxu0 0.0
    %3762 = vmatpush1.msra.mxu0 0.0
    %3763 = vmatprep.subr.mxu0 0.0
    %3764 = vmatpush1.msra.mxu0 0.0
    %3765 = vmatprep.subr.mxu0 0.0
    %3766 = vmatpush1.msra.mxu0 0.0
    %3767 = vmatprep.mubr.f32.mxu0 0.0
    %3768 = vmatmul.mubr.f32.gmra.mrb[0].mxu0 %v3622
    %v3769 = vpop.f32.mrb[0].mxu0
    %v3770 = vadd.f32 0.0, %v3769
    %v3771 = vpop.f32.mrb[0].mxu0
    %3772 = vmatprep.mubr.f32.mxu0 0.0
    %3773 = vmatmul.mubr.f32.gmra.mrb[0].mxu0 %v3623
    %v3774 = vpop.f32.mrb[0].mxu0
    %v3775 = vadd.f32 0.0, %v3774
    %v3776 = vpop.f32.mrb[0].mxu0
    %3777 = vmatprep.mubr.f32.mxu0 0.0
    %3778 = vmatmul.mubr.f32.gmra.mrb[0].mxu0 %v3624
    %v3779 = vpop.f32.mrb[0].mxu0
    %v3780 = vadd.f32 0.0, %v3779
    %v3781 = vpop.f32.mrb[0].mxu0
    %3782 = vmatprep.mubr.f32.mxu0 0.0
    %3783 = vmatmul.mubr.f32.gmra.mrb[0].mxu0 %v3625
    %v3784 = vpop.f32.mrb[0].mxu0
    %v3785 = vadd.f32 0.0, %v3784
    %v3786 = vpop.f32.mrb[0].mxu0
    %3787 = vmatprep.mubr.f32.mxu0 0.0
    %3788 = vmatmul.mubr.f32.gmra.mrb[0].mxu0 %v3626
    %v3789 = vpop.f32.mrb[0].mxu0
    %v3790 = vadd.f32 0.0, %v3789
    %v3791 = vpop.f32.mrb[0].mxu0
    %3792 = vmatprep.mubr.f32.mxu0 0.0
    %3793 = vmatmul.mubr.f32.gmra.mrb[0].mxu0 %v3627
    %v3794 = vpop.f32.mrb[0].mxu0
    %v3795 = vadd.f32 0.0, %v3794
    %v3796 = vpop.f32.mrb[0].mxu0
    %3797 = vmatprep.mubr.f32.mxu0 0.0
    %3798 = vmatmul.mubr.f32.gmra.mrb[0].mxu0 %v3628
    %v3799 = vpop.f32.mrb[0].mxu0
    %v3800 = vadd.f32 0.0, %v3799
    %v3801 = vpop.f32.mrb[0].mxu0
    %3802 = vmatprep.mubr.f32.mxu0 0.0
    %3803 = vmatmul.mubr.f32.gmra.mrb[0].mxu0 %v3629
    %v3804 = vpop.f32.mrb[0].mxu0
    %v3805 = vadd.f32 0.0, %v3804
    %v3806 = vpop.f32.mrb[0].mxu0
    %3807 = vmatprep.mubr.f32.mxu0 0.0
    %3808 = vmatmul.mubr.f32.gmra.mrb[0].mxu0 %v3630
    %v3809 = vpop.f32.mrb[0].mxu0
    %v3810 = vadd.f32 0.0, %v3809
    %v3811 = vpop.f32.mrb[0].mxu0
    %3812 = vmatprep.mubr.f32.mxu0 0.0
    %3813 = vmatmul.mubr.f32.gmra.mrb[0].mxu0 %v3631
    %v3814 = vpop.f32.mrb[0].mxu0
    %v3815 = vadd.f32 0.0, %v3814
    %v3816 = vpop.f32.mrb[0].mxu0
    %3817 = vmatprep.mubr.f32.mxu0 0.0
    %3818 = vmatmul.mubr.f32.gmra.mrb[0].mxu0 %v3632
    %v3819 = vpop.f32.mrb[0].mxu0
    %v3820 = vadd.f32 0.0, %v3819
    %v3821 = vpop.f32.mrb[0].mxu0
    %3822 = vmatprep.mubr.f32.mxu0 0.0
    %3823 = vmatmul.mubr.f32.gmra.mrb[0].mxu0 %v3633
    %v3824 = vpop.f32.mrb[0].mxu0
    %v3825 = vadd.f32 0.0, %v3824
    %v3826 = vpop.f32.mrb[0].mxu0
    %3827 = vmatprep.mubr.f32.mxu0 0.0
    %3828 = vmatmul.mubr.f32.gmra.mrb[0].mxu0 %v3634
    %v3829 = vpop.f32.mrb[0].mxu0
    %v3830 = vadd.f32 0.0, %v3829
    %v3831 = vpop.f32.mrb[0].mxu0
    %3832 = vmatprep.mubr.f32.mxu0 0.0
    %3833 = vmatmul.mubr.f32.gmra.mrb[0].mxu0 %v3635
    %v3834 = vpop.f32.mrb[0].mxu0
    %v3835 = vadd.f32 0.0, %v3834
    %v3836 = vpop.f32.mrb[0].mxu0
    %3837 = vmatprep.mubr.f32.mxu0 0.0
    %3838 = vmatmul.mubr.f32.gmra.mrb[0].mxu0 %v3636
    %v3839 = vpop.f32.mrb[0].mxu0
    %v3840 = vadd.f32 0.0, %v3839
    %v3841 = vpop.f32.mrb[0].mxu0
    %3842 = vmatprep.mubr.f32.mxu0 0.0
    %3843 = vmatmul.mubr.f32.gmra.mrb[0].mxu0 %v3637
    %v3844 = vpop.f32.mrb[0].mxu0
    %v3845 = vadd.f32 0.0, %v3844
    %v3846 = vpop.f32.mrb[0].mxu0
    %3847 = vmatprep.mubr.f32.mxu0 0.0
    %3848 = vmatmul.mubr.f32.gmra.mrb[0].mxu0 %v3638
    %v3849 = vpop.f32.mrb[0].mxu0
    %v3850 = vadd.f32 0.0, %v3849
    %v3851 = vpop.f32.mrb[0].mxu0
    %3852 = vmatprep.mubr.f32.mxu0 0.0
    %3853 = vmatmul.mubr.f32.gmra.mrb[0].mxu0 %v3639
    %v3854 = vpop.f32.mrb[0].mxu0
    %v3855 = vadd.f32 0.0, %v3854
    %v3856 = vpop.f32.mrb[0].mxu0
    %3857 = vmatprep.mubr.f32.mxu0 0.0
    %3858 = vmatmul.mubr.f32.gmra.mrb[0].mxu0 %v3640
    %v3859 = vpop.f32.mrb[0].mxu0
    %v3860 = vadd.f32 0.0, %v3859
    %v3861 = vpop.f32.mrb[0].mxu0
    %3862 = vmatprep.mubr.f32.mxu0 0.0
    %3863 = vmatmul.mubr.f32.gmra.mrb[0].mxu0 %v3641
    %v3864 = vpop.f32.mrb[0].mxu0
    %v3865 = vadd.f32 0.0, %v3864
    %v3866 = vpop.f32.mrb[0].mxu0
    %3867 = vmatprep.mubr.f32.mxu0 0.0
    %3868 = vmatmul.mubr.f32.gmra.mrb[0].mxu0 %v3642
    %v3869 = vpop.f32.mrb[0].mxu0
    %v3870 = vadd.f32 0.0, %v3869
    %v3871 = vpop.f32.mrb[0].mxu0
    %3872 = vmatprep.mubr.f32.mxu0 0.0
    %3873 = vmatmul.mubr.f32.gmra.mrb[0].mxu0 %v3643
    %v3874 = vpop.f32.mrb[0].mxu0
    %v3875 = vadd.f32 0.0, %v3874
    %v3876 = vpop.f32.mrb[0].mxu0
    %3877 = vmatprep.mubr.f32.mxu0 0.0
    %3878 = vmatmul.mubr.f32.gmra.mrb[0].mxu0 %v3644
    %v3879 = vpop.f32.mrb[0].mxu0
    %v3880 = vadd.f32 0.0, %v3879
    %v3881 = vpop.f32.mrb[0].mxu0
    %3882 = vmatprep.mubr.f32.mxu0 0.0
    %3883 = vmatmul.mubr.f32.gmra.mrb[0].mxu0 %v3645
    %v3884 = vpop.f32.mrb[0].mxu0
    %v3885 = vadd.f32 0.0, %v3884
    %v3886 = vpop.f32.mrb[0].mxu0
    %3887 = vmatprep.mubr.f32.mxu0 0.0
    %3888 = vmatmul.mubr.f32.gmra.mrb[0].mxu0 %v3646
    %v3889 = vpop.f32.mrb[0].mxu0
    %v3890 = vadd.f32 0.0, %v3889
    %v3891 = vpop.f32.mrb[0].mxu0
    %3892 = vmatprep.mubr.f32.mxu0 0.0
    %3893 = vmatmul.mubr.f32.gmra.mrb[0].mxu0 %v3647
    %v3894 = vpop.f32.mrb[0].mxu0
    %v3895 = vadd.f32 0.0, %v3894
    %v3896 = vpop.f32.mrb[0].mxu0
    %3897 = vmatprep.mubr.f32.mxu0 0.0
    %3898 = vmatmul.mubr.f32.gmra.mrb[0].mxu0 %v3648
    %v3899 = vpop.f32.mrb[0].mxu0
    %v3900 = vadd.f32 0.0, %v3899
    %v3901 = vpop.f32.mrb[0].mxu0
    %3902 = vmatprep.mubr.f32.mxu0 0.0
    %3903 = vmatmul.mubr.f32.gmra.mrb[0].mxu0 %v3649
    %v3904 = vpop.f32.mrb[0].mxu0
    %v3905 = vadd.f32 0.0, %v3904
    %v3906 = vpop.f32.mrb[0].mxu0
    %3907 = vmatprep.mubr.f32.mxu0 0.0
    %3908 = vmatmul.mubr.f32.gmra.mrb[0].mxu0 %v3650
    %v3909 = vpop.f32.mrb[0].mxu0
    %v3910 = vadd.f32 0.0, %v3909
    %v3911 = vpop.f32.mrb[0].mxu0
    %3912 = vmatprep.mubr.f32.mxu0 0.0
    %3913 = vmatmul.mubr.f32.gmra.mrb[0].mxu0 %v3651
    %v3914 = vpop.f32.mrb[0].mxu0
    %v3915 = vadd.f32 0.0, %v3914
    %v3916 = vpop.f32.mrb[0].mxu0
    %3917 = vmatprep.mubr.f32.mxu0 0.0
    %3918 = vmatmul.mubr.f32.gmra.mrb[0].mxu0 %v3652
    %v3919 = vpop.f32.mrb[0].mxu0
    %v3920 = vadd.f32 0.0, %v3919
    %v3921 = vpop.f32.mrb[0].mxu0
    %3922 = vmatprep.mubr.f32.mxu0 0.0
    %3923 = vmatmul.mubr.f32.gmra.mrb[0].mxu0 %v3653
    %v3924 = vpop.f32.mrb[0].mxu0
    %v3925 = vadd.f32 0.0, %v3924
    %v3926 = vpop.f32.mrb[0].mxu0
    %3927 = vmatprep.mubr.f32.mxu0 0.0
    %3928 = vmatmul.mubr.f32.gmra.mrb[0].mxu0 %v3654
    %v3929 = vpop.f32.mrb[0].mxu0
    %v3930 = vadd.f32 0.0, %v3929
    %v3931 = vpop.f32.mrb[0].mxu0
    %3932 = vmatprep.mubr.f32.mxu0 0.0
    %3933 = vmatmul.mubr.f32.gmra.mrb[0].mxu0 %v3655
    %v3934 = vpop.f32.mrb[0].mxu0
    %v3935 = vadd.f32 0.0, %v3934
    %v3936 = vpop.f32.mrb[0].mxu0
    %3937 = vmatprep.mubr.f32.mxu0 0.0
    %3938 = vmatmul.mubr.f32.gmra.mrb[0].mxu0 %v3656
    %v3939 = vpop.f32.mrb[0].mxu0
    %v3940 = vadd.f32 0.0, %v3939
    %v3941 = vpop.f32.mrb[0].mxu0
    %3942 = vmatprep.mubr.f32.mxu0 0.0
    %3943 = vmatmul.mubr.f32.gmra.mrb[0].mxu0 %v3657
    %v3944 = vpop.f32.mrb[0].mxu0
    %v3945 = vadd.f32 0.0, %v3944
    %v3946 = vpop.f32.mrb[0].mxu0
    %3947 = vmatprep.mubr.f32.mxu0 0.0
    %3948 = vmatmul.mubr.f32.gmra.mrb[0].mxu0 %v3658
    %v3949 = vpop.f32.mrb[0].mxu0
    %v3950 = vadd.f32 0.0, %v3949
    %v3951 = vpop.f32.mrb[0].mxu0
    %3952 = vmatprep.mubr.f32.mxu0 0.0
    %3953 = vmatmul.mubr.f32.gmra.mrb[0].mxu0 %v3659
    %v3954 = vpop.f32.mrb[0].mxu0
    %v3955 = vadd.f32 0.0, %v3954
    %v3956 = vpop.f32.mrb[0].mxu0
    %3957 = vmatprep.mubr.f32.mxu0 0.0
    %3958 = vmatmul.mubr.f32.gmra.mrb[0].mxu0 %v3660
    %v3959 = vpop.f32.mrb[0].mxu0
    %v3960 = vadd.f32 0.0, %v3959
    %v3961 = vpop.f32.mrb[0].mxu0
    %3962 = vmatprep.mubr.f32.mxu0 0.0
    %3963 = vmatmul.mubr.f32.gmra.mrb[0].mxu0 %v3661
    %v3964 = vpop.f32.mrb[0].mxu0
    %v3965 = vadd.f32 0.0, %v3964
    %v3966 = vpop.f32.mrb[0].mxu0
    %3967 = vmatprep.mubr.f32.mxu0 0.0
    %3968 = vmatmul.mubr.f32.gmra.mrb[0].mxu0 %v3662
    %v3969 = vpop.f32.mrb[0].mxu0
    %v3970 = vadd.f32 0.0, %v3969
    %v3971 = vpop.f32.mrb[0].mxu0
    %3972 = vmatprep.mubr.f32.mxu0 0.0
    %3973 = vmatmul.mubr.f32.gmra.mrb[0].mxu0 %v3663
    %v3974 = vpop.f32.mrb[0].mxu0
    %v3975 = vadd.f32 0.0, %v3974
    %v3976 = vpop.f32.mrb[0].mxu0
    %3977 = vmatprep.mubr.f32.mxu0 0.0
    %3978 = vmatmul.mubr.f32.gmra.mrb[0].mxu0 %v3664
    %v3979 = vpop.f32.mrb[0].mxu0
    %v3980 = vadd.f32 0.0, %v3979
    %v3981 = vpop.f32.mrb[0].mxu0
    %3982 = vmatprep.mubr.f32.mxu0 0.0
    %3983 = vmatmul.mubr.f32.gmra.mrb[0].mxu0 %v3665
    %v3984 = vpop.f32.mrb[0].mxu0
    %v3985 = vadd.f32 0.0, %v3984
    %v3986 = vpop.f32.mrb[0].mxu0
    %3987 = vmatprep.mubr.f32.mxu0 0.0
    %3988 = vmatmul.mubr.f32.gmra.mrb[0].mxu0 %v3666
    %v3989 = vpop.f32.mrb[0].mxu0
    %v3990 = vadd.f32 0.0, %v3989
    %v3991 = vpop.f32.mrb[0].mxu0
    %3992 = vmatprep.mubr.f32.mxu0 0.0
    %3993 = vmatmul.mubr.f32.gmra.mrb[0].mxu0 %v3667
    %v3994 = vpop.f32.mrb[0].mxu0
    %v3995 = vadd.f32 0.0, %v3994
    %v3996 = vpop.f32.mrb[0].mxu0
    %3997 = vmatprep.mubr.f32.mxu0 0.0
    %3998 = vmatmul.mubr.f32.gmra.mrb[0].mxu0 %v3668
    %v3999 = vpop.f32.mrb[0].mxu0
    %v4000 = vadd.f32 0.0, %v3999
    %v4001 = vpop.f32.mrb[0].mxu0
    %4002 = vmatprep.mubr.f32.mxu0 0.0
    %4003 = vmatmul.mubr.f32.gmra.mrb[0].mxu0 %v3669
    %v4004 = vpop.f32.mrb[0].mxu0
    %v4005 = vadd.f32 0.0, %v4004
    %v4006 = vpop.f32.mrb[0].mxu0
    %4007 = vmatprep.mubr.f32.mxu0 0.0
    %4008 = vmatmul.mubr.f32.gmra.mrb[0].mxu0 %v3670
    %v4009 = vpop.f32.mrb[0].mxu0
    %v4010 = vadd.f32 0.0, %v4009
    %v4011 = vpop.f32.mrb[0].mxu0
    %4012 = vmatprep.mubr.f32.mxu0 0.0
    %4013 = vmatmul.mubr.f32.gmra.mrb[0].mxu0 %v3671
    %v4014 = vpop.f32.mrb[0].mxu0
    %v4015 = vadd.f32 0.0, %v4014
    %v4016 = vpop.f32.mrb[0].mxu0
    %4017 = vmatprep.mubr.f32.mxu0 0.0
    %4018 = vmatmul.mubr.f32.gmra.mrb[0].mxu0 %v3672
    %v4019 = vpop.f32.mrb[0].mxu0
    %v4020 = vadd.f32 0.0, %v4019
    %v4021 = vpop.f32.mrb[0].mxu0
    %4022 = vmatprep.mubr.f32.mxu0 0.0
    %4023 = vmatmul.mubr.f32.gmra.mrb[0].mxu0 %v3673
    %v4024 = vpop.f32.mrb[0].mxu0
    %v4025 = vadd.f32 0.0, %v4024
    %v4026 = vpop.f32.mrb[0].mxu0
    %4027 = vmatprep.mubr.f32.mxu0 0.0
    %4028 = vmatmul.mubr.f32.gmra.mrb[0].mxu0 %v3674
    %v4029 = vpop.f32.mrb[0].mxu0
    %v4030 = vadd.f32 0.0, %v4029
    %v4031 = vpop.f32.mrb[0].mxu0
    %4032 = vmatprep.mubr.f32.mxu0 0.0
    %4033 = vmatmul.mubr.f32.gmra.mrb[0].mxu0 %v3675
    %v4034 = vpop.f32.mrb[0].mxu0
    %v4035 = vadd.f32 0.0, %v4034
    %v4036 = vpop.f32.mrb[0].mxu0
    %4037 = vmatprep.mubr.f32.mxu0 0.0
    %4038 = vmatmul.mubr.f32.gmra.mrb[0].mxu0 %v3676
    %v4039 = vpop.f32.mrb[0].mxu0
    %v4040 = vadd.f32 0.0, %v4039
    %v4041 = vpop.f32.mrb[0].mxu0
    %4042 = vmatprep.mubr.f32.mxu0 0.0
    %4043 = vmatmul.mubr.f32.gmra.mrb[0].mxu0 %v3677
    %v4044 = vpop.f32.mrb[0].mxu0
    %v4045 = vadd.f32 0.0, %v4044
    %v4046 = vpop.f32.mrb[0].mxu0
    %4047 = vmatprep.mubr.f32.mxu0 0.0
    %4048 = vmatmul.mubr.f32.gmra.mrb[0].mxu0 %v3678
    %v4049 = vpop.f32.mrb[0].mxu0
    %v4050 = vadd.f32 0.0, %v4049
    %v4051 = vpop.f32.mrb[0].mxu0
    %4052 = vmatprep.mubr.f32.mxu0 0.0
    %4053 = vmatmul.mubr.f32.gmra.mrb[0].mxu0 %v3679
    %v4054 = vpop.f32.mrb[0].mxu0
    %v4055 = vadd.f32 0.0, %v4054
    %v4056 = vpop.f32.mrb[0].mxu0
    %4057 = vmatprep.mubr.f32.mxu0 0.0
    %4058 = vmatmul.mubr.f32.gmra.mrb[0].mxu0 %v3680
    %v4059 = vpop.f32.mrb[0].mxu0
    %v4060 = vadd.f32 0.0, %v4059
    %v4061 = vpop.f32.mrb[0].mxu0
    %4062 = vmatprep.mubr.f32.mxu0 0.0
    %4063 = vmatmul.mubr.f32.gmra.mrb[0].mxu0 %v3681
    %v4064 = vpop.f32.mrb[0].mxu0
    %v4065 = vadd.f32 0.0, %v4064
    %v4066 = vpop.f32.mrb[0].mxu0
    %4067 = vmatprep.mubr.f32.mxu0 0.0
    %4068 = vmatmul.mubr.f32.gmra.mrb[0].mxu0 %v3682
    %v4069 = vpop.f32.mrb[0].mxu0
    %v4070 = vadd.f32 0.0, %v4069
    %v4071 = vpop.f32.mrb[0].mxu0
    %4072 = vmatprep.mubr.f32.mxu0 0.0
    %4073 = vmatmul.mubr.f32.gmra.mrb[0].mxu0 %v3683
    %v4074 = vpop.f32.mrb[0].mxu0
    %v4075 = vadd.f32 0.0, %v4074
    %v4076 = vpop.f32.mrb[0].mxu0
    %4077 = vmatprep.mubr.f32.mxu0 0.0
    %4078 = vmatmul.mubr.f32.gmra.mrb[0].mxu0 %v3684
    %v4079 = vpop.f32.mrb[0].mxu0
    %v4080 = vadd.f32 0.0, %v4079
    %v4081 = vpop.f32.mrb[0].mxu0
    %4082 = vmatprep.mubr.f32.mxu0 0.0
    %4083 = vmatmul.mubr.f32.gmra.mrb[0].mxu0 %v3685
    %v4084 = vpop.f32.mrb[0].mxu0
    %v4085 = vadd.f32 0.0, %v4084
    %v4086 = vpop.f32.mrb[0].mxu0
    %4087 = vdwg.mxu0
    %v4088 = vadd.f32 %v3558, %v3770
    %v4089 = vadd.f32 %v3559, %v3775
    %v4090 = vadd.f32 %v3560, %v3780
    %v4091 = vadd.f32 %v3561, %v3785
    %v4092 = vadd.f32 %v3562, %v3790
    %v4093 = vadd.f32 %v3563, %v3795
    %v4094 = vadd.f32 %v3564, %v3800
    %v4095 = vadd.f32 %v3565, %v3805
    %v4096 = vadd.f32 %v3566, %v3810
    %v4097 = vadd.f32 %v3567, %v3815
    %v4098 = vadd.f32 %v3568, %v3820
    %v4099 = vadd.f32 %v3569, %v3825
    %v4100 = vadd.f32 %v3570, %v3830
    %v4101 = vadd.f32 %v3571, %v3835
    %v4102 = vadd.f32 %v3572, %v3840
    %v4103 = vadd.f32 %v3573, %v3845
    %v4104 = vadd.f32 %v3574, %v3850
    %v4105 = vadd.f32 %v3575, %v3855
    %v4106 = vadd.f32 %v3576, %v3860
    %v4107 = vadd.f32 %v3577, %v3865
    %v4108 = vadd.f32 %v3578, %v3870
    %v4109 = vadd.f32 %v3579, %v3875
    %v4110 = vadd.f32 %v3580, %v3880
    %v4111 = vadd.f32 %v3581, %v3885
    %v4112 = vadd.f32 %v3582, %v3890
    %v4113 = vadd.f32 %v3583, %v3895
    %v4114 = vadd.f32 %v3584, %v3900
    %v4115 = vadd.f32 %v3585, %v3905
    %v4116 = vadd.f32 %v3586, %v3910
    %v4117 = vadd.f32 %v3587, %v3915
    %v4118 = vadd.f32 %v3588, %v3920
    %v4119 = vadd.f32 %v3589, %v3925
    %v4120 = vadd.f32 %v3590, %v3930
    %v4121 = vadd.f32 %v3591, %v3935
    %v4122 = vadd.f32 %v3592, %v3940
    %v4123 = vadd.f32 %v3593, %v3945
    %v4124 = vadd.f32 %v3594, %v3950
    %v4125 = vadd.f32 %v3595, %v3955
    %v4126 = vadd.f32 %v3596, %v3960
    %v4127 = vadd.f32 %v3597, %v3965
    %v4128 = vadd.f32 %v3598, %v3970
    %v4129 = vadd.f32 %v3599, %v3975
    %v4130 = vadd.f32 %v3600, %v3980
    %v4131 = vadd.f32 %v3601, %v3985
    %v4132 = vadd.f32 %v3602, %v3990
    %v4133 = vadd.f32 %v3603, %v3995
    %v4134 = vadd.f32 %v3604, %v4000
    %v4135 = vadd.f32 %v3605, %v4005
    %v4136 = vadd.f32 %v3606, %v4010
    %v4137 = vadd.f32 %v3607, %v4015
    %v4138 = vadd.f32 %v3608, %v4020
    %v4139 = vadd.f32 %v3609, %v4025
    %v4140 = vadd.f32 %v3610, %v4030
    %v4141 = vadd.f32 %v3611, %v4035
    %v4142 = vadd.f32 %v3612, %v4040
    %v4143 = vadd.f32 %v3613, %v4045
    %v4144 = vadd.f32 %v3614, %v4050
    %v4145 = vadd.f32 %v3615, %v4055
    %v4146 = vadd.f32 %v3616, %v4060
    %v4147 = vadd.f32 %v3617, %v4065
    %v4148 = vadd.f32 %v3618, %v4070
    %v4149 = vadd.f32 %v3619, %v4075
    %v4150 = vadd.f32 %v3620, %v4080
    %v4151 = vadd.f32 %v3621, %v4085
    %s4152 = scalar_lea.vmem [#allocation2], 48
    %v4153 = vld [vmem:[%s4152] sm:$0xff]
    %v4154 = vld [vmem:[%s4152 + $0x8] sm:$0xff]
    %v4155 = vld [vmem:[%s4152 + $0x18] sm:$0xff]
    %v4156 = vld [vmem:[%s4152 + $0x20] sm:$0xff]
    %v4157 = vld [vmem:[%s4152 + $0x30] sm:$0xff]
    %v4158 = vld [vmem:[%s4152 + $0x38] sm:$0xff]
    %v4159 = vld [vmem:[%s4152 + $0x48] sm:$0xff]
    %v4160 = vld [vmem:[%s4152 + $0x50] sm:$0xff]
    %v4161 = vld [vmem:[%s4152 + $0x60] sm:$0xff]
    %v4162 = vld [vmem:[%s4152 + $0x68] sm:$0xff]
    %v4163 = vld [vmem:[%s4152 + $0x78] sm:$0xff]
    %v4164 = vld [vmem:[%s4152 + $0x80] sm:$0xff]
    %v4165 = vld [vmem:[%s4152 + $0x90] sm:$0xff]
    %v4166 = vld [vmem:[%s4152 + $0x98] sm:$0xff]
    %v4167 = vld [vmem:[%s4152 + $0xa8] sm:$0xff]
    %v4168 = vld [vmem:[%s4152 + $0xb0] sm:$0xff]
    %v4169 = vld [vmem:[%s4152 + $0xc0] sm:$0xff]
    %v4170 = vld [vmem:[%s4152 + $0xc8] sm:$0xff]
    %v4171 = vld [vmem:[%s4152 + $0xd8] sm:$0xff]
    %v4172 = vld [vmem:[%s4152 + $0xe0] sm:$0xff]
    %v4173 = vld [vmem:[%s4152 + $0xf0] sm:$0xff]
    %v4174 = vld [vmem:[%s4152 + $0xf8] sm:$0xff]
    %v4175 = vld [vmem:[%s4152 + $0x108] sm:$0xff]
    %v4176 = vld [vmem:[%s4152 + $0x110] sm:$0xff]
    %v4177 = vld [vmem:[%s4152 + $0x120] sm:$0xff]
    %v4178 = vld [vmem:[%s4152 + $0x128] sm:$0xff]
    %v4179 = vld [vmem:[%s4152 + $0x138] sm:$0xff]
    %v4180 = vld [vmem:[%s4152 + $0x140] sm:$0xff]
    %v4181 = vld [vmem:[%s4152 + $0x150] sm:$0xff]
    %v4182 = vld [vmem:[%s4152 + $0x158] sm:$0xff]
    %v4183 = vld [vmem:[%s4152 + $0x168] sm:$0xff]
    %v4184 = vld [vmem:[%s4152 + $0x170] sm:$0xff]
    %v4185 = vld [vmem:[%s4152 + $0x1b0] sm:$0xff]
    %v4186 = vld [vmem:[%s4152 + $0x1b8] sm:$0xff]
    %v4187 = vld [vmem:[%s4152 + $0x1c8] sm:$0xff]
    %v4188 = vld [vmem:[%s4152 + $0x1d0] sm:$0xff]
    %v4189 = vld [vmem:[%s4152 + $0x1e0] sm:$0xff]
    %v4190 = vld [vmem:[%s4152 + $0x1e8] sm:$0xff]
    %v4191 = vld [vmem:[%s4152 + $0x1f8] sm:$0xff]
    %v4192 = vld [vmem:[%s4152 + $0x200] sm:$0xff]
    %v4193 = vld [vmem:[%s4152 + $0x210] sm:$0xff]
    %v4194 = vld [vmem:[%s4152 + $0x218] sm:$0xff]
    %v4195 = vld [vmem:[%s4152 + $0x228] sm:$0xff]
    %v4196 = vld [vmem:[%s4152 + $0x230] sm:$0xff]
    %v4197 = vld [vmem:[%s4152 + $0x240] sm:$0xff]
    %v4198 = vld [vmem:[%s4152 + $0x248] sm:$0xff]
    %v4199 = vld [vmem:[%s4152 + $0x258] sm:$0xff]
    %v4200 = vld [vmem:[%s4152 + $0x260] sm:$0xff]
    %v4201 = vld [vmem:[%s4152 + $0x270] sm:$0xff]
    %v4202 = vld [vmem:[%s4152 + $0x278] sm:$0xff]
    %v4203 = vld [vmem:[%s4152 + $0x288] sm:$0xff]
    %v4204 = vld [vmem:[%s4152 + $0x290] sm:$0xff]
    %v4205 = vld [vmem:[%s4152 + $0x2a0] sm:$0xff]
    %v4206 = vld [vmem:[%s4152 + $0x2a8] sm:$0xff]
    %v4207 = vld [vmem:[%s4152 + $0x2b8] sm:$0xff]
    %v4208 = vld [vmem:[%s4152 + $0x2c0] sm:$0xff]
    %v4209 = vld [vmem:[%s4152 + $0x2d0] sm:$0xff]
    %v4210 = vld [vmem:[%s4152 + $0x2d8] sm:$0xff]
    %v4211 = vld [vmem:[%s4152 + $0x2e8] sm:$0xff]
    %v4212 = vld [vmem:[%s4152 + $0x2f0] sm:$0xff]
    %v4213 = vld [vmem:[%s4152 + $0x300] sm:$0xff]
    %v4214 = vld [vmem:[%s4152 + $0x308] sm:$0xff]
    %v4215 = vld [vmem:[%s4152 + $0x318] sm:$0xff]
    %v4216 = vld [vmem:[%s4152 + $0x320] sm:$0xff]
    %s4217 = scalar_lea.vmem [#allocation8], 768
    %v4218 = vld [vmem:[%s4217] sm:$0xff]
    %v4219 = vld [vmem:[%s4217 + $0x8] sm:$0xff]
    %v4220 = vld [vmem:[%s4217 + $0x10] sm:$0xff]
    %v4221 = vld [vmem:[%s4217 + $0x18] sm:$0xff]
    %v4222 = vld [vmem:[%s4217 + $0x20] sm:$0xff]
    %v4223 = vld [vmem:[%s4217 + $0x28] sm:$0xff]
    %v4224 = vld [vmem:[%s4217 + $0x30] sm:$0xff]
    %v4225 = vld [vmem:[%s4217 + $0x38] sm:$0xff]
    %v4226 = vld [vmem:[%s4217 + $0x40] sm:$0xff]
    %v4227 = vld [vmem:[%s4217 + $0x48] sm:$0xff]
    %v4228 = vld [vmem:[%s4217 + $0x50] sm:$0xff]
    %v4229 = vld [vmem:[%s4217 + $0x58] sm:$0xff]
    %v4230 = vld [vmem:[%s4217 + $0x60] sm:$0xff]
    %v4231 = vld [vmem:[%s4217 + $0x68] sm:$0xff]
    %v4232 = vld [vmem:[%s4217 + $0x70] sm:$0xff]
    %v4233 = vld [vmem:[%s4217 + $0x78] sm:$0xff]
    %4234 = vmatprep.subr.mxu0 0.0
    %4235 = vmatpush1.msra.mxu0 %v4218
    %4236 = vmatprep.subr.mxu0 0.0
    %4237 = vmatpush1.msra.mxu0 %v4219
    %4238 = vmatprep.subr.mxu0 0.0
    %4239 = vmatpush1.msra.mxu0 %v4220
    %4240 = vmatprep.subr.mxu0 0.0
    %4241 = vmatpush1.msra.mxu0 %v4221
    %4242 = vmatprep.subr.mxu0 0.0
    %4243 = vmatpush1.msra.mxu0 %v4222
    %4244 = vmatprep.subr.mxu0 0.0
    %4245 = vmatpush1.msra.mxu0 %v4223
    %4246 = vmatprep.subr.mxu0 0.0
    %4247 = vmatpush1.msra.mxu0 %v4224
    %4248 = vmatprep.subr.mxu0 0.0
    %4249 = vmatpush1.msra.mxu0 %v4225
    %4250 = vmatprep.subr.mxu0 0.0
    %4251 = vmatpush1.msra.mxu0 %v4226
    %4252 = vmatprep.subr.mxu0 0.0
    %4253 = vmatpush1.msra.mxu0 %v4227
    %4254 = vmatprep.subr.mxu0 0.0
    %4255 = vmatpush1.msra.mxu0 %v4228
    %4256 = vmatprep.subr.mxu0 0.0
    %4257 = vmatpush1.msra.mxu0 %v4229
    %4258 = vmatprep.subr.mxu0 0.0
    %4259 = vmatpush1.msra.mxu0 %v4230
    %4260 = vmatprep.subr.mxu0 0.0
    %4261 = vmatpush1.msra.mxu0 %v4231
    %4262 = vmatprep.subr.mxu0 0.0
    %4263 = vmatpush1.msra.mxu0 %v4232
    %4264 = vmatprep.subr.mxu0 0.0
    %4265 = vmatpush1.msra.mxu0 %v4233
    %4266 = vmatprep.subr.mxu0 0.0
    %4267 = vmatpush1.msra.mxu0 0.0
    %4268 = vmatprep.subr.mxu0 0.0
    %4269 = vmatpush1.msra.mxu0 0.0
    %4270 = vmatprep.subr.mxu0 0.0
    %4271 = vmatpush1.msra.mxu0 0.0
    %4272 = vmatprep.subr.mxu0 0.0
    %4273 = vmatpush1.msra.mxu0 0.0
    %4274 = vmatprep.subr.mxu0 0.0
    %4275 = vmatpush1.msra.mxu0 0.0
    %4276 = vmatprep.subr.mxu0 0.0
    %4277 = vmatpush1.msra.mxu0 0.0
    %4278 = vmatprep.subr.mxu0 0.0
    %4279 = vmatpush1.msra.mxu0 0.0
    %4280 = vmatprep.subr.mxu0 0.0
    %4281 = vmatpush1.msra.mxu0 0.0
    %4282 = vmatprep.subr.mxu0 0.0
    %4283 = vmatpush1.msra.mxu0 0.0
    %4284 = vmatprep.subr.mxu0 0.0
    %4285 = vmatpush1.msra.mxu0 0.0
    %4286 = vmatprep.subr.mxu0 0.0
    %4287 = vmatpush1.msra.mxu0 0.0
    %4288 = vmatprep.subr.mxu0 0.0
    %4289 = vmatpush1.msra.mxu0 0.0
    %4290 = vmatprep.subr.mxu0 0.0
    %4291 = vmatpush1.msra.mxu0 0.0
    %4292 = vmatprep.subr.mxu0 0.0
    %4293 = vmatpush1.msra.mxu0 0.0
    %4294 = vmatprep.subr.mxu0 0.0
    %4295 = vmatpush1.msra.mxu0 0.0
    %4296 = vmatprep.subr.mxu0 0.0
    %4297 = vmatpush1.msra.mxu0 0.0
    %4298 = vmatprep.mubr.f32.mxu0 0.0
    %4299 = vmatmul.mubr.f32.gmra.mrb[0].mxu0 %v4153
    %v4300 = vpop.f32.mrb[0].mxu0
    %v4301 = vadd.f32 0.0, %v4300
    %v4302 = vpop.f32.mrb[0].mxu0
    %4303 = vmatprep.mubr.f32.mxu0 0.0
    %4304 = vmatmul.mubr.f32.gmra.mrb[0].mxu0 %v4154
    %v4305 = vpop.f32.mrb[0].mxu0
    %v4306 = vadd.f32 0.0, %v4305
    %v4307 = vpop.f32.mrb[0].mxu0
    %4308 = vmatprep.mubr.f32.mxu0 0.0
    %4309 = vmatmul.mubr.f32.gmra.mrb[0].mxu0 %v4155
    %v4310 = vpop.f32.mrb[0].mxu0
    %v4311 = vadd.f32 0.0, %v4310
    %v4312 = vpop.f32.mrb[0].mxu0
    %4313 = vmatprep.mubr.f32.mxu0 0.0
    %4314 = vmatmul.mubr.f32.gmra.mrb[0].mxu0 %v4156
    %v4315 = vpop.f32.mrb[0].mxu0
    %v4316 = vadd.f32 0.0, %v4315
    %v4317 = vpop.f32.mrb[0].mxu0
    %4318 = vmatprep.mubr.f32.mxu0 0.0
    %4319 = vmatmul.mubr.f32.gmra.mrb[0].mxu0 %v4157
    %v4320 = vpop.f32.mrb[0].mxu0
    %v4321 = vadd.f32 0.0, %v4320
    %v4322 = vpop.f32.mrb[0].mxu0
    %4323 = vmatprep.mubr.f32.mxu0 0.0
    %4324 = vmatmul.mubr.f32.gmra.mrb[0].mxu0 %v4158
    %v4325 = vpop.f32.mrb[0].mxu0
    %v4326 = vadd.f32 0.0, %v4325
    %v4327 = vpop.f32.mrb[0].mxu0
    %4328 = vmatprep.mubr.f32.mxu0 0.0
    %4329 = vmatmul.mubr.f32.gmra.mrb[0].mxu0 %v4159
    %v4330 = vpop.f32.mrb[0].mxu0
    %v4331 = vadd.f32 0.0, %v4330
    %v4332 = vpop.f32.mrb[0].mxu0
    %4333 = vmatprep.mubr.f32.mxu0 0.0
    %4334 = vmatmul.mubr.f32.gmra.mrb[0].mxu0 %v4160
    %v4335 = vpop.f32.mrb[0].mxu0
    %v4336 = vadd.f32 0.0, %v4335
    %v4337 = vpop.f32.mrb[0].mxu0
    %4338 = vmatprep.mubr.f32.mxu0 0.0
    %4339 = vmatmul.mubr.f32.gmra.mrb[0].mxu0 %v4161
    %v4340 = vpop.f32.mrb[0].mxu0
    %v4341 = vadd.f32 0.0, %v4340
    %v4342 = vpop.f32.mrb[0].mxu0
    %4343 = vmatprep.mubr.f32.mxu0 0.0
    %4344 = vmatmul.mubr.f32.gmra.mrb[0].mxu0 %v4162
    %v4345 = vpop.f32.mrb[0].mxu0
    %v4346 = vadd.f32 0.0, %v4345
    %v4347 = vpop.f32.mrb[0].mxu0
    %4348 = vmatprep.mubr.f32.mxu0 0.0
    %4349 = vmatmul.mubr.f32.gmra.mrb[0].mxu0 %v4163
    %v4350 = vpop.f32.mrb[0].mxu0
    %v4351 = vadd.f32 0.0, %v4350
    %v4352 = vpop.f32.mrb[0].mxu0
    %4353 = vmatprep.mubr.f32.mxu0 0.0
    %4354 = vmatmul.mubr.f32.gmra.mrb[0].mxu0 %v4164
    %v4355 = vpop.f32.mrb[0].mxu0
    %v4356 = vadd.f32 0.0, %v4355
    %v4357 = vpop.f32.mrb[0].mxu0
    %4358 = vmatprep.mubr.f32.mxu0 0.0
    %4359 = vmatmul.mubr.f32.gmra.mrb[0].mxu0 %v4165
    %v4360 = vpop.f32.mrb[0].mxu0
    %v4361 = vadd.f32 0.0, %v4360
    %v4362 = vpop.f32.mrb[0].mxu0
    %4363 = vmatprep.mubr.f32.mxu0 0.0
    %4364 = vmatmul.mubr.f32.gmra.mrb[0].mxu0 %v4166
    %v4365 = vpop.f32.mrb[0].mxu0
    %v4366 = vadd.f32 0.0, %v4365
    %v4367 = vpop.f32.mrb[0].mxu0
    %4368 = vmatprep.mubr.f32.mxu0 0.0
    %4369 = vmatmul.mubr.f32.gmra.mrb[0].mxu0 %v4167
    %v4370 = vpop.f32.mrb[0].mxu0
    %v4371 = vadd.f32 0.0, %v4370
    %v4372 = vpop.f32.mrb[0].mxu0
    %4373 = vmatprep.mubr.f32.mxu0 0.0
    %4374 = vmatmul.mubr.f32.gmra.mrb[0].mxu0 %v4168
    %v4375 = vpop.f32.mrb[0].mxu0
    %v4376 = vadd.f32 0.0, %v4375
    %v4377 = vpop.f32.mrb[0].mxu0
    %4378 = vmatprep.mubr.f32.mxu0 0.0
    %4379 = vmatmul.mubr.f32.gmra.mrb[0].mxu0 %v4169
    %v4380 = vpop.f32.mrb[0].mxu0
    %v4381 = vadd.f32 0.0, %v4380
    %v4382 = vpop.f32.mrb[0].mxu0
    %4383 = vmatprep.mubr.f32.mxu0 0.0
    %4384 = vmatmul.mubr.f32.gmra.mrb[0].mxu0 %v4170
    %v4385 = vpop.f32.mrb[0].mxu0
    %v4386 = vadd.f32 0.0, %v4385
    %v4387 = vpop.f32.mrb[0].mxu0
    %4388 = vmatprep.mubr.f32.mxu0 0.0
    %4389 = vmatmul.mubr.f32.gmra.mrb[0].mxu0 %v4171
    %v4390 = vpop.f32.mrb[0].mxu0
    %v4391 = vadd.f32 0.0, %v4390
    %v4392 = vpop.f32.mrb[0].mxu0
    %4393 = vmatprep.mubr.f32.mxu0 0.0
    %4394 = vmatmul.mubr.f32.gmra.mrb[0].mxu0 %v4172
    %v4395 = vpop.f32.mrb[0].mxu0
    %v4396 = vadd.f32 0.0, %v4395
    %v4397 = vpop.f32.mrb[0].mxu0
    %4398 = vmatprep.mubr.f32.mxu0 0.0
    %4399 = vmatmul.mubr.f32.gmra.mrb[0].mxu0 %v4173
    %v4400 = vpop.f32.mrb[0].mxu0
    %v4401 = vadd.f32 0.0, %v4400
    %v4402 = vpop.f32.mrb[0].mxu0
    %4403 = vmatprep.mubr.f32.mxu0 0.0
    %4404 = vmatmul.mubr.f32.gmra.mrb[0].mxu0 %v4174
    %v4405 = vpop.f32.mrb[0].mxu0
    %v4406 = vadd.f32 0.0, %v4405
    %v4407 = vpop.f32.mrb[0].mxu0
    %4408 = vmatprep.mubr.f32.mxu0 0.0
    %4409 = vmatmul.mubr.f32.gmra.mrb[0].mxu0 %v4175
    %v4410 = vpop.f32.mrb[0].mxu0
    %v4411 = vadd.f32 0.0, %v4410
    %v4412 = vpop.f32.mrb[0].mxu0
    %4413 = vmatprep.mubr.f32.mxu0 0.0
    %4414 = vmatmul.mubr.f32.gmra.mrb[0].mxu0 %v4176
    %v4415 = vpop.f32.mrb[0].mxu0
    %v4416 = vadd.f32 0.0, %v4415
    %v4417 = vpop.f32.mrb[0].mxu0
    %4418 = vmatprep.mubr.f32.mxu0 0.0
    %4419 = vmatmul.mubr.f32.gmra.mrb[0].mxu0 %v4177
    %v4420 = vpop.f32.mrb[0].mxu0
    %v4421 = vadd.f32 0.0, %v4420
    %v4422 = vpop.f32.mrb[0].mxu0
    %4423 = vmatprep.mubr.f32.mxu0 0.0
    %4424 = vmatmul.mubr.f32.gmra.mrb[0].mxu0 %v4178
    %v4425 = vpop.f32.mrb[0].mxu0
    %v4426 = vadd.f32 0.0, %v4425
    %v4427 = vpop.f32.mrb[0].mxu0
    %4428 = vmatprep.mubr.f32.mxu0 0.0
    %4429 = vmatmul.mubr.f32.gmra.mrb[0].mxu0 %v4179
    %v4430 = vpop.f32.mrb[0].mxu0
    %v4431 = vadd.f32 0.0, %v4430
    %v4432 = vpop.f32.mrb[0].mxu0
    %4433 = vmatprep.mubr.f32.mxu0 0.0
    %4434 = vmatmul.mubr.f32.gmra.mrb[0].mxu0 %v4180
    %v4435 = vpop.f32.mrb[0].mxu0
    %v4436 = vadd.f32 0.0, %v4435
    %v4437 = vpop.f32.mrb[0].mxu0
    %4438 = vmatprep.mubr.f32.mxu0 0.0
    %4439 = vmatmul.mubr.f32.gmra.mrb[0].mxu0 %v4181
    %v4440 = vpop.f32.mrb[0].mxu0
    %v4441 = vadd.f32 0.0, %v4440
    %v4442 = vpop.f32.mrb[0].mxu0
    %4443 = vmatprep.mubr.f32.mxu0 0.0
    %4444 = vmatmul.mubr.f32.gmra.mrb[0].mxu0 %v4182
    %v4445 = vpop.f32.mrb[0].mxu0
    %v4446 = vadd.f32 0.0, %v4445
    %v4447 = vpop.f32.mrb[0].mxu0
    %4448 = vmatprep.mubr.f32.mxu0 0.0
    %4449 = vmatmul.mubr.f32.gmra.mrb[0].mxu0 %v4183
    %v4450 = vpop.f32.mrb[0].mxu0
    %v4451 = vadd.f32 0.0, %v4450
    %v4452 = vpop.f32.mrb[0].mxu0
    %4453 = vmatprep.mubr.f32.mxu0 0.0
    %4454 = vmatmul.mubr.f32.gmra.mrb[0].mxu0 %v4184
    %v4455 = vpop.f32.mrb[0].mxu0
    %v4456 = vadd.f32 0.0, %v4455
    %v4457 = vpop.f32.mrb[0].mxu0
    %4458 = vmatprep.mubr.f32.mxu0 0.0
    %4459 = vmatmul.mubr.f32.gmra.mrb[0].mxu0 %v4185
    %v4460 = vpop.f32.mrb[0].mxu0
    %v4461 = vadd.f32 0.0, %v4460
    %v4462 = vpop.f32.mrb[0].mxu0
    %4463 = vmatprep.mubr.f32.mxu0 0.0
    %4464 = vmatmul.mubr.f32.gmra.mrb[0].mxu0 %v4186
    %v4465 = vpop.f32.mrb[0].mxu0
    %v4466 = vadd.f32 0.0, %v4465
    %v4467 = vpop.f32.mrb[0].mxu0
    %4468 = vmatprep.mubr.f32.mxu0 0.0
    %4469 = vmatmul.mubr.f32.gmra.mrb[0].mxu0 %v4187
    %v4470 = vpop.f32.mrb[0].mxu0
    %v4471 = vadd.f32 0.0, %v4470
    %v4472 = vpop.f32.mrb[0].mxu0
    %4473 = vmatprep.mubr.f32.mxu0 0.0
    %4474 = vmatmul.mubr.f32.gmra.mrb[0].mxu0 %v4188
    %v4475 = vpop.f32.mrb[0].mxu0
    %v4476 = vadd.f32 0.0, %v4475
    %v4477 = vpop.f32.mrb[0].mxu0
    %4478 = vmatprep.mubr.f32.mxu0 0.0
    %4479 = vmatmul.mubr.f32.gmra.mrb[0].mxu0 %v4189
    %v4480 = vpop.f32.mrb[0].mxu0
    %v4481 = vadd.f32 0.0, %v4480
    %v4482 = vpop.f32.mrb[0].mxu0
    %4483 = vmatprep.mubr.f32.mxu0 0.0
    %4484 = vmatmul.mubr.f32.gmra.mrb[0].mxu0 %v4190
    %v4485 = vpop.f32.mrb[0].mxu0
    %v4486 = vadd.f32 0.0, %v4485
    %v4487 = vpop.f32.mrb[0].mxu0
    %4488 = vmatprep.mubr.f32.mxu0 0.0
    %4489 = vmatmul.mubr.f32.gmra.mrb[0].mxu0 %v4191
    %v4490 = vpop.f32.mrb[0].mxu0
    %v4491 = vadd.f32 0.0, %v4490
    %v4492 = vpop.f32.mrb[0].mxu0
    %4493 = vmatprep.mubr.f32.mxu0 0.0
    %4494 = vmatmul.mubr.f32.gmra.mrb[0].mxu0 %v4192
    %v4495 = vpop.f32.mrb[0].mxu0
    %v4496 = vadd.f32 0.0, %v4495
    %v4497 = vpop.f32.mrb[0].mxu0
    %4498 = vmatprep.mubr.f32.mxu0 0.0
    %4499 = vmatmul.mubr.f32.gmra.mrb[0].mxu0 %v4193
    %v4500 = vpop.f32.mrb[0].mxu0
    %v4501 = vadd.f32 0.0, %v4500
    %v4502 = vpop.f32.mrb[0].mxu0
    %4503 = vmatprep.mubr.f32.mxu0 0.0
    %4504 = vmatmul.mubr.f32.gmra.mrb[0].mxu0 %v4194
    %v4505 = vpop.f32.mrb[0].mxu0
    %v4506 = vadd.f32 0.0, %v4505
    %v4507 = vpop.f32.mrb[0].mxu0
    %4508 = vmatprep.mubr.f32.mxu0 0.0
    %4509 = vmatmul.mubr.f32.gmra.mrb[0].mxu0 %v4195
    %v4510 = vpop.f32.mrb[0].mxu0
    %v4511 = vadd.f32 0.0, %v4510
    %v4512 = vpop.f32.mrb[0].mxu0
    %4513 = vmatprep.mubr.f32.mxu0 0.0
    %4514 = vmatmul.mubr.f32.gmra.mrb[0].mxu0 %v4196
    %v4515 = vpop.f32.mrb[0].mxu0
    %v4516 = vadd.f32 0.0, %v4515
    %v4517 = vpop.f32.mrb[0].mxu0
    %4518 = vmatprep.mubr.f32.mxu0 0.0
    %4519 = vmatmul.mubr.f32.gmra.mrb[0].mxu0 %v4197
    %v4520 = vpop.f32.mrb[0].mxu0
    %v4521 = vadd.f32 0.0, %v4520
    %v4522 = vpop.f32.mrb[0].mxu0
    %4523 = vmatprep.mubr.f32.mxu0 0.0
    %4524 = vmatmul.mubr.f32.gmra.mrb[0].mxu0 %v4198
    %v4525 = vpop.f32.mrb[0].mxu0
    %v4526 = vadd.f32 0.0, %v4525
    %v4527 = vpop.f32.mrb[0].mxu0
    %4528 = vmatprep.mubr.f32.mxu0 0.0
    %4529 = vmatmul.mubr.f32.gmra.mrb[0].mxu0 %v4199
    %v4530 = vpop.f32.mrb[0].mxu0
    %v4531 = vadd.f32 0.0, %v4530
    %v4532 = vpop.f32.mrb[0].mxu0
    %4533 = vmatprep.mubr.f32.mxu0 0.0
    %4534 = vmatmul.mubr.f32.gmra.mrb[0].mxu0 %v4200
    %v4535 = vpop.f32.mrb[0].mxu0
    %v4536 = vadd.f32 0.0, %v4535
    %v4537 = vpop.f32.mrb[0].mxu0
    %4538 = vmatprep.mubr.f32.mxu0 0.0
    %4539 = vmatmul.mubr.f32.gmra.mrb[0].mxu0 %v4201
    %v4540 = vpop.f32.mrb[0].mxu0
    %v4541 = vadd.f32 0.0, %v4540
    %v4542 = vpop.f32.mrb[0].mxu0
    %4543 = vmatprep.mubr.f32.mxu0 0.0
    %4544 = vmatmul.mubr.f32.gmra.mrb[0].mxu0 %v4202
    %v4545 = vpop.f32.mrb[0].mxu0
    %v4546 = vadd.f32 0.0, %v4545
    %v4547 = vpop.f32.mrb[0].mxu0
    %4548 = vmatprep.mubr.f32.mxu0 0.0
    %4549 = vmatmul.mubr.f32.gmra.mrb[0].mxu0 %v4203
    %v4550 = vpop.f32.mrb[0].mxu0
    %v4551 = vadd.f32 0.0, %v4550
    %v4552 = vpop.f32.mrb[0].mxu0
    %4553 = vmatprep.mubr.f32.mxu0 0.0
    %4554 = vmatmul.mubr.f32.gmra.mrb[0].mxu0 %v4204
    %v4555 = vpop.f32.mrb[0].mxu0
    %v4556 = vadd.f32 0.0, %v4555
    %v4557 = vpop.f32.mrb[0].mxu0
    %4558 = vmatprep.mubr.f32.mxu0 0.0
    %4559 = vmatmul.mubr.f32.gmra.mrb[0].mxu0 %v4205
    %v4560 = vpop.f32.mrb[0].mxu0
    %v4561 = vadd.f32 0.0, %v4560
    %v4562 = vpop.f32.mrb[0].mxu0
    %4563 = vmatprep.mubr.f32.mxu0 0.0
    %4564 = vmatmul.mubr.f32.gmra.mrb[0].mxu0 %v4206
    %v4565 = vpop.f32.mrb[0].mxu0
    %v4566 = vadd.f32 0.0, %v4565
    %v4567 = vpop.f32.mrb[0].mxu0
    %4568 = vmatprep.mubr.f32.mxu0 0.0
    %4569 = vmatmul.mubr.f32.gmra.mrb[0].mxu0 %v4207
    %v4570 = vpop.f32.mrb[0].mxu0
    %v4571 = vadd.f32 0.0, %v4570
    %v4572 = vpop.f32.mrb[0].mxu0
    %4573 = vmatprep.mubr.f32.mxu0 0.0
    %4574 = vmatmul.mubr.f32.gmra.mrb[0].mxu0 %v4208
    %v4575 = vpop.f32.mrb[0].mxu0
    %v4576 = vadd.f32 0.0, %v4575
    %v4577 = vpop.f32.mrb[0].mxu0
    %4578 = vmatprep.mubr.f32.mxu0 0.0
    %4579 = vmatmul.mubr.f32.gmra.mrb[0].mxu0 %v4209
    %v4580 = vpop.f32.mrb[0].mxu0
    %v4581 = vadd.f32 0.0, %v4580
    %v4582 = vpop.f32.mrb[0].mxu0
    %4583 = vmatprep.mubr.f32.mxu0 0.0
    %4584 = vmatmul.mubr.f32.gmra.mrb[0].mxu0 %v4210
    %v4585 = vpop.f32.mrb[0].mxu0
    %v4586 = vadd.f32 0.0, %v4585
    %v4587 = vpop.f32.mrb[0].mxu0
    %4588 = vmatprep.mubr.f32.mxu0 0.0
    %4589 = vmatmul.mubr.f32.gmra.mrb[0].mxu0 %v4211
    %v4590 = vpop.f32.mrb[0].mxu0
    %v4591 = vadd.f32 0.0, %v4590
    %v4592 = vpop.f32.mrb[0].mxu0
    %4593 = vmatprep.mubr.f32.mxu0 0.0
    %4594 = vmatmul.mubr.f32.gmra.mrb[0].mxu0 %v4212
    %v4595 = vpop.f32.mrb[0].mxu0
    %v4596 = vadd.f32 0.0, %v4595
    %v4597 = vpop.f32.mrb[0].mxu0
    %4598 = vmatprep.mubr.f32.mxu0 0.0
    %4599 = vmatmul.mubr.f32.gmra.mrb[0].mxu0 %v4213
    %v4600 = vpop.f32.mrb[0].mxu0
    %v4601 = vadd.f32 0.0, %v4600
    %v4602 = vpop.f32.mrb[0].mxu0
    %4603 = vmatprep.mubr.f32.mxu0 0.0
    %4604 = vmatmul.mubr.f32.gmra.mrb[0].mxu0 %v4214
    %v4605 = vpop.f32.mrb[0].mxu0
    %v4606 = vadd.f32 0.0, %v4605
    %v4607 = vpop.f32.mrb[0].mxu0
    %4608 = vmatprep.mubr.f32.mxu0 0.0
    %4609 = vmatmul.mubr.f32.gmra.mrb[0].mxu0 %v4215
    %v4610 = vpop.f32.mrb[0].mxu0
    %v4611 = vadd.f32 0.0, %v4610
    %v4612 = vpop.f32.mrb[0].mxu0
    %4613 = vmatprep.mubr.f32.mxu0 0.0
    %4614 = vmatmul.mubr.f32.gmra.mrb[0].mxu0 %v4216
    %v4615 = vpop.f32.mrb[0].mxu0
    %v4616 = vadd.f32 0.0, %v4615
    %v4617 = vpop.f32.mrb[0].mxu0
    %4618 = vdwg.mxu0
    %v4619 = vadd.f32 %v4088, %v4301
    %v4620 = vadd.f32 %v4089, %v4306
    %v4621 = vadd.f32 %v4090, %v4311
    %v4622 = vadd.f32 %v4091, %v4316
    %v4623 = vadd.f32 %v4092, %v4321
    %v4624 = vadd.f32 %v4093, %v4326
    %v4625 = vadd.f32 %v4094, %v4331
    %v4626 = vadd.f32 %v4095, %v4336
    %v4627 = vadd.f32 %v4096, %v4341
    %v4628 = vadd.f32 %v4097, %v4346
    %v4629 = vadd.f32 %v4098, %v4351
    %v4630 = vadd.f32 %v4099, %v4356
    %v4631 = vadd.f32 %v4100, %v4361
    %v4632 = vadd.f32 %v4101, %v4366
    %v4633 = vadd.f32 %v4102, %v4371
    %v4634 = vadd.f32 %v4103, %v4376
    %v4635 = vadd.f32 %v4104, %v4381
    %v4636 = vadd.f32 %v4105, %v4386
    %v4637 = vadd.f32 %v4106, %v4391
    %v4638 = vadd.f32 %v4107, %v4396
    %v4639 = vadd.f32 %v4108, %v4401
    %v4640 = vadd.f32 %v4109, %v4406
    %v4641 = vadd.f32 %v4110, %v4411
    %v4642 = vadd.f32 %v4111, %v4416
    %v4643 = vadd.f32 %v4112, %v4421
    %v4644 = vadd.f32 %v4113, %v4426
    %v4645 = vadd.f32 %v4114, %v4431
    %v4646 = vadd.f32 %v4115, %v4436
    %v4647 = vadd.f32 %v4116, %v4441
    %v4648 = vadd.f32 %v4117, %v4446
    %v4649 = vadd.f32 %v4118, %v4451
    %v4650 = vadd.f32 %v4119, %v4456
    %v4651 = vadd.f32 %v4120, %v4461
    %v4652 = vadd.f32 %v4121, %v4466
    %v4653 = vadd.f32 %v4122, %v4471
    %v4654 = vadd.f32 %v4123, %v4476
    %v4655 = vadd.f32 %v4124, %v4481
    %v4656 = vadd.f32 %v4125, %v4486
    %v4657 = vadd.f32 %v4126, %v4491
    %v4658 = vadd.f32 %v4127, %v4496
    %v4659 = vadd.f32 %v4128, %v4501
    %v4660 = vadd.f32 %v4129, %v4506
    %v4661 = vadd.f32 %v4130, %v4511
    %v4662 = vadd.f32 %v4131, %v4516
    %v4663 = vadd.f32 %v4132, %v4521
    %v4664 = vadd.f32 %v4133, %v4526
    %v4665 = vadd.f32 %v4134, %v4531
    %v4666 = vadd.f32 %v4135, %v4536
    %v4667 = vadd.f32 %v4136, %v4541
    %v4668 = vadd.f32 %v4137, %v4546
    %v4669 = vadd.f32 %v4138, %v4551
    %v4670 = vadd.f32 %v4139, %v4556
    %v4671 = vadd.f32 %v4140, %v4561
    %v4672 = vadd.f32 %v4141, %v4566
    %v4673 = vadd.f32 %v4142, %v4571
    %v4674 = vadd.f32 %v4143, %v4576
    %v4675 = vadd.f32 %v4144, %v4581
    %v4676 = vadd.f32 %v4145, %v4586
    %v4677 = vadd.f32 %v4146, %v4591
    %v4678 = vadd.f32 %v4147, %v4596
    %v4679 = vadd.f32 %v4148, %v4601
    %v4680 = vadd.f32 %v4149, %v4606
    %v4681 = vadd.f32 %v4150, %v4611
    %v4682 = vadd.f32 %v4151, %v4616
    %v4683 = vld [vmem:[%s4152 + $0x1] sm:$0xff]
    %v4684 = vld [vmem:[%s4152 + $0x9] sm:$0xff]
    %v4685 = vld [vmem:[%s4152 + $0x19] sm:$0xff]
    %v4686 = vld [vmem:[%s4152 + $0x21] sm:$0xff]
    %v4687 = vld [vmem:[%s4152 + $0x31] sm:$0xff]
    %v4688 = vld [vmem:[%s4152 + $0x39] sm:$0xff]
    %v4689 = vld [vmem:[%s4152 + $0x49] sm:$0xff]
    %v4690 = vld [vmem:[%s4152 + $0x51] sm:$0xff]
    %v4691 = vld [vmem:[%s4152 + $0x61] sm:$0xff]
    %v4692 = vld [vmem:[%s4152 + $0x69] sm:$0xff]
    %v4693 = vld [vmem:[%s4152 + $0x79] sm:$0xff]
    %v4694 = vld [vmem:[%s4152 + $0x81] sm:$0xff]
    %v4695 = vld [vmem:[%s4152 + $0x91] sm:$0xff]
    %v4696 = vld [vmem:[%s4152 + $0x99] sm:$0xff]
    %v4697 = vld [vmem:[%s4152 + $0xa9] sm:$0xff]
    %v4698 = vld [vmem:[%s4152 + $0xb1] sm:$0xff]
    %v4699 = vld [vmem:[%s4152 + $0xc1] sm:$0xff]
    %v4700 = vld [vmem:[%s4152 + $0xc9] sm:$0xff]
    %v4701 = vld [vmem:[%s4152 + $0xd9] sm:$0xff]
    %v4702 = vld [vmem:[%s4152 + $0xe1] sm:$0xff]
    %v4703 = vld [vmem:[%s4152 + $0xf1] sm:$0xff]
    %v4704 = vld [vmem:[%s4152 + $0xf9] sm:$0xff]
    %v4705 = vld [vmem:[%s4152 + $0x109] sm:$0xff]
    %v4706 = vld [vmem:[%s4152 + $0x111] sm:$0xff]
    %v4707 = vld [vmem:[%s4152 + $0x121] sm:$0xff]
    %v4708 = vld [vmem:[%s4152 + $0x129] sm:$0xff]
    %v4709 = vld [vmem:[%s4152 + $0x139] sm:$0xff]
    %v4710 = vld [vmem:[%s4152 + $0x141] sm:$0xff]
    %v4711 = vld [vmem:[%s4152 + $0x151] sm:$0xff]
    %v4712 = vld [vmem:[%s4152 + $0x159] sm:$0xff]
    %v4713 = vld [vmem:[%s4152 + $0x169] sm:$0xff]
    %v4714 = vld [vmem:[%s4152 + $0x171] sm:$0xff]
    %v4715 = vld [vmem:[%s4152 + $0x1b1] sm:$0xff]
    %v4716 = vld [vmem:[%s4152 + $0x1b9] sm:$0xff]
    %v4717 = vld [vmem:[%s4152 + $0x1c9] sm:$0xff]
    %v4718 = vld [vmem:[%s4152 + $0x1d1] sm:$0xff]
    %v4719 = vld [vmem:[%s4152 + $0x1e1] sm:$0xff]
    %v4720 = vld [vmem:[%s4152 + $0x1e9] sm:$0xff]
    %v4721 = vld [vmem:[%s4152 + $0x1f9] sm:$0xff]
    %v4722 = vld [vmem:[%s4152 + $0x201] sm:$0xff]
    %v4723 = vld [vmem:[%s4152 + $0x211] sm:$0xff]
    %v4724 = vld [vmem:[%s4152 + $0x219] sm:$0xff]
    %v4725 = vld [vmem:[%s4152 + $0x229] sm:$0xff]
    %v4726 = vld [vmem:[%s4152 + $0x231] sm:$0xff]
    %v4727 = vld [vmem:[%s4152 + $0x241] sm:$0xff]
    %v4728 = vld [vmem:[%s4152 + $0x249] sm:$0xff]
    %v4729 = vld [vmem:[%s4152 + $0x259] sm:$0xff]
    %v4730 = vld [vmem:[%s4152 + $0x261] sm:$0xff]
    %v4731 = vld [vmem:[%s4152 + $0x271] sm:$0xff]
    %v4732 = vld [vmem:[%s4152 + $0x279] sm:$0xff]
    %v4733 = vld [vmem:[%s4152 + $0x289] sm:$0xff]
    %v4734 = vld [vmem:[%s4152 + $0x291] sm:$0xff]
    %v4735 = vld [vmem:[%s4152 + $0x2a1] sm:$0xff]
    %v4736 = vld [vmem:[%s4152 + $0x2a9] sm:$0xff]
    %v4737 = vld [vmem:[%s4152 + $0x2b9] sm:$0xff]
    %v4738 = vld [vmem:[%s4152 + $0x2c1] sm:$0xff]
    %v4739 = vld [vmem:[%s4152 + $0x2d1] sm:$0xff]
    %v4740 = vld [vmem:[%s4152 + $0x2d9] sm:$0xff]
    %v4741 = vld [vmem:[%s4152 + $0x2e9] sm:$0xff]
    %v4742 = vld [vmem:[%s4152 + $0x2f1] sm:$0xff]
    %v4743 = vld [vmem:[%s4152 + $0x301] sm:$0xff]
    %v4744 = vld [vmem:[%s4152 + $0x309] sm:$0xff]
    %v4745 = vld [vmem:[%s4152 + $0x319] sm:$0xff]
    %v4746 = vld [vmem:[%s4152 + $0x321] sm:$0xff]
    %s4747 = scalar_lea.vmem [#allocation8], 896
    %v4748 = vld [vmem:[%s4747] sm:$0xff]
    %v4749 = vld [vmem:[%s4747 + $0x8] sm:$0xff]
    %v4750 = vld [vmem:[%s4747 + $0x10] sm:$0xff]
    %v4751 = vld [vmem:[%s4747 + $0x18] sm:$0xff]
    %v4752 = vld [vmem:[%s4747 + $0x20] sm:$0xff]
    %v4753 = vld [vmem:[%s4747 + $0x28] sm:$0xff]
    %v4754 = vld [vmem:[%s4747 + $0x30] sm:$0xff]
    %v4755 = vld [vmem:[%s4747 + $0x38] sm:$0xff]
    %v4756 = vld [vmem:[%s4747 + $0x40] sm:$0xff]
    %v4757 = vld [vmem:[%s4747 + $0x48] sm:$0xff]
    %v4758 = vld [vmem:[%s4747 + $0x50] sm:$0xff]
    %v4759 = vld [vmem:[%s4747 + $0x58] sm:$0xff]
    %v4760 = vld [vmem:[%s4747 + $0x60] sm:$0xff]
    %v4761 = vld [vmem:[%s4747 + $0x68] sm:$0xff]
    %v4762 = vld [vmem:[%s4747 + $0x70] sm:$0xff]
    %v4763 = vld [vmem:[%s4747 + $0x78] sm:$0xff]
    %4764 = vmatprep.subr.mxu0 0.0
    %4765 = vmatpush1.msra.mxu0 %v4748
    %4766 = vmatprep.subr.mxu0 0.0
    %4767 = vmatpush1.msra.mxu0 %v4749
    %4768 = vmatprep.subr.mxu0 0.0
    %4769 = vmatpush1.msra.mxu0 %v4750
    %4770 = vmatprep.subr.mxu0 0.0
    %4771 = vmatpush1.msra.mxu0 %v4751
    %4772 = vmatprep.subr.mxu0 0.0
    %4773 = vmatpush1.msra.mxu0 %v4752
    %4774 = vmatprep.subr.mxu0 0.0
    %4775 = vmatpush1.msra.mxu0 %v4753
    %4776 = vmatprep.subr.mxu0 0.0
    %4777 = vmatpush1.msra.mxu0 %v4754
    %4778 = vmatprep.subr.mxu0 0.0
    %4779 = vmatpush1.msra.mxu0 %v4755
    %4780 = vmatprep.subr.mxu0 0.0
    %4781 = vmatpush1.msra.mxu0 %v4756
    %4782 = vmatprep.subr.mxu0 0.0
    %4783 = vmatpush1.msra.mxu0 %v4757
    %4784 = vmatprep.subr.mxu0 0.0
    %4785 = vmatpush1.msra.mxu0 %v4758
    %4786 = vmatprep.subr.mxu0 0.0
    %4787 = vmatpush1.msra.mxu0 %v4759
    %4788 = vmatprep.subr.mxu0 0.0
    %4789 = vmatpush1.msra.mxu0 %v4760
    %4790 = vmatprep.subr.mxu0 0.0
    %4791 = vmatpush1.msra.mxu0 %v4761
    %4792 = vmatprep.subr.mxu0 0.0
    %4793 = vmatpush1.msra.mxu0 %v4762
    %4794 = vmatprep.subr.mxu0 0.0
    %4795 = vmatpush1.msra.mxu0 %v4763
    %4796 = vmatprep.subr.mxu0 0.0
    %4797 = vmatpush1.msra.mxu0 0.0
    %4798 = vmatprep.subr.mxu0 0.0
    %4799 = vmatpush1.msra.mxu0 0.0
    %4800 = vmatprep.subr.mxu0 0.0
    %4801 = vmatpush1.msra.mxu0 0.0
    %4802 = vmatprep.subr.mxu0 0.0
    %4803 = vmatpush1.msra.mxu0 0.0
    %4804 = vmatprep.subr.mxu0 0.0
    %4805 = vmatpush1.msra.mxu0 0.0
    %4806 = vmatprep.subr.mxu0 0.0
    %4807 = vmatpush1.msra.mxu0 0.0
    %4808 = vmatprep.subr.mxu0 0.0
    %4809 = vmatpush1.msra.mxu0 0.0
    %4810 = vmatprep.subr.mxu0 0.0
    %4811 = vmatpush1.msra.mxu0 0.0
    %4812 = vmatprep.subr.mxu0 0.0
    %4813 = vmatpush1.msra.mxu0 0.0
    %4814 = vmatprep.subr.mxu0 0.0
    %4815 = vmatpush1.msra.mxu0 0.0
    %4816 = vmatprep.subr.mxu0 0.0
    %4817 = vmatpush1.msra.mxu0 0.0
    %4818 = vmatprep.subr.mxu0 0.0
    %4819 = vmatpush1.msra.mxu0 0.0
    %4820 = vmatprep.subr.mxu0 0.0
    %4821 = vmatpush1.msra.mxu0 0.0
    %4822 = vmatprep.subr.mxu0 0.0
    %4823 = vmatpush1.msra.mxu0 0.0
    %4824 = vmatprep.subr.mxu0 0.0
    %4825 = vmatpush1.msra.mxu0 0.0
    %4826 = vmatprep.subr.mxu0 0.0
    %4827 = vmatpush1.msra.mxu0 0.0
    %4828 = vmatprep.mubr.f32.mxu0 0.0
    %4829 = vmatmul.mubr.f32.gmra.mrb[0].mxu0 %v4683
    %v4830 = vpop.f32.mrb[0].mxu0
    %v4831 = vadd.f32 0.0, %v4830
    %v4832 = vpop.f32.mrb[0].mxu0
    %4833 = vmatprep.mubr.f32.mxu0 0.0
    %4834 = vmatmul.mubr.f32.gmra.mrb[0].mxu0 %v4684
    %v4835 = vpop.f32.mrb[0].mxu0
    %v4836 = vadd.f32 0.0, %v4835
    %v4837 = vpop.f32.mrb[0].mxu0
    %4838 = vmatprep.mubr.f32.mxu0 0.0
    %4839 = vmatmul.mubr.f32.gmra.mrb[0].mxu0 %v4685
    %v4840 = vpop.f32.mrb[0].mxu0
    %v4841 = vadd.f32 0.0, %v4840
    %v4842 = vpop.f32.mrb[0].mxu0
    %4843 = vmatprep.mubr.f32.mxu0 0.0
    %4844 = vmatmul.mubr.f32.gmra.mrb[0].mxu0 %v4686
    %v4845 = vpop.f32.mrb[0].mxu0
    %v4846 = vadd.f32 0.0, %v4845
    %v4847 = vpop.f32.mrb[0].mxu0
    %4848 = vmatprep.mubr.f32.mxu0 0.0
    %4849 = vmatmul.mubr.f32.gmra.mrb[0].mxu0 %v4687
    %v4850 = vpop.f32.mrb[0].mxu0
    %v4851 = vadd.f32 0.0, %v4850
    %v4852 = vpop.f32.mrb[0].mxu0
    %4853 = vmatprep.mubr.f32.mxu0 0.0
    %4854 = vmatmul.mubr.f32.gmra.mrb[0].mxu0 %v4688
    %v4855 = vpop.f32.mrb[0].mxu0
    %v4856 = vadd.f32 0.0, %v4855
    %v4857 = vpop.f32.mrb[0].mxu0
    %4858 = vmatprep.mubr.f32.mxu0 0.0
    %4859 = vmatmul.mubr.f32.gmra.mrb[0].mxu0 %v4689
    %v4860 = vpop.f32.mrb[0].mxu0
    %v4861 = vadd.f32 0.0, %v4860
    %v4862 = vpop.f32.mrb[0].mxu0
    %4863 = vmatprep.mubr.f32.mxu0 0.0
    %4864 = vmatmul.mubr.f32.gmra.mrb[0].mxu0 %v4690
    %v4865 = vpop.f32.mrb[0].mxu0
    %v4866 = vadd.f32 0.0, %v4865
    %v4867 = vpop.f32.mrb[0].mxu0
    %4868 = vmatprep.mubr.f32.mxu0 0.0
    %4869 = vmatmul.mubr.f32.gmra.mrb[0].mxu0 %v4691
    %v4870 = vpop.f32.mrb[0].mxu0
    %v4871 = vadd.f32 0.0, %v4870
    %v4872 = vpop.f32.mrb[0].mxu0
    %4873 = vmatprep.mubr.f32.mxu0 0.0
    %4874 = vmatmul.mubr.f32.gmra.mrb[0].mxu0 %v4692
    %v4875 = vpop.f32.mrb[0].mxu0
    %v4876 = vadd.f32 0.0, %v4875
    %v4877 = vpop.f32.mrb[0].mxu0
    %4878 = vmatprep.mubr.f32.mxu0 0.0
    %4879 = vmatmul.mubr.f32.gmra.mrb[0].mxu0 %v4693
    %v4880 = vpop.f32.mrb[0].mxu0
    %v4881 = vadd.f32 0.0, %v4880
    %v4882 = vpop.f32.mrb[0].mxu0
    %4883 = vmatprep.mubr.f32.mxu0 0.0
    %4884 = vmatmul.mubr.f32.gmra.mrb[0].mxu0 %v4694
    %v4885 = vpop.f32.mrb[0].mxu0
    %v4886 = vadd.f32 0.0, %v4885
    %v4887 = vpop.f32.mrb[0].mxu0
    %4888 = vmatprep.mubr.f32.mxu0 0.0
    %4889 = vmatmul.mubr.f32.gmra.mrb[0].mxu0 %v4695
    %v4890 = vpop.f32.mrb[0].mxu0
    %v4891 = vadd.f32 0.0, %v4890
    %v4892 = vpop.f32.mrb[0].mxu0
    %4893 = vmatprep.mubr.f32.mxu0 0.0
    %4894 = vmatmul.mubr.f32.gmra.mrb[0].mxu0 %v4696
    %v4895 = vpop.f32.mrb[0].mxu0
    %v4896 = vadd.f32 0.0, %v4895
    %v4897 = vpop.f32.mrb[0].mxu0
    %4898 = vmatprep.mubr.f32.mxu0 0.0
    %4899 = vmatmul.mubr.f32.gmra.mrb[0].mxu0 %v4697
    %v4900 = vpop.f32.mrb[0].mxu0
    %v4901 = vadd.f32 0.0, %v4900
    %v4902 = vpop.f32.mrb[0].mxu0
    %4903 = vmatprep.mubr.f32.mxu0 0.0
    %4904 = vmatmul.mubr.f32.gmra.mrb[0].mxu0 %v4698
    %v4905 = vpop.f32.mrb[0].mxu0
    %v4906 = vadd.f32 0.0, %v4905
    %v4907 = vpop.f32.mrb[0].mxu0
    %4908 = vmatprep.mubr.f32.mxu0 0.0
    %4909 = vmatmul.mubr.f32.gmra.mrb[0].mxu0 %v4699
    %v4910 = vpop.f32.mrb[0].mxu0
    %v4911 = vadd.f32 0.0, %v4910
    %v4912 = vpop.f32.mrb[0].mxu0
    %4913 = vmatprep.mubr.f32.mxu0 0.0
    %4914 = vmatmul.mubr.f32.gmra.mrb[0].mxu0 %v4700
    %v4915 = vpop.f32.mrb[0].mxu0
    %v4916 = vadd.f32 0.0, %v4915
    %v4917 = vpop.f32.mrb[0].mxu0
    %4918 = vmatprep.mubr.f32.mxu0 0.0
    %4919 = vmatmul.mubr.f32.gmra.mrb[0].mxu0 %v4701
    %v4920 = vpop.f32.mrb[0].mxu0
    %v4921 = vadd.f32 0.0, %v4920
    %v4922 = vpop.f32.mrb[0].mxu0
    %4923 = vmatprep.mubr.f32.mxu0 0.0
    %4924 = vmatmul.mubr.f32.gmra.mrb[0].mxu0 %v4702
    %v4925 = vpop.f32.mrb[0].mxu0
    %v4926 = vadd.f32 0.0, %v4925
    %v4927 = vpop.f32.mrb[0].mxu0
    %4928 = vmatprep.mubr.f32.mxu0 0.0
    %4929 = vmatmul.mubr.f32.gmra.mrb[0].mxu0 %v4703
    %v4930 = vpop.f32.mrb[0].mxu0
    %v4931 = vadd.f32 0.0, %v4930
    %v4932 = vpop.f32.mrb[0].mxu0
    %4933 = vmatprep.mubr.f32.mxu0 0.0
    %4934 = vmatmul.mubr.f32.gmra.mrb[0].mxu0 %v4704
    %v4935 = vpop.f32.mrb[0].mxu0
    %v4936 = vadd.f32 0.0, %v4935
    %v4937 = vpop.f32.mrb[0].mxu0
    %4938 = vmatprep.mubr.f32.mxu0 0.0
    %4939 = vmatmul.mubr.f32.gmra.mrb[0].mxu0 %v4705
    %v4940 = vpop.f32.mrb[0].mxu0
    %v4941 = vadd.f32 0.0, %v4940
    %v4942 = vpop.f32.mrb[0].mxu0
    %4943 = vmatprep.mubr.f32.mxu0 0.0
    %4944 = vmatmul.mubr.f32.gmra.mrb[0].mxu0 %v4706
    %v4945 = vpop.f32.mrb[0].mxu0
    %v4946 = vadd.f32 0.0, %v4945
    %v4947 = vpop.f32.mrb[0].mxu0
    %4948 = vmatprep.mubr.f32.mxu0 0.0
    %4949 = vmatmul.mubr.f32.gmra.mrb[0].mxu0 %v4707
    %v4950 = vpop.f32.mrb[0].mxu0
    %v4951 = vadd.f32 0.0, %v4950
    %v4952 = vpop.f32.mrb[0].mxu0
    %4953 = vmatprep.mubr.f32.mxu0 0.0
    %4954 = vmatmul.mubr.f32.gmra.mrb[0].mxu0 %v4708
    %v4955 = vpop.f32.mrb[0].mxu0
    %v4956 = vadd.f32 0.0, %v4955
    %v4957 = vpop.f32.mrb[0].mxu0
    %4958 = vmatprep.mubr.f32.mxu0 0.0
    %4959 = vmatmul.mubr.f32.gmra.mrb[0].mxu0 %v4709
    %v4960 = vpop.f32.mrb[0].mxu0
    %v4961 = vadd.f32 0.0, %v4960
    %v4962 = vpop.f32.mrb[0].mxu0
    %4963 = vmatprep.mubr.f32.mxu0 0.0
    %4964 = vmatmul.mubr.f32.gmra.mrb[0].mxu0 %v4710
    %v4965 = vpop.f32.mrb[0].mxu0
    %v4966 = vadd.f32 0.0, %v4965
    %v4967 = vpop.f32.mrb[0].mxu0
    %4968 = vmatprep.mubr.f32.mxu0 0.0
    %4969 = vmatmul.mubr.f32.gmra.mrb[0].mxu0 %v4711
    %v4970 = vpop.f32.mrb[0].mxu0
    %v4971 = vadd.f32 0.0, %v4970
    %v4972 = vpop.f32.mrb[0].mxu0
    %4973 = vmatprep.mubr.f32.mxu0 0.0
    %4974 = vmatmul.mubr.f32.gmra.mrb[0].mxu0 %v4712
    %v4975 = vpop.f32.mrb[0].mxu0
    %v4976 = vadd.f32 0.0, %v4975
    %v4977 = vpop.f32.mrb[0].mxu0
    %4978 = vmatprep.mubr.f32.mxu0 0.0
    %4979 = vmatmul.mubr.f32.gmra.mrb[0].mxu0 %v4713
    %v4980 = vpop.f32.mrb[0].mxu0
    %v4981 = vadd.f32 0.0, %v4980
    %v4982 = vpop.f32.mrb[0].mxu0
    %4983 = vmatprep.mubr.f32.mxu0 0.0
    %4984 = vmatmul.mubr.f32.gmra.mrb[0].mxu0 %v4714
    %v4985 = vpop.f32.mrb[0].mxu0
    %v4986 = vadd.f32 0.0, %v4985
    %v4987 = vpop.f32.mrb[0].mxu0
    %4988 = vmatprep.mubr.f32.mxu0 0.0
    %4989 = vmatmul.mubr.f32.gmra.mrb[0].mxu0 %v4715
    %v4990 = vpop.f32.mrb[0].mxu0
    %v4991 = vadd.f32 0.0, %v4990
    %v4992 = vpop.f32.mrb[0].mxu0
    %4993 = vmatprep.mubr.f32.mxu0 0.0
    %4994 = vmatmul.mubr.f32.gmra.mrb[0].mxu0 %v4716
    %v4995 = vpop.f32.mrb[0].mxu0
    %v4996 = vadd.f32 0.0, %v4995
    %v4997 = vpop.f32.mrb[0].mxu0
    %4998 = vmatprep.mubr.f32.mxu0 0.0
    %4999 = vmatmul.mubr.f32.gmra.mrb[0].mxu0 %v4717
    %v5000 = vpop.f32.mrb[0].mxu0
    %v5001 = vadd.f32 0.0, %v5000
    %v5002 = vpop.f32.mrb[0].mxu0
    %5003 = vmatprep.mubr.f32.mxu0 0.0
    %5004 = vmatmul.mubr.f32.gmra.mrb[0].mxu0 %v4718
    %v5005 = vpop.f32.mrb[0].mxu0
    %v5006 = vadd.f32 0.0, %v5005
    %v5007 = vpop.f32.mrb[0].mxu0
    %5008 = vmatprep.mubr.f32.mxu0 0.0
    %5009 = vmatmul.mubr.f32.gmra.mrb[0].mxu0 %v4719
    %v5010 = vpop.f32.mrb[0].mxu0
    %v5011 = vadd.f32 0.0, %v5010
    %v5012 = vpop.f32.mrb[0].mxu0
    %5013 = vmatprep.mubr.f32.mxu0 0.0
    %5014 = vmatmul.mubr.f32.gmra.mrb[0].mxu0 %v4720
    %v5015 = vpop.f32.mrb[0].mxu0
    %v5016 = vadd.f32 0.0, %v5015
    %v5017 = vpop.f32.mrb[0].mxu0
    %5018 = vmatprep.mubr.f32.mxu0 0.0
    %5019 = vmatmul.mubr.f32.gmra.mrb[0].mxu0 %v4721
    %v5020 = vpop.f32.mrb[0].mxu0
    %v5021 = vadd.f32 0.0, %v5020
    %v5022 = vpop.f32.mrb[0].mxu0
    %5023 = vmatprep.mubr.f32.mxu0 0.0
    %5024 = vmatmul.mubr.f32.gmra.mrb[0].mxu0 %v4722
    %v5025 = vpop.f32.mrb[0].mxu0
    %v5026 = vadd.f32 0.0, %v5025
    %v5027 = vpop.f32.mrb[0].mxu0
    %5028 = vmatprep.mubr.f32.mxu0 0.0
    %5029 = vmatmul.mubr.f32.gmra.mrb[0].mxu0 %v4723
    %v5030 = vpop.f32.mrb[0].mxu0
    %v5031 = vadd.f32 0.0, %v5030
    %v5032 = vpop.f32.mrb[0].mxu0
    %5033 = vmatprep.mubr.f32.mxu0 0.0
    %5034 = vmatmul.mubr.f32.gmra.mrb[0].mxu0 %v4724
    %v5035 = vpop.f32.mrb[0].mxu0
    %v5036 = vadd.f32 0.0, %v5035
    %v5037 = vpop.f32.mrb[0].mxu0
    %5038 = vmatprep.mubr.f32.mxu0 0.0
    %5039 = vmatmul.mubr.f32.gmra.mrb[0].mxu0 %v4725
    %v5040 = vpop.f32.mrb[0].mxu0
    %v5041 = vadd.f32 0.0, %v5040
    %v5042 = vpop.f32.mrb[0].mxu0
    %5043 = vmatprep.mubr.f32.mxu0 0.0
    %5044 = vmatmul.mubr.f32.gmra.mrb[0].mxu0 %v4726
    %v5045 = vpop.f32.mrb[0].mxu0
    %v5046 = vadd.f32 0.0, %v5045
    %v5047 = vpop.f32.mrb[0].mxu0
    %5048 = vmatprep.mubr.f32.mxu0 0.0
    %5049 = vmatmul.mubr.f32.gmra.mrb[0].mxu0 %v4727
    %v5050 = vpop.f32.mrb[0].mxu0
    %v5051 = vadd.f32 0.0, %v5050
    %v5052 = vpop.f32.mrb[0].mxu0
    %5053 = vmatprep.mubr.f32.mxu0 0.0
    %5054 = vmatmul.mubr.f32.gmra.mrb[0].mxu0 %v4728
    %v5055 = vpop.f32.mrb[0].mxu0
    %v5056 = vadd.f32 0.0, %v5055
    %v5057 = vpop.f32.mrb[0].mxu0
    %5058 = vmatprep.mubr.f32.mxu0 0.0
    %5059 = vmatmul.mubr.f32.gmra.mrb[0].mxu0 %v4729
    %v5060 = vpop.f32.mrb[0].mxu0
    %v5061 = vadd.f32 0.0, %v5060
    %v5062 = vpop.f32.mrb[0].mxu0
    %5063 = vmatprep.mubr.f32.mxu0 0.0
    %5064 = vmatmul.mubr.f32.gmra.mrb[0].mxu0 %v4730
    %v5065 = vpop.f32.mrb[0].mxu0
    %v5066 = vadd.f32 0.0, %v5065
    %v5067 = vpop.f32.mrb[0].mxu0
    %5068 = vmatprep.mubr.f32.mxu0 0.0
    %5069 = vmatmul.mubr.f32.gmra.mrb[0].mxu0 %v4731
    %v5070 = vpop.f32.mrb[0].mxu0
    %v5071 = vadd.f32 0.0, %v5070
    %v5072 = vpop.f32.mrb[0].mxu0
    %5073 = vmatprep.mubr.f32.mxu0 0.0
    %5074 = vmatmul.mubr.f32.gmra.mrb[0].mxu0 %v4732
    %v5075 = vpop.f32.mrb[0].mxu0
    %v5076 = vadd.f32 0.0, %v5075
    %v5077 = vpop.f32.mrb[0].mxu0
    %5078 = vmatprep.mubr.f32.mxu0 0.0
    %5079 = vmatmul.mubr.f32.gmra.mrb[0].mxu0 %v4733
    %v5080 = vpop.f32.mrb[0].mxu0
    %v5081 = vadd.f32 0.0, %v5080
    %v5082 = vpop.f32.mrb[0].mxu0
    %5083 = vmatprep.mubr.f32.mxu0 0.0
    %5084 = vmatmul.mubr.f32.gmra.mrb[0].mxu0 %v4734
    %v5085 = vpop.f32.mrb[0].mxu0
    %v5086 = vadd.f32 0.0, %v5085
    %v5087 = vpop.f32.mrb[0].mxu0
    %5088 = vmatprep.mubr.f32.mxu0 0.0
    %5089 = vmatmul.mubr.f32.gmra.mrb[0].mxu0 %v4735
    %v5090 = vpop.f32.mrb[0].mxu0
    %v5091 = vadd.f32 0.0, %v5090
    %v5092 = vpop.f32.mrb[0].mxu0
    %5093 = vmatprep.mubr.f32.mxu0 0.0
    %5094 = vmatmul.mubr.f32.gmra.mrb[0].mxu0 %v4736
    %v5095 = vpop.f32.mrb[0].mxu0
    %v5096 = vadd.f32 0.0, %v5095
    %v5097 = vpop.f32.mrb[0].mxu0
    %5098 = vmatprep.mubr.f32.mxu0 0.0
    %5099 = vmatmul.mubr.f32.gmra.mrb[0].mxu0 %v4737
    %v5100 = vpop.f32.mrb[0].mxu0
    %v5101 = vadd.f32 0.0, %v5100
    %v5102 = vpop.f32.mrb[0].mxu0
    %5103 = vmatprep.mubr.f32.mxu0 0.0
    %5104 = vmatmul.mubr.f32.gmra.mrb[0].mxu0 %v4738
    %v5105 = vpop.f32.mrb[0].mxu0
    %v5106 = vadd.f32 0.0, %v5105
    %v5107 = vpop.f32.mrb[0].mxu0
    %5108 = vmatprep.mubr.f32.mxu0 0.0
    %5109 = vmatmul.mubr.f32.gmra.mrb[0].mxu0 %v4739
    %v5110 = vpop.f32.mrb[0].mxu0
    %v5111 = vadd.f32 0.0, %v5110
    %v5112 = vpop.f32.mrb[0].mxu0
    %5113 = vmatprep.mubr.f32.mxu0 0.0
    %5114 = vmatmul.mubr.f32.gmra.mrb[0].mxu0 %v4740
    %v5115 = vpop.f32.mrb[0].mxu0
    %v5116 = vadd.f32 0.0, %v5115
    %v5117 = vpop.f32.mrb[0].mxu0
    %5118 = vmatprep.mubr.f32.mxu0 0.0
    %5119 = vmatmul.mubr.f32.gmra.mrb[0].mxu0 %v4741
    %v5120 = vpop.f32.mrb[0].mxu0
    %v5121 = vadd.f32 0.0, %v5120
    %v5122 = vpop.f32.mrb[0].mxu0
    %5123 = vmatprep.mubr.f32.mxu0 0.0
    %5124 = vmatmul.mubr.f32.gmra.mrb[0].mxu0 %v4742
    %v5125 = vpop.f32.mrb[0].mxu0
    %v5126 = vadd.f32 0.0, %v5125
    %v5127 = vpop.f32.mrb[0].mxu0
    %5128 = vmatprep.mubr.f32.mxu0 0.0
    %5129 = vmatmul.mubr.f32.gmra.mrb[0].mxu0 %v4743
    %v5130 = vpop.f32.mrb[0].mxu0
    %v5131 = vadd.f32 0.0, %v5130
    %v5132 = vpop.f32.mrb[0].mxu0
    %5133 = vmatprep.mubr.f32.mxu0 0.0
    %5134 = vmatmul.mubr.f32.gmra.mrb[0].mxu0 %v4744
    %v5135 = vpop.f32.mrb[0].mxu0
    %v5136 = vadd.f32 0.0, %v5135
    %v5137 = vpop.f32.mrb[0].mxu0
    %5138 = vmatprep.mubr.f32.mxu0 0.0
    %5139 = vmatmul.mubr.f32.gmra.mrb[0].mxu0 %v4745
    %v5140 = vpop.f32.mrb[0].mxu0
    %v5141 = vadd.f32 0.0, %v5140
    %v5142 = vpop.f32.mrb[0].mxu0
    %5143 = vmatprep.mubr.f32.mxu0 0.0
    %5144 = vmatmul.mubr.f32.gmra.mrb[0].mxu0 %v4746
    %v5145 = vpop.f32.mrb[0].mxu0
    %v5146 = vadd.f32 0.0, %v5145
    %v5147 = vpop.f32.mrb[0].mxu0
    %5148 = vdwg.mxu0
    %v5149 = vadd.f32 %v4619, %v4831
    %v5150 = vadd.f32 %v4620, %v4836
    %v5151 = vadd.f32 %v4621, %v4841
    %v5152 = vadd.f32 %v4622, %v4846
    %v5153 = vadd.f32 %v4623, %v4851
    %v5154 = vadd.f32 %v4624, %v4856
    %v5155 = vadd.f32 %v4625, %v4861
    %v5156 = vadd.f32 %v4626, %v4866
    %v5157 = vadd.f32 %v4627, %v4871
    %v5158 = vadd.f32 %v4628, %v4876
    %v5159 = vadd.f32 %v4629, %v4881
    %v5160 = vadd.f32 %v4630, %v4886
    %v5161 = vadd.f32 %v4631, %v4891
    %v5162 = vadd.f32 %v4632, %v4896
    %v5163 = vadd.f32 %v4633, %v4901
    %v5164 = vadd.f32 %v4634, %v4906
    %v5165 = vadd.f32 %v4635, %v4911
    %v5166 = vadd.f32 %v4636, %v4916
    %v5167 = vadd.f32 %v4637, %v4921
    %v5168 = vadd.f32 %v4638, %v4926
    %v5169 = vadd.f32 %v4639, %v4931
    %v5170 = vadd.f32 %v4640, %v4936
    %v5171 = vadd.f32 %v4641, %v4941
    %v5172 = vadd.f32 %v4642, %v4946
    %v5173 = vadd.f32 %v4643, %v4951
    %v5174 = vadd.f32 %v4644, %v4956
    %v5175 = vadd.f32 %v4645, %v4961
    %v5176 = vadd.f32 %v4646, %v4966
    %v5177 = vadd.f32 %v4647, %v4971
    %v5178 = vadd.f32 %v4648, %v4976
    %v5179 = vadd.f32 %v4649, %v4981
    %v5180 = vadd.f32 %v4650, %v4986
    %v5181 = vadd.f32 %v4651, %v4991
    %v5182 = vadd.f32 %v4652, %v4996
    %v5183 = vadd.f32 %v4653, %v5001
    %v5184 = vadd.f32 %v4654, %v5006
    %v5185 = vadd.f32 %v4655, %v5011
    %v5186 = vadd.f32 %v4656, %v5016
    %v5187 = vadd.f32 %v4657, %v5021
    %v5188 = vadd.f32 %v4658, %v5026
    %v5189 = vadd.f32 %v4659, %v5031
    %v5190 = vadd.f32 %v4660, %v5036
    %v5191 = vadd.f32 %v4661, %v5041
    %v5192 = vadd.f32 %v4662, %v5046
    %v5193 = vadd.f32 %v4663, %v5051
    %v5194 = vadd.f32 %v4664, %v5056
    %v5195 = vadd.f32 %v4665, %v5061
    %v5196 = vadd.f32 %v4666, %v5066
    %v5197 = vadd.f32 %v4667, %v5071
    %v5198 = vadd.f32 %v4668, %v5076
    %v5199 = vadd.f32 %v4669, %v5081
    %v5200 = vadd.f32 %v4670, %v5086
    %v5201 = vadd.f32 %v4671, %v5091
    %v5202 = vadd.f32 %v4672, %v5096
    %v5203 = vadd.f32 %v4673, %v5101
    %v5204 = vadd.f32 %v4674, %v5106
    %v5205 = vadd.f32 %v4675, %v5111
    %v5206 = vadd.f32 %v4676, %v5116
    %v5207 = vadd.f32 %v4677, %v5121
    %v5208 = vadd.f32 %v4678, %v5126
    %v5209 = vadd.f32 %v4679, %v5131
    %v5210 = vadd.f32 %v4680, %v5136
    %v5211 = vadd.f32 %v4681, %v5141
    %v5212 = vadd.f32 %v4682, %v5146
    %v5213 = vld [vmem:[%s4152 + $0x2] sm:$0xff]
    %v5214 = vld [vmem:[%s4152 + $0xa] sm:$0xff]
    %v5215 = vld [vmem:[%s4152 + $0x1a] sm:$0xff]
    %v5216 = vld [vmem:[%s4152 + $0x22] sm:$0xff]
    %v5217 = vld [vmem:[%s4152 + $0x32] sm:$0xff]
    %v5218 = vld [vmem:[%s4152 + $0x3a] sm:$0xff]
    %v5219 = vld [vmem:[%s4152 + $0x4a] sm:$0xff]
    %v5220 = vld [vmem:[%s4152 + $0x52] sm:$0xff]
    %v5221 = vld [vmem:[%s4152 + $0x62] sm:$0xff]
    %v5222 = vld [vmem:[%s4152 + $0x6a] sm:$0xff]
    %v5223 = vld [vmem:[%s4152 + $0x7a] sm:$0xff]
    %v5224 = vld [vmem:[%s4152 + $0x82] sm:$0xff]
    %v5225 = vld [vmem:[%s4152 + $0x92] sm:$0xff]
    %v5226 = vld [vmem:[%s4152 + $0x9a] sm:$0xff]
    %v5227 = vld [vmem:[%s4152 + $0xaa] sm:$0xff]
    %v5228 = vld [vmem:[%s4152 + $0xb2] sm:$0xff]
    %v5229 = vld [vmem:[%s4152 + $0xc2] sm:$0xff]
    %v5230 = vld [vmem:[%s4152 + $0xca] sm:$0xff]
    %v5231 = vld [vmem:[%s4152 + $0xda] sm:$0xff]
    %v5232 = vld [vmem:[%s4152 + $0xe2] sm:$0xff]
    %v5233 = vld [vmem:[%s4152 + $0xf2] sm:$0xff]
    %v5234 = vld [vmem:[%s4152 + $0xfa] sm:$0xff]
    %v5235 = vld [vmem:[%s4152 + $0x10a] sm:$0xff]
    %v5236 = vld [vmem:[%s4152 + $0x112] sm:$0xff]
    %v5237 = vld [vmem:[%s4152 + $0x122] sm:$0xff]
    %v5238 = vld [vmem:[%s4152 + $0x12a] sm:$0xff]
    %v5239 = vld [vmem:[%s4152 + $0x13a] sm:$0xff]
    %v5240 = vld [vmem:[%s4152 + $0x142] sm:$0xff]
    %v5241 = vld [vmem:[%s4152 + $0x152] sm:$0xff]
    %v5242 = vld [vmem:[%s4152 + $0x15a] sm:$0xff]
    %v5243 = vld [vmem:[%s4152 + $0x16a] sm:$0xff]
    %v5244 = vld [vmem:[%s4152 + $0x172] sm:$0xff]
    %v5245 = vld [vmem:[%s4152 + $0x1b2] sm:$0xff]
    %v5246 = vld [vmem:[%s4152 + $0x1ba] sm:$0xff]
    %v5247 = vld [vmem:[%s4152 + $0x1ca] sm:$0xff]
    %v5248 = vld [vmem:[%s4152 + $0x1d2] sm:$0xff]
    %v5249 = vld [vmem:[%s4152 + $0x1e2] sm:$0xff]
    %v5250 = vld [vmem:[%s4152 + $0x1ea] sm:$0xff]
    %v5251 = vld [vmem:[%s4152 + $0x1fa] sm:$0xff]
    %v5252 = vld [vmem:[%s4152 + $0x202] sm:$0xff]
    %v5253 = vld [vmem:[%s4152 + $0x212] sm:$0xff]
    %v5254 = vld [vmem:[%s4152 + $0x21a] sm:$0xff]
    %v5255 = vld [vmem:[%s4152 + $0x22a] sm:$0xff]
    %v5256 = vld [vmem:[%s4152 + $0x232] sm:$0xff]
    %v5257 = vld [vmem:[%s4152 + $0x242] sm:$0xff]
    %v5258 = vld [vmem:[%s4152 + $0x24a] sm:$0xff]
    %v5259 = vld [vmem:[%s4152 + $0x25a] sm:$0xff]
    %v5260 = vld [vmem:[%s4152 + $0x262] sm:$0xff]
    %v5261 = vld [vmem:[%s4152 + $0x272] sm:$0xff]
    %v5262 = vld [vmem:[%s4152 + $0x27a] sm:$0xff]
    %v5263 = vld [vmem:[%s4152 + $0x28a] sm:$0xff]
    %v5264 = vld [vmem:[%s4152 + $0x292] sm:$0xff]
    %v5265 = vld [vmem:[%s4152 + $0x2a2] sm:$0xff]
    %v5266 = vld [vmem:[%s4152 + $0x2aa] sm:$0xff]
    %v5267 = vld [vmem:[%s4152 + $0x2ba] sm:$0xff]
    %v5268 = vld [vmem:[%s4152 + $0x2c2] sm:$0xff]
    %v5269 = vld [vmem:[%s4152 + $0x2d2] sm:$0xff]
    %v5270 = vld [vmem:[%s4152 + $0x2da] sm:$0xff]
    %v5271 = vld [vmem:[%s4152 + $0x2ea] sm:$0xff]
    %v5272 = vld [vmem:[%s4152 + $0x2f2] sm:$0xff]
    %v5273 = vld [vmem:[%s4152 + $0x302] sm:$0xff]
    %v5274 = vld [vmem:[%s4152 + $0x30a] sm:$0xff]
    %v5275 = vld [vmem:[%s4152 + $0x31a] sm:$0xff]
    %v5276 = vld [vmem:[%s4152 + $0x322] sm:$0xff]
    %s5277 = scalar_lea.vmem [#allocation8], 1024
    %v5278 = vld [vmem:[%s5277] sm:$0xff]
    %v5279 = vld [vmem:[%s5277 + $0x8] sm:$0xff]
    %v5280 = vld [vmem:[%s5277 + $0x10] sm:$0xff]
    %v5281 = vld [vmem:[%s5277 + $0x18] sm:$0xff]
    %v5282 = vld [vmem:[%s5277 + $0x20] sm:$0xff]
    %v5283 = vld [vmem:[%s5277 + $0x28] sm:$0xff]
    %v5284 = vld [vmem:[%s5277 + $0x30] sm:$0xff]
    %v5285 = vld [vmem:[%s5277 + $0x38] sm:$0xff]
    %v5286 = vld [vmem:[%s5277 + $0x40] sm:$0xff]
    %v5287 = vld [vmem:[%s5277 + $0x48] sm:$0xff]
    %v5288 = vld [vmem:[%s5277 + $0x50] sm:$0xff]
    %v5289 = vld [vmem:[%s5277 + $0x58] sm:$0xff]
    %v5290 = vld [vmem:[%s5277 + $0x60] sm:$0xff]
    %v5291 = vld [vmem:[%s5277 + $0x68] sm:$0xff]
    %v5292 = vld [vmem:[%s5277 + $0x70] sm:$0xff]
    %v5293 = vld [vmem:[%s5277 + $0x78] sm:$0xff]
    %5294 = vmatprep.subr.mxu0 0.0
    %5295 = vmatpush1.msra.mxu0 %v5278
    %5296 = vmatprep.subr.mxu0 0.0
    %5297 = vmatpush1.msra.mxu0 %v5279
    %5298 = vmatprep.subr.mxu0 0.0
    %5299 = vmatpush1.msra.mxu0 %v5280
    %5300 = vmatprep.subr.mxu0 0.0
    %5301 = vmatpush1.msra.mxu0 %v5281
    %5302 = vmatprep.subr.mxu0 0.0
    %5303 = vmatpush1.msra.mxu0 %v5282
    %5304 = vmatprep.subr.mxu0 0.0
    %5305 = vmatpush1.msra.mxu0 %v5283
    %5306 = vmatprep.subr.mxu0 0.0
    %5307 = vmatpush1.msra.mxu0 %v5284
    %5308 = vmatprep.subr.mxu0 0.0
    %5309 = vmatpush1.msra.mxu0 %v5285
    %5310 = vmatprep.subr.mxu0 0.0
    %5311 = vmatpush1.msra.mxu0 %v5286
    %5312 = vmatprep.subr.mxu0 0.0
    %5313 = vmatpush1.msra.mxu0 %v5287
    %5314 = vmatprep.subr.mxu0 0.0
    %5315 = vmatpush1.msra.mxu0 %v5288
    %5316 = vmatprep.subr.mxu0 0.0
    %5317 = vmatpush1.msra.mxu0 %v5289
    %5318 = vmatprep.subr.mxu0 0.0
    %5319 = vmatpush1.msra.mxu0 %v5290
    %5320 = vmatprep.subr.mxu0 0.0
    %5321 = vmatpush1.msra.mxu0 %v5291
    %5322 = vmatprep.subr.mxu0 0.0
    %5323 = vmatpush1.msra.mxu0 %v5292
    %5324 = vmatprep.subr.mxu0 0.0
    %5325 = vmatpush1.msra.mxu0 %v5293
    %5326 = vmatprep.subr.mxu0 0.0
    %5327 = vmatpush1.msra.mxu0 0.0
    %5328 = vmatprep.subr.mxu0 0.0
    %5329 = vmatpush1.msra.mxu0 0.0
    %5330 = vmatprep.subr.mxu0 0.0
    %5331 = vmatpush1.msra.mxu0 0.0
    %5332 = vmatprep.subr.mxu0 0.0
    %5333 = vmatpush1.msra.mxu0 0.0
    %5334 = vmatprep.subr.mxu0 0.0
    %5335 = vmatpush1.msra.mxu0 0.0
    %5336 = vmatprep.subr.mxu0 0.0
    %5337 = vmatpush1.msra.mxu0 0.0
    %5338 = vmatprep.subr.mxu0 0.0
    %5339 = vmatpush1.msra.mxu0 0.0
    %5340 = vmatprep.subr.mxu0 0.0
    %5341 = vmatpush1.msra.mxu0 0.0
    %5342 = vmatprep.subr.mxu0 0.0
    %5343 = vmatpush1.msra.mxu0 0.0
    %5344 = vmatprep.subr.mxu0 0.0
    %5345 = vmatpush1.msra.mxu0 0.0
    %5346 = vmatprep.subr.mxu0 0.0
    %5347 = vmatpush1.msra.mxu0 0.0
    %5348 = vmatprep.subr.mxu0 0.0
    %5349 = vmatpush1.msra.mxu0 0.0
    %5350 = vmatprep.subr.mxu0 0.0
    %5351 = vmatpush1.msra.mxu0 0.0
    %5352 = vmatprep.subr.mxu0 0.0
    %5353 = vmatpush1.msra.mxu0 0.0
    %5354 = vmatprep.subr.mxu0 0.0
    %5355 = vmatpush1.msra.mxu0 0.0
    %5356 = vmatprep.subr.mxu0 0.0
    %5357 = vmatpush1.msra.mxu0 0.0
    %5358 = vmatprep.mubr.f32.mxu0 0.0
    %5359 = vmatmul.mubr.f32.gmra.mrb[0].mxu0 %v5213
    %v5360 = vpop.f32.mrb[0].mxu0
    %v5361 = vadd.f32 0.0, %v5360
    %v5362 = vpop.f32.mrb[0].mxu0
    %5363 = vmatprep.mubr.f32.mxu0 0.0
    %5364 = vmatmul.mubr.f32.gmra.mrb[0].mxu0 %v5214
    %v5365 = vpop.f32.mrb[0].mxu0
    %v5366 = vadd.f32 0.0, %v5365
    %v5367 = vpop.f32.mrb[0].mxu0
    %5368 = vmatprep.mubr.f32.mxu0 0.0
    %5369 = vmatmul.mubr.f32.gmra.mrb[0].mxu0 %v5215
    %v5370 = vpop.f32.mrb[0].mxu0
    %v5371 = vadd.f32 0.0, %v5370
    %v5372 = vpop.f32.mrb[0].mxu0
    %5373 = vmatprep.mubr.f32.mxu0 0.0
    %5374 = vmatmul.mubr.f32.gmra.mrb[0].mxu0 %v5216
    %v5375 = vpop.f32.mrb[0].mxu0
    %v5376 = vadd.f32 0.0, %v5375
    %v5377 = vpop.f32.mrb[0].mxu0
    %5378 = vmatprep.mubr.f32.mxu0 0.0
    %5379 = vmatmul.mubr.f32.gmra.mrb[0].mxu0 %v5217
    %v5380 = vpop.f32.mrb[0].mxu0
    %v5381 = vadd.f32 0.0, %v5380
    %v5382 = vpop.f32.mrb[0].mxu0
    %5383 = vmatprep.mubr.f32.mxu0 0.0
    %5384 = vmatmul.mubr.f32.gmra.mrb[0].mxu0 %v5218
    %v5385 = vpop.f32.mrb[0].mxu0
    %v5386 = vadd.f32 0.0, %v5385
    %v5387 = vpop.f32.mrb[0].mxu0
    %5388 = vmatprep.mubr.f32.mxu0 0.0
    %5389 = vmatmul.mubr.f32.gmra.mrb[0].mxu0 %v5219
    %v5390 = vpop.f32.mrb[0].mxu0
    %v5391 = vadd.f32 0.0, %v5390
    %v5392 = vpop.f32.mrb[0].mxu0
    %5393 = vmatprep.mubr.f32.mxu0 0.0
    %5394 = vmatmul.mubr.f32.gmra.mrb[0].mxu0 %v5220
    %v5395 = vpop.f32.mrb[0].mxu0
    %v5396 = vadd.f32 0.0, %v5395
    %v5397 = vpop.f32.mrb[0].mxu0
    %5398 = vmatprep.mubr.f32.mxu0 0.0
    %5399 = vmatmul.mubr.f32.gmra.mrb[0].mxu0 %v5221
    %v5400 = vpop.f32.mrb[0].mxu0
    %v5401 = vadd.f32 0.0, %v5400
    %v5402 = vpop.f32.mrb[0].mxu0
    %5403 = vmatprep.mubr.f32.mxu0 0.0
    %5404 = vmatmul.mubr.f32.gmra.mrb[0].mxu0 %v5222
    %v5405 = vpop.f32.mrb[0].mxu0
    %v5406 = vadd.f32 0.0, %v5405
    %v5407 = vpop.f32.mrb[0].mxu0
    %5408 = vmatprep.mubr.f32.mxu0 0.0
    %5409 = vmatmul.mubr.f32.gmra.mrb[0].mxu0 %v5223
    %v5410 = vpop.f32.mrb[0].mxu0
    %v5411 = vadd.f32 0.0, %v5410
    %v5412 = vpop.f32.mrb[0].mxu0
    %5413 = vmatprep.mubr.f32.mxu0 0.0
    %5414 = vmatmul.mubr.f32.gmra.mrb[0].mxu0 %v5224
    %v5415 = vpop.f32.mrb[0].mxu0
    %v5416 = vadd.f32 0.0, %v5415
    %v5417 = vpop.f32.mrb[0].mxu0
    %5418 = vmatprep.mubr.f32.mxu0 0.0
    %5419 = vmatmul.mubr.f32.gmra.mrb[0].mxu0 %v5225
    %v5420 = vpop.f32.mrb[0].mxu0
    %v5421 = vadd.f32 0.0, %v5420
    %v5422 = vpop.f32.mrb[0].mxu0
    %5423 = vmatprep.mubr.f32.mxu0 0.0
    %5424 = vmatmul.mubr.f32.gmra.mrb[0].mxu0 %v5226
    %v5425 = vpop.f32.mrb[0].mxu0
    %v5426 = vadd.f32 0.0, %v5425
    %v5427 = vpop.f32.mrb[0].mxu0
    %5428 = vmatprep.mubr.f32.mxu0 0.0
    %5429 = vmatmul.mubr.f32.gmra.mrb[0].mxu0 %v5227
    %v5430 = vpop.f32.mrb[0].mxu0
    %v5431 = vadd.f32 0.0, %v5430
    %v5432 = vpop.f32.mrb[0].mxu0
    %5433 = vmatprep.mubr.f32.mxu0 0.0
    %5434 = vmatmul.mubr.f32.gmra.mrb[0].mxu0 %v5228
    %v5435 = vpop.f32.mrb[0].mxu0
    %v5436 = vadd.f32 0.0, %v5435
    %v5437 = vpop.f32.mrb[0].mxu0
    %5438 = vmatprep.mubr.f32.mxu0 0.0
    %5439 = vmatmul.mubr.f32.gmra.mrb[0].mxu0 %v5229
    %v5440 = vpop.f32.mrb[0].mxu0
    %v5441 = vadd.f32 0.0, %v5440
    %v5442 = vpop.f32.mrb[0].mxu0
    %5443 = vmatprep.mubr.f32.mxu0 0.0
    %5444 = vmatmul.mubr.f32.gmra.mrb[0].mxu0 %v5230
    %v5445 = vpop.f32.mrb[0].mxu0
    %v5446 = vadd.f32 0.0, %v5445
    %v5447 = vpop.f32.mrb[0].mxu0
    %5448 = vmatprep.mubr.f32.mxu0 0.0
    %5449 = vmatmul.mubr.f32.gmra.mrb[0].mxu0 %v5231
    %v5450 = vpop.f32.mrb[0].mxu0
    %v5451 = vadd.f32 0.0, %v5450
    %v5452 = vpop.f32.mrb[0].mxu0
    %5453 = vmatprep.mubr.f32.mxu0 0.0
    %5454 = vmatmul.mubr.f32.gmra.mrb[0].mxu0 %v5232
    %v5455 = vpop.f32.mrb[0].mxu0
    %v5456 = vadd.f32 0.0, %v5455
    %v5457 = vpop.f32.mrb[0].mxu0
    %5458 = vmatprep.mubr.f32.mxu0 0.0
    %5459 = vmatmul.mubr.f32.gmra.mrb[0].mxu0 %v5233
    %v5460 = vpop.f32.mrb[0].mxu0
    %v5461 = vadd.f32 0.0, %v5460
    %v5462 = vpop.f32.mrb[0].mxu0
    %5463 = vmatprep.mubr.f32.mxu0 0.0
    %5464 = vmatmul.mubr.f32.gmra.mrb[0].mxu0 %v5234
    %v5465 = vpop.f32.mrb[0].mxu0
    %v5466 = vadd.f32 0.0, %v5465
    %v5467 = vpop.f32.mrb[0].mxu0
    %5468 = vmatprep.mubr.f32.mxu0 0.0
    %5469 = vmatmul.mubr.f32.gmra.mrb[0].mxu0 %v5235
    %v5470 = vpop.f32.mrb[0].mxu0
    %v5471 = vadd.f32 0.0, %v5470
    %v5472 = vpop.f32.mrb[0].mxu0
    %5473 = vmatprep.mubr.f32.mxu0 0.0
    %5474 = vmatmul.mubr.f32.gmra.mrb[0].mxu0 %v5236
    %v5475 = vpop.f32.mrb[0].mxu0
    %v5476 = vadd.f32 0.0, %v5475
    %v5477 = vpop.f32.mrb[0].mxu0
    %5478 = vmatprep.mubr.f32.mxu0 0.0
    %5479 = vmatmul.mubr.f32.gmra.mrb[0].mxu0 %v5237
    %v5480 = vpop.f32.mrb[0].mxu0
    %v5481 = vadd.f32 0.0, %v5480
    %v5482 = vpop.f32.mrb[0].mxu0
    %5483 = vmatprep.mubr.f32.mxu0 0.0
    %5484 = vmatmul.mubr.f32.gmra.mrb[0].mxu0 %v5238
    %v5485 = vpop.f32.mrb[0].mxu0
    %v5486 = vadd.f32 0.0, %v5485
    %v5487 = vpop.f32.mrb[0].mxu0
    %5488 = vmatprep.mubr.f32.mxu0 0.0
    %5489 = vmatmul.mubr.f32.gmra.mrb[0].mxu0 %v5239
    %v5490 = vpop.f32.mrb[0].mxu0
    %v5491 = vadd.f32 0.0, %v5490
    %v5492 = vpop.f32.mrb[0].mxu0
    %5493 = vmatprep.mubr.f32.mxu0 0.0
    %5494 = vmatmul.mubr.f32.gmra.mrb[0].mxu0 %v5240
    %v5495 = vpop.f32.mrb[0].mxu0
    %v5496 = vadd.f32 0.0, %v5495
    %v5497 = vpop.f32.mrb[0].mxu0
    %5498 = vmatprep.mubr.f32.mxu0 0.0
    %5499 = vmatmul.mubr.f32.gmra.mrb[0].mxu0 %v5241
    %v5500 = vpop.f32.mrb[0].mxu0
    %v5501 = vadd.f32 0.0, %v5500
    %v5502 = vpop.f32.mrb[0].mxu0
    %5503 = vmatprep.mubr.f32.mxu0 0.0
    %5504 = vmatmul.mubr.f32.gmra.mrb[0].mxu0 %v5242
    %v5505 = vpop.f32.mrb[0].mxu0
    %v5506 = vadd.f32 0.0, %v5505
    %v5507 = vpop.f32.mrb[0].mxu0
    %5508 = vmatprep.mubr.f32.mxu0 0.0
    %5509 = vmatmul.mubr.f32.gmra.mrb[0].mxu0 %v5243
    %v5510 = vpop.f32.mrb[0].mxu0
    %v5511 = vadd.f32 0.0, %v5510
    %v5512 = vpop.f32.mrb[0].mxu0
    %5513 = vmatprep.mubr.f32.mxu0 0.0
    %5514 = vmatmul.mubr.f32.gmra.mrb[0].mxu0 %v5244
    %v5515 = vpop.f32.mrb[0].mxu0
    %v5516 = vadd.f32 0.0, %v5515
    %v5517 = vpop.f32.mrb[0].mxu0
    %5518 = vmatprep.mubr.f32.mxu0 0.0
    %5519 = vmatmul.mubr.f32.gmra.mrb[0].mxu0 %v5245
    %v5520 = vpop.f32.mrb[0].mxu0
    %v5521 = vadd.f32 0.0, %v5520
    %v5522 = vpop.f32.mrb[0].mxu0
    %5523 = vmatprep.mubr.f32.mxu0 0.0
    %5524 = vmatmul.mubr.f32.gmra.mrb[0].mxu0 %v5246
    %v5525 = vpop.f32.mrb[0].mxu0
    %v5526 = vadd.f32 0.0, %v5525
    %v5527 = vpop.f32.mrb[0].mxu0
    %5528 = vmatprep.mubr.f32.mxu0 0.0
    %5529 = vmatmul.mubr.f32.gmra.mrb[0].mxu0 %v5247
    %v5530 = vpop.f32.mrb[0].mxu0
    %v5531 = vadd.f32 0.0, %v5530
    %v5532 = vpop.f32.mrb[0].mxu0
    %5533 = vmatprep.mubr.f32.mxu0 0.0
    %5534 = vmatmul.mubr.f32.gmra.mrb[0].mxu0 %v5248
    %v5535 = vpop.f32.mrb[0].mxu0
    %v5536 = vadd.f32 0.0, %v5535
    %v5537 = vpop.f32.mrb[0].mxu0
    %5538 = vmatprep.mubr.f32.mxu0 0.0
    %5539 = vmatmul.mubr.f32.gmra.mrb[0].mxu0 %v5249
    %v5540 = vpop.f32.mrb[0].mxu0
    %v5541 = vadd.f32 0.0, %v5540
    %v5542 = vpop.f32.mrb[0].mxu0
    %5543 = vmatprep.mubr.f32.mxu0 0.0
    %5544 = vmatmul.mubr.f32.gmra.mrb[0].mxu0 %v5250
    %v5545 = vpop.f32.mrb[0].mxu0
    %v5546 = vadd.f32 0.0, %v5545
    %v5547 = vpop.f32.mrb[0].mxu0
    %5548 = vmatprep.mubr.f32.mxu0 0.0
    %5549 = vmatmul.mubr.f32.gmra.mrb[0].mxu0 %v5251
    %v5550 = vpop.f32.mrb[0].mxu0
    %v5551 = vadd.f32 0.0, %v5550
    %v5552 = vpop.f32.mrb[0].mxu0
    %5553 = vmatprep.mubr.f32.mxu0 0.0
    %5554 = vmatmul.mubr.f32.gmra.mrb[0].mxu0 %v5252
    %v5555 = vpop.f32.mrb[0].mxu0
    %v5556 = vadd.f32 0.0, %v5555
    %v5557 = vpop.f32.mrb[0].mxu0
    %5558 = vmatprep.mubr.f32.mxu0 0.0
    %5559 = vmatmul.mubr.f32.gmra.mrb[0].mxu0 %v5253
    %v5560 = vpop.f32.mrb[0].mxu0
    %v5561 = vadd.f32 0.0, %v5560
    %v5562 = vpop.f32.mrb[0].mxu0
    %5563 = vmatprep.mubr.f32.mxu0 0.0
    %5564 = vmatmul.mubr.f32.gmra.mrb[0].mxu0 %v5254
    %v5565 = vpop.f32.mrb[0].mxu0
    %v5566 = vadd.f32 0.0, %v5565
    %v5567 = vpop.f32.mrb[0].mxu0
    %5568 = vmatprep.mubr.f32.mxu0 0.0
    %5569 = vmatmul.mubr.f32.gmra.mrb[0].mxu0 %v5255
    %v5570 = vpop.f32.mrb[0].mxu0
    %v5571 = vadd.f32 0.0, %v5570
    %v5572 = vpop.f32.mrb[0].mxu0
    %5573 = vmatprep.mubr.f32.mxu0 0.0
    %5574 = vmatmul.mubr.f32.gmra.mrb[0].mxu0 %v5256
    %v5575 = vpop.f32.mrb[0].mxu0
    %v5576 = vadd.f32 0.0, %v5575
    %v5577 = vpop.f32.mrb[0].mxu0
    %5578 = vmatprep.mubr.f32.mxu0 0.0
    %5579 = vmatmul.mubr.f32.gmra.mrb[0].mxu0 %v5257
    %v5580 = vpop.f32.mrb[0].mxu0
    %v5581 = vadd.f32 0.0, %v5580
    %v5582 = vpop.f32.mrb[0].mxu0
    %5583 = vmatprep.mubr.f32.mxu0 0.0
    %5584 = vmatmul.mubr.f32.gmra.mrb[0].mxu0 %v5258
    %v5585 = vpop.f32.mrb[0].mxu0
    %v5586 = vadd.f32 0.0, %v5585
    %v5587 = vpop.f32.mrb[0].mxu0
    %5588 = vmatprep.mubr.f32.mxu0 0.0
    %5589 = vmatmul.mubr.f32.gmra.mrb[0].mxu0 %v5259
    %v5590 = vpop.f32.mrb[0].mxu0
    %v5591 = vadd.f32 0.0, %v5590
    %v5592 = vpop.f32.mrb[0].mxu0
    %5593 = vmatprep.mubr.f32.mxu0 0.0
    %5594 = vmatmul.mubr.f32.gmra.mrb[0].mxu0 %v5260
    %v5595 = vpop.f32.mrb[0].mxu0
    %v5596 = vadd.f32 0.0, %v5595
    %v5597 = vpop.f32.mrb[0].mxu0
    %5598 = vmatprep.mubr.f32.mxu0 0.0
    %5599 = vmatmul.mubr.f32.gmra.mrb[0].mxu0 %v5261
    %v5600 = vpop.f32.mrb[0].mxu0
    %v5601 = vadd.f32 0.0, %v5600
    %v5602 = vpop.f32.mrb[0].mxu0
    %5603 = vmatprep.mubr.f32.mxu0 0.0
    %5604 = vmatmul.mubr.f32.gmra.mrb[0].mxu0 %v5262
    %v5605 = vpop.f32.mrb[0].mxu0
    %v5606 = vadd.f32 0.0, %v5605
    %v5607 = vpop.f32.mrb[0].mxu0
    %5608 = vmatprep.mubr.f32.mxu0 0.0
    %5609 = vmatmul.mubr.f32.gmra.mrb[0].mxu0 %v5263
    %v5610 = vpop.f32.mrb[0].mxu0
    %v5611 = vadd.f32 0.0, %v5610
    %v5612 = vpop.f32.mrb[0].mxu0
    %5613 = vmatprep.mubr.f32.mxu0 0.0
    %5614 = vmatmul.mubr.f32.gmra.mrb[0].mxu0 %v5264
    %v5615 = vpop.f32.mrb[0].mxu0
    %v5616 = vadd.f32 0.0, %v5615
    %v5617 = vpop.f32.mrb[0].mxu0
    %5618 = vmatprep.mubr.f32.mxu0 0.0
    %5619 = vmatmul.mubr.f32.gmra.mrb[0].mxu0 %v5265
    %v5620 = vpop.f32.mrb[0].mxu0
    %v5621 = vadd.f32 0.0, %v5620
    %v5622 = vpop.f32.mrb[0].mxu0
    %5623 = vmatprep.mubr.f32.mxu0 0.0
    %5624 = vmatmul.mubr.f32.gmra.mrb[0].mxu0 %v5266
    %v5625 = vpop.f32.mrb[0].mxu0
    %v5626 = vadd.f32 0.0, %v5625
    %v5627 = vpop.f32.mrb[0].mxu0
    %5628 = vmatprep.mubr.f32.mxu0 0.0
    %5629 = vmatmul.mubr.f32.gmra.mrb[0].mxu0 %v5267
    %v5630 = vpop.f32.mrb[0].mxu0
    %v5631 = vadd.f32 0.0, %v5630
    %v5632 = vpop.f32.mrb[0].mxu0
    %5633 = vmatprep.mubr.f32.mxu0 0.0
    %5634 = vmatmul.mubr.f32.gmra.mrb[0].mxu0 %v5268
    %v5635 = vpop.f32.mrb[0].mxu0
    %v5636 = vadd.f32 0.0, %v5635
    %v5637 = vpop.f32.mrb[0].mxu0
    %5638 = vmatprep.mubr.f32.mxu0 0.0
    %5639 = vmatmul.mubr.f32.gmra.mrb[0].mxu0 %v5269
    %v5640 = vpop.f32.mrb[0].mxu0
    %v5641 = vadd.f32 0.0, %v5640
    %v5642 = vpop.f32.mrb[0].mxu0
    %5643 = vmatprep.mubr.f32.mxu0 0.0
    %5644 = vmatmul.mubr.f32.gmra.mrb[0].mxu0 %v5270
    %v5645 = vpop.f32.mrb[0].mxu0
    %v5646 = vadd.f32 0.0, %v5645
    %v5647 = vpop.f32.mrb[0].mxu0
    %5648 = vmatprep.mubr.f32.mxu0 0.0
    %5649 = vmatmul.mubr.f32.gmra.mrb[0].mxu0 %v5271
    %v5650 = vpop.f32.mrb[0].mxu0
    %v5651 = vadd.f32 0.0, %v5650
    %v5652 = vpop.f32.mrb[0].mxu0
    %5653 = vmatprep.mubr.f32.mxu0 0.0
    %5654 = vmatmul.mubr.f32.gmra.mrb[0].mxu0 %v5272
    %v5655 = vpop.f32.mrb[0].mxu0
    %v5656 = vadd.f32 0.0, %v5655
    %v5657 = vpop.f32.mrb[0].mxu0
    %5658 = vmatprep.mubr.f32.mxu0 0.0
    %5659 = vmatmul.mubr.f32.gmra.mrb[0].mxu0 %v5273
    %v5660 = vpop.f32.mrb[0].mxu0
    %v5661 = vadd.f32 0.0, %v5660
    %v5662 = vpop.f32.mrb[0].mxu0
    %5663 = vmatprep.mubr.f32.mxu0 0.0
    %5664 = vmatmul.mubr.f32.gmra.mrb[0].mxu0 %v5274
    %v5665 = vpop.f32.mrb[0].mxu0
    %v5666 = vadd.f32 0.0, %v5665
    %v5667 = vpop.f32.mrb[0].mxu0
    %5668 = vmatprep.mubr.f32.mxu0 0.0
    %5669 = vmatmul.mubr.f32.gmra.mrb[0].mxu0 %v5275
    %v5670 = vpop.f32.mrb[0].mxu0
    %v5671 = vadd.f32 0.0, %v5670
    %v5672 = vpop.f32.mrb[0].mxu0
    %5673 = vmatprep.mubr.f32.mxu0 0.0
    %5674 = vmatmul.mubr.f32.gmra.mrb[0].mxu0 %v5276
    %v5675 = vpop.f32.mrb[0].mxu0
    %v5676 = vadd.f32 0.0, %v5675
    %v5677 = vpop.f32.mrb[0].mxu0
    %5678 = vdwg.mxu0
    %v5679 = vadd.f32 %v5149, %v5361
    %v5680 = vadd.f32 %v5150, %v5366
    %v5681 = vadd.f32 %v5151, %v5371
    %v5682 = vadd.f32 %v5152, %v5376
    %v5683 = vadd.f32 %v5153, %v5381
    %v5684 = vadd.f32 %v5154, %v5386
    %v5685 = vadd.f32 %v5155, %v5391
    %v5686 = vadd.f32 %v5156, %v5396
    %v5687 = vadd.f32 %v5157, %v5401
    %v5688 = vadd.f32 %v5158, %v5406
    %v5689 = vadd.f32 %v5159, %v5411
    %v5690 = vadd.f32 %v5160, %v5416
    %v5691 = vadd.f32 %v5161, %v5421
    %v5692 = vadd.f32 %v5162, %v5426
    %v5693 = vadd.f32 %v5163, %v5431
    %v5694 = vadd.f32 %v5164, %v5436
    %v5695 = vadd.f32 %v5165, %v5441
    %v5696 = vadd.f32 %v5166, %v5446
    %v5697 = vadd.f32 %v5167, %v5451
    %v5698 = vadd.f32 %v5168, %v5456
    %v5699 = vadd.f32 %v5169, %v5461
    %v5700 = vadd.f32 %v5170, %v5466
    %v5701 = vadd.f32 %v5171, %v5471
    %v5702 = vadd.f32 %v5172, %v5476
    %v5703 = vadd.f32 %v5173, %v5481
    %v5704 = vadd.f32 %v5174, %v5486
    %v5705 = vadd.f32 %v5175, %v5491
    %v5706 = vadd.f32 %v5176, %v5496
    %v5707 = vadd.f32 %v5177, %v5501
    %v5708 = vadd.f32 %v5178, %v5506
    %v5709 = vadd.f32 %v5179, %v5511
    %v5710 = vadd.f32 %v5180, %v5516
    %v5711 = vadd.f32 %v5181, %v5521
    %v5712 = vadd.f32 %v5182, %v5526
    %v5713 = vadd.f32 %v5183, %v5531
    %v5714 = vadd.f32 %v5184, %v5536
    %v5715 = vadd.f32 %v5185, %v5541
    %v5716 = vadd.f32 %v5186, %v5546
    %v5717 = vadd.f32 %v5187, %v5551
    %v5718 = vadd.f32 %v5188, %v5556
    %v5719 = vadd.f32 %v5189, %v5561
    %v5720 = vadd.f32 %v5190, %v5566
    %v5721 = vadd.f32 %v5191, %v5571
    %v5722 = vadd.f32 %v5192, %v5576
    %v5723 = vadd.f32 %v5193, %v5581
    %v5724 = vadd.f32 %v5194, %v5586
    %v5725 = vadd.f32 %v5195, %v5591
    %v5726 = vadd.f32 %v5196, %v5596
    %v5727 = vadd.f32 %v5197, %v5601
    %v5728 = vadd.f32 %v5198, %v5606
    %v5729 = vadd.f32 %v5199, %v5611
    %v5730 = vadd.f32 %v5200, %v5616
    %v5731 = vadd.f32 %v5201, %v5621
    %v5732 = vadd.f32 %v5202, %v5626
    %v5733 = vadd.f32 %v5203, %v5631
    %v5734 = vadd.f32 %v5204, %v5636
    %v5735 = vadd.f32 %v5205, %v5641
    %v5736 = vadd.f32 %v5206, %v5646
    %v5737 = vadd.f32 %v5207, %v5651
    %v5738 = vadd.f32 %v5208, %v5656
    %v5739 = vadd.f32 %v5209, %v5661
    %v5740 = vadd.f32 %v5210, %v5666
    %v5741 = vadd.f32 %v5211, %v5671
    %v5742 = vadd.f32 %v5212, %v5676
    %v5743 = vld [vmem:[%s5] sm:$0x1]
    %v5744 = vld [vmem:[%s6] sm:$0x1]
    %v5745 = vadd.f32 %v5679, %v5680
    %v5746 = vadd.f32 %v5745, %v5681
    %v5747 = vadd.f32 %v5746, %v5682
    %v5748 = vadd.f32 %v5747, %v5683
    %v5749 = vadd.f32 %v5748, %v5684
    %v5750 = vadd.f32 %v5749, %v5685
    %v5751 = vadd.f32 %v5750, %v5686
    %v5752 = vadd.f32 %v5751, %v5687
    %v5753 = vadd.f32 %v5752, %v5688
    %v5754 = vadd.f32 %v5753, %v5689
    %v5755 = vadd.f32 %v5754, %v5690
    %v5756 = vadd.f32 %v5755, %v5691
    %v5757 = vadd.f32 %v5756, %v5692
    %v5758 = vadd.f32 %v5757, %v5693
    %v5759 = vadd.f32 %v5758, %v5694
    %v5760 = vadd.f32 %v5759, %v5695
    %v5761 = vadd.f32 %v5760, %v5696
    %v5762 = vadd.f32 %v5761, %v5697
    %v5763 = vadd.f32 %v5762, %v5698
    %v5764 = vadd.f32 %v5763, %v5699
    %v5765 = vadd.f32 %v5764, %v5700
    %v5766 = vadd.f32 %v5765, %v5701
    %v5767 = vadd.f32 %v5766, %v5702
    %v5768 = vadd.f32 %v5767, %v5703
    %v5769 = vadd.f32 %v5768, %v5704
    %v5770 = vadd.f32 %v5769, %v5705
    %v5771 = vadd.f32 %v5770, %v5706
    %v5772 = vadd.f32 %v5771, %v5707
    %v5773 = vadd.f32 %v5772, %v5708
    %v5774 = vadd.f32 %v5773, %v5709
    %v5775 = vadd.f32 %v5774, %v5710
    %v5776 = vadd.f32 %v5775, %v5711
    %v5777 = vadd.f32 %v5776, %v5712
    %v5778 = vadd.f32 %v5777, %v5713
    %v5779 = vadd.f32 %v5778, %v5714
    %v5780 = vadd.f32 %v5779, %v5715
    %v5781 = vadd.f32 %v5780, %v5716
    %v5782 = vadd.f32 %v5781, %v5717
    %v5783 = vadd.f32 %v5782, %v5718
    %v5784 = vadd.f32 %v5783, %v5719
    %v5785 = vadd.f32 %v5784, %v5720
    %v5786 = vadd.f32 %v5785, %v5721
    %v5787 = vadd.f32 %v5786, %v5722
    %v5788 = vadd.f32 %v5787, %v5723
    %v5789 = vadd.f32 %v5788, %v5724
    %v5790 = vadd.f32 %v5789, %v5725
    %v5791 = vadd.f32 %v5790, %v5726
    %v5792 = vadd.f32 %v5791, %v5727
    %v5793 = vadd.f32 %v5792, %v5728
    %v5794 = vadd.f32 %v5793, %v5729
    %v5795 = vadd.f32 %v5794, %v5730
    %v5796 = vadd.f32 %v5795, %v5731
    %v5797 = vadd.f32 %v5796, %v5732
    %v5798 = vadd.f32 %v5797, %v5733
    %v5799 = vadd.f32 %v5798, %v5734
    %v5800 = vadd.f32 %v5799, %v5735
    %v5801 = vadd.f32 %v5800, %v5736
    %v5802 = vadd.f32 %v5801, %v5737
    %v5803 = vadd.f32 %v5802, %v5738
    %v5804 = vadd.f32 %v5803, %v5739
    %v5805 = vadd.f32 %v5804, %v5740
    %v5806 = vadd.f32 %v5805, %v5741
    %v5807 = vadd.f32 %v5806, %v5742
    %v5808 = vrot.slane %v5807, 4
    %v5809 = vadd.f32 %v5807, %v5808
    %v5810 = vrot.slane %v5809, 2
    %v5811 = vadd.f32 %v5809, %v5810
    %v5812 = vrot.slane %v5811, 1
    %v5813 = vadd.f32 %v5811, %v5812
    %v5814 = vmul.f32 %v5679, %v5679
    %v5815 = vmul.f32 %v5680, %v5680
    %v5816 = vmul.f32 %v5681, %v5681
    %v5817 = vmul.f32 %v5682, %v5682
    %v5818 = vmul.f32 %v5683, %v5683
    %v5819 = vmul.f32 %v5684, %v5684
    %v5820 = vmul.f32 %v5685, %v5685
    %v5821 = vmul.f32 %v5686, %v5686
    %v5822 = vmul.f32 %v5687, %v5687
    %v5823 = vmul.f32 %v5688, %v5688
    %v5824 = vmul.f32 %v5689, %v5689
    %v5825 = vmul.f32 %v5690, %v5690
    %v5826 = vmul.f32 %v5691, %v5691
    %v5827 = vmul.f32 %v5692, %v5692
    %v5828 = vmul.f32 %v5693, %v5693
    %v5829 = vmul.f32 %v5694, %v5694
    %v5830 = vmul.f32 %v5695, %v5695
    %v5831 = vmul.f32 %v5696, %v5696
    %v5832 = vmul.f32 %v5697, %v5697
    %v5833 = vmul.f32 %v5698, %v5698
    %v5834 = vmul.f32 %v5699, %v5699
    %v5835 = vmul.f32 %v5700, %v5700
    %v5836 = vmul.f32 %v5701, %v5701
    %v5837 = vmul.f32 %v5702, %v5702
    %v5838 = vmul.f32 %v5703, %v5703
    %v5839 = vmul.f32 %v5704, %v5704
    %v5840 = vmul.f32 %v5705, %v5705
    %v5841 = vmul.f32 %v5706, %v5706
    %v5842 = vmul.f32 %v5707, %v5707
    %v5843 = vmul.f32 %v5708, %v5708
    %v5844 = vmul.f32 %v5709, %v5709
    %v5845 = vmul.f32 %v5710, %v5710
    %v5846 = vmul.f32 %v5711, %v5711
    %v5847 = vmul.f32 %v5712, %v5712
    %v5848 = vmul.f32 %v5713, %v5713
    %v5849 = vmul.f32 %v5714, %v5714
    %v5850 = vmul.f32 %v5715, %v5715
    %v5851 = vmul.f32 %v5716, %v5716
    %v5852 = vmul.f32 %v5717, %v5717
    %v5853 = vmul.f32 %v5718, %v5718
    %v5854 = vmul.f32 %v5719, %v5719
    %v5855 = vmul.f32 %v5720, %v5720
    %v5856 = vmul.f32 %v5721, %v5721
    %v5857 = vmul.f32 %v5722, %v5722
    %v5858 = vmul.f32 %v5723, %v5723
    %v5859 = vmul.f32 %v5724, %v5724
    %v5860 = vmul.f32 %v5725, %v5725
    %v5861 = vmul.f32 %v5726, %v5726
    %v5862 = vmul.f32 %v5727, %v5727
    %v5863 = vmul.f32 %v5728, %v5728
    %v5864 = vmul.f32 %v5729, %v5729
    %v5865 = vmul.f32 %v5730, %v5730
    %v5866 = vmul.f32 %v5731, %v5731
    %v5867 = vmul.f32 %v5732, %v5732
    %v5868 = vmul.f32 %v5733, %v5733
    %v5869 = vmul.f32 %v5734, %v5734
    %v5870 = vmul.f32 %v5735, %v5735
    %v5871 = vmul.f32 %v5736, %v5736
    %v5872 = vmul.f32 %v5737, %v5737
    %v5873 = vmul.f32 %v5738, %v5738
    %v5874 = vmul.f32 %v5739, %v5739
    %v5875 = vmul.f32 %v5740, %v5740
    %v5876 = vmul.f32 %v5741, %v5741
    %v5877 = vmul.f32 %v5742, %v5742
    %v5878 = vadd.f32 %v5814, %v5815
    %v5879 = vadd.f32 %v5878, %v5816
    %v5880 = vadd.f32 %v5879, %v5817
    %v5881 = vadd.f32 %v5880, %v5818
    %v5882 = vadd.f32 %v5881, %v5819
    %v5883 = vadd.f32 %v5882, %v5820
    %v5884 = vadd.f32 %v5883, %v5821
    %v5885 = vadd.f32 %v5884, %v5822
    %v5886 = vadd.f32 %v5885, %v5823
    %v5887 = vadd.f32 %v5886, %v5824
    %v5888 = vadd.f32 %v5887, %v5825
    %v5889 = vadd.f32 %v5888, %v5826
    %v5890 = vadd.f32 %v5889, %v5827
    %v5891 = vadd.f32 %v5890, %v5828
    %v5892 = vadd.f32 %v5891, %v5829
    %v5893 = vadd.f32 %v5892, %v5830
    %v5894 = vadd.f32 %v5893, %v5831
    %v5895 = vadd.f32 %v5894, %v5832
    %v5896 = vadd.f32 %v5895, %v5833
    %v5897 = vadd.f32 %v5896, %v5834
    %v5898 = vadd.f32 %v5897, %v5835
    %v5899 = vadd.f32 %v5898, %v5836
    %v5900 = vadd.f32 %v5899, %v5837
    %v5901 = vadd.f32 %v5900, %v5838
    %v5902 = vadd.f32 %v5901, %v5839
    %v5903 = vadd.f32 %v5902, %v5840
    %v5904 = vadd.f32 %v5903, %v5841
    %v5905 = vadd.f32 %v5904, %v5842
    %v5906 = vadd.f32 %v5905, %v5843
    %v5907 = vadd.f32 %v5906, %v5844
    %v5908 = vadd.f32 %v5907, %v5845
    %v5909 = vadd.f32 %v5908, %v5846
    %v5910 = vadd.f32 %v5909, %v5847
    %v5911 = vadd.f32 %v5910, %v5848
    %v5912 = vadd.f32 %v5911, %v5849
    %v5913 = vadd.f32 %v5912, %v5850
    %v5914 = vadd.f32 %v5913, %v5851
    %v5915 = vadd.f32 %v5914, %v5852
    %v5916 = vadd.f32 %v5915, %v5853
    %v5917 = vadd.f32 %v5916, %v5854
    %v5918 = vadd.f32 %v5917, %v5855
    %v5919 = vadd.f32 %v5918, %v5856
    %v5920 = vadd.f32 %v5919, %v5857
    %v5921 = vadd.f32 %v5920, %v5858
    %v5922 = vadd.f32 %v5921, %v5859
    %v5923 = vadd.f32 %v5922, %v5860
    %v5924 = vadd.f32 %v5923, %v5861
    %v5925 = vadd.f32 %v5924, %v5862
    %v5926 = vadd.f32 %v5925, %v5863
    %v5927 = vadd.f32 %v5926, %v5864
    %v5928 = vadd.f32 %v5927, %v5865
    %v5929 = vadd.f32 %v5928, %v5866
    %v5930 = vadd.f32 %v5929, %v5867
    %v5931 = vadd.f32 %v5930, %v5868
    %v5932 = vadd.f32 %v5931, %v5869
    %v5933 = vadd.f32 %v5932, %v5870
    %v5934 = vadd.f32 %v5933, %v5871
    %v5935 = vadd.f32 %v5934, %v5872
    %v5936 = vadd.f32 %v5935, %v5873
    %v5937 = vadd.f32 %v5936, %v5874
    %v5938 = vadd.f32 %v5937, %v5875
    %v5939 = vadd.f32 %v5938, %v5876
    %v5940 = vadd.f32 %v5939, %v5877
    %v5941 = vrot.slane %v5940, 4
    %v5942 = vadd.f32 %v5940, %v5941
    %v5943 = vrot.slane %v5942, 2
    %v5944 = vadd.f32 %v5942, %v5943
    %v5945 = vrot.slane %v5944, 1
    %v5946 = vadd.f32 %v5944, %v5945
    %v5947 = vmul.f32 %v5813, 0.001953125
    %v5948 = vmul.f32 %v5946, 0.001953125
    %v5949 = vmul.f32 %v5947, %v5947
    %v5950 = vsub.f32 %v5948, %v5949
    %v5951 = vmax.f32 %v5950, 0.0
    %v5952 = vadd.f32 %v5951, 1e-05
    %v5953 = vrsqrt.pop %v5952
    %v5954 = vmul.f32 %v5743, %v5953
    %v5955 = vmul.f32 %v5947, %v5954
    %v5956 = vsub.f32 %v5744, %v5955
    %v5958 = vlaneseq
    %v5959 = vshrl.u32 %v5958, 7
    %v5960 = vsub.s32 0, %v5959
    %v5961 = vrot.slane %v5954, %v5960
    %v5963 = vmul.f32 %v5679, %v5961
    %v5964 = vmul.f32 %v5680, %v5961
    %v5965 = vmul.f32 %v5681, %v5961
    %v5966 = vmul.f32 %v5682, %v5961
    %v5967 = vmul.f32 %v5683, %v5961
    %v5968 = vmul.f32 %v5684, %v5961
    %v5969 = vmul.f32 %v5685, %v5961
    %v5970 = vmul.f32 %v5686, %v5961
    %v5971 = vmul.f32 %v5687, %v5961
    %v5972 = vmul.f32 %v5688, %v5961
    %v5973 = vmul.f32 %v5689, %v5961
    %v5974 = vmul.f32 %v5690, %v5961
    %v5975 = vmul.f32 %v5691, %v5961
    %v5976 = vmul.f32 %v5692, %v5961
    %v5977 = vmul.f32 %v5693, %v5961
    %v5978 = vmul.f32 %v5694, %v5961
    %v5979 = vmul.f32 %v5695, %v5961
    %v5980 = vmul.f32 %v5696, %v5961
    %v5981 = vmul.f32 %v5697, %v5961
    %v5982 = vmul.f32 %v5698, %v5961
    %v5983 = vmul.f32 %v5699, %v5961
    %v5984 = vmul.f32 %v5700, %v5961
    %v5985 = vmul.f32 %v5701, %v5961
    %v5986 = vmul.f32 %v5702, %v5961
    %v5987 = vmul.f32 %v5703, %v5961
    %v5988 = vmul.f32 %v5704, %v5961
    %v5989 = vmul.f32 %v5705, %v5961
    %v5990 = vmul.f32 %v5706, %v5961
    %v5991 = vmul.f32 %v5707, %v5961
    %v5992 = vmul.f32 %v5708, %v5961
    %v5993 = vmul.f32 %v5709, %v5961
    %v5994 = vmul.f32 %v5710, %v5961
    %v5995 = vmul.f32 %v5711, %v5961
    %v5996 = vmul.f32 %v5712, %v5961
    %v5997 = vmul.f32 %v5713, %v5961
    %v5998 = vmul.f32 %v5714, %v5961
    %v5999 = vmul.f32 %v5715, %v5961
    %v6000 = vmul.f32 %v5716, %v5961
    %v6001 = vmul.f32 %v5717, %v5961
    %v6002 = vmul.f32 %v5718, %v5961
    %v6003 = vmul.f32 %v5719, %v5961
    %v6004 = vmul.f32 %v5720, %v5961
    %v6005 = vmul.f32 %v5721, %v5961
    %v6006 = vmul.f32 %v5722, %v5961
    %v6007 = vmul.f32 %v5723, %v5961
    %v6008 = vmul.f32 %v5724, %v5961
    %v6009 = vmul.f32 %v5725, %v5961
    %v6010 = vmul.f32 %v5726, %v5961
    %v6011 = vmul.f32 %v5727, %v5961
    %v6012 = vmul.f32 %v5728, %v5961
    %v6013 = vmul.f32 %v5729, %v5961
    %v6014 = vmul.f32 %v5730, %v5961
    %v6015 = vmul.f32 %v5731, %v5961
    %v6016 = vmul.f32 %v5732, %v5961
    %v6017 = vmul.f32 %v5733, %v5961
    %v6018 = vmul.f32 %v5734, %v5961
    %v6019 = vmul.f32 %v5735, %v5961
    %v6020 = vmul.f32 %v5736, %v5961
    %v6021 = vmul.f32 %v5737, %v5961
    %v6022 = vmul.f32 %v5738, %v5961
    %v6023 = vmul.f32 %v5739, %v5961
    %v6024 = vmul.f32 %v5740, %v5961
    %v6025 = vmul.f32 %v5741, %v5961
    %v6026 = vmul.f32 %v5742, %v5961
    %v6028 = vlaneseq
    %v6029 = vshrl.u32 %v6028, 7
    %v6030 = vsub.s32 0, %v6029
    %v6031 = vrot.slane %v5956, %v6030
    %v6033 = vadd.f32 %v5963, %v6031
    %v6034 = vadd.f32 %v5964, %v6031
    %v6035 = vadd.f32 %v5965, %v6031
    %v6036 = vadd.f32 %v5966, %v6031
    %v6037 = vadd.f32 %v5967, %v6031
    %v6038 = vadd.f32 %v5968, %v6031
    %v6039 = vadd.f32 %v5969, %v6031
    %v6040 = vadd.f32 %v5970, %v6031
    %v6041 = vadd.f32 %v5971, %v6031
    %v6042 = vadd.f32 %v5972, %v6031
    %v6043 = vadd.f32 %v5973, %v6031
    %v6044 = vadd.f32 %v5974, %v6031
    %v6045 = vadd.f32 %v5975, %v6031
    %v6046 = vadd.f32 %v5976, %v6031
    %v6047 = vadd.f32 %v5977, %v6031
    %v6048 = vadd.f32 %v5978, %v6031
    %v6049 = vadd.f32 %v5979, %v6031
    %v6050 = vadd.f32 %v5980, %v6031
    %v6051 = vadd.f32 %v5981, %v6031
    %v6052 = vadd.f32 %v5982, %v6031
    %v6053 = vadd.f32 %v5983, %v6031
    %v6054 = vadd.f32 %v5984, %v6031
    %v6055 = vadd.f32 %v5985, %v6031
    %v6056 = vadd.f32 %v5986, %v6031
    %v6057 = vadd.f32 %v5987, %v6031
    %v6058 = vadd.f32 %v5988, %v6031
    %v6059 = vadd.f32 %v5989, %v6031
    %v6060 = vadd.f32 %v5990, %v6031
    %v6061 = vadd.f32 %v5991, %v6031
    %v6062 = vadd.f32 %v5992, %v6031
    %v6063 = vadd.f32 %v5993, %v6031
    %v6064 = vadd.f32 %v5994, %v6031
    %v6065 = vadd.f32 %v5995, %v6031
    %v6066 = vadd.f32 %v5996, %v6031
    %v6067 = vadd.f32 %v5997, %v6031
    %v6068 = vadd.f32 %v5998, %v6031
    %v6069 = vadd.f32 %v5999, %v6031
    %v6070 = vadd.f32 %v6000, %v6031
    %v6071 = vadd.f32 %v6001, %v6031
    %v6072 = vadd.f32 %v6002, %v6031
    %v6073 = vadd.f32 %v6003, %v6031
    %v6074 = vadd.f32 %v6004, %v6031
    %v6075 = vadd.f32 %v6005, %v6031
    %v6076 = vadd.f32 %v6006, %v6031
    %v6077 = vadd.f32 %v6007, %v6031
    %v6078 = vadd.f32 %v6008, %v6031
    %v6079 = vadd.f32 %v6009, %v6031
    %v6080 = vadd.f32 %v6010, %v6031
    %v6081 = vadd.f32 %v6011, %v6031
    %v6082 = vadd.f32 %v6012, %v6031
    %v6083 = vadd.f32 %v6013, %v6031
    %v6084 = vadd.f32 %v6014, %v6031
    %v6085 = vadd.f32 %v6015, %v6031
    %v6086 = vadd.f32 %v6016, %v6031
    %v6087 = vadd.f32 %v6017, %v6031
    %v6088 = vadd.f32 %v6018, %v6031
    %v6089 = vadd.f32 %v6019, %v6031
    %v6090 = vadd.f32 %v6020, %v6031
    %v6091 = vadd.f32 %v6021, %v6031
    %v6092 = vadd.f32 %v6022, %v6031
    %v6093 = vadd.f32 %v6023, %v6031
    %v6094 = vadd.f32 %v6024, %v6031
    %v6095 = vadd.f32 %v6025, %v6031
    %v6096 = vadd.f32 %v6026, %v6031
    %v6097 = vmax.f32 %v6033, 0.0
    %v6098 = vmax.f32 %v6034, 0.0
    %v6099 = vmax.f32 %v6035, 0.0
    %v6100 = vmax.f32 %v6036, 0.0
    %v6101 = vmax.f32 %v6037, 0.0
    %v6102 = vmax.f32 %v6038, 0.0
    %v6103 = vmax.f32 %v6039, 0.0
    %v6104 = vmax.f32 %v6040, 0.0
    %v6105 = vmax.f32 %v6041, 0.0
    %v6106 = vmax.f32 %v6042, 0.0
    %v6107 = vmax.f32 %v6043, 0.0
    %v6108 = vmax.f32 %v6044, 0.0
    %v6109 = vmax.f32 %v6045, 0.0
    %v6110 = vmax.f32 %v6046, 0.0
    %v6111 = vmax.f32 %v6047, 0.0
    %v6112 = vmax.f32 %v6048, 0.0
    %v6113 = vmax.f32 %v6049, 0.0
    %v6114 = vmax.f32 %v6050, 0.0
    %v6115 = vmax.f32 %v6051, 0.0
    %v6116 = vmax.f32 %v6052, 0.0
    %v6117 = vmax.f32 %v6053, 0.0
    %v6118 = vmax.f32 %v6054, 0.0
    %v6119 = vmax.f32 %v6055, 0.0
    %v6120 = vmax.f32 %v6056, 0.0
    %v6121 = vmax.f32 %v6057, 0.0
    %v6122 = vmax.f32 %v6058, 0.0
    %v6123 = vmax.f32 %v6059, 0.0
    %v6124 = vmax.f32 %v6060, 0.0
    %v6125 = vmax.f32 %v6061, 0.0
    %v6126 = vmax.f32 %v6062, 0.0
    %v6127 = vmax.f32 %v6063, 0.0
    %v6128 = vmax.f32 %v6064, 0.0
    %v6129 = vmax.f32 %v6065, 0.0
    %v6130 = vmax.f32 %v6066, 0.0
    %v6131 = vmax.f32 %v6067, 0.0
    %v6132 = vmax.f32 %v6068, 0.0
    %v6133 = vmax.f32 %v6069, 0.0
    %v6134 = vmax.f32 %v6070, 0.0
    %v6135 = vmax.f32 %v6071, 0.0
    %v6136 = vmax.f32 %v6072, 0.0
    %v6137 = vmax.f32 %v6073, 0.0
    %v6138 = vmax.f32 %v6074, 0.0
    %v6139 = vmax.f32 %v6075, 0.0
    %v6140 = vmax.f32 %v6076, 0.0
    %v6141 = vmax.f32 %v6077, 0.0
    %v6142 = vmax.f32 %v6078, 0.0
    %v6143 = vmax.f32 %v6079, 0.0
    %v6144 = vmax.f32 %v6080, 0.0
    %v6145 = vmax.f32 %v6081, 0.0
    %v6146 = vmax.f32 %v6082, 0.0
    %v6147 = vmax.f32 %v6083, 0.0
    %v6148 = vmax.f32 %v6084, 0.0
    %v6149 = vmax.f32 %v6085, 0.0
    %v6150 = vmax.f32 %v6086, 0.0
    %v6151 = vmax.f32 %v6087, 0.0
    %v6152 = vmax.f32 %v6088, 0.0
    %v6153 = vmax.f32 %v6089, 0.0
    %v6154 = vmax.f32 %v6090, 0.0
    %v6155 = vmax.f32 %v6091, 0.0
    %v6156 = vmax.f32 %v6092, 0.0
    %v6157 = vmax.f32 %v6093, 0.0
    %v6158 = vmax.f32 %v6094, 0.0
    %v6159 = vmax.f32 %v6095, 0.0
    %v6160 = vmax.f32 %v6096, 0.0
    %6161 = vst [vmem:[#allocation9] sm:$0xff] %v6097
    %6162 = vst [vmem:[#allocation9 + $0x8] sm:$0xff] %v6098
    %6163 = vst [vmem:[#allocation9 + $0x10] sm:$0xff] %v6099
    %6164 = vst [vmem:[#allocation9 + $0x18] sm:$0xff] %v6100
    %6165 = vst [vmem:[#allocation9 + $0x20] sm:$0xff] %v6101
    %6166 = vst [vmem:[#allocation9 + $0x28] sm:$0xff] %v6102
    %6167 = vst [vmem:[#allocation9 + $0x30] sm:$0xff] %v6103
    %6168 = vst [vmem:[#allocation9 + $0x38] sm:$0xff] %v6104
    %6169 = vst [vmem:[#allocation9 + $0x40] sm:$0xff] %v6105
    %6170 = vst [vmem:[#allocation9 + $0x48] sm:$0xff] %v6106
    %6171 = vst [vmem:[#allocation9 + $0x50] sm:$0xff] %v6107
    %6172 = vst [vmem:[#allocation9 + $0x58] sm:$0xff] %v6108
    %6173 = vst [vmem:[#allocation9 + $0x60] sm:$0xff] %v6109
    %6174 = vst [vmem:[#allocation9 + $0x68] sm:$0xff] %v6110
    %6175 = vst [vmem:[#allocation9 + $0x70] sm:$0xff] %v6111
    %6176 = vst [vmem:[#allocation9 + $0x78] sm:$0xff] %v6112
    %6177 = vst [vmem:[#allocation9 + $0x80] sm:$0xff] %v6113
    %6178 = vst [vmem:[#allocation9 + $0x88] sm:$0xff] %v6114
    %6179 = vst [vmem:[#allocation9 + $0x90] sm:$0xff] %v6115
    %6180 = vst [vmem:[#allocation9 + $0x98] sm:$0xff] %v6116
    %6181 = vst [vmem:[#allocation9 + $0xa0] sm:$0xff] %v6117
    %6182 = vst [vmem:[#allocation9 + $0xa8] sm:$0xff] %v6118
    %6183 = vst [vmem:[#allocation9 + $0xb0] sm:$0xff] %v6119
    %6184 = vst [vmem:[#allocation9 + $0xb8] sm:$0xff] %v6120
    %6185 = vst [vmem:[#allocation9 + $0xc0] sm:$0xff] %v6121
    %6186 = vst [vmem:[#allocation9 + $0xc8] sm:$0xff] %v6122
    %6187 = vst [vmem:[#allocation9 + $0xd0] sm:$0xff] %v6123
    %6188 = vst [vmem:[#allocation9 + $0xd8] sm:$0xff] %v6124
    %6189 = vst [vmem:[#allocation9 + $0xe0] sm:$0xff] %v6125
    %6190 = vst [vmem:[#allocation9 + $0xe8] sm:$0xff] %v6126
    %6191 = vst [vmem:[#allocation9 + $0xf0] sm:$0xff] %v6127
    %6192 = vst [vmem:[#allocation9 + $0xf8] sm:$0xff] %v6128
    %6193 = vst [vmem:[#allocation9 + $0x100] sm:$0xff] %v6129
    %6194 = vst [vmem:[#allocation9 + $0x108] sm:$0xff] %v6130
    %6195 = vst [vmem:[#allocation9 + $0x110] sm:$0xff] %v6131
    %6196 = vst [vmem:[#allocation9 + $0x118] sm:$0xff] %v6132
    %6197 = vst [vmem:[#allocation9 + $0x120] sm:$0xff] %v6133
    %6198 = vst [vmem:[#allocation9 + $0x128] sm:$0xff] %v6134
    %6199 = vst [vmem:[#allocation9 + $0x130] sm:$0xff] %v6135
    %6200 = vst [vmem:[#allocation9 + $0x138] sm:$0xff] %v6136
    %6201 = vst [vmem:[#allocation9 + $0x140] sm:$0xff] %v6137
    %6202 = vst [vmem:[#allocation9 + $0x148] sm:$0xff] %v6138
    %6203 = vst [vmem:[#allocation9 + $0x150] sm:$0xff] %v6139
    %6204 = vst [vmem:[#allocation9 + $0x158] sm:$0xff] %v6140
    %6205 = vst [vmem:[#allocation9 + $0x160] sm:$0xff] %v6141
    %6206 = vst [vmem:[#allocation9 + $0x168] sm:$0xff] %v6142
    %6207 = vst [vmem:[#allocation9 + $0x170] sm:$0xff] %v6143
    %6208 = vst [vmem:[#allocation9 + $0x178] sm:$0xff] %v6144
    %6209 = vst [vmem:[#allocation9 + $0x180] sm:$0xff] %v6145
    %6210 = vst [vmem:[#allocation9 + $0x188] sm:$0xff] %v6146
    %6211 = vst [vmem:[#allocation9 + $0x190] sm:$0xff] %v6147
    %6212 = vst [vmem:[#allocation9 + $0x198] sm:$0xff] %v6148
    %6213 = vst [vmem:[#allocation9 + $0x1a0] sm:$0xff] %v6149
    %6214 = vst [vmem:[#allocation9 + $0x1a8] sm:$0xff] %v6150
    %6215 = vst [vmem:[#allocation9 + $0x1b0] sm:$0xff] %v6151
    %6216 = vst [vmem:[#allocation9 + $0x1b8] sm:$0xff] %v6152
    %6217 = vst [vmem:[#allocation9 + $0x1c0] sm:$0xff] %v6153
    %6218 = vst [vmem:[#allocation9 + $0x1c8] sm:$0xff] %v6154
    %6219 = vst [vmem:[#allocation9 + $0x1d0] sm:$0xff] %v6155
    %6220 = vst [vmem:[#allocation9 + $0x1d8] sm:$0xff] %v6156
    %6221 = vst [vmem:[#allocation9 + $0x1e0] sm:$0xff] %v6157
    %6222 = vst [vmem:[#allocation9 + $0x1e8] sm:$0xff] %v6158
    %6223 = vst [vmem:[#allocation9 + $0x1f0] sm:$0xff] %v6159
    %6224 = vst [vmem:[#allocation9 + $0x1f8] sm:$0xff] %v6160
    // Predicated region
    $region42: #{tpu_custom_call.1} parent=1 // pred_check
      _
    $region43: #{tpu_custom_call.1} parent=1 // pred_check_branch
      %6226 = sbr.rel (0) target = $region45
    $region44: #{tpu_custom_call.1} parent=1 // pred_region
      %s6228 = ssub.s32 8192, 8192
      %6229 = vsyncadd [#allocation5], %s6228
      %s6230 = sshll.u32 [#allocation9], 4
      %s6231 = int_to_ptr.vmem [resolvable:$true] %s6230
      %6236 = dma.vmem_to_hbm [thread:$0]  %s6231, 8192, %s7, [#allocation5], 128, 128, 8
    $region45: #{tpu_custom_call.1} parent=1 // pred_fallthru
      _
    // Predicated region
    $region46: #{tpu_custom_call.1} parent=1 // pred_check
      _
    $region47: #{tpu_custom_call.1} parent=1 // pred_check_branch
      %6238 = sbr.rel (0) target = $region49
    $region48: #{tpu_custom_call.1} parent=1 // pred_region
      %6239 = dma.done [#allocation5], 8192
    $region49: #{tpu_custom_call.1} parent=1 // pred_fallthru
      _
    %6240 = vsyncpa [#allocation4], 1
    %6241 = vsyncpa [#allocation7], 1
    %6242 = vsyncpa [#allocation5], 1

</llo_original>
